<compile_context>
chip_gen: v7x
topology: tpu7x:2x2x1
jax: 0.10.0
libtpu: 0.0.40
codegen_flags: <defaults>
</compile_context>

<pallas_src>
import functools

import jax
import jax.numpy as jnp
from jax.experimental import pallas as pl
from jax.experimental.pallas import tpu as pltpu

# Small, deterministic "config" values (config.* in the reference module).
IMG_CHANNELS = 3
DOWN_CHANNELS = [8, 16, 32]
NUM_RES = 2
UP_CHANNELS = [16, 8]
FINAL_CHANNELS = 3
EPS = 1e-5  # nn.InstanceNorm2d default eps


def _round_up(x, m):
    return (x + m - 1) // m * m


@functools.lru_cache(maxsize=1)
def _vmem_limit_bytes():
    """Generation-aware VMEM cap: ~3/4 of physical, clamped to [32, 100] MiB."""
    try:
        cap = int(pltpu.get_tpu_info().vmem_capacity_bytes)
    except Exception:  # pragma: no cover - conservative fallback
        cap = 64 * 1024 * 1024
    return int(min(100 * 1024 * 1024, max(32 * 1024 * 1024, (cap * 3) // 4)))


# ----------------------------------------------------------------------------
# Fused chain kernel: n_stages x [3x3 conv -> InstanceNorm(affine) -> act]
# Activations live in a flat, lane-dense layout: (C, Ho*Wrow) with Wrow = Wo+2
# (2 slack columns per row) so every 3x3 tap is a static lane slice.
# ----------------------------------------------------------------------------
def _make_chain_kernel(*, stages, acts, Ho, Wo, stride2, L_store, L_pad, C_scr):
    Wrow = Wo + 2
    L_out = Ho * Wrow
    inv_cnt = 1.0 / float(Ho * Wo)
    n_stages = len(stages)
    s1_offs = tuple(ky * Wrow + kx for ky in range(3) for kx in range(3))
    s2_taps = tuple((2 * (ky & 1) + (kx & 1), (ky >> 1) * Wrow + (kx >> 1))
                    for ky in range(3) for kx in range(3))
    uses_pad = (not stride2) or n_stages > 1

    def kernel(x_ref, *rest):
        pad_ref = rest[-1]                 # VMEM scratch (C_scr, L_pad) f32
        o_ref = rest[-2]                   # (1, C_blk, L_store)
        prm = rest[:-2]                    # (w2_0, gb_0, w2_1, gb_1, ...)

        lane = jax.lax.broadcasted_iota(jnp.int32, (1, L_store), 1)
        valid = ((lane % Wrow) < Wo) & (lane < L_out)   # spatial validity mask

        if uses_pad:
            pad_ref[...] = jnp.zeros((C_scr, L_pad), jnp.float32)
            lane_p = jax.lax.broadcasted_iota(jnp.int32, (1, L_pad), 1)
            col_p = lane_p % Wrow
            left_m = col_p == 0
            right_m = col_p == (Wo + 1)

        def repad(y, c):
            """Reflect-pad(1) of y (c, L_store) into pad_ref[:c] via patch stores."""
            # interior: pad[r, col] = y[r-1, col-1]
            pad_ref[:c, pl.ds(Wrow + 1, L_store)] = y
            z = pad_ref[:c, :]
            zero2 = jnp.zeros((c, 2), jnp.float32)
            # left border col 0 <- interior col 2 (i.e. z[q + 2])
            vl = jnp.concatenate([z[:, 2:], zero2], axis=1)
            pltpu.store(pad_ref.at[:c, :], vl,
                        mask=jnp.broadcast_to(left_m, (c, L_pad)))
            # right border col Wo+1 <- interior col Wo-1 (i.e. z[q - 2])
            vr = jnp.concatenate([zero2, z[:, :-2]], axis=1)
            pltpu.store(pad_ref.at[:c, :], vr,
                        mask=jnp.broadcast_to(right_m, (c, L_pad)))
            # top row 0 <- row 2 ; bottom row Ho+1 <- row Ho-1 (borders now fixed)
            pad_ref[:c, pl.ds(0, Wrow)] = pad_ref[:c, pl.ds(2 * Wrow, Wrow)]
            pad_ref[:c, pl.ds((Ho + 1) * Wrow, Wrow)] = (
                pad_ref[:c, pl.ds((Ho - 1) * Wrow, Wrow)])

        def s1_tap_slices(c):
            zp = pad_ref[:c, :]
            return [zp[:, off:off + L_store] for off in s1_offs]

        # ---- stage 0 taps ----
        if stride2:
            planes = x_ref[0]                                   # (4, Cin0, L_x) bf16
            taps = [planes[p][:, off:off + L_store] for p, off in s2_taps]
        else:
            cin0 = stages[0][0]
            repad(x_ref[0].astype(jnp.float32), cin0)
            taps = s1_tap_slices(cin0)

        y = None
        for si, (cin, cout) in enumerate(stages):
            w2 = prm[2 * si][...]                               # (cout, 9*cin) bf16
            gb = prm[2 * si + 1][...]                           # (cout, 2) f32
            # One wide MXU dot over the stacked contraction (9*cin deep).
            stacked = jnp.concatenate(taps, axis=0).astype(jnp.bfloat16)
            acc = jnp.dot(w2, stacked, preferred_element_type=jnp.float32)
            # InstanceNorm2d over the Ho*Wo valid positions: zero the garbage lanes
            # once, then unmasked sums; biased variance via E[x^2] - mean^2.
            acc = jnp.where(valid, acc, 0.0)
            mean = jnp.sum(acc, axis=1, keepdims=True) * inv_cnt
            ex2 = jnp.sum(acc * acc, axis=1, keepdims=True) * inv_cnt
            var = jnp.maximum(ex2 - mean * mean, 0.0)
            y = (acc - mean) * jax.lax.rsqrt(var + EPS)
            y = y * gb[:, 0:1] + gb[:, 1:2]
            a = acts[si]
            if a == "relu":
                y = jnp.maximum(y, 0.0)
            elif a == "tanh":
                y = jnp.tanh(y)
            if si + 1 < n_stages:
                repad(y, cout)
                taps = s1_tap_slices(cout)

        c_last = stages[-1][1]
        c_blk = o_ref.shape[1]
        yo = y.astype(o_ref.dtype)
        if c_blk > c_last:          # sublane-pad final 3-channel output to 8
            yo = jnp.concatenate(
                [yo, jnp.zeros((c_blk - c_last, L_store), o_ref.dtype)], axis=0)
        o_ref[0] = yo

    return kernel


# ----------------------------------------------------------------------------
# XLA glue: layout plumbing only (slack columns / phase split / upsample / trim)
# ----------------------------------------------------------------------------
def _nchw_to_ylayout(x, l_store):
    """(N, C, H, W) -> (N, C, l_store) bf16, row stride W+2, zero slack lanes."""
    n, c, h, w = x.shape
    xf = jnp.pad(x, ((0, 0), (0, 0), (0, 0), (0, 2))).reshape(n, c, h * (w + 2))
    xf = jnp.pad(xf, ((0, 0), (0, 0), (0, l_store - h * (w + 2))))
    return xf.astype(jnp.bfloat16)


def _flat_to_nchw(y, c, h, w):
    n = y.shape[0]
    wrow = w + 2
    return y[:, :c, :h * wrow].reshape(n, c, h, wrow)[:, :, :, :w]


def _phase_split(x, l_x):
    """Reflect-pad(1) then split into 4 stride-2 phase planes, flat + zero slack."""
    n, c, h, w = x.shape
    ho, wo = h // 2, w // 2
    wrow = wo + 2
    xp = jnp.pad(x, ((0, 0), (0, 0), (1, 1), (1, 1)), mode="reflect")
    planes = []
    for a in range(2):
        for b in range(2):
            p = xp[:, :, a::2, b::2]                            # (n, c, ho+1, wo+1)
            p = jnp.pad(p, ((0, 0), (0, 0), (0, 1), (0, 1)))    # (n, c, ho+2, wrow)
            planes.append(p.reshape(n, c, (ho + 2) * wrow))
    pl4 = jnp.stack(planes, axis=1)
    pl4 = jnp.pad(pl4, ((0, 0), (0, 0), (0, 0), (0, l_x - (ho + 2) * wrow)))
    return pl4.astype(jnp.bfloat16)


def _upsample2x_f32(x):
    """Bilinear 2x (align_corners=False): gather-free 0.25/0.75 blend, in f32."""
    x = x.astype(jnp.float32)
    n, c, h, w = x.shape
    xp = jnp.concatenate([x[:, :, :1], x[:, :, :-1]], axis=2)
    xn = jnp.concatenate([x[:, :, 1:], x[:, :, -1:]], axis=2)
    xh = jnp.stack([0.25 * xp + 0.75 * x, 0.75 * x + 0.25 * xn], axis=3)
    xh = xh.reshape(n, c, 2 * h, w)
    yp = jnp.concatenate([xh[:, :, :, :1], xh[:, :, :, :-1]], axis=3)
    yn = jnp.concatenate([xh[:, :, :, 1:], xh[:, :, :, -1:]], axis=3)
    yv = jnp.stack([0.25 * yp + 0.75 * xh, 0.75 * xh + 0.25 * yn], axis=4)
    return yv.reshape(n, c, 2 * h, 2 * w)


def _run_chain(x, stage_params, acts, *, mode, out_dtype=jnp.bfloat16):
    """One pallas_call running a fused chain of ConvBlocks.

    x: (N, C, H, W).  mode: 's1' (stride-1), 's2' (stride-2 first stage),
    'up' (bilinear 2x upsample then stride-1 chain).  Returns (N, C_out, Ho, Wo).
    """
    n, _, h, w = x.shape
    if mode == "s2":
        ho, wo = h // 2, w // 2
    elif mode == "up":
        ho, wo = 2 * h, 2 * w
    else:
        ho, wo = h, w
    wrow = wo + 2
    l_out = ho * wrow
    l_store = _round_up(l_out, 128)
    l_pad = _round_up(2 * wrow + 2 + l_store, 128)
    stride2 = mode == "s2"

    stages = tuple((int(p["w2"].shape[1]) // 9, int(p["w2"].shape[0]))
                   for p in stage_params)
    c_last = stages[-1][1]
    c_blk = _round_up(c_last, 8)
    c_scr = max(8, max(max(ci, co) for ci, co in stages))

    if stride2:
        l_x = _round_up(max(wrow + 1 + l_store, (ho + 2) * wrow), 128)
        x_in = _phase_split(x, l_x)
        x_spec = pl.BlockSpec((1, 4, stages[0][0], l_x), lambda i: (i, 0, 0, 0))
    else:
        if mode == "up":
            x = _upsample2x_f32(x)
        x_in = _nchw_to_ylayout(x, l_store)
        x_spec = pl.BlockSpec((1, stages[0][0], l_store), lambda i: (i, 0, 0))

    kernel = _make_chain_kernel(stages=stages, acts=tuple(acts), Ho=ho, Wo=wo,
                                stride2=stride2, L_store=l_store, L_pad=l_pad,
                                C_scr=c_scr)

    in_specs = [x_spec]
    args = [x_in]
    for p in stage_params:
        in_specs.append(pl.BlockSpec(tuple(p["w2"].shape), lambda i: (0, 0)))
        in_specs.append(pl.BlockSpec(tuple(p["gb"].shape), lambda i: (0, 0)))
        args += [p["w2"], p["gb"]]

    y = pl.pallas_call(
        kernel,
        out_shape=jax.ShapeDtypeStruct((n, c_blk, l_store), out_dtype),
        grid=(n,),
        in_specs=in_specs,
        out_specs=pl.BlockSpec((1, c_blk, l_store), lambda i: (i, 0, 0)),
        scratch_shapes=[pltpu.VMEM((c_scr, l_pad), jnp.float32)],
        compiler_params=pltpu.CompilerParams(
            dimension_semantics=("parallel",),
            vmem_limit_bytes=_vmem_limit_bytes()),
    )(*args)
    return _flat_to_nchw(y, c_last, ho, wo)


# ----------------------------------------------------------------------------
# Deterministic parameter init (shapes follow the nn.Module __init__)
# ----------------------------------------------------------------------------
def init_conv_block(key, cin, cout):
    """ConvBlock params.  Conv bias is dropped: it is exactly cancelled by the
    InstanceNorm mean subtraction, so the forward pass is unchanged."""
    w = jax.random.normal(key, (cout, cin, 3, 3), jnp.float32) / jnp.sqrt(9.0 * cin)
    # (cout, 9*cin), [ky, kx, cin]-minor order == the kernel's tap-stacking order.
    w2 = jnp.transpose(w, (0, 2, 3, 1)).reshape(cout, 9 * cin).astype(jnp.bfloat16)
    gb = jnp.stack([jnp.ones((cout,), jnp.float32),      # gamma (IN affine weight)
                    jnp.zeros((cout,), jnp.float32)],    # beta  (IN affine bias)
                   axis=1)                               # (cout, 2)
    return {"w2": w2, "gb": gb}


def init_stylizing_network(key):
    keys = iter(jax.random.split(key, 16))
    params = {"initial": init_conv_block(next(keys), IMG_CHANNELS, DOWN_CHANNELS[0])}
    cin = DOWN_CHANNELS[0]
    params["down"] = []
    for cout in DOWN_CHANNELS[1:]:
        params["down"].append(init_conv_block(next(keys), cin, cout))
        cin = cout
    params["res"] = []
    for _ in range(NUM_RES):
        params["res"].append((init_conv_block(next(keys), cin, cin),
                              init_conv_block(next(keys), cin, cin)))
    params["up"] = []
    for cout in UP_CHANNELS:
        params["up"].append(init_conv_block(next(keys), cin, cout))
        cin = cout
    params["final"] = init_conv_block(next(keys), cin, FINAL_CHANNELS)
    return params


# ----------------------------------------------------------------------------
# Full forward pass (mirrors StylizingNetwork.forward), NCHW in / NCHW out
# ----------------------------------------------------------------------------
def stylizing_network(params, x_nchw):
    x = x_nchw.astype(jnp.float32)
    assert x.shape[2] % 4 == 0 and x.shape[3] % 4 == 0
    # initial block (stride 1, ReLU)
    x = _run_chain(x, [params["initial"]], ["relu"], mode="s1")
    # first down block (stride 2, ReLU)
    x = _run_chain(x, [params["down"][0]], ["relu"], mode="s2")
    # second down block + ALL residual convs fused into one pallas_call.
    # NB: the reference ResBlock has NO skip connection -- reproduced faithfully.
    stages = [params["down"][1]]
    acts = ["relu"]
    for p1, p2 in params["res"]:
        stages += [p1, p2]
        acts += ["relu", "none"]
    x = _run_chain(x, stages, acts, mode="s2")
    # up blocks: f32 bilinear 2x (XLA glue) + fused stride-1 conv chain
    x = _run_chain(x, [params["up"][0]], ["relu"], mode="up")
    # last up block + final block (tanh) fused
    x = _run_chain(x, [params["up"][1], params["final"]], ["relu", "tanh"],
                   mode="up", out_dtype=jnp.float32)
    return x


if __name__ == "__main__":
    key = jax.random.PRNGKey(0)
    pkey, xkey = jax.random.split(key)
    params = init_stylizing_network(pkey)
    x = jax.random.normal(xkey, (2, IMG_CHANNELS, 16, 16), jnp.float32)

    out = jax.jit(stylizing_network)(params, x)
    jax.block_until_ready(out)
    assert out.shape == (2, FINAL_CHANNELS, 16, 16), out.shape
    assert bool(jnp.all(jnp.isfinite(out)))
    print("KERNEL_OK")
</pallas_src>

<mosaic_0001>
module attributes {stable_mosaic.version = 11 : i64} {
  func.func @kernel(%arg0: i32, %arg1: memref<1x3x384xbf16, #tpu.memory_space<vmem>>, %arg2: memref<8x27xbf16, #tpu.memory_space<vmem>>, %arg3: memref<8x2xf32, #tpu.memory_space<vmem>>, %arg4: memref<1x8x384xbf16, #tpu.memory_space<vmem>>, %arg5: memref<8x512xf32, #tpu.memory_space<vmem>>) attributes {dimension_semantics = [#tpu.dimension_semantics<parallel>], iteration_bounds = array<i64: 2>, scalar_prefetch = 0 : i64, scratch_operands = 1 : i64, tpu.core_type = #tpu.core_type<tc>, window_params = [{transform_indices = @transform_0, window_bounds = array<i64: 1, 3, 384>}, {pipeline_mode = #tpu.pipeline_mode<synchronous>, transform_indices = @transform_1, window_bounds = array<i64: 8, 27>}, {pipeline_mode = #tpu.pipeline_mode<synchronous>, transform_indices = @transform_2, window_bounds = array<i64: 8, 2>}, {transform_indices = @transform_3, window_bounds = array<i64: 1, 8, 384>}]} {
    %0 = tpu.iota {dimensions = array<i32: 1>} : vector<1x384xi32>
    %c18_i32 = arith.constant 18 : i32
    %c0_i32 = arith.constant 0 : i32
    %1 = arith.cmpi eq, %c18_i32, %c0_i32 : i32
    %c1_i32 = arith.constant 1 : i32
    %2 = arith.select %1, %c1_i32, %c18_i32 : i32
    %3 = vector.broadcast %2 : i32 to vector<1x384xi32>
    %4 = arith.remsi %0, %3 : vector<1x384xi32>
    %c0_i32_0 = arith.constant 0 : i32
    %5 = vector.broadcast %c0_i32_0 : i32 to vector<1x384xi32>
    %6 = arith.cmpi ne, %4, %5 : vector<1x384xi32>
    %c0_i32_1 = arith.constant 0 : i32
    %7 = vector.broadcast %c0_i32_1 : i32 to vector<1x384xi32>
    %8 = arith.cmpi slt, %4, %7 : vector<1x384xi32>
    %c0_i32_2 = arith.constant 0 : i32
    %9 = arith.cmpi slt, %2, %c0_i32_2 : i32
    %10 = vector.broadcast %9 : i1 to vector<1x384xi1>
    %11 = vector.broadcast %10 : vector<1x384xi1> to vector<1x384xi1>
    %12 = arith.xori %8, %11 : vector<1x384xi1>
    %13 = arith.andi %12, %6 : vector<1x384xi1>
    %14 = vector.broadcast %2 : i32 to vector<1x384xi32>
    %15 = arith.addi %4, %14 : vector<1x384xi32>
    %16 = arith.select %13, %15, %4 : vector<1x384xi1>, vector<1x384xi32>
    %c16_i32 = arith.constant 16 : i32
    %17 = vector.broadcast %c16_i32 : i32 to vector<1x384xi32>
    %18 = arith.cmpi slt, %16, %17 : vector<1x384xi32>
    %c288_i32 = arith.constant 288 : i32
    %19 = vector.broadcast %c288_i32 : i32 to vector<1x384xi32>
    %20 = arith.cmpi slt, %0, %19 : vector<1x384xi32>
    %21 = arith.andi %18, %20 : vector<1x384xi1>
    %cst = arith.constant 0.000000e+00 : f32
    %22 = vector.broadcast %cst : f32 to vector<8x512xf32>
    %c0 = arith.constant 0 : index
    %c0_3 = arith.constant 0 : index
    %23 = vector.load %arg5[%c0, %c0_3] : memref<8x512xf32, #tpu.memory_space<vmem>>, vector<8x512xf32>
    tpu.vector_store %arg5[%c0, %c0_3], %22 {strides = array<i32>} : memref<8x512xf32, #tpu.memory_space<vmem>>, vector<8x512xf32>,
    %24 = tpu.iota {dimensions = array<i32: 1>} : vector<1x512xi32>
    %c18_i32_4 = arith.constant 18 : i32
    %c0_i32_5 = arith.constant 0 : i32
    %25 = arith.cmpi eq, %c18_i32_4, %c0_i32_5 : i32
    %c1_i32_6 = arith.constant 1 : i32
    %26 = arith.select %25, %c1_i32_6, %c18_i32_4 : i32
    %27 = vector.broadcast %26 : i32 to vector<1x512xi32>
    %28 = arith.remsi %24, %27 : vector<1x512xi32>
    %c0_i32_7 = arith.constant 0 : i32
    %29 = vector.broadcast %c0_i32_7 : i32 to vector<1x512xi32>
    %30 = arith.cmpi ne, %28, %29 : vector<1x512xi32>
    %c0_i32_8 = arith.constant 0 : i32
    %31 = vector.broadcast %c0_i32_8 : i32 to vector<1x512xi32>
    %32 = arith.cmpi slt, %28, %31 : vector<1x512xi32>
    %c0_i32_9 = arith.constant 0 : i32
    %33 = arith.cmpi slt, %26, %c0_i32_9 : i32
    %34 = vector.broadcast %33 : i1 to vector<1x512xi1>
    %35 = vector.broadcast %34 : vector<1x512xi1> to vector<1x512xi1>
    %36 = arith.xori %32, %35 : vector<1x512xi1>
    %37 = arith.andi %36, %30 : vector<1x512xi1>
    %38 = vector.broadcast %26 : i32 to vector<1x512xi32>
    %39 = arith.addi %28, %38 : vector<1x512xi32>
    %40 = arith.select %37, %39, %28 : vector<1x512xi1>, vector<1x512xi32>
    %c0_i32_10 = arith.constant 0 : i32
    %41 = vector.broadcast %c0_i32_10 : i32 to vector<1x512xi32>
    %42 = arith.cmpi eq, %40, %41 : vector<1x512xi32>
    %c17_i32 = arith.constant 17 : i32
    %43 = vector.broadcast %c17_i32 : i32 to vector<1x512xi32>
    %44 = arith.cmpi eq, %40, %43 : vector<1x512xi32>
    %c0_11 = arith.constant 0 : index
    %c0_12 = arith.constant 0 : index
    %c0_13 = arith.constant 0 : index
    %45 = vector.load %arg1[%c0_11, %c0_12, %c0_13] : memref<1x3x384xbf16, #tpu.memory_space<vmem>>, vector<1x3x384xbf16>
    %46 = vector.shape_cast %45 : vector<1x3x384xbf16> to vector<3x384xbf16>
    %47 = arith.extf %46 : vector<3x384xbf16> to vector<3x384xf32>
    %c0_14 = arith.constant 0 : index
    %c19 = arith.constant 19 : index
    %48 = vector.load %arg5[%c0_14, %c19] : memref<8x512xf32, #tpu.memory_space<vmem>>, vector<3x384xf32>
    tpu.vector_store %arg5[%c0_14, %c19], %47 {strides = array<i32>} : memref<8x512xf32, #tpu.memory_space<vmem>>, vector<3x384xf32>,
    %c0_15 = arith.constant 0 : index
    %c0_16 = arith.constant 0 : index
    %49 = vector.load %arg5[%c0_15, %c0_16] : memref<8x512xf32, #tpu.memory_space<vmem>>, vector<3x512xf32>
    %cst_17 = arith.constant 0.000000e+00 : f32
    %50 = vector.broadcast %cst_17 : f32 to vector<3x2xf32>
    %51 = vector.extract_strided_slice %49 {offsets = [0, 2], sizes = [3, 510], strides = [1, 1]} : vector<3x512xf32> to vector<3x510xf32>
    %52 = tpu.concatenate %51, %50 in 1 : vector<3x510xf32>, vector<3x2xf32> -> vector<3x512xf32>
    %53 = vector.shape_cast %42 : vector<1x512xi1> to vector<1x512xi1>
    %54 = vector.broadcast %53 : vector<1x512xi1> to vector<3x512xi1>
    %c0_18 = arith.constant 0 : index
    %c0_19 = arith.constant 0 : index
    %55 = vector.load %arg5[%c0_18, %c0_19] : memref<8x512xf32, #tpu.memory_space<vmem>>, vector<3x512xf32>
    tpu.vector_store %arg5[%c0_18, %c0_19], %52 masked %54 {strides = array<i32>} : memref<8x512xf32, #tpu.memory_space<vmem>>, vector<3x512xf32>, vector<3x512xi1>
    %56 = vector.extract_strided_slice %49 {offsets = [0, 0], sizes = [3, 510], strides = [1, 1]} : vector<3x512xf32> to vector<3x510xf32>
    %57 = tpu.concatenate %50, %56 in 1 : vector<3x2xf32>, vector<3x510xf32> -> vector<3x512xf32>
    %58 = vector.shape_cast %44 : vector<1x512xi1> to vector<1x512xi1>
    %59 = vector.broadcast %58 : vector<1x512xi1> to vector<3x512xi1>
    %c0_20 = arith.constant 0 : index
    %c0_21 = arith.constant 0 : index
    %60 = vector.load %arg5[%c0_20, %c0_21] : memref<8x512xf32, #tpu.memory_space<vmem>>, vector<3x512xf32>
    tpu.vector_store %arg5[%c0_20, %c0_21], %57 masked %59 {strides = array<i32>} : memref<8x512xf32, #tpu.memory_space<vmem>>, vector<3x512xf32>, vector<3x512xi1>
    %c0_22 = arith.constant 0 : index
    %c36 = arith.constant 36 : index
    %61 = vector.load %arg5[%c0_22, %c36] : memref<8x512xf32, #tpu.memory_space<vmem>>, vector<3x18xf32>
    %c0_23 = arith.constant 0 : index
    %c0_24 = arith.constant 0 : index
    %62 = vector.load %arg5[%c0_23, %c0_24] : memref<8x512xf32, #tpu.memory_space<vmem>>, vector<3x18xf32>
    tpu.vector_store %arg5[%c0_23, %c0_24], %61 {strides = array<i32>} : memref<8x512xf32, #tpu.memory_space<vmem>>, vector<3x18xf32>,
    %c0_25 = arith.constant 0 : index
    %c270 = arith.constant 270 : index
    %63 = vector.load %arg5[%c0_25, %c270] : memref<8x512xf32, #tpu.memory_space<vmem>>, vector<3x18xf32>
    %c0_26 = arith.constant 0 : index
    %c306 = arith.constant 306 : index
    %64 = vector.load %arg5[%c0_26, %c306] : memref<8x512xf32, #tpu.memory_space<vmem>>, vector<3x18xf32>
    tpu.vector_store %arg5[%c0_26, %c306], %63 {strides = array<i32>} : memref<8x512xf32, #tpu.memory_space<vmem>>, vector<3x18xf32>,
    %c0_27 = arith.constant 0 : index
    %c0_28 = arith.constant 0 : index
    %65 = vector.load %arg5[%c0_27, %c0_28] : memref<8x512xf32, #tpu.memory_space<vmem>>, vector<3x512xf32>
    %66 = vector.extract_strided_slice %65 {offsets = [0, 0], sizes = [3, 384], strides = [1, 1]} : vector<3x512xf32> to vector<3x384xf32>
    %67 = vector.extract_strided_slice %65 {offsets = [0, 1], sizes = [3, 384], strides = [1, 1]} : vector<3x512xf32> to vector<3x384xf32>
    %68 = vector.extract_strided_slice %65 {offsets = [0, 2], sizes = [3, 384], strides = [1, 1]} : vector<3x512xf32> to vector<3x384xf32>
    %69 = vector.extract_strided_slice %65 {offsets = [0, 18], sizes = [3, 384], strides = [1, 1]} : vector<3x512xf32> to vector<3x384xf32>
    %70 = vector.extract_strided_slice %65 {offsets = [0, 19], sizes = [3, 384], strides = [1, 1]} : vector<3x512xf32> to vector<3x384xf32>
    %71 = vector.extract_strided_slice %65 {offsets = [0, 20], sizes = [3, 384], strides = [1, 1]} : vector<3x512xf32> to vector<3x384xf32>
    %72 = vector.extract_strided_slice %65 {offsets = [0, 36], sizes = [3, 384], strides = [1, 1]} : vector<3x512xf32> to vector<3x384xf32>
    %73 = vector.extract_strided_slice %65 {offsets = [0, 37], sizes = [3, 384], strides = [1, 1]} : vector<3x512xf32> to vector<3x384xf32>
    %74 = vector.extract_strided_slice %65 {offsets = [0, 38], sizes = [3, 384], strides = [1, 1]} : vector<3x512xf32> to vector<3x384xf32>
    %c0_29 = arith.constant 0 : index
    %c0_30 = arith.constant 0 : index
    %75 = vector.load %arg2[%c0_29, %c0_30] : memref<8x27xbf16, #tpu.memory_space<vmem>>, vector<8x27xbf16>
    %c0_31 = arith.constant 0 : index
    %c0_32 = arith.constant 0 : index
    %76 = vector.load %arg3[%c0_31, %c0_32] : memref<8x2xf32, #tpu.memory_space<vmem>>, vector<8x2xf32>
    %77 = tpu.concatenate %66, %67, %68, %69, %70, %71, %72, %73, %74 in 0 : vector<3x384xf32>, vector<3x384xf32>, vector<3x384xf32>, vector<3x384xf32>, vector<3x384xf32>, vector<3x384xf32>, vector<3x384xf32>, vector<3x384xf32>, vector<3x384xf32> -> vector<27x384xf32>
    %78 = arith.truncf %77 : vector<27x384xf32> to vector<27x384xbf16>
    %cst_33 = arith.constant dense<0.000000e+00> : vector<8x384xf32>
    %79 = tpu.matmul %75, %78, %cst_33 {dimension_numbers = #tpu.dot_dimension_numbers<[1], [0], [0], [1], [0, 0, 1, 1], [], []>} : vector<8x27xbf16>, vector<27x384xbf16>, vector<8x384xf32> -> vector<8x384xf32>
    %cst_34 = arith.constant 0.000000e+00 : f32
    %80 = vector.shape_cast %21 : vector<1x384xi1> to vector<1x384xi1>
    %81 = vector.broadcast %80 : vector<1x384xi1> to vector<8x384xi1>
    %82 = vector.broadcast %cst_34 : f32 to vector<8x384xf32>
    %83 = arith.select %81, %79, %82 : vector<8x384xi1>, vector<8x384xf32>
    %cst_35 = arith.constant dense<0.000000e+00> : vector<8xf32>
    %84 = vector.multi_reduction <add>, %83, %cst_35 [1] : vector<8x384xf32> to vector<8xf32>
    %85 = vector.shape_cast %84 : vector<8xf32> to vector<8x1xf32>
    %cst_36 = arith.constant 3.906250e-03 : f32
    %86 = vector.broadcast %cst_36 : f32 to vector<8x1xf32>
    %87 = arith.mulf %85, %86 : vector<8x1xf32>
    %88 = arith.mulf %83, %83 : vector<8x384xf32>
    %cst_37 = arith.constant dense<0.000000e+00> : vector<8xf32>
    %89 = vector.multi_reduction <add>, %88, %cst_37 [1] : vector<8x384xf32> to vector<8xf32>
    %90 = vector.shape_cast %89 : vector<8xf32> to vector<8x1xf32>
    %cst_38 = arith.constant 3.906250e-03 : f32
    %91 = vector.broadcast %cst_38 : f32 to vector<8x1xf32>
    %92 = arith.mulf %90, %91 : vector<8x1xf32>
    %93 = arith.mulf %87, %87 : vector<8x1xf32>
    %94 = arith.subf %92, %93 : vector<8x1xf32>
    %cst_39 = arith.constant 0.000000e+00 : f32
    %95 = vector.broadcast %cst_39 : f32 to vector<8x1xf32>
    %96 = arith.maximumf %94, %95 : vector<8x1xf32>
    %97 = vector.broadcast %87 : vector<8x1xf32> to vector<8x384xf32>
    %98 = arith.subf %83, %97 : vector<8x384xf32>
    %cst_40 = arith.constant 9.99999974E-6 : f32
    %99 = vector.broadcast %cst_40 : f32 to vector<8x1xf32>
    %100 = arith.addf %96, %99 : vector<8x1xf32>
    %101 = math.rsqrt %100 : vector<8x1xf32>
    %102 = vector.broadcast %101 : vector<8x1xf32> to vector<8x384xf32>
    %103 = arith.mulf %98, %102 : vector<8x384xf32>
    %104 = vector.extract_strided_slice %76 {offsets = [0, 0], sizes = [8, 1], strides = [1, 1]} : vector<8x2xf32> to vector<8x1xf32>
    %105 = vector.broadcast %104 : vector<8x1xf32> to vector<8x384xf32>
    %106 = arith.mulf %103, %105 : vector<8x384xf32>
    %107 = vector.extract_strided_slice %76 {offsets = [0, 1], sizes = [8, 1], strides = [1, 1]} : vector<8x2xf32> to vector<8x1xf32>
    %108 = vector.broadcast %107 : vector<8x1xf32> to vector<8x384xf32>
    %109 = arith.addf %106, %108 : vector<8x384xf32>
    %cst_41 = arith.constant 0.000000e+00 : f32
    %110 = vector.broadcast %cst_41 : f32 to vector<8x384xf32>
    %111 = arith.maximumf %109, %110 : vector<8x384xf32>
    %112 = arith.truncf %111 : vector<8x384xf32> to vector<8x384xbf16>
    %c0_42 = arith.constant 0 : index
    %c0_43 = arith.constant 0 : index
    %c0_44 = arith.constant 0 : index
    %113 = vector.load %arg4[%c0_42, %c0_43, %c0_44] : memref<1x8x384xbf16, #tpu.memory_space<vmem>>, vector<1x8x384xbf16>
    %114 = vector.shape_cast %113 : vector<1x8x384xbf16> to vector<8x384xbf16>
    %115 = vector.shape_cast %112 : vector<8x384xbf16> to vector<1x8x384xbf16>
    tpu.vector_store %arg4[%c0_42, %c0_43, %c0_44], %115 {strides = array<i32>} : memref<1x8x384xbf16, #tpu.memory_space<vmem>>, vector<1x8x384xbf16>,
    return
  }
  func.func @transform_0(%arg0: i32) -> (i32, i32, i32) {
    %c0_i32 = arith.constant 0 : i32
    %c0_i32_0 = arith.constant 0 : i32
    %c0_i32_1 = arith.constant 0 : i32
    return %arg0, %c0_i32, %c0_i32_0 : i32, i32, i32
  }
  func.func @transform_1(%arg0: i32) -> (i32, i32) {
    %c0_i32 = arith.constant 0 : i32
    %c0_i32_0 = arith.constant 0 : i32
    %c0_i32_1 = arith.constant 0 : i32
    return %c0_i32, %c0_i32_0 : i32, i32
  }
  func.func @transform_2(%arg0: i32) -> (i32, i32) {
    %c0_i32 = arith.constant 0 : i32
    %c0_i32_0 = arith.constant 0 : i32
    %c0_i32_1 = arith.constant 0 : i32
    return %c0_i32, %c0_i32_0 : i32, i32
  }
  func.func @transform_3(%arg0: i32) -> (i32, i32, i32) {
    %c0_i32 = arith.constant 0 : i32
    %c0_i32_0 = arith.constant 0 : i32
    %c0_i32_1 = arith.constant 0 : i32
    return %arg0, %c0_i32, %c0_i32_0 : i32, i32, i32
  }
}

module attributes {stable_mosaic.version = 11 : i64} {
  func.func @kernel(%arg0: i32, %arg1: memref<1x4x8x256xbf16, #tpu.memory_space<vmem>>, %arg2: memref<16x72xbf16, #tpu.memory_space<vmem>>, %arg3: memref<16x2xf32, #tpu.memory_space<vmem>>, %arg4: memref<1x16x128xbf16, #tpu.memory_space<vmem>>, %arg5: memref<16x256xf32, #tpu.memory_space<vmem>>) attributes {dimension_semantics = [#tpu.dimension_semantics<parallel>], iteration_bounds = array<i64: 2>, scalar_prefetch = 0 : i64, scratch_operands = 1 : i64, tpu.core_type = #tpu.core_type<tc>, window_params = [{transform_indices = @transform_0, window_bounds = array<i64: 1, 4, 8, 256>}, {pipeline_mode = #tpu.pipeline_mode<synchronous>, transform_indices = @transform_1, window_bounds = array<i64: 16, 72>}, {pipeline_mode = #tpu.pipeline_mode<synchronous>, transform_indices = @transform_2, window_bounds = array<i64: 16, 2>}, {transform_indices = @transform_3, window_bounds = array<i64: 1, 16, 128>}]} {
    %0 = tpu.iota {dimensions = array<i32: 1>} : vector<1x128xi32>
    %c10_i32 = arith.constant 10 : i32
    %c0_i32 = arith.constant 0 : i32
    %1 = arith.cmpi eq, %c10_i32, %c0_i32 : i32
    %c1_i32 = arith.constant 1 : i32
    %2 = arith.select %1, %c1_i32, %c10_i32 : i32
    %3 = vector.broadcast %2 : i32 to vector<1x128xi32>
    %4 = arith.remsi %0, %3 : vector<1x128xi32>
    %c0_i32_0 = arith.constant 0 : i32
    %5 = vector.broadcast %c0_i32_0 : i32 to vector<1x128xi32>
    %6 = arith.cmpi ne, %4, %5 : vector<1x128xi32>
    %c0_i32_1 = arith.constant 0 : i32
    %7 = vector.broadcast %c0_i32_1 : i32 to vector<1x128xi32>
    %8 = arith.cmpi slt, %4, %7 : vector<1x128xi32>
    %c0_i32_2 = arith.constant 0 : i32
    %9 = arith.cmpi slt, %2, %c0_i32_2 : i32
    %10 = vector.broadcast %9 : i1 to vector<1x128xi1>
    %11 = vector.broadcast %10 : vector<1x128xi1> to vector<1x128xi1>
    %12 = arith.xori %8, %11 : vector<1x128xi1>
    %13 = arith.andi %12, %6 : vector<1x128xi1>
    %14 = vector.broadcast %2 : i32 to vector<1x128xi32>
    %15 = arith.addi %4, %14 : vector<1x128xi32>
    %16 = arith.select %13, %15, %4 : vector<1x128xi1>, vector<1x128xi32>
    %c8_i32 = arith.constant 8 : i32
    %17 = vector.broadcast %c8_i32 : i32 to vector<1x128xi32>
    %18 = arith.cmpi slt, %16, %17 : vector<1x128xi32>
    %c80_i32 = arith.constant 80 : i32
    %19 = vector.broadcast %c80_i32 : i32 to vector<1x128xi32>
    %20 = arith.cmpi slt, %0, %19 : vector<1x128xi32>
    %21 = arith.andi %18, %20 : vector<1x128xi1>
    %c0 = arith.constant 0 : index
    %c0_3 = arith.constant 0 : index
    %c0_4 = arith.constant 0 : index
    %c0_5 = arith.constant 0 : index
    %22 = vector.load %arg1[%c0, %c0_3, %c0_4, %c0_5] : memref<1x4x8x256xbf16, #tpu.memory_space<vmem>>, vector<1x4x8x256xbf16>
    %23 = vector.shape_cast %22 : vector<1x4x8x256xbf16> to vector<4x8x256xbf16>
    %24 = vector.extract_strided_slice %23 {offsets = [0, 0, 0], sizes = [1, 8, 256], strides = [1, 1, 1]} : vector<4x8x256xbf16> to vector<1x8x256xbf16>
    %25 = vector.shape_cast %24 : vector<1x8x256xbf16> to vector<8x256xbf16>
    %26 = vector.extract_strided_slice %25 {offsets = [0, 0], sizes = [8, 128], strides = [1, 1]} : vector<8x256xbf16> to vector<8x128xbf16>
    %27 = vector.extract_strided_slice %23 {offsets = [1, 0, 0], sizes = [1, 8, 256], strides = [1, 1, 1]} : vector<4x8x256xbf16> to vector<1x8x256xbf16>
    %28 = vector.shape_cast %27 : vector<1x8x256xbf16> to vector<8x256xbf16>
    %29 = vector.extract_strided_slice %28 {offsets = [0, 0], sizes = [8, 128], strides = [1, 1]} : vector<8x256xbf16> to vector<8x128xbf16>
    %30 = vector.extract_strided_slice %23 {offsets = [0, 0, 0], sizes = [1, 8, 256], strides = [1, 1, 1]} : vector<4x8x256xbf16> to vector<1x8x256xbf16>
    %31 = vector.shape_cast %30 : vector<1x8x256xbf16> to vector<8x256xbf16>
    %32 = vector.extract_strided_slice %31 {offsets = [0, 1], sizes = [8, 128], strides = [1, 1]} : vector<8x256xbf16> to vector<8x128xbf16>
    %33 = vector.extract_strided_slice %23 {offsets = [2, 0, 0], sizes = [1, 8, 256], strides = [1, 1, 1]} : vector<4x8x256xbf16> to vector<1x8x256xbf16>
    %34 = vector.shape_cast %33 : vector<1x8x256xbf16> to vector<8x256xbf16>
    %35 = vector.extract_strided_slice %34 {offsets = [0, 0], sizes = [8, 128], strides = [1, 1]} : vector<8x256xbf16> to vector<8x128xbf16>
    %36 = vector.extract_strided_slice %23 {offsets = [3, 0, 0], sizes = [1, 8, 256], strides = [1, 1, 1]} : vector<4x8x256xbf16> to vector<1x8x256xbf16>
    %37 = vector.shape_cast %36 : vector<1x8x256xbf16> to vector<8x256xbf16>
    %38 = vector.extract_strided_slice %37 {offsets = [0, 0], sizes = [8, 128], strides = [1, 1]} : vector<8x256xbf16> to vector<8x128xbf16>
    %39 = vector.extract_strided_slice %23 {offsets = [2, 0, 0], sizes = [1, 8, 256], strides = [1, 1, 1]} : vector<4x8x256xbf16> to vector<1x8x256xbf16>
    %40 = vector.shape_cast %39 : vector<1x8x256xbf16> to vector<8x256xbf16>
    %41 = vector.extract_strided_slice %40 {offsets = [0, 1], sizes = [8, 128], strides = [1, 1]} : vector<8x256xbf16> to vector<8x128xbf16>
    %42 = vector.extract_strided_slice %23 {offsets = [0, 0, 0], sizes = [1, 8, 256], strides = [1, 1, 1]} : vector<4x8x256xbf16> to vector<1x8x256xbf16>
    %43 = vector.shape_cast %42 : vector<1x8x256xbf16> to vector<8x256xbf16>
    %44 = vector.extract_strided_slice %43 {offsets = [0, 10], sizes = [8, 128], strides = [1, 1]} : vector<8x256xbf16> to vector<8x128xbf16>
    %45 = vector.extract_strided_slice %23 {offsets = [1, 0, 0], sizes = [1, 8, 256], strides = [1, 1, 1]} : vector<4x8x256xbf16> to vector<1x8x256xbf16>
    %46 = vector.shape_cast %45 : vector<1x8x256xbf16> to vector<8x256xbf16>
    %47 = vector.extract_strided_slice %46 {offsets = [0, 10], sizes = [8, 128], strides = [1, 1]} : vector<8x256xbf16> to vector<8x128xbf16>
    %48 = vector.extract_strided_slice %23 {offsets = [0, 0, 0], sizes = [1, 8, 256], strides = [1, 1, 1]} : vector<4x8x256xbf16> to vector<1x8x256xbf16>
    %49 = vector.shape_cast %48 : vector<1x8x256xbf16> to vector<8x256xbf16>
    %50 = vector.extract_strided_slice %49 {offsets = [0, 11], sizes = [8, 128], strides = [1, 1]} : vector<8x256xbf16> to vector<8x128xbf16>
    %c0_6 = arith.constant 0 : index
    %c0_7 = arith.constant 0 : index
    %51 = vector.load %arg2[%c0_6, %c0_7] : memref<16x72xbf16, #tpu.memory_space<vmem>>, vector<16x72xbf16>
    %c0_8 = arith.constant 0 : index
    %c0_9 = arith.constant 0 : index
    %52 = vector.load %arg3[%c0_8, %c0_9] : memref<16x2xf32, #tpu.memory_space<vmem>>, vector<16x2xf32>
    %53 = tpu.concatenate %26, %29, %32, %35, %38, %41, %44, %47, %50 in 0 : vector<8x128xbf16>, vector<8x128xbf16>, vector<8x128xbf16>, vector<8x128xbf16>, vector<8x128xbf16>, vector<8x128xbf16>, vector<8x128xbf16>, vector<8x128xbf16>, vector<8x128xbf16> -> vector<72x128xbf16>
    %cst = arith.constant dense<0.000000e+00> : vector<16x128xf32>
    %54 = tpu.matmul %51, %53, %cst {dimension_numbers = #tpu.dot_dimension_numbers<[1], [0], [0], [1], [0, 0, 1, 1], [], []>} : vector<16x72xbf16>, vector<72x128xbf16>, vector<16x128xf32> -> vector<16x128xf32>
    %cst_10 = arith.constant 0.000000e+00 : f32
    %55 = vector.shape_cast %21 : vector<1x128xi1> to vector<1x128xi1>
    %56 = vector.broadcast %55 : vector<1x128xi1> to vector<16x128xi1>
    %57 = vector.broadcast %cst_10 : f32 to vector<16x128xf32>
    %58 = arith.select %56, %54, %57 : vector<16x128xi1>, vector<16x128xf32>
    %cst_11 = arith.constant dense<0.000000e+00> : vector<16xf32>
    %59 = vector.multi_reduction <add>, %58, %cst_11 [1] : vector<16x128xf32> to vector<16xf32>
    %60 = vector.shape_cast %59 : vector<16xf32> to vector<16x1xf32>
    %cst_12 = arith.constant 1.562500e-02 : f32
    %61 = vector.broadcast %cst_12 : f32 to vector<16x1xf32>
    %62 = arith.mulf %60, %61 : vector<16x1xf32>
    %63 = arith.mulf %58, %58 : vector<16x128xf32>
    %cst_13 = arith.constant dense<0.000000e+00> : vector<16xf32>
    %64 = vector.multi_reduction <add>, %63, %cst_13 [1] : vector<16x128xf32> to vector<16xf32>
    %65 = vector.shape_cast %64 : vector<16xf32> to vector<16x1xf32>
    %cst_14 = arith.constant 1.562500e-02 : f32
    %66 = vector.broadcast %cst_14 : f32 to vector<16x1xf32>
    %67 = arith.mulf %65, %66 : vector<16x1xf32>
    %68 = arith.mulf %62, %62 : vector<16x1xf32>
    %69 = arith.subf %67, %68 : vector<16x1xf32>
    %cst_15 = arith.constant 0.000000e+00 : f32
    %70 = vector.broadcast %cst_15 : f32 to vector<16x1xf32>
    %71 = arith.maximumf %69, %70 : vector<16x1xf32>
    %72 = vector.broadcast %62 : vector<16x1xf32> to vector<16x128xf32>
    %73 = arith.subf %58, %72 : vector<16x128xf32>
    %cst_16 = arith.constant 9.99999974E-6 : f32
    %74 = vector.broadcast %cst_16 : f32 to vector<16x1xf32>
    %75 = arith.addf %71, %74 : vector<16x1xf32>
    %76 = math.rsqrt %75 : vector<16x1xf32>
    %77 = vector.broadcast %76 : vector<16x1xf32> to vector<16x128xf32>
    %78 = arith.mulf %73, %77 : vector<16x128xf32>
    %79 = vector.extract_strided_slice %52 {offsets = [0, 0], sizes = [16, 1], strides = [1, 1]} : vector<16x2xf32> to vector<16x1xf32>
    %80 = vector.broadcast %79 : vector<16x1xf32> to vector<16x128xf32>
    %81 = arith.mulf %78, %80 : vector<16x128xf32>
    %82 = vector.extract_strided_slice %52 {offsets = [0, 1], sizes = [16, 1], strides = [1, 1]} : vector<16x2xf32> to vector<16x1xf32>
    %83 = vector.broadcast %82 : vector<16x1xf32> to vector<16x128xf32>
    %84 = arith.addf %81, %83 : vector<16x128xf32>
    %cst_17 = arith.constant 0.000000e+00 : f32
    %85 = vector.broadcast %cst_17 : f32 to vector<16x128xf32>
    %86 = arith.maximumf %84, %85 : vector<16x128xf32>
    %87 = arith.truncf %86 : vector<16x128xf32> to vector<16x128xbf16>
    %c0_18 = arith.constant 0 : index
    %c0_19 = arith.constant 0 : index
    %c0_20 = arith.constant 0 : index
    %88 = vector.load %arg4[%c0_18, %c0_19, %c0_20] : memref<1x16x128xbf16, #tpu.memory_space<vmem>>, vector<1x16x128xbf16>
    %89 = vector.shape_cast %88 : vector<1x16x128xbf16> to vector<16x128xbf16>
    %90 = vector.shape_cast %87 : vector<16x128xbf16> to vector<1x16x128xbf16>
    tpu.vector_store %arg4[%c0_18, %c0_19, %c0_20], %90 {strides = array<i32>} : memref<1x16x128xbf16, #tpu.memory_space<vmem>>, vector<1x16x128xbf16>,
    return
  }
  func.func @transform_0(%arg0: i32) -> (i32, i32, i32, i32) {
    %c0_i32 = arith.constant 0 : i32
    %c0_i32_0 = arith.constant 0 : i32
    %c0_i32_1 = arith.constant 0 : i32
    %c0_i32_2 = arith.constant 0 : i32
    return %arg0, %c0_i32, %c0_i32_0, %c0_i32_1 : i32, i32, i32, i32
  }
  func.func @transform_1(%arg0: i32) -> (i32, i32) {
    %c0_i32 = arith.constant 0 : i32
    %c0_i32_0 = arith.constant 0 : i32
    %c0_i32_1 = arith.constant 0 : i32
    return %c0_i32, %c0_i32_0 : i32, i32
  }
  func.func @transform_2(%arg0: i32) -> (i32, i32) {
    %c0_i32 = arith.constant 0 : i32
    %c0_i32_0 = arith.constant 0 : i32
    %c0_i32_1 = arith.constant 0 : i32
    return %c0_i32, %c0_i32_0 : i32, i32
  }
  func.func @transform_3(%arg0: i32) -> (i32, i32, i32) {
    %c0_i32 = arith.constant 0 : i32
    %c0_i32_0 = arith.constant 0 : i32
    %c0_i32_1 = arith.constant 0 : i32
    return %arg0, %c0_i32, %c0_i32_0 : i32, i32, i32
  }
}

module attributes {stable_mosaic.version = 11 : i64} {
  func.func @kernel(%arg0: i32, %arg1: memref<1x4x16x256xbf16, #tpu.memory_space<vmem>>, %arg2: memref<32x144xbf16, #tpu.memory_space<vmem>>, %arg3: memref<32x2xf32, #tpu.memory_space<vmem>>, %arg4: memref<32x288xbf16, #tpu.memory_space<vmem>>, %arg5: memref<32x2xf32, #tpu.memory_space<vmem>>, %arg6: memref<32x288xbf16, #tpu.memory_space<vmem>>, %arg7: memref<32x2xf32, #tpu.memory_space<vmem>>, %arg8: memref<32x288xbf16, #tpu.memory_space<vmem>>, %arg9: memref<32x2xf32, #tpu.memory_space<vmem>>, %arg10: memref<32x288xbf16, #tpu.memory_space<vmem>>, %arg11: memref<32x2xf32, #tpu.memory_space<vmem>>, %arg12: memref<1x32x128xbf16, #tpu.memory_space<vmem>>, %arg13: memref<32x256xf32, #tpu.memory_space<vmem>>) attributes {dimension_semantics = [#tpu.dimension_semantics<parallel>], iteration_bounds = array<i64: 2>, scalar_prefetch = 0 : i64, scratch_operands = 1 : i64, tpu.core_type = #tpu.core_type<tc>, window_params = [{transform_indices = @transform_0, window_bounds = array<i64: 1, 4, 16, 256>}, {pipeline_mode = #tpu.pipeline_mode<synchronous>, transform_indices = @transform_1, window_bounds = array<i64: 32, 144>}, {pipeline_mode = #tpu.pipeline_mode<synchronous>, transform_indices = @transform_2, window_bounds = array<i64: 32, 2>}, {pipeline_mode = #tpu.pipeline_mode<synchronous>, transform_indices = @transform_3, window_bounds = array<i64: 32, 288>}, {pipeline_mode = #tpu.pipeline_mode<synchronous>, transform_indices = @transform_4, window_bounds = array<i64: 32, 2>}, {pipeline_mode = #tpu.pipeline_mode<synchronous>, transform_indices = @transform_5, window_bounds = array<i64: 32, 288>}, {pipeline_mode = #tpu.pipeline_mode<synchronous>, transform_indices = @transform_6, window_bounds = array<i64: 32, 2>}, {pipeline_mode = #tpu.pipeline_mode<synchronous>, transform_indices = @transform_7, window_bounds = array<i64: 32, 288>}, {pipeline_mode = #tpu.pipeline_mode<synchronous>, transform_indices = @transform_8, window_bounds = array<i64: 32, 2>}, {pipeline_mode = #tpu.pipeline_mode<synchronous>, transform_indices = @transform_9, window_bounds = array<i64: 32, 288>}, {pipeline_mode = #tpu.pipeline_mode<synchronous>, transform_indices = @transform_10, window_bounds = array<i64: 32, 2>}, {transform_indices = @transform_11, window_bounds = array<i64: 1, 32, 128>}]} {
    %0 = tpu.iota {dimensions = array<i32: 1>} : vector<1x128xi32>
    %c6_i32 = arith.constant 6 : i32
    %c0_i32 = arith.constant 0 : i32
    %1 = arith.cmpi eq, %c6_i32, %c0_i32 : i32
    %c1_i32 = arith.constant 1 : i32
    %2 = arith.select %1, %c1_i32, %c6_i32 : i32
    %3 = vector.broadcast %2 : i32 to vector<1x128xi32>
    %4 = arith.remsi %0, %3 : vector<1x128xi32>
    %c0_i32_0 = arith.constant 0 : i32
    %5 = vector.broadcast %c0_i32_0 : i32 to vector<1x128xi32>
    %6 = arith.cmpi ne, %4, %5 : vector<1x128xi32>
    %c0_i32_1 = arith.constant 0 : i32
    %7 = vector.broadcast %c0_i32_1 : i32 to vector<1x128xi32>
    %8 = arith.cmpi slt, %4, %7 : vector<1x128xi32>
    %c0_i32_2 = arith.constant 0 : i32
    %9 = arith.cmpi slt, %2, %c0_i32_2 : i32
    %10 = vector.broadcast %9 : i1 to vector<1x128xi1>
    %11 = vector.broadcast %10 : vector<1x128xi1> to vector<1x128xi1>
    %12 = arith.xori %8, %11 : vector<1x128xi1>
    %13 = arith.andi %12, %6 : vector<1x128xi1>
    %14 = vector.broadcast %2 : i32 to vector<1x128xi32>
    %15 = arith.addi %4, %14 : vector<1x128xi32>
    %16 = arith.select %13, %15, %4 : vector<1x128xi1>, vector<1x128xi32>
    %c4_i32 = arith.constant 4 : i32
    %17 = vector.broadcast %c4_i32 : i32 to vector<1x128xi32>
    %18 = arith.cmpi slt, %16, %17 : vector<1x128xi32>
    %c24_i32 = arith.constant 24 : i32
    %19 = vector.broadcast %c24_i32 : i32 to vector<1x128xi32>
    %20 = arith.cmpi slt, %0, %19 : vector<1x128xi32>
    %21 = arith.andi %18, %20 : vector<1x128xi1>
    %cst = arith.constant 0.000000e+00 : f32
    %22 = vector.broadcast %cst : f32 to vector<32x256xf32>
    %c0 = arith.constant 0 : index
    %c0_3 = arith.constant 0 : index
    %23 = vector.load %arg13[%c0, %c0_3] : memref<32x256xf32, #tpu.memory_space<vmem>>, vector<32x256xf32>
    tpu.vector_store %arg13[%c0, %c0_3], %22 {strides = array<i32>} : memref<32x256xf32, #tpu.memory_space<vmem>>, vector<32x256xf32>,
    %24 = tpu.iota {dimensions = array<i32: 1>} : vector<1x256xi32>
    %c6_i32_4 = arith.constant 6 : i32
    %c0_i32_5 = arith.constant 0 : i32
    %25 = arith.cmpi eq, %c6_i32_4, %c0_i32_5 : i32
    %c1_i32_6 = arith.constant 1 : i32
    %26 = arith.select %25, %c1_i32_6, %c6_i32_4 : i32
    %27 = vector.broadcast %26 : i32 to vector<1x256xi32>
    %28 = arith.remsi %24, %27 : vector<1x256xi32>
    %c0_i32_7 = arith.constant 0 : i32
    %29 = vector.broadcast %c0_i32_7 : i32 to vector<1x256xi32>
    %30 = arith.cmpi ne, %28, %29 : vector<1x256xi32>
    %c0_i32_8 = arith.constant 0 : i32
    %31 = vector.broadcast %c0_i32_8 : i32 to vector<1x256xi32>
    %32 = arith.cmpi slt, %28, %31 : vector<1x256xi32>
    %c0_i32_9 = arith.constant 0 : i32
    %33 = arith.cmpi slt, %26, %c0_i32_9 : i32
    %34 = vector.broadcast %33 : i1 to vector<1x256xi1>
    %35 = vector.broadcast %34 : vector<1x256xi1> to vector<1x256xi1>
    %36 = arith.xori %32, %35 : vector<1x256xi1>
    %37 = arith.andi %36, %30 : vector<1x256xi1>
    %38 = vector.broadcast %26 : i32 to vector<1x256xi32>
    %39 = arith.addi %28, %38 : vector<1x256xi32>
    %40 = arith.select %37, %39, %28 : vector<1x256xi1>, vector<1x256xi32>
    %c0_i32_10 = arith.constant 0 : i32
    %41 = vector.broadcast %c0_i32_10 : i32 to vector<1x256xi32>
    %42 = arith.cmpi eq, %40, %41 : vector<1x256xi32>
    %c5_i32 = arith.constant 5 : i32
    %43 = vector.broadcast %c5_i32 : i32 to vector<1x256xi32>
    %44 = arith.cmpi eq, %40, %43 : vector<1x256xi32>
    %c0_11 = arith.constant 0 : index
    %c0_12 = arith.constant 0 : index
    %c0_13 = arith.constant 0 : index
    %c0_14 = arith.constant 0 : index
    %45 = vector.load %arg1[%c0_11, %c0_12, %c0_13, %c0_14] : memref<1x4x16x256xbf16, #tpu.memory_space<vmem>>, vector<1x4x16x256xbf16>
    %46 = vector.shape_cast %45 : vector<1x4x16x256xbf16> to vector<4x16x256xbf16>
    %47 = vector.extract_strided_slice %46 {offsets = [0, 0, 0], sizes = [1, 16, 256], strides = [1, 1, 1]} : vector<4x16x256xbf16> to vector<1x16x256xbf16>
    %48 = vector.shape_cast %47 : vector<1x16x256xbf16> to vector<16x256xbf16>
    %49 = vector.extract_strided_slice %48 {offsets = [0, 0], sizes = [16, 128], strides = [1, 1]} : vector<16x256xbf16> to vector<16x128xbf16>
    %50 = vector.extract_strided_slice %46 {offsets = [1, 0, 0], sizes = [1, 16, 256], strides = [1, 1, 1]} : vector<4x16x256xbf16> to vector<1x16x256xbf16>
    %51 = vector.shape_cast %50 : vector<1x16x256xbf16> to vector<16x256xbf16>
    %52 = vector.extract_strided_slice %51 {offsets = [0, 0], sizes = [16, 128], strides = [1, 1]} : vector<16x256xbf16> to vector<16x128xbf16>
    %53 = vector.extract_strided_slice %46 {offsets = [0, 0, 0], sizes = [1, 16, 256], strides = [1, 1, 1]} : vector<4x16x256xbf16> to vector<1x16x256xbf16>
    %54 = vector.shape_cast %53 : vector<1x16x256xbf16> to vector<16x256xbf16>
    %55 = vector.extract_strided_slice %54 {offsets = [0, 1], sizes = [16, 128], strides = [1, 1]} : vector<16x256xbf16> to vector<16x128xbf16>
    %56 = vector.extract_strided_slice %46 {offsets = [2, 0, 0], sizes = [1, 16, 256], strides = [1, 1, 1]} : vector<4x16x256xbf16> to vector<1x16x256xbf16>
    %57 = vector.shape_cast %56 : vector<1x16x256xbf16> to vector<16x256xbf16>
    %58 = vector.extract_strided_slice %57 {offsets = [0, 0], sizes = [16, 128], strides = [1, 1]} : vector<16x256xbf16> to vector<16x128xbf16>
    %59 = vector.extract_strided_slice %46 {offsets = [3, 0, 0], sizes = [1, 16, 256], strides = [1, 1, 1]} : vector<4x16x256xbf16> to vector<1x16x256xbf16>
    %60 = vector.shape_cast %59 : vector<1x16x256xbf16> to vector<16x256xbf16>
    %61 = vector.extract_strided_slice %60 {offsets = [0, 0], sizes = [16, 128], strides = [1, 1]} : vector<16x256xbf16> to vector<16x128xbf16>
    %62 = vector.extract_strided_slice %46 {offsets = [2, 0, 0], sizes = [1, 16, 256], strides = [1, 1, 1]} : vector<4x16x256xbf16> to vector<1x16x256xbf16>
    %63 = vector.shape_cast %62 : vector<1x16x256xbf16> to vector<16x256xbf16>
    %64 = vector.extract_strided_slice %63 {offsets = [0, 1], sizes = [16, 128], strides = [1, 1]} : vector<16x256xbf16> to vector<16x128xbf16>
    %65 = vector.extract_strided_slice %46 {offsets = [0, 0, 0], sizes = [1, 16, 256], strides = [1, 1, 1]} : vector<4x16x256xbf16> to vector<1x16x256xbf16>
    %66 = vector.shape_cast %65 : vector<1x16x256xbf16> to vector<16x256xbf16>
    %67 = vector.extract_strided_slice %66 {offsets = [0, 6], sizes = [16, 128], strides = [1, 1]} : vector<16x256xbf16> to vector<16x128xbf16>
    %68 = vector.extract_strided_slice %46 {offsets = [1, 0, 0], sizes = [1, 16, 256], strides = [1, 1, 1]} : vector<4x16x256xbf16> to vector<1x16x256xbf16>
    %69 = vector.shape_cast %68 : vector<1x16x256xbf16> to vector<16x256xbf16>
    %70 = vector.extract_strided_slice %69 {offsets = [0, 6], sizes = [16, 128], strides = [1, 1]} : vector<16x256xbf16> to vector<16x128xbf16>
    %71 = vector.extract_strided_slice %46 {offsets = [0, 0, 0], sizes = [1, 16, 256], strides = [1, 1, 1]} : vector<4x16x256xbf16> to vector<1x16x256xbf16>
    %72 = vector.shape_cast %71 : vector<1x16x256xbf16> to vector<16x256xbf16>
    %73 = vector.extract_strided_slice %72 {offsets = [0, 7], sizes = [16, 128], strides = [1, 1]} : vector<16x256xbf16> to vector<16x128xbf16>
    %c0_15 = arith.constant 0 : index
    %c0_16 = arith.constant 0 : index
    %74 = vector.load %arg2[%c0_15, %c0_16] : memref<32x144xbf16, #tpu.memory_space<vmem>>, vector<32x144xbf16>
    %c0_17 = arith.constant 0 : index
    %c0_18 = arith.constant 0 : index
    %75 = vector.load %arg3[%c0_17, %c0_18] : memref<32x2xf32, #tpu.memory_space<vmem>>, vector<32x2xf32>
    %76 = tpu.concatenate %49, %52, %55, %58, %61, %64, %67, %70, %73 in 0 : vector<16x128xbf16>, vector<16x128xbf16>, vector<16x128xbf16>, vector<16x128xbf16>, vector<16x128xbf16>, vector<16x128xbf16>, vector<16x128xbf16>, vector<16x128xbf16>, vector<16x128xbf16> -> vector<144x128xbf16>
    %cst_19 = arith.constant dense<0.000000e+00> : vector<32x128xf32>
    %77 = tpu.matmul %74, %76, %cst_19 {dimension_numbers = #tpu.dot_dimension_numbers<[1], [0], [0], [1], [0, 0, 1, 1], [], []>} : vector<32x144xbf16>, vector<144x128xbf16>, vector<32x128xf32> -> vector<32x128xf32>
    %cst_20 = arith.constant 0.000000e+00 : f32
    %78 = vector.shape_cast %21 : vector<1x128xi1> to vector<1x128xi1>
    %79 = vector.broadcast %78 : vector<1x128xi1> to vector<32x128xi1>
    %80 = vector.broadcast %cst_20 : f32 to vector<32x128xf32>
    %81 = arith.select %79, %77, %80 : vector<32x128xi1>, vector<32x128xf32>
    %cst_21 = arith.constant dense<0.000000e+00> : vector<32xf32>
    %82 = vector.multi_reduction <add>, %81, %cst_21 [1] : vector<32x128xf32> to vector<32xf32>
    %83 = vector.shape_cast %82 : vector<32xf32> to vector<32x1xf32>
    %cst_22 = arith.constant 6.250000e-02 : f32
    %84 = vector.broadcast %cst_22 : f32 to vector<32x1xf32>
    %85 = arith.mulf %83, %84 : vector<32x1xf32>
    %86 = arith.mulf %81, %81 : vector<32x128xf32>
    %cst_23 = arith.constant dense<0.000000e+00> : vector<32xf32>
    %87 = vector.multi_reduction <add>, %86, %cst_23 [1] : vector<32x128xf32> to vector<32xf32>
    %88 = vector.shape_cast %87 : vector<32xf32> to vector<32x1xf32>
    %cst_24 = arith.constant 6.250000e-02 : f32
    %89 = vector.broadcast %cst_24 : f32 to vector<32x1xf32>
    %90 = arith.mulf %88, %89 : vector<32x1xf32>
    %91 = arith.mulf %85, %85 : vector<32x1xf32>
    %92 = arith.subf %90, %91 : vector<32x1xf32>
    %cst_25 = arith.constant 0.000000e+00 : f32
    %93 = vector.broadcast %cst_25 : f32 to vector<32x1xf32>
    %94 = arith.maximumf %92, %93 : vector<32x1xf32>
    %95 = vector.broadcast %85 : vector<32x1xf32> to vector<32x128xf32>
    %96 = arith.subf %81, %95 : vector<32x128xf32>
    %cst_26 = arith.constant 9.99999974E-6 : f32
    %97 = vector.broadcast %cst_26 : f32 to vector<32x1xf32>
    %98 = arith.addf %94, %97 : vector<32x1xf32>
    %99 = math.rsqrt %98 : vector<32x1xf32>
    %100 = vector.broadcast %99 : vector<32x1xf32> to vector<32x128xf32>
    %101 = arith.mulf %96, %100 : vector<32x128xf32>
    %102 = vector.extract_strided_slice %75 {offsets = [0, 0], sizes = [32, 1], strides = [1, 1]} : vector<32x2xf32> to vector<32x1xf32>
    %103 = vector.broadcast %102 : vector<32x1xf32> to vector<32x128xf32>
    %104 = arith.mulf %101, %103 : vector<32x128xf32>
    %105 = vector.extract_strided_slice %75 {offsets = [0, 1], sizes = [32, 1], strides = [1, 1]} : vector<32x2xf32> to vector<32x1xf32>
    %106 = vector.broadcast %105 : vector<32x1xf32> to vector<32x128xf32>
    %107 = arith.addf %104, %106 : vector<32x128xf32>
    %cst_27 = arith.constant 0.000000e+00 : f32
    %108 = vector.broadcast %cst_27 : f32 to vector<32x128xf32>
    %109 = arith.maximumf %107, %108 : vector<32x128xf32>
    %c0_28 = arith.constant 0 : index
    %c7 = arith.constant 7 : index
    %110 = vector.load %arg13[%c0_28, %c7] : memref<32x256xf32, #tpu.memory_space<vmem>>, vector<32x128xf32>
    tpu.vector_store %arg13[%c0_28, %c7], %109 {strides = array<i32>} : memref<32x256xf32, #tpu.memory_space<vmem>>, vector<32x128xf32>,
    %c0_29 = arith.constant 0 : index
    %c0_30 = arith.constant 0 : index
    %111 = vector.load %arg13[%c0_29, %c0_30] : memref<32x256xf32, #tpu.memory_space<vmem>>, vector<32x256xf32>
    %cst_31 = arith.constant 0.000000e+00 : f32
    %112 = vector.broadcast %cst_31 : f32 to vector<32x2xf32>
    %113 = vector.extract_strided_slice %111 {offsets = [0, 2], sizes = [32, 254], strides = [1, 1]} : vector<32x256xf32> to vector<32x254xf32>
    %114 = tpu.concatenate %113, %112 in 1 : vector<32x254xf32>, vector<32x2xf32> -> vector<32x256xf32>
    %115 = vector.shape_cast %42 : vector<1x256xi1> to vector<1x256xi1>
    %116 = vector.broadcast %115 : vector<1x256xi1> to vector<32x256xi1>
    %c0_32 = arith.constant 0 : index
    %c0_33 = arith.constant 0 : index
    %117 = vector.load %arg13[%c0_32, %c0_33] : memref<32x256xf32, #tpu.memory_space<vmem>>, vector<32x256xf32>
    tpu.vector_store %arg13[%c0_32, %c0_33], %114 masked %116 {strides = array<i32>} : memref<32x256xf32, #tpu.memory_space<vmem>>, vector<32x256xf32>, vector<32x256xi1>
    %118 = vector.extract_strided_slice %111 {offsets = [0, 0], sizes = [32, 254], strides = [1, 1]} : vector<32x256xf32> to vector<32x254xf32>
    %119 = tpu.concatenate %112, %118 in 1 : vector<32x2xf32>, vector<32x254xf32> -> vector<32x256xf32>
    %120 = vector.shape_cast %44 : vector<1x256xi1> to vector<1x256xi1>
    %121 = vector.broadcast %120 : vector<1x256xi1> to vector<32x256xi1>
    %c0_34 = arith.constant 0 : index
    %c0_35 = arith.constant 0 : index
    %122 = vector.load %arg13[%c0_34, %c0_35] : memref<32x256xf32, #tpu.memory_space<vmem>>, vector<32x256xf32>
    tpu.vector_store %arg13[%c0_34, %c0_35], %119 masked %121 {strides = array<i32>} : memref<32x256xf32, #tpu.memory_space<vmem>>, vector<32x256xf32>, vector<32x256xi1>
    %c0_36 = arith.constant 0 : index
    %c12 = arith.constant 12 : index
    %123 = vector.load %arg13[%c0_36, %c12] : memref<32x256xf32, #tpu.memory_space<vmem>>, vector<32x6xf32>
    %c0_37 = arith.constant 0 : index
    %c0_38 = arith.constant 0 : index
    %124 = vector.load %arg13[%c0_37, %c0_38] : memref<32x256xf32, #tpu.memory_space<vmem>>, vector<32x6xf32>
    tpu.vector_store %arg13[%c0_37, %c0_38], %123 {strides = array<i32>} : memref<32x256xf32, #tpu.memory_space<vmem>>, vector<32x6xf32>,
    %c0_39 = arith.constant 0 : index
    %c18 = arith.constant 18 : index
    %125 = vector.load %arg13[%c0_39, %c18] : memref<32x256xf32, #tpu.memory_space<vmem>>, vector<32x6xf32>
    %c0_40 = arith.constant 0 : index
    %c30 = arith.constant 30 : index
    %126 = vector.load %arg13[%c0_40, %c30] : memref<32x256xf32, #tpu.memory_space<vmem>>, vector<32x6xf32>
    tpu.vector_store %arg13[%c0_40, %c30], %125 {strides = array<i32>} : memref<32x256xf32, #tpu.memory_space<vmem>>, vector<32x6xf32>,
    %c0_41 = arith.constant 0 : index
    %c0_42 = arith.constant 0 : index
    %127 = vector.load %arg13[%c0_41, %c0_42] : memref<32x256xf32, #tpu.memory_space<vmem>>, vector<32x256xf32>
    %128 = vector.extract_strided_slice %127 {offsets = [0, 0], sizes = [32, 128], strides = [1, 1]} : vector<32x256xf32> to vector<32x128xf32>
    %129 = vector.extract_strided_slice %127 {offsets = [0, 1], sizes = [32, 128], strides = [1, 1]} : vector<32x256xf32> to vector<32x128xf32>
    %130 = vector.extract_strided_slice %127 {offsets = [0, 2], sizes = [32, 128], strides = [1, 1]} : vector<32x256xf32> to vector<32x128xf32>
    %131 = vector.extract_strided_slice %127 {offsets = [0, 6], sizes = [32, 128], strides = [1, 1]} : vector<32x256xf32> to vector<32x128xf32>
    %132 = vector.extract_strided_slice %127 {offsets = [0, 7], sizes = [32, 128], strides = [1, 1]} : vector<32x256xf32> to vector<32x128xf32>
    %133 = vector.extract_strided_slice %127 {offsets = [0, 8], sizes = [32, 128], strides = [1, 1]} : vector<32x256xf32> to vector<32x128xf32>
    %134 = vector.extract_strided_slice %127 {offsets = [0, 12], sizes = [32, 128], strides = [1, 1]} : vector<32x256xf32> to vector<32x128xf32>
    %135 = vector.extract_strided_slice %127 {offsets = [0, 13], sizes = [32, 128], strides = [1, 1]} : vector<32x256xf32> to vector<32x128xf32>
    %136 = vector.extract_strided_slice %127 {offsets = [0, 14], sizes = [32, 128], strides = [1, 1]} : vector<32x256xf32> to vector<32x128xf32>
    %c0_43 = arith.constant 0 : index
    %c0_44 = arith.constant 0 : index
    %137 = vector.load %arg4[%c0_43, %c0_44] : memref<32x288xbf16, #tpu.memory_space<vmem>>, vector<32x288xbf16>
    %c0_45 = arith.constant 0 : index
    %c0_46 = arith.constant 0 : index
    %138 = vector.load %arg5[%c0_45, %c0_46] : memref<32x2xf32, #tpu.memory_space<vmem>>, vector<32x2xf32>
    %139 = tpu.concatenate %128, %129, %130, %131, %132, %133, %134, %135, %136 in 0 : vector<32x128xf32>, vector<32x128xf32>, vector<32x128xf32>, vector<32x128xf32>, vector<32x128xf32>, vector<32x128xf32>, vector<32x128xf32>, vector<32x128xf32>, vector<32x128xf32> -> vector<288x128xf32>
    %140 = arith.truncf %139 : vector<288x128xf32> to vector<288x128xbf16>
    %cst_47 = arith.constant dense<0.000000e+00> : vector<32x128xf32>
    %141 = tpu.matmul %137, %140, %cst_47 {dimension_numbers = #tpu.dot_dimension_numbers<[1], [0], [0], [1], [0, 0, 1, 1], [], []>} : vector<32x288xbf16>, vector<288x128xbf16>, vector<32x128xf32> -> vector<32x128xf32>
    %cst_48 = arith.constant 0.000000e+00 : f32
    %142 = vector.shape_cast %21 : vector<1x128xi1> to vector<1x128xi1>
    %143 = vector.broadcast %142 : vector<1x128xi1> to vector<32x128xi1>
    %144 = vector.broadcast %cst_48 : f32 to vector<32x128xf32>
    %145 = arith.select %143, %141, %144 : vector<32x128xi1>, vector<32x128xf32>
    %cst_49 = arith.constant dense<0.000000e+00> : vector<32xf32>
    %146 = vector.multi_reduction <add>, %145, %cst_49 [1] : vector<32x128xf32> to vector<32xf32>
    %147 = vector.shape_cast %146 : vector<32xf32> to vector<32x1xf32>
    %cst_50 = arith.constant 6.250000e-02 : f32
    %148 = vector.broadcast %cst_50 : f32 to vector<32x1xf32>
    %149 = arith.mulf %147, %148 : vector<32x1xf32>
    %150 = arith.mulf %145, %145 : vector<32x128xf32>
    %cst_51 = arith.constant dense<0.000000e+00> : vector<32xf32>
    %151 = vector.multi_reduction <add>, %150, %cst_51 [1] : vector<32x128xf32> to vector<32xf32>
    %152 = vector.shape_cast %151 : vector<32xf32> to vector<32x1xf32>
    %cst_52 = arith.constant 6.250000e-02 : f32
    %153 = vector.broadcast %cst_52 : f32 to vector<32x1xf32>
    %154 = arith.mulf %152, %153 : vector<32x1xf32>
    %155 = arith.mulf %149, %149 : vector<32x1xf32>
    %156 = arith.subf %154, %155 : vector<32x1xf32>
    %cst_53 = arith.constant 0.000000e+00 : f32
    %157 = vector.broadcast %cst_53 : f32 to vector<32x1xf32>
    %158 = arith.maximumf %156, %157 : vector<32x1xf32>
    %159 = vector.broadcast %149 : vector<32x1xf32> to vector<32x128xf32>
    %160 = arith.subf %145, %159 : vector<32x128xf32>
    %cst_54 = arith.constant 9.99999974E-6 : f32
    %161 = vector.broadcast %cst_54 : f32 to vector<32x1xf32>
    %162 = arith.addf %158, %161 : vector<32x1xf32>
    %163 = math.rsqrt %162 : vector<32x1xf32>
    %164 = vector.broadcast %163 : vector<32x1xf32> to vector<32x128xf32>
    %165 = arith.mulf %160, %164 : vector<32x128xf32>
    %166 = vector.extract_strided_slice %138 {offsets = [0, 0], sizes = [32, 1], strides = [1, 1]} : vector<32x2xf32> to vector<32x1xf32>
    %167 = vector.broadcast %166 : vector<32x1xf32> to vector<32x128xf32>
    %168 = arith.mulf %165, %167 : vector<32x128xf32>
    %169 = vector.extract_strided_slice %138 {offsets = [0, 1], sizes = [32, 1], strides = [1, 1]} : vector<32x2xf32> to vector<32x1xf32>
    %170 = vector.broadcast %169 : vector<32x1xf32> to vector<32x128xf32>
    %171 = arith.addf %168, %170 : vector<32x128xf32>
    %cst_55 = arith.constant 0.000000e+00 : f32
    %172 = vector.broadcast %cst_55 : f32 to vector<32x128xf32>
    %173 = arith.maximumf %171, %172 : vector<32x128xf32>
    %c0_56 = arith.constant 0 : index
    %c7_57 = arith.constant 7 : index
    %174 = vector.load %arg13[%c0_56, %c7_57] : memref<32x256xf32, #tpu.memory_space<vmem>>, vector<32x128xf32>
    tpu.vector_store %arg13[%c0_56, %c7_57], %173 {strides = array<i32>} : memref<32x256xf32, #tpu.memory_space<vmem>>, vector<32x128xf32>,
    %c0_58 = arith.constant 0 : index
    %c0_59 = arith.constant 0 : index
    %175 = vector.load %arg13[%c0_58, %c0_59] : memref<32x256xf32, #tpu.memory_space<vmem>>, vector<32x256xf32>
    %cst_60 = arith.constant 0.000000e+00 : f32
    %176 = vector.broadcast %cst_60 : f32 to vector<32x2xf32>
    %177 = vector.extract_strided_slice %175 {offsets = [0, 2], sizes = [32, 254], strides = [1, 1]} : vector<32x256xf32> to vector<32x254xf32>
    %178 = tpu.concatenate %177, %176 in 1 : vector<32x254xf32>, vector<32x2xf32> -> vector<32x256xf32>
    %179 = vector.shape_cast %42 : vector<1x256xi1> to vector<1x256xi1>
    %180 = vector.broadcast %179 : vector<1x256xi1> to vector<32x256xi1>
    %c0_61 = arith.constant 0 : index
    %c0_62 = arith.constant 0 : index
    %181 = vector.load %arg13[%c0_61, %c0_62] : memref<32x256xf32, #tpu.memory_space<vmem>>, vector<32x256xf32>
    tpu.vector_store %arg13[%c0_61, %c0_62], %178 masked %180 {strides = array<i32>} : memref<32x256xf32, #tpu.memory_space<vmem>>, vector<32x256xf32>, vector<32x256xi1>
    %182 = vector.extract_strided_slice %175 {offsets = [0, 0], sizes = [32, 254], strides = [1, 1]} : vector<32x256xf32> to vector<32x254xf32>
    %183 = tpu.concatenate %176, %182 in 1 : vector<32x2xf32>, vector<32x254xf32> -> vector<32x256xf32>
    %184 = vector.shape_cast %44 : vector<1x256xi1> to vector<1x256xi1>
    %185 = vector.broadcast %184 : vector<1x256xi1> to vector<32x256xi1>
    %c0_63 = arith.constant 0 : index
    %c0_64 = arith.constant 0 : index
    %186 = vector.load %arg13[%c0_63, %c0_64] : memref<32x256xf32, #tpu.memory_space<vmem>>, vector<32x256xf32>
    tpu.vector_store %arg13[%c0_63, %c0_64], %183 masked %185 {strides = array<i32>} : memref<32x256xf32, #tpu.memory_space<vmem>>, vector<32x256xf32>, vector<32x256xi1>
    %c0_65 = arith.constant 0 : index
    %c12_66 = arith.constant 12 : index
    %187 = vector.load %arg13[%c0_65, %c12_66] : memref<32x256xf32, #tpu.memory_space<vmem>>, vector<32x6xf32>
    %c0_67 = arith.constant 0 : index
    %c0_68 = arith.constant 0 : index
    %188 = vector.load %arg13[%c0_67, %c0_68] : memref<32x256xf32, #tpu.memory_space<vmem>>, vector<32x6xf32>
    tpu.vector_store %arg13[%c0_67, %c0_68], %187 {strides = array<i32>} : memref<32x256xf32, #tpu.memory_space<vmem>>, vector<32x6xf32>,
    %c0_69 = arith.constant 0 : index
    %c18_70 = arith.constant 18 : index
    %189 = vector.load %arg13[%c0_69, %c18_70] : memref<32x256xf32, #tpu.memory_space<vmem>>, vector<32x6xf32>
    %c0_71 = arith.constant 0 : index
    %c30_72 = arith.constant 30 : index
    %190 = vector.load %arg13[%c0_71, %c30_72] : memref<32x256xf32, #tpu.memory_space<vmem>>, vector<32x6xf32>
    tpu.vector_store %arg13[%c0_71, %c30_72], %189 {strides = array<i32>} : memref<32x256xf32, #tpu.memory_space<vmem>>, vector<32x6xf32>,
    %c0_73 = arith.constant 0 : index
    %c0_74 = arith.constant 0 : index
    %191 = vector.load %arg13[%c0_73, %c0_74] : memref<32x256xf32, #tpu.memory_space<vmem>>, vector<32x256xf32>
    %192 = vector.extract_strided_slice %191 {offsets = [0, 0], sizes = [32, 128], strides = [1, 1]} : vector<32x256xf32> to vector<32x128xf32>
    %193 = vector.extract_strided_slice %191 {offsets = [0, 1], sizes = [32, 128], strides = [1, 1]} : vector<32x256xf32> to vector<32x128xf32>
    %194 = vector.extract_strided_slice %191 {offsets = [0, 2], sizes = [32, 128], strides = [1, 1]} : vector<32x256xf32> to vector<32x128xf32>
    %195 = vector.extract_strided_slice %191 {offsets = [0, 6], sizes = [32, 128], strides = [1, 1]} : vector<32x256xf32> to vector<32x128xf32>
    %196 = vector.extract_strided_slice %191 {offsets = [0, 7], sizes = [32, 128], strides = [1, 1]} : vector<32x256xf32> to vector<32x128xf32>
    %197 = vector.extract_strided_slice %191 {offsets = [0, 8], sizes = [32, 128], strides = [1, 1]} : vector<32x256xf32> to vector<32x128xf32>
    %198 = vector.extract_strided_slice %191 {offsets = [0, 12], sizes = [32, 128], strides = [1, 1]} : vector<32x256xf32> to vector<32x128xf32>
    %199 = vector.extract_strided_slice %191 {offsets = [0, 13], sizes = [32, 128], strides = [1, 1]} : vector<32x256xf32> to vector<32x128xf32>
    %200 = vector.extract_strided_slice %191 {offsets = [0, 14], sizes = [32, 128], strides = [1, 1]} : vector<32x256xf32> to vector<32x128xf32>
    %c0_75 = arith.constant 0 : index
    %c0_76 = arith.constant 0 : index
    %201 = vector.load %arg6[%c0_75, %c0_76] : memref<32x288xbf16, #tpu.memory_space<vmem>>, vector<32x288xbf16>
    %c0_77 = arith.constant 0 : index
    %c0_78 = arith.constant 0 : index
    %202 = vector.load %arg7[%c0_77, %c0_78] : memref<32x2xf32, #tpu.memory_space<vmem>>, vector<32x2xf32>
    %203 = tpu.concatenate %192, %193, %194, %195, %196, %197, %198, %199, %200 in 0 : vector<32x128xf32>, vector<32x128xf32>, vector<32x128xf32>, vector<32x128xf32>, vector<32x128xf32>, vector<32x128xf32>, vector<32x128xf32>, vector<32x128xf32>, vector<32x128xf32> -> vector<288x128xf32>
    %204 = arith.truncf %203 : vector<288x128xf32> to vector<288x128xbf16>
    %cst_79 = arith.constant dense<0.000000e+00> : vector<32x128xf32>
    %205 = tpu.matmul %201, %204, %cst_79 {dimension_numbers = #tpu.dot_dimension_numbers<[1], [0], [0], [1], [0, 0, 1, 1], [], []>} : vector<32x288xbf16>, vector<288x128xbf16>, vector<32x128xf32> -> vector<32x128xf32>
    %cst_80 = arith.constant 0.000000e+00 : f32
    %206 = vector.shape_cast %21 : vector<1x128xi1> to vector<1x128xi1>
    %207 = vector.broadcast %206 : vector<1x128xi1> to vector<32x128xi1>
    %208 = vector.broadcast %cst_80 : f32 to vector<32x128xf32>
    %209 = arith.select %207, %205, %208 : vector<32x128xi1>, vector<32x128xf32>
    %cst_81 = arith.constant dense<0.000000e+00> : vector<32xf32>
    %210 = vector.multi_reduction <add>, %209, %cst_81 [1] : vector<32x128xf32> to vector<32xf32>
    %211 = vector.shape_cast %210 : vector<32xf32> to vector<32x1xf32>
    %cst_82 = arith.constant 6.250000e-02 : f32
    %212 = vector.broadcast %cst_82 : f32 to vector<32x1xf32>
    %213 = arith.mulf %211, %212 : vector<32x1xf32>
    %214 = arith.mulf %209, %209 : vector<32x128xf32>
    %cst_83 = arith.constant dense<0.000000e+00> : vector<32xf32>
    %215 = vector.multi_reduction <add>, %214, %cst_83 [1] : vector<32x128xf32> to vector<32xf32>
    %216 = vector.shape_cast %215 : vector<32xf32> to vector<32x1xf32>
    %cst_84 = arith.constant 6.250000e-02 : f32
    %217 = vector.broadcast %cst_84 : f32 to vector<32x1xf32>
    %218 = arith.mulf %216, %217 : vector<32x1xf32>
    %219 = arith.mulf %213, %213 : vector<32x1xf32>
    %220 = arith.subf %218, %219 : vector<32x1xf32>
    %cst_85 = arith.constant 0.000000e+00 : f32
    %221 = vector.broadcast %cst_85 : f32 to vector<32x1xf32>
    %222 = arith.maximumf %220, %221 : vector<32x1xf32>
    %223 = vector.broadcast %213 : vector<32x1xf32> to vector<32x128xf32>
    %224 = arith.subf %209, %223 : vector<32x128xf32>
    %cst_86 = arith.constant 9.99999974E-6 : f32
    %225 = vector.broadcast %cst_86 : f32 to vector<32x1xf32>
    %226 = arith.addf %222, %225 : vector<32x1xf32>
    %227 = math.rsqrt %226 : vector<32x1xf32>
    %228 = vector.broadcast %227 : vector<32x1xf32> to vector<32x128xf32>
    %229 = arith.mulf %224, %228 : vector<32x128xf32>
    %230 = vector.extract_strided_slice %202 {offsets = [0, 0], sizes = [32, 1], strides = [1, 1]} : vector<32x2xf32> to vector<32x1xf32>
    %231 = vector.broadcast %230 : vector<32x1xf32> to vector<32x128xf32>
    %232 = arith.mulf %229, %231 : vector<32x128xf32>
    %233 = vector.extract_strided_slice %202 {offsets = [0, 1], sizes = [32, 1], strides = [1, 1]} : vector<32x2xf32> to vector<32x1xf32>
    %234 = vector.broadcast %233 : vector<32x1xf32> to vector<32x128xf32>
    %235 = arith.addf %232, %234 : vector<32x128xf32>
    %c0_87 = arith.constant 0 : index
    %c7_88 = arith.constant 7 : index
    %236 = vector.load %arg13[%c0_87, %c7_88] : memref<32x256xf32, #tpu.memory_space<vmem>>, vector<32x128xf32>
    tpu.vector_store %arg13[%c0_87, %c7_88], %235 {strides = array<i32>} : memref<32x256xf32, #tpu.memory_space<vmem>>, vector<32x128xf32>,
    %c0_89 = arith.constant 0 : index
    %c0_90 = arith.constant 0 : index
    %237 = vector.load %arg13[%c0_89, %c0_90] : memref<32x256xf32, #tpu.memory_space<vmem>>, vector<32x256xf32>
    %cst_91 = arith.constant 0.000000e+00 : f32
    %238 = vector.broadcast %cst_91 : f32 to vector<32x2xf32>
    %239 = vector.extract_strided_slice %237 {offsets = [0, 2], sizes = [32, 254], strides = [1, 1]} : vector<32x256xf32> to vector<32x254xf32>
    %240 = tpu.concatenate %239, %238 in 1 : vector<32x254xf32>, vector<32x2xf32> -> vector<32x256xf32>
    %241 = vector.shape_cast %42 : vector<1x256xi1> to vector<1x256xi1>
    %242 = vector.broadcast %241 : vector<1x256xi1> to vector<32x256xi1>
    %c0_92 = arith.constant 0 : index
    %c0_93 = arith.constant 0 : index
    %243 = vector.load %arg13[%c0_92, %c0_93] : memref<32x256xf32, #tpu.memory_space<vmem>>, vector<32x256xf32>
    tpu.vector_store %arg13[%c0_92, %c0_93], %240 masked %242 {strides = array<i32>} : memref<32x256xf32, #tpu.memory_space<vmem>>, vector<32x256xf32>, vector<32x256xi1>
    %244 = vector.extract_strided_slice %237 {offsets = [0, 0], sizes = [32, 254], strides = [1, 1]} : vector<32x256xf32> to vector<32x254xf32>
    %245 = tpu.concatenate %238, %244 in 1 : vector<32x2xf32>, vector<32x254xf32> -> vector<32x256xf32>
    %246 = vector.shape_cast %44 : vector<1x256xi1> to vector<1x256xi1>
    %247 = vector.broadcast %246 : vector<1x256xi1> to vector<32x256xi1>
    %c0_94 = arith.constant 0 : index
    %c0_95 = arith.constant 0 : index
    %248 = vector.load %arg13[%c0_94, %c0_95] : memref<32x256xf32, #tpu.memory_space<vmem>>, vector<32x256xf32>
    tpu.vector_store %arg13[%c0_94, %c0_95], %245 masked %247 {strides = array<i32>} : memref<32x256xf32, #tpu.memory_space<vmem>>, vector<32x256xf32>, vector<32x256xi1>
    %c0_96 = arith.constant 0 : index
    %c12_97 = arith.constant 12 : index
    %249 = vector.load %arg13[%c0_96, %c12_97] : memref<32x256xf32, #tpu.memory_space<vmem>>, vector<32x6xf32>
    %c0_98 = arith.constant 0 : index
    %c0_99 = arith.constant 0 : index
    %250 = vector.load %arg13[%c0_98, %c0_99] : memref<32x256xf32, #tpu.memory_space<vmem>>, vector<32x6xf32>
    tpu.vector_store %arg13[%c0_98, %c0_99], %249 {strides = array<i32>} : memref<32x256xf32, #tpu.memory_space<vmem>>, vector<32x6xf32>,
    %c0_100 = arith.constant 0 : index
    %c18_101 = arith.constant 18 : index
    %251 = vector.load %arg13[%c0_100, %c18_101] : memref<32x256xf32, #tpu.memory_space<vmem>>, vector<32x6xf32>
    %c0_102 = arith.constant 0 : index
    %c30_103 = arith.constant 30 : index
    %252 = vector.load %arg13[%c0_102, %c30_103] : memref<32x256xf32, #tpu.memory_space<vmem>>, vector<32x6xf32>
    tpu.vector_store %arg13[%c0_102, %c30_103], %251 {strides = array<i32>} : memref<32x256xf32, #tpu.memory_space<vmem>>, vector<32x6xf32>,
    %c0_104 = arith.constant 0 : index
    %c0_105 = arith.constant 0 : index
    %253 = vector.load %arg13[%c0_104, %c0_105] : memref<32x256xf32, #tpu.memory_space<vmem>>, vector<32x256xf32>
    %254 = vector.extract_strided_slice %253 {offsets = [0, 0], sizes = [32, 128], strides = [1, 1]} : vector<32x256xf32> to vector<32x128xf32>
    %255 = vector.extract_strided_slice %253 {offsets = [0, 1], sizes = [32, 128], strides = [1, 1]} : vector<32x256xf32> to vector<32x128xf32>
    %256 = vector.extract_strided_slice %253 {offsets = [0, 2], sizes = [32, 128], strides = [1, 1]} : vector<32x256xf32> to vector<32x128xf32>
    %257 = vector.extract_strided_slice %253 {offsets = [0, 6], sizes = [32, 128], strides = [1, 1]} : vector<32x256xf32> to vector<32x128xf32>
    %258 = vector.extract_strided_slice %253 {offsets = [0, 7], sizes = [32, 128], strides = [1, 1]} : vector<32x256xf32> to vector<32x128xf32>
    %259 = vector.extract_strided_slice %253 {offsets = [0, 8], sizes = [32, 128], strides = [1, 1]} : vector<32x256xf32> to vector<32x128xf32>
    %260 = vector.extract_strided_slice %253 {offsets = [0, 12], sizes = [32, 128], strides = [1, 1]} : vector<32x256xf32> to vector<32x128xf32>
    %261 = vector.extract_strided_slice %253 {offsets = [0, 13], sizes = [32, 128], strides = [1, 1]} : vector<32x256xf32> to vector<32x128xf32>
    %262 = vector.extract_strided_slice %253 {offsets = [0, 14], sizes = [32, 128], strides = [1, 1]} : vector<32x256xf32> to vector<32x128xf32>
    %c0_106 = arith.constant 0 : index
    %c0_107 = arith.constant 0 : index
    %263 = vector.load %arg8[%c0_106, %c0_107] : memref<32x288xbf16, #tpu.memory_space<vmem>>, vector<32x288xbf16>
    %c0_108 = arith.constant 0 : index
    %c0_109 = arith.constant 0 : index
    %264 = vector.load %arg9[%c0_108, %c0_109] : memref<32x2xf32, #tpu.memory_space<vmem>>, vector<32x2xf32>
    %265 = tpu.concatenate %254, %255, %256, %257, %258, %259, %260, %261, %262 in 0 : vector<32x128xf32>, vector<32x128xf32>, vector<32x128xf32>, vector<32x128xf32>, vector<32x128xf32>, vector<32x128xf32>, vector<32x128xf32>, vector<32x128xf32>, vector<32x128xf32> -> vector<288x128xf32>
    %266 = arith.truncf %265 : vector<288x128xf32> to vector<288x128xbf16>
    %cst_110 = arith.constant dense<0.000000e+00> : vector<32x128xf32>
    %267 = tpu.matmul %263, %266, %cst_110 {dimension_numbers = #tpu.dot_dimension_numbers<[1], [0], [0], [1], [0, 0, 1, 1], [], []>} : vector<32x288xbf16>, vector<288x128xbf16>, vector<32x128xf32> -> vector<32x128xf32>
    %cst_111 = arith.constant 0.000000e+00 : f32
    %268 = vector.shape_cast %21 : vector<1x128xi1> to vector<1x128xi1>
    %269 = vector.broadcast %268 : vector<1x128xi1> to vector<32x128xi1>
    %270 = vector.broadcast %cst_111 : f32 to vector<32x128xf32>
    %271 = arith.select %269, %267, %270 : vector<32x128xi1>, vector<32x128xf32>
    %cst_112 = arith.constant dense<0.000000e+00> : vector<32xf32>
    %272 = vector.multi_reduction <add>, %271, %cst_112 [1] : vector<32x128xf32> to vector<32xf32>
    %273 = vector.shape_cast %272 : vector<32xf32> to vector<32x1xf32>
    %cst_113 = arith.constant 6.250000e-02 : f32
    %274 = vector.broadcast %cst_113 : f32 to vector<32x1xf32>
    %275 = arith.mulf %273, %274 : vector<32x1xf32>
    %276 = arith.mulf %271, %271 : vector<32x128xf32>
    %cst_114 = arith.constant dense<0.000000e+00> : vector<32xf32>
    %277 = vector.multi_reduction <add>, %276, %cst_114 [1] : vector<32x128xf32> to vector<32xf32>
    %278 = vector.shape_cast %277 : vector<32xf32> to vector<32x1xf32>
    %cst_115 = arith.constant 6.250000e-02 : f32
    %279 = vector.broadcast %cst_115 : f32 to vector<32x1xf32>
    %280 = arith.mulf %278, %279 : vector<32x1xf32>
    %281 = arith.mulf %275, %275 : vector<32x1xf32>
    %282 = arith.subf %280, %281 : vector<32x1xf32>
    %cst_116 = arith.constant 0.000000e+00 : f32
    %283 = vector.broadcast %cst_116 : f32 to vector<32x1xf32>
    %284 = arith.maximumf %282, %283 : vector<32x1xf32>
    %285 = vector.broadcast %275 : vector<32x1xf32> to vector<32x128xf32>
    %286 = arith.subf %271, %285 : vector<32x128xf32>
    %cst_117 = arith.constant 9.99999974E-6 : f32
    %287 = vector.broadcast %cst_117 : f32 to vector<32x1xf32>
    %288 = arith.addf %284, %287 : vector<32x1xf32>
    %289 = math.rsqrt %288 : vector<32x1xf32>
    %290 = vector.broadcast %289 : vector<32x1xf32> to vector<32x128xf32>
    %291 = arith.mulf %286, %290 : vector<32x128xf32>
    %292 = vector.extract_strided_slice %264 {offsets = [0, 0], sizes = [32, 1], strides = [1, 1]} : vector<32x2xf32> to vector<32x1xf32>
    %293 = vector.broadcast %292 : vector<32x1xf32> to vector<32x128xf32>
    %294 = arith.mulf %291, %293 : vector<32x128xf32>
    %295 = vector.extract_strided_slice %264 {offsets = [0, 1], sizes = [32, 1], strides = [1, 1]} : vector<32x2xf32> to vector<32x1xf32>
    %296 = vector.broadcast %295 : vector<32x1xf32> to vector<32x128xf32>
    %297 = arith.addf %294, %296 : vector<32x128xf32>
    %cst_118 = arith.constant 0.000000e+00 : f32
    %298 = vector.broadcast %cst_118 : f32 to vector<32x128xf32>
    %299 = arith.maximumf %297, %298 : vector<32x128xf32>
    %c0_119 = arith.constant 0 : index
    %c7_120 = arith.constant 7 : index
    %300 = vector.load %arg13[%c0_119, %c7_120] : memref<32x256xf32, #tpu.memory_space<vmem>>, vector<32x128xf32>
    tpu.vector_store %arg13[%c0_119, %c7_120], %299 {strides = array<i32>} : memref<32x256xf32, #tpu.memory_space<vmem>>, vector<32x128xf32>,
    %c0_121 = arith.constant 0 : index
    %c0_122 = arith.constant 0 : index
    %301 = vector.load %arg13[%c0_121, %c0_122] : memref<32x256xf32, #tpu.memory_space<vmem>>, vector<32x256xf32>
    %cst_123 = arith.constant 0.000000e+00 : f32
    %302 = vector.broadcast %cst_123 : f32 to vector<32x2xf32>
    %303 = vector.extract_strided_slice %301 {offsets = [0, 2], sizes = [32, 254], strides = [1, 1]} : vector<32x256xf32> to vector<32x254xf32>
    %304 = tpu.concatenate %303, %302 in 1 : vector<32x254xf32>, vector<32x2xf32> -> vector<32x256xf32>
    %305 = vector.shape_cast %42 : vector<1x256xi1> to vector<1x256xi1>
    %306 = vector.broadcast %305 : vector<1x256xi1> to vector<32x256xi1>
    %c0_124 = arith.constant 0 : index
    %c0_125 = arith.constant 0 : index
    %307 = vector.load %arg13[%c0_124, %c0_125] : memref<32x256xf32, #tpu.memory_space<vmem>>, vector<32x256xf32>
    tpu.vector_store %arg13[%c0_124, %c0_125], %304 masked %306 {strides = array<i32>} : memref<32x256xf32, #tpu.memory_space<vmem>>, vector<32x256xf32>, vector<32x256xi1>
    %308 = vector.extract_strided_slice %301 {offsets = [0, 0], sizes = [32, 254], strides = [1, 1]} : vector<32x256xf32> to vector<32x254xf32>
    %309 = tpu.concatenate %302, %308 in 1 : vector<32x2xf32>, vector<32x254xf32> -> vector<32x256xf32>
    %310 = vector.shape_cast %44 : vector<1x256xi1> to vector<1x256xi1>
    %311 = vector.broadcast %310 : vector<1x256xi1> to vector<32x256xi1>
    %c0_126 = arith.constant 0 : index
    %c0_127 = arith.constant 0 : index
    %312 = vector.load %arg13[%c0_126, %c0_127] : memref<32x256xf32, #tpu.memory_space<vmem>>, vector<32x256xf32>
    tpu.vector_store %arg13[%c0_126, %c0_127], %309 masked %311 {strides = array<i32>} : memref<32x256xf32, #tpu.memory_space<vmem>>, vector<32x256xf32>, vector<32x256xi1>
    %c0_128 = arith.constant 0 : index
    %c12_129 = arith.constant 12 : index
    %313 = vector.load %arg13[%c0_128, %c12_129] : memref<32x256xf32, #tpu.memory_space<vmem>>, vector<32x6xf32>
    %c0_130 = arith.constant 0 : index
    %c0_131 = arith.constant 0 : index
    %314 = vector.load %arg13[%c0_130, %c0_131] : memref<32x256xf32, #tpu.memory_space<vmem>>, vector<32x6xf32>
    tpu.vector_store %arg13[%c0_130, %c0_131], %313 {strides = array<i32>} : memref<32x256xf32, #tpu.memory_space<vmem>>, vector<32x6xf32>,
    %c0_132 = arith.constant 0 : index
    %c18_133 = arith.constant 18 : index
    %315 = vector.load %arg13[%c0_132, %c18_133] : memref<32x256xf32, #tpu.memory_space<vmem>>, vector<32x6xf32>
    %c0_134 = arith.constant 0 : index
    %c30_135 = arith.constant 30 : index
    %316 = vector.load %arg13[%c0_134, %c30_135] : memref<32x256xf32, #tpu.memory_space<vmem>>, vector<32x6xf32>
    tpu.vector_store %arg13[%c0_134, %c30_135], %315 {strides = array<i32>} : memref<32x256xf32, #tpu.memory_space<vmem>>, vector<32x6xf32>,
    %c0_136 = arith.constant 0 : index
    %c0_137 = arith.constant 0 : index
    %317 = vector.load %arg13[%c0_136, %c0_137] : memref<32x256xf32, #tpu.memory_space<vmem>>, vector<32x256xf32>
    %318 = vector.extract_strided_slice %317 {offsets = [0, 0], sizes = [32, 128], strides = [1, 1]} : vector<32x256xf32> to vector<32x128xf32>
    %319 = vector.extract_strided_slice %317 {offsets = [0, 1], sizes = [32, 128], strides = [1, 1]} : vector<32x256xf32> to vector<32x128xf32>
    %320 = vector.extract_strided_slice %317 {offsets = [0, 2], sizes = [32, 128], strides = [1, 1]} : vector<32x256xf32> to vector<32x128xf32>
    %321 = vector.extract_strided_slice %317 {offsets = [0, 6], sizes = [32, 128], strides = [1, 1]} : vector<32x256xf32> to vector<32x128xf32>
    %322 = vector.extract_strided_slice %317 {offsets = [0, 7], sizes = [32, 128], strides = [1, 1]} : vector<32x256xf32> to vector<32x128xf32>
    %323 = vector.extract_strided_slice %317 {offsets = [0, 8], sizes = [32, 128], strides = [1, 1]} : vector<32x256xf32> to vector<32x128xf32>
    %324 = vector.extract_strided_slice %317 {offsets = [0, 12], sizes = [32, 128], strides = [1, 1]} : vector<32x256xf32> to vector<32x128xf32>
    %325 = vector.extract_strided_slice %317 {offsets = [0, 13], sizes = [32, 128], strides = [1, 1]} : vector<32x256xf32> to vector<32x128xf32>
    %326 = vector.extract_strided_slice %317 {offsets = [0, 14], sizes = [32, 128], strides = [1, 1]} : vector<32x256xf32> to vector<32x128xf32>
    %c0_138 = arith.constant 0 : index
    %c0_139 = arith.constant 0 : index
    %327 = vector.load %arg10[%c0_138, %c0_139] : memref<32x288xbf16, #tpu.memory_space<vmem>>, vector<32x288xbf16>
    %c0_140 = arith.constant 0 : index
    %c0_141 = arith.constant 0 : index
    %328 = vector.load %arg11[%c0_140, %c0_141] : memref<32x2xf32, #tpu.memory_space<vmem>>, vector<32x2xf32>
    %329 = tpu.concatenate %318, %319, %320, %321, %322, %323, %324, %325, %326 in 0 : vector<32x128xf32>, vector<32x128xf32>, vector<32x128xf32>, vector<32x128xf32>, vector<32x128xf32>, vector<32x128xf32>, vector<32x128xf32>, vector<32x128xf32>, vector<32x128xf32> -> vector<288x128xf32>
    %330 = arith.truncf %329 : vector<288x128xf32> to vector<288x128xbf16>
    %cst_142 = arith.constant dense<0.000000e+00> : vector<32x128xf32>
    %331 = tpu.matmul %327, %330, %cst_142 {dimension_numbers = #tpu.dot_dimension_numbers<[1], [0], [0], [1], [0, 0, 1, 1], [], []>} : vector<32x288xbf16>, vector<288x128xbf16>, vector<32x128xf32> -> vector<32x128xf32>
    %cst_143 = arith.constant 0.000000e+00 : f32
    %332 = vector.shape_cast %21 : vector<1x128xi1> to vector<1x128xi1>
    %333 = vector.broadcast %332 : vector<1x128xi1> to vector<32x128xi1>
    %334 = vector.broadcast %cst_143 : f32 to vector<32x128xf32>
    %335 = arith.select %333, %331, %334 : vector<32x128xi1>, vector<32x128xf32>
    %cst_144 = arith.constant dense<0.000000e+00> : vector<32xf32>
    %336 = vector.multi_reduction <add>, %335, %cst_144 [1] : vector<32x128xf32> to vector<32xf32>
    %337 = vector.shape_cast %336 : vector<32xf32> to vector<32x1xf32>
    %cst_145 = arith.constant 6.250000e-02 : f32
    %338 = vector.broadcast %cst_145 : f32 to vector<32x1xf32>
    %339 = arith.mulf %337, %338 : vector<32x1xf32>
    %340 = arith.mulf %335, %335 : vector<32x128xf32>
    %cst_146 = arith.constant dense<0.000000e+00> : vector<32xf32>
    %341 = vector.multi_reduction <add>, %340, %cst_146 [1] : vector<32x128xf32> to vector<32xf32>
    %342 = vector.shape_cast %341 : vector<32xf32> to vector<32x1xf32>
    %cst_147 = arith.constant 6.250000e-02 : f32
    %343 = vector.broadcast %cst_147 : f32 to vector<32x1xf32>
    %344 = arith.mulf %342, %343 : vector<32x1xf32>
    %345 = arith.mulf %339, %339 : vector<32x1xf32>
    %346 = arith.subf %344, %345 : vector<32x1xf32>
    %cst_148 = arith.constant 0.000000e+00 : f32
    %347 = vector.broadcast %cst_148 : f32 to vector<32x1xf32>
    %348 = arith.maximumf %346, %347 : vector<32x1xf32>
    %349 = vector.broadcast %339 : vector<32x1xf32> to vector<32x128xf32>
    %350 = arith.subf %335, %349 : vector<32x128xf32>
    %cst_149 = arith.constant 9.99999974E-6 : f32
    %351 = vector.broadcast %cst_149 : f32 to vector<32x1xf32>
    %352 = arith.addf %348, %351 : vector<32x1xf32>
    %353 = math.rsqrt %352 : vector<32x1xf32>
    %354 = vector.broadcast %353 : vector<32x1xf32> to vector<32x128xf32>
    %355 = arith.mulf %350, %354 : vector<32x128xf32>
    %356 = vector.extract_strided_slice %328 {offsets = [0, 0], sizes = [32, 1], strides = [1, 1]} : vector<32x2xf32> to vector<32x1xf32>
    %357 = vector.broadcast %356 : vector<32x1xf32> to vector<32x128xf32>
    %358 = arith.mulf %355, %357 : vector<32x128xf32>
    %359 = vector.extract_strided_slice %328 {offsets = [0, 1], sizes = [32, 1], strides = [1, 1]} : vector<32x2xf32> to vector<32x1xf32>
    %360 = vector.broadcast %359 : vector<32x1xf32> to vector<32x128xf32>
    %361 = arith.addf %358, %360 : vector<32x128xf32>
    %362 = arith.truncf %361 : vector<32x128xf32> to vector<32x128xbf16>
    %c0_150 = arith.constant 0 : index
    %c0_151 = arith.constant 0 : index
    %c0_152 = arith.constant 0 : index
    %363 = vector.load %arg12[%c0_150, %c0_151, %c0_152] : memref<1x32x128xbf16, #tpu.memory_space<vmem>>, vector<1x32x128xbf16>
    %364 = vector.shape_cast %363 : vector<1x32x128xbf16> to vector<32x128xbf16>
    %365 = vector.shape_cast %362 : vector<32x128xbf16> to vector<1x32x128xbf16>
    tpu.vector_store %arg12[%c0_150, %c0_151, %c0_152], %365 {strides = array<i32>} : memref<1x32x128xbf16, #tpu.memory_space<vmem>>, vector<1x32x128xbf16>,
    return
  }
  func.func @transform_0(%arg0: i32) -> (i32, i32, i32, i32) {
    %c0_i32 = arith.constant 0 : i32
    %c0_i32_0 = arith.constant 0 : i32
    %c0_i32_1 = arith.constant 0 : i32
    %c0_i32_2 = arith.constant 0 : i32
    return %arg0, %c0_i32, %c0_i32_0, %c0_i32_1 : i32, i32, i32, i32
  }
  func.func @transform_1(%arg0: i32) -> (i32, i32) {
    %c0_i32 = arith.constant 0 : i32
    %c0_i32_0 = arith.constant 0 : i32
    %c0_i32_1 = arith.constant 0 : i32
    return %c0_i32, %c0_i32_0 : i32, i32
  }
  func.func @transform_2(%arg0: i32) -> (i32, i32) {
    %c0_i32 = arith.constant 0 : i32
    %c0_i32_0 = arith.constant 0 : i32
    %c0_i32_1 = arith.constant 0 : i32
    return %c0_i32, %c0_i32_0 : i32, i32
  }
  func.func @transform_3(%arg0: i32) -> (i32, i32) {
    %c0_i32 = arith.constant 0 : i32
    %c0_i32_0 = arith.constant 0 : i32
    %c0_i32_1 = arith.constant 0 : i32
    return %c0_i32, %c0_i32_0 : i32, i32
  }
  func.func @transform_4(%arg0: i32) -> (i32, i32) {
    %c0_i32 = arith.constant 0 : i32
    %c0_i32_0 = arith.constant 0 : i32
    %c0_i32_1 = arith.constant 0 : i32
    return %c0_i32, %c0_i32_0 : i32, i32
  }
  func.func @transform_5(%arg0: i32) -> (i32, i32) {
    %c0_i32 = arith.constant 0 : i32
    %c0_i32_0 = arith.constant 0 : i32
    %c0_i32_1 = arith.constant 0 : i32
    return %c0_i32, %c0_i32_0 : i32, i32
  }
  func.func @transform_6(%arg0: i32) -> (i32, i32) {
    %c0_i32 = arith.constant 0 : i32
    %c0_i32_0 = arith.constant 0 : i32
    %c0_i32_1 = arith.constant 0 : i32
    return %c0_i32, %c0_i32_0 : i32, i32
  }
  func.func @transform_7(%arg0: i32) -> (i32, i32) {
    %c0_i32 = arith.constant 0 : i32
    %c0_i32_0 = arith.constant 0 : i32
    %c0_i32_1 = arith.constant 0 : i32
    return %c0_i32, %c0_i32_0 : i32, i32
  }
  func.func @transform_8(%arg0: i32) -> (i32, i32) {
    %c0_i32 = arith.constant 0 : i32
    %c0_i32_0 = arith.constant 0 : i32
    %c0_i32_1 = arith.constant 0 : i32
    return %c0_i32, %c0_i32_0 : i32, i32
  }
  func.func @transform_9(%arg0: i32) -> (i32, i32) {
    %c0_i32 = arith.constant 0 : i32
    %c0_i32_0 = arith.constant 0 : i32
    %c0_i32_1 = arith.constant 0 : i32
    return %c0_i32, %c0_i32_0 : i32, i32
  }
  func.func @transform_10(%arg0: i32) -> (i32, i32) {
    %c0_i32 = arith.constant 0 : i32
    %c0_i32_0 = arith.constant 0 : i32
    %c0_i32_1 = arith.constant 0 : i32
    return %c0_i32, %c0_i32_0 : i32, i32
  }
  func.func @transform_11(%arg0: i32) -> (i32, i32, i32) {
    %c0_i32 = arith.constant 0 : i32
    %c0_i32_0 = arith.constant 0 : i32
    %c0_i32_1 = arith.constant 0 : i32
    return %arg0, %c0_i32, %c0_i32_0 : i32, i32, i32
  }
}

module attributes {stable_mosaic.version = 11 : i64} {
  func.func @kernel(%arg0: i32, %arg1: memref<1x32x128xbf16, #tpu.memory_space<vmem>>, %arg2: memref<16x288xbf16, #tpu.memory_space<vmem>>, %arg3: memref<16x2xf32, #tpu.memory_space<vmem>>, %arg4: memref<1x16x128xbf16, #tpu.memory_space<vmem>>, %arg5: memref<32x256xf32, #tpu.memory_space<vmem>>) attributes {dimension_semantics = [#tpu.dimension_semantics<parallel>], iteration_bounds = array<i64: 2>, scalar_prefetch = 0 : i64, scratch_operands = 1 : i64, tpu.core_type = #tpu.core_type<tc>, window_params = [{transform_indices = @transform_0, window_bounds = array<i64: 1, 32, 128>}, {pipeline_mode = #tpu.pipeline_mode<synchronous>, transform_indices = @transform_1, window_bounds = array<i64: 16, 288>}, {pipeline_mode = #tpu.pipeline_mode<synchronous>, transform_indices = @transform_2, window_bounds = array<i64: 16, 2>}, {transform_indices = @transform_3, window_bounds = array<i64: 1, 16, 128>}]} {
    %0 = tpu.iota {dimensions = array<i32: 1>} : vector<1x128xi32>
    %c10_i32 = arith.constant 10 : i32
    %c0_i32 = arith.constant 0 : i32
    %1 = arith.cmpi eq, %c10_i32, %c0_i32 : i32
    %c1_i32 = arith.constant 1 : i32
    %2 = arith.select %1, %c1_i32, %c10_i32 : i32
    %3 = vector.broadcast %2 : i32 to vector<1x128xi32>
    %4 = arith.remsi %0, %3 : vector<1x128xi32>
    %c0_i32_0 = arith.constant 0 : i32
    %5 = vector.broadcast %c0_i32_0 : i32 to vector<1x128xi32>
    %6 = arith.cmpi ne, %4, %5 : vector<1x128xi32>
    %c0_i32_1 = arith.constant 0 : i32
    %7 = vector.broadcast %c0_i32_1 : i32 to vector<1x128xi32>
    %8 = arith.cmpi slt, %4, %7 : vector<1x128xi32>
    %c0_i32_2 = arith.constant 0 : i32
    %9 = arith.cmpi slt, %2, %c0_i32_2 : i32
    %10 = vector.broadcast %9 : i1 to vector<1x128xi1>
    %11 = vector.broadcast %10 : vector<1x128xi1> to vector<1x128xi1>
    %12 = arith.xori %8, %11 : vector<1x128xi1>
    %13 = arith.andi %12, %6 : vector<1x128xi1>
    %14 = vector.broadcast %2 : i32 to vector<1x128xi32>
    %15 = arith.addi %4, %14 : vector<1x128xi32>
    %16 = arith.select %13, %15, %4 : vector<1x128xi1>, vector<1x128xi32>
    %c8_i32 = arith.constant 8 : i32
    %17 = vector.broadcast %c8_i32 : i32 to vector<1x128xi32>
    %18 = arith.cmpi slt, %16, %17 : vector<1x128xi32>
    %c80_i32 = arith.constant 80 : i32
    %19 = vector.broadcast %c80_i32 : i32 to vector<1x128xi32>
    %20 = arith.cmpi slt, %0, %19 : vector<1x128xi32>
    %21 = arith.andi %18, %20 : vector<1x128xi1>
    %cst = arith.constant 0.000000e+00 : f32
    %22 = vector.broadcast %cst : f32 to vector<32x256xf32>
    %c0 = arith.constant 0 : index
    %c0_3 = arith.constant 0 : index
    %23 = vector.load %arg5[%c0, %c0_3] : memref<32x256xf32, #tpu.memory_space<vmem>>, vector<32x256xf32>
    tpu.vector_store %arg5[%c0, %c0_3], %22 {strides = array<i32>} : memref<32x256xf32, #tpu.memory_space<vmem>>, vector<32x256xf32>,
    %24 = tpu.iota {dimensions = array<i32: 1>} : vector<1x256xi32>
    %c10_i32_4 = arith.constant 10 : i32
    %c0_i32_5 = arith.constant 0 : i32
    %25 = arith.cmpi eq, %c10_i32_4, %c0_i32_5 : i32
    %c1_i32_6 = arith.constant 1 : i32
    %26 = arith.select %25, %c1_i32_6, %c10_i32_4 : i32
    %27 = vector.broadcast %26 : i32 to vector<1x256xi32>
    %28 = arith.remsi %24, %27 : vector<1x256xi32>
    %c0_i32_7 = arith.constant 0 : i32
    %29 = vector.broadcast %c0_i32_7 : i32 to vector<1x256xi32>
    %30 = arith.cmpi ne, %28, %29 : vector<1x256xi32>
    %c0_i32_8 = arith.constant 0 : i32
    %31 = vector.broadcast %c0_i32_8 : i32 to vector<1x256xi32>
    %32 = arith.cmpi slt, %28, %31 : vector<1x256xi32>
    %c0_i32_9 = arith.constant 0 : i32
    %33 = arith.cmpi slt, %26, %c0_i32_9 : i32
    %34 = vector.broadcast %33 : i1 to vector<1x256xi1>
    %35 = vector.broadcast %34 : vector<1x256xi1> to vector<1x256xi1>
    %36 = arith.xori %32, %35 : vector<1x256xi1>
    %37 = arith.andi %36, %30 : vector<1x256xi1>
    %38 = vector.broadcast %26 : i32 to vector<1x256xi32>
    %39 = arith.addi %28, %38 : vector<1x256xi32>
    %40 = arith.select %37, %39, %28 : vector<1x256xi1>, vector<1x256xi32>
    %c0_i32_10 = arith.constant 0 : i32
    %41 = vector.broadcast %c0_i32_10 : i32 to vector<1x256xi32>
    %42 = arith.cmpi eq, %40, %41 : vector<1x256xi32>
    %c9_i32 = arith.constant 9 : i32
    %43 = vector.broadcast %c9_i32 : i32 to vector<1x256xi32>
    %44 = arith.cmpi eq, %40, %43 : vector<1x256xi32>
    %c0_11 = arith.constant 0 : index
    %c0_12 = arith.constant 0 : index
    %c0_13 = arith.constant 0 : index
    %45 = vector.load %arg1[%c0_11, %c0_12, %c0_13] : memref<1x32x128xbf16, #tpu.memory_space<vmem>>, vector<1x32x128xbf16>
    %46 = vector.shape_cast %45 : vector<1x32x128xbf16> to vector<32x128xbf16>
    %47 = arith.extf %46 : vector<32x128xbf16> to vector<32x128xf32>
    %c0_14 = arith.constant 0 : index
    %c11 = arith.constant 11 : index
    %48 = vector.load %arg5[%c0_14, %c11] : memref<32x256xf32, #tpu.memory_space<vmem>>, vector<32x128xf32>
    tpu.vector_store %arg5[%c0_14, %c11], %47 {strides = array<i32>} : memref<32x256xf32, #tpu.memory_space<vmem>>, vector<32x128xf32>,
    %c0_15 = arith.constant 0 : index
    %c0_16 = arith.constant 0 : index
    %49 = vector.load %arg5[%c0_15, %c0_16] : memref<32x256xf32, #tpu.memory_space<vmem>>, vector<32x256xf32>
    %cst_17 = arith.constant 0.000000e+00 : f32
    %50 = vector.broadcast %cst_17 : f32 to vector<32x2xf32>
    %51 = vector.extract_strided_slice %49 {offsets = [0, 2], sizes = [32, 254], strides = [1, 1]} : vector<32x256xf32> to vector<32x254xf32>
    %52 = tpu.concatenate %51, %50 in 1 : vector<32x254xf32>, vector<32x2xf32> -> vector<32x256xf32>
    %53 = vector.shape_cast %42 : vector<1x256xi1> to vector<1x256xi1>
    %54 = vector.broadcast %53 : vector<1x256xi1> to vector<32x256xi1>
    %c0_18 = arith.constant 0 : index
    %c0_19 = arith.constant 0 : index
    %55 = vector.load %arg5[%c0_18, %c0_19] : memref<32x256xf32, #tpu.memory_space<vmem>>, vector<32x256xf32>
    tpu.vector_store %arg5[%c0_18, %c0_19], %52 masked %54 {strides = array<i32>} : memref<32x256xf32, #tpu.memory_space<vmem>>, vector<32x256xf32>, vector<32x256xi1>
    %56 = vector.extract_strided_slice %49 {offsets = [0, 0], sizes = [32, 254], strides = [1, 1]} : vector<32x256xf32> to vector<32x254xf32>
    %57 = tpu.concatenate %50, %56 in 1 : vector<32x2xf32>, vector<32x254xf32> -> vector<32x256xf32>
    %58 = vector.shape_cast %44 : vector<1x256xi1> to vector<1x256xi1>
    %59 = vector.broadcast %58 : vector<1x256xi1> to vector<32x256xi1>
    %c0_20 = arith.constant 0 : index
    %c0_21 = arith.constant 0 : index
    %60 = vector.load %arg5[%c0_20, %c0_21] : memref<32x256xf32, #tpu.memory_space<vmem>>, vector<32x256xf32>
    tpu.vector_store %arg5[%c0_20, %c0_21], %57 masked %59 {strides = array<i32>} : memref<32x256xf32, #tpu.memory_space<vmem>>, vector<32x256xf32>, vector<32x256xi1>
    %c0_22 = arith.constant 0 : index
    %c20 = arith.constant 20 : index
    %61 = vector.load %arg5[%c0_22, %c20] : memref<32x256xf32, #tpu.memory_space<vmem>>, vector<32x10xf32>
    %c0_23 = arith.constant 0 : index
    %c0_24 = arith.constant 0 : index
    %62 = vector.load %arg5[%c0_23, %c0_24] : memref<32x256xf32, #tpu.memory_space<vmem>>, vector<32x10xf32>
    tpu.vector_store %arg5[%c0_23, %c0_24], %61 {strides = array<i32>} : memref<32x256xf32, #tpu.memory_space<vmem>>, vector<32x10xf32>,
    %c0_25 = arith.constant 0 : index
    %c70 = arith.constant 70 : index
    %63 = vector.load %arg5[%c0_25, %c70] : memref<32x256xf32, #tpu.memory_space<vmem>>, vector<32x10xf32>
    %c0_26 = arith.constant 0 : index
    %c90 = arith.constant 90 : index
    %64 = vector.load %arg5[%c0_26, %c90] : memref<32x256xf32, #tpu.memory_space<vmem>>, vector<32x10xf32>
    tpu.vector_store %arg5[%c0_26, %c90], %63 {strides = array<i32>} : memref<32x256xf32, #tpu.memory_space<vmem>>, vector<32x10xf32>,
    %c0_27 = arith.constant 0 : index
    %c0_28 = arith.constant 0 : index
    %65 = vector.load %arg5[%c0_27, %c0_28] : memref<32x256xf32, #tpu.memory_space<vmem>>, vector<32x256xf32>
    %66 = vector.extract_strided_slice %65 {offsets = [0, 0], sizes = [32, 128], strides = [1, 1]} : vector<32x256xf32> to vector<32x128xf32>
    %67 = vector.extract_strided_slice %65 {offsets = [0, 1], sizes = [32, 128], strides = [1, 1]} : vector<32x256xf32> to vector<32x128xf32>
    %68 = vector.extract_strided_slice %65 {offsets = [0, 2], sizes = [32, 128], strides = [1, 1]} : vector<32x256xf32> to vector<32x128xf32>
    %69 = vector.extract_strided_slice %65 {offsets = [0, 10], sizes = [32, 128], strides = [1, 1]} : vector<32x256xf32> to vector<32x128xf32>
    %70 = vector.extract_strided_slice %65 {offsets = [0, 11], sizes = [32, 128], strides = [1, 1]} : vector<32x256xf32> to vector<32x128xf32>
    %71 = vector.extract_strided_slice %65 {offsets = [0, 12], sizes = [32, 128], strides = [1, 1]} : vector<32x256xf32> to vector<32x128xf32>
    %72 = vector.extract_strided_slice %65 {offsets = [0, 20], sizes = [32, 128], strides = [1, 1]} : vector<32x256xf32> to vector<32x128xf32>
    %73 = vector.extract_strided_slice %65 {offsets = [0, 21], sizes = [32, 128], strides = [1, 1]} : vector<32x256xf32> to vector<32x128xf32>
    %74 = vector.extract_strided_slice %65 {offsets = [0, 22], sizes = [32, 128], strides = [1, 1]} : vector<32x256xf32> to vector<32x128xf32>
    %c0_29 = arith.constant 0 : index
    %c0_30 = arith.constant 0 : index
    %75 = vector.load %arg2[%c0_29, %c0_30] : memref<16x288xbf16, #tpu.memory_space<vmem>>, vector<16x288xbf16>
    %c0_31 = arith.constant 0 : index
    %c0_32 = arith.constant 0 : index
    %76 = vector.load %arg3[%c0_31, %c0_32] : memref<16x2xf32, #tpu.memory_space<vmem>>, vector<16x2xf32>
    %77 = tpu.concatenate %66, %67, %68, %69, %70, %71, %72, %73, %74 in 0 : vector<32x128xf32>, vector<32x128xf32>, vector<32x128xf32>, vector<32x128xf32>, vector<32x128xf32>, vector<32x128xf32>, vector<32x128xf32>, vector<32x128xf32>, vector<32x128xf32> -> vector<288x128xf32>
    %78 = arith.truncf %77 : vector<288x128xf32> to vector<288x128xbf16>
    %cst_33 = arith.constant dense<0.000000e+00> : vector<16x128xf32>
    %79 = tpu.matmul %75, %78, %cst_33 {dimension_numbers = #tpu.dot_dimension_numbers<[1], [0], [0], [1], [0, 0, 1, 1], [], []>} : vector<16x288xbf16>, vector<288x128xbf16>, vector<16x128xf32> -> vector<16x128xf32>
    %cst_34 = arith.constant 0.000000e+00 : f32
    %80 = vector.shape_cast %21 : vector<1x128xi1> to vector<1x128xi1>
    %81 = vector.broadcast %80 : vector<1x128xi1> to vector<16x128xi1>
    %82 = vector.broadcast %cst_34 : f32 to vector<16x128xf32>
    %83 = arith.select %81, %79, %82 : vector<16x128xi1>, vector<16x128xf32>
    %cst_35 = arith.constant dense<0.000000e+00> : vector<16xf32>
    %84 = vector.multi_reduction <add>, %83, %cst_35 [1] : vector<16x128xf32> to vector<16xf32>
    %85 = vector.shape_cast %84 : vector<16xf32> to vector<16x1xf32>
    %cst_36 = arith.constant 1.562500e-02 : f32
    %86 = vector.broadcast %cst_36 : f32 to vector<16x1xf32>
    %87 = arith.mulf %85, %86 : vector<16x1xf32>
    %88 = arith.mulf %83, %83 : vector<16x128xf32>
    %cst_37 = arith.constant dense<0.000000e+00> : vector<16xf32>
    %89 = vector.multi_reduction <add>, %88, %cst_37 [1] : vector<16x128xf32> to vector<16xf32>
    %90 = vector.shape_cast %89 : vector<16xf32> to vector<16x1xf32>
    %cst_38 = arith.constant 1.562500e-02 : f32
    %91 = vector.broadcast %cst_38 : f32 to vector<16x1xf32>
    %92 = arith.mulf %90, %91 : vector<16x1xf32>
    %93 = arith.mulf %87, %87 : vector<16x1xf32>
    %94 = arith.subf %92, %93 : vector<16x1xf32>
    %cst_39 = arith.constant 0.000000e+00 : f32
    %95 = vector.broadcast %cst_39 : f32 to vector<16x1xf32>
    %96 = arith.maximumf %94, %95 : vector<16x1xf32>
    %97 = vector.broadcast %87 : vector<16x1xf32> to vector<16x128xf32>
    %98 = arith.subf %83, %97 : vector<16x128xf32>
    %cst_40 = arith.constant 9.99999974E-6 : f32
    %99 = vector.broadcast %cst_40 : f32 to vector<16x1xf32>
    %100 = arith.addf %96, %99 : vector<16x1xf32>
    %101 = math.rsqrt %100 : vector<16x1xf32>
    %102 = vector.broadcast %101 : vector<16x1xf32> to vector<16x128xf32>
    %103 = arith.mulf %98, %102 : vector<16x128xf32>
    %104 = vector.extract_strided_slice %76 {offsets = [0, 0], sizes = [16, 1], strides = [1, 1]} : vector<16x2xf32> to vector<16x1xf32>
    %105 = vector.broadcast %104 : vector<16x1xf32> to vector<16x128xf32>
    %106 = arith.mulf %103, %105 : vector<16x128xf32>
    %107 = vector.extract_strided_slice %76 {offsets = [0, 1], sizes = [16, 1], strides = [1, 1]} : vector<16x2xf32> to vector<16x1xf32>
    %108 = vector.broadcast %107 : vector<16x1xf32> to vector<16x128xf32>
    %109 = arith.addf %106, %108 : vector<16x128xf32>
    %cst_41 = arith.constant 0.000000e+00 : f32
    %110 = vector.broadcast %cst_41 : f32 to vector<16x128xf32>
    %111 = arith.maximumf %109, %110 : vector<16x128xf32>
    %112 = arith.truncf %111 : vector<16x128xf32> to vector<16x128xbf16>
    %c0_42 = arith.constant 0 : index
    %c0_43 = arith.constant 0 : index
    %c0_44 = arith.constant 0 : index
    %113 = vector.load %arg4[%c0_42, %c0_43, %c0_44] : memref<1x16x128xbf16, #tpu.memory_space<vmem>>, vector<1x16x128xbf16>
    %114 = vector.shape_cast %113 : vector<1x16x128xbf16> to vector<16x128xbf16>
    %115 = vector.shape_cast %112 : vector<16x128xbf16> to vector<1x16x128xbf16>
    tpu.vector_store %arg4[%c0_42, %c0_43, %c0_44], %115 {strides = array<i32>} : memref<1x16x128xbf16, #tpu.memory_space<vmem>>, vector<1x16x128xbf16>,
    return
  }
  func.func @transform_0(%arg0: i32) -> (i32, i32, i32) {
    %c0_i32 = arith.constant 0 : i32
    %c0_i32_0 = arith.constant 0 : i32
    %c0_i32_1 = arith.constant 0 : i32
    return %arg0, %c0_i32, %c0_i32_0 : i32, i32, i32
  }
  func.func @transform_1(%arg0: i32) -> (i32, i32) {
    %c0_i32 = arith.constant 0 : i32
    %c0_i32_0 = arith.constant 0 : i32
    %c0_i32_1 = arith.constant 0 : i32
    return %c0_i32, %c0_i32_0 : i32, i32
  }
  func.func @transform_2(%arg0: i32) -> (i32, i32) {
    %c0_i32 = arith.constant 0 : i32
    %c0_i32_0 = arith.constant 0 : i32
    %c0_i32_1 = arith.constant 0 : i32
    return %c0_i32, %c0_i32_0 : i32, i32
  }
  func.func @transform_3(%arg0: i32) -> (i32, i32, i32) {
    %c0_i32 = arith.constant 0 : i32
    %c0_i32_0 = arith.constant 0 : i32
    %c0_i32_1 = arith.constant 0 : i32
    return %arg0, %c0_i32, %c0_i32_0 : i32, i32, i32
  }
}

module attributes {stable_mosaic.version = 11 : i64} {
  func.func @kernel(%arg0: i32, %arg1: memref<1x16x384xbf16, #tpu.memory_space<vmem>>, %arg2: memref<8x144xbf16, #tpu.memory_space<vmem>>, %arg3: memref<8x2xf32, #tpu.memory_space<vmem>>, %arg4: memref<3x72xbf16, #tpu.memory_space<vmem>>, %arg5: memref<3x2xf32, #tpu.memory_space<vmem>>, %arg6: memref<1x8x384xf32, #tpu.memory_space<vmem>>, %arg7: memref<16x512xf32, #tpu.memory_space<vmem>>) attributes {dimension_semantics = [#tpu.dimension_semantics<parallel>], iteration_bounds = array<i64: 2>, scalar_prefetch = 0 : i64, scratch_operands = 1 : i64, tpu.core_type = #tpu.core_type<tc>, window_params = [{transform_indices = @transform_0, window_bounds = array<i64: 1, 16, 384>}, {pipeline_mode = #tpu.pipeline_mode<synchronous>, transform_indices = @transform_1, window_bounds = array<i64: 8, 144>}, {pipeline_mode = #tpu.pipeline_mode<synchronous>, transform_indices = @transform_2, window_bounds = array<i64: 8, 2>}, {pipeline_mode = #tpu.pipeline_mode<synchronous>, transform_indices = @transform_3, window_bounds = array<i64: 3, 72>}, {pipeline_mode = #tpu.pipeline_mode<synchronous>, transform_indices = @transform_4, window_bounds = array<i64: 3, 2>}, {transform_indices = @transform_5, window_bounds = array<i64: 1, 8, 384>}]} {
    %0 = tpu.iota {dimensions = array<i32: 1>} : vector<1x384xi32>
    %c18_i32 = arith.constant 18 : i32
    %c0_i32 = arith.constant 0 : i32
    %1 = arith.cmpi eq, %c18_i32, %c0_i32 : i32
    %c1_i32 = arith.constant 1 : i32
    %2 = arith.select %1, %c1_i32, %c18_i32 : i32
    %3 = vector.broadcast %2 : i32 to vector<1x384xi32>
    %4 = arith.remsi %0, %3 : vector<1x384xi32>
    %c0_i32_0 = arith.constant 0 : i32
    %5 = vector.broadcast %c0_i32_0 : i32 to vector<1x384xi32>
    %6 = arith.cmpi ne, %4, %5 : vector<1x384xi32>
    %c0_i32_1 = arith.constant 0 : i32
    %7 = vector.broadcast %c0_i32_1 : i32 to vector<1x384xi32>
    %8 = arith.cmpi slt, %4, %7 : vector<1x384xi32>
    %c0_i32_2 = arith.constant 0 : i32
    %9 = arith.cmpi slt, %2, %c0_i32_2 : i32
    %10 = vector.broadcast %9 : i1 to vector<1x384xi1>
    %11 = vector.broadcast %10 : vector<1x384xi1> to vector<1x384xi1>
    %12 = arith.xori %8, %11 : vector<1x384xi1>
    %13 = arith.andi %12, %6 : vector<1x384xi1>
    %14 = vector.broadcast %2 : i32 to vector<1x384xi32>
    %15 = arith.addi %4, %14 : vector<1x384xi32>
    %16 = arith.select %13, %15, %4 : vector<1x384xi1>, vector<1x384xi32>
    %c16_i32 = arith.constant 16 : i32
    %17 = vector.broadcast %c16_i32 : i32 to vector<1x384xi32>
    %18 = arith.cmpi slt, %16, %17 : vector<1x384xi32>
    %c288_i32 = arith.constant 288 : i32
    %19 = vector.broadcast %c288_i32 : i32 to vector<1x384xi32>
    %20 = arith.cmpi slt, %0, %19 : vector<1x384xi32>
    %21 = arith.andi %18, %20 : vector<1x384xi1>
    %cst = arith.constant 0.000000e+00 : f32
    %22 = vector.broadcast %cst : f32 to vector<16x512xf32>
    %c0 = arith.constant 0 : index
    %c0_3 = arith.constant 0 : index
    %23 = vector.load %arg7[%c0, %c0_3] : memref<16x512xf32, #tpu.memory_space<vmem>>, vector<16x512xf32>
    tpu.vector_store %arg7[%c0, %c0_3], %22 {strides = array<i32>} : memref<16x512xf32, #tpu.memory_space<vmem>>, vector<16x512xf32>,
    %24 = tpu.iota {dimensions = array<i32: 1>} : vector<1x512xi32>
    %c18_i32_4 = arith.constant 18 : i32
    %c0_i32_5 = arith.constant 0 : i32
    %25 = arith.cmpi eq, %c18_i32_4, %c0_i32_5 : i32
    %c1_i32_6 = arith.constant 1 : i32
    %26 = arith.select %25, %c1_i32_6, %c18_i32_4 : i32
    %27 = vector.broadcast %26 : i32 to vector<1x512xi32>
    %28 = arith.remsi %24, %27 : vector<1x512xi32>
    %c0_i32_7 = arith.constant 0 : i32
    %29 = vector.broadcast %c0_i32_7 : i32 to vector<1x512xi32>
    %30 = arith.cmpi ne, %28, %29 : vector<1x512xi32>
    %c0_i32_8 = arith.constant 0 : i32
    %31 = vector.broadcast %c0_i32_8 : i32 to vector<1x512xi32>
    %32 = arith.cmpi slt, %28, %31 : vector<1x512xi32>
    %c0_i32_9 = arith.constant 0 : i32
    %33 = arith.cmpi slt, %26, %c0_i32_9 : i32
    %34 = vector.broadcast %33 : i1 to vector<1x512xi1>
    %35 = vector.broadcast %34 : vector<1x512xi1> to vector<1x512xi1>
    %36 = arith.xori %32, %35 : vector<1x512xi1>
    %37 = arith.andi %36, %30 : vector<1x512xi1>
    %38 = vector.broadcast %26 : i32 to vector<1x512xi32>
    %39 = arith.addi %28, %38 : vector<1x512xi32>
    %40 = arith.select %37, %39, %28 : vector<1x512xi1>, vector<1x512xi32>
    %c0_i32_10 = arith.constant 0 : i32
    %41 = vector.broadcast %c0_i32_10 : i32 to vector<1x512xi32>
    %42 = arith.cmpi eq, %40, %41 : vector<1x512xi32>
    %c17_i32 = arith.constant 17 : i32
    %43 = vector.broadcast %c17_i32 : i32 to vector<1x512xi32>
    %44 = arith.cmpi eq, %40, %43 : vector<1x512xi32>
    %c0_11 = arith.constant 0 : index
    %c0_12 = arith.constant 0 : index
    %c0_13 = arith.constant 0 : index
    %45 = vector.load %arg1[%c0_11, %c0_12, %c0_13] : memref<1x16x384xbf16, #tpu.memory_space<vmem>>, vector<1x16x384xbf16>
    %46 = vector.shape_cast %45 : vector<1x16x384xbf16> to vector<16x384xbf16>
    %47 = arith.extf %46 : vector<16x384xbf16> to vector<16x384xf32>
    %c0_14 = arith.constant 0 : index
    %c19 = arith.constant 19 : index
    %48 = vector.load %arg7[%c0_14, %c19] : memref<16x512xf32, #tpu.memory_space<vmem>>, vector<16x384xf32>
    tpu.vector_store %arg7[%c0_14, %c19], %47 {strides = array<i32>} : memref<16x512xf32, #tpu.memory_space<vmem>>, vector<16x384xf32>,
    %c0_15 = arith.constant 0 : index
    %c0_16 = arith.constant 0 : index
    %49 = vector.load %arg7[%c0_15, %c0_16] : memref<16x512xf32, #tpu.memory_space<vmem>>, vector<16x512xf32>
    %cst_17 = arith.constant 0.000000e+00 : f32
    %50 = vector.broadcast %cst_17 : f32 to vector<16x2xf32>
    %51 = vector.extract_strided_slice %49 {offsets = [0, 2], sizes = [16, 510], strides = [1, 1]} : vector<16x512xf32> to vector<16x510xf32>
    %52 = tpu.concatenate %51, %50 in 1 : vector<16x510xf32>, vector<16x2xf32> -> vector<16x512xf32>
    %53 = vector.shape_cast %42 : vector<1x512xi1> to vector<1x512xi1>
    %54 = vector.broadcast %53 : vector<1x512xi1> to vector<16x512xi1>
    %c0_18 = arith.constant 0 : index
    %c0_19 = arith.constant 0 : index
    %55 = vector.load %arg7[%c0_18, %c0_19] : memref<16x512xf32, #tpu.memory_space<vmem>>, vector<16x512xf32>
    tpu.vector_store %arg7[%c0_18, %c0_19], %52 masked %54 {strides = array<i32>} : memref<16x512xf32, #tpu.memory_space<vmem>>, vector<16x512xf32>, vector<16x512xi1>
    %56 = vector.extract_strided_slice %49 {offsets = [0, 0], sizes = [16, 510], strides = [1, 1]} : vector<16x512xf32> to vector<16x510xf32>
    %57 = tpu.concatenate %50, %56 in 1 : vector<16x2xf32>, vector<16x510xf32> -> vector<16x512xf32>
    %58 = vector.shape_cast %44 : vector<1x512xi1> to vector<1x512xi1>
    %59 = vector.broadcast %58 : vector<1x512xi1> to vector<16x512xi1>
    %c0_20 = arith.constant 0 : index
    %c0_21 = arith.constant 0 : index
    %60 = vector.load %arg7[%c0_20, %c0_21] : memref<16x512xf32, #tpu.memory_space<vmem>>, vector<16x512xf32>
    tpu.vector_store %arg7[%c0_20, %c0_21], %57 masked %59 {strides = array<i32>} : memref<16x512xf32, #tpu.memory_space<vmem>>, vector<16x512xf32>, vector<16x512xi1>
    %c0_22 = arith.constant 0 : index
    %c36 = arith.constant 36 : index
    %61 = vector.load %arg7[%c0_22, %c36] : memref<16x512xf32, #tpu.memory_space<vmem>>, vector<16x18xf32>
    %c0_23 = arith.constant 0 : index
    %c0_24 = arith.constant 0 : index
    %62 = vector.load %arg7[%c0_23, %c0_24] : memref<16x512xf32, #tpu.memory_space<vmem>>, vector<16x18xf32>
    tpu.vector_store %arg7[%c0_23, %c0_24], %61 {strides = array<i32>} : memref<16x512xf32, #tpu.memory_space<vmem>>, vector<16x18xf32>,
    %c0_25 = arith.constant 0 : index
    %c270 = arith.constant 270 : index
    %63 = vector.load %arg7[%c0_25, %c270] : memref<16x512xf32, #tpu.memory_space<vmem>>, vector<16x18xf32>
    %c0_26 = arith.constant 0 : index
    %c306 = arith.constant 306 : index
    %64 = vector.load %arg7[%c0_26, %c306] : memref<16x512xf32, #tpu.memory_space<vmem>>, vector<16x18xf32>
    tpu.vector_store %arg7[%c0_26, %c306], %63 {strides = array<i32>} : memref<16x512xf32, #tpu.memory_space<vmem>>, vector<16x18xf32>,
    %c0_27 = arith.constant 0 : index
    %c0_28 = arith.constant 0 : index
    %65 = vector.load %arg7[%c0_27, %c0_28] : memref<16x512xf32, #tpu.memory_space<vmem>>, vector<16x512xf32>
    %66 = vector.extract_strided_slice %65 {offsets = [0, 0], sizes = [16, 384], strides = [1, 1]} : vector<16x512xf32> to vector<16x384xf32>
    %67 = vector.extract_strided_slice %65 {offsets = [0, 1], sizes = [16, 384], strides = [1, 1]} : vector<16x512xf32> to vector<16x384xf32>
    %68 = vector.extract_strided_slice %65 {offsets = [0, 2], sizes = [16, 384], strides = [1, 1]} : vector<16x512xf32> to vector<16x384xf32>
    %69 = vector.extract_strided_slice %65 {offsets = [0, 18], sizes = [16, 384], strides = [1, 1]} : vector<16x512xf32> to vector<16x384xf32>
    %70 = vector.extract_strided_slice %65 {offsets = [0, 19], sizes = [16, 384], strides = [1, 1]} : vector<16x512xf32> to vector<16x384xf32>
    %71 = vector.extract_strided_slice %65 {offsets = [0, 20], sizes = [16, 384], strides = [1, 1]} : vector<16x512xf32> to vector<16x384xf32>
    %72 = vector.extract_strided_slice %65 {offsets = [0, 36], sizes = [16, 384], strides = [1, 1]} : vector<16x512xf32> to vector<16x384xf32>
    %73 = vector.extract_strided_slice %65 {offsets = [0, 37], sizes = [16, 384], strides = [1, 1]} : vector<16x512xf32> to vector<16x384xf32>
    %74 = vector.extract_strided_slice %65 {offsets = [0, 38], sizes = [16, 384], strides = [1, 1]} : vector<16x512xf32> to vector<16x384xf32>
    %c0_29 = arith.constant 0 : index
    %c0_30 = arith.constant 0 : index
    %75 = vector.load %arg2[%c0_29, %c0_30] : memref<8x144xbf16, #tpu.memory_space<vmem>>, vector<8x144xbf16>
    %c0_31 = arith.constant 0 : index
    %c0_32 = arith.constant 0 : index
    %76 = vector.load %arg3[%c0_31, %c0_32] : memref<8x2xf32, #tpu.memory_space<vmem>>, vector<8x2xf32>
    %77 = tpu.concatenate %66, %67, %68, %69, %70, %71, %72, %73, %74 in 0 : vector<16x384xf32>, vector<16x384xf32>, vector<16x384xf32>, vector<16x384xf32>, vector<16x384xf32>, vector<16x384xf32>, vector<16x384xf32>, vector<16x384xf32>, vector<16x384xf32> -> vector<144x384xf32>
    %78 = arith.truncf %77 : vector<144x384xf32> to vector<144x384xbf16>
    %cst_33 = arith.constant dense<0.000000e+00> : vector<8x384xf32>
    %79 = tpu.matmul %75, %78, %cst_33 {dimension_numbers = #tpu.dot_dimension_numbers<[1], [0], [0], [1], [0, 0, 1, 1], [], []>} : vector<8x144xbf16>, vector<144x384xbf16>, vector<8x384xf32> -> vector<8x384xf32>
    %cst_34 = arith.constant 0.000000e+00 : f32
    %80 = vector.shape_cast %21 : vector<1x384xi1> to vector<1x384xi1>
    %81 = vector.broadcast %80 : vector<1x384xi1> to vector<8x384xi1>
    %82 = vector.broadcast %cst_34 : f32 to vector<8x384xf32>
    %83 = arith.select %81, %79, %82 : vector<8x384xi1>, vector<8x384xf32>
    %cst_35 = arith.constant dense<0.000000e+00> : vector<8xf32>
    %84 = vector.multi_reduction <add>, %83, %cst_35 [1] : vector<8x384xf32> to vector<8xf32>
    %85 = vector.shape_cast %84 : vector<8xf32> to vector<8x1xf32>
    %cst_36 = arith.constant 3.906250e-03 : f32
    %86 = vector.broadcast %cst_36 : f32 to vector<8x1xf32>
    %87 = arith.mulf %85, %86 : vector<8x1xf32>
    %88 = arith.mulf %83, %83 : vector<8x384xf32>
    %cst_37 = arith.constant dense<0.000000e+00> : vector<8xf32>
    %89 = vector.multi_reduction <add>, %88, %cst_37 [1] : vector<8x384xf32> to vector<8xf32>
    %90 = vector.shape_cast %89 : vector<8xf32> to vector<8x1xf32>
    %cst_38 = arith.constant 3.906250e-03 : f32
    %91 = vector.broadcast %cst_38 : f32 to vector<8x1xf32>
    %92 = arith.mulf %90, %91 : vector<8x1xf32>
    %93 = arith.mulf %87, %87 : vector<8x1xf32>
    %94 = arith.subf %92, %93 : vector<8x1xf32>
    %cst_39 = arith.constant 0.000000e+00 : f32
    %95 = vector.broadcast %cst_39 : f32 to vector<8x1xf32>
    %96 = arith.maximumf %94, %95 : vector<8x1xf32>
    %97 = vector.broadcast %87 : vector<8x1xf32> to vector<8x384xf32>
    %98 = arith.subf %83, %97 : vector<8x384xf32>
    %cst_40 = arith.constant 9.99999974E-6 : f32
    %99 = vector.broadcast %cst_40 : f32 to vector<8x1xf32>
    %100 = arith.addf %96, %99 : vector<8x1xf32>
    %101 = math.rsqrt %100 : vector<8x1xf32>
    %102 = vector.broadcast %101 : vector<8x1xf32> to vector<8x384xf32>
    %103 = arith.mulf %98, %102 : vector<8x384xf32>
    %104 = vector.extract_strided_slice %76 {offsets = [0, 0], sizes = [8, 1], strides = [1, 1]} : vector<8x2xf32> to vector<8x1xf32>
    %105 = vector.broadcast %104 : vector<8x1xf32> to vector<8x384xf32>
    %106 = arith.mulf %103, %105 : vector<8x384xf32>
    %107 = vector.extract_strided_slice %76 {offsets = [0, 1], sizes = [8, 1], strides = [1, 1]} : vector<8x2xf32> to vector<8x1xf32>
    %108 = vector.broadcast %107 : vector<8x1xf32> to vector<8x384xf32>
    %109 = arith.addf %106, %108 : vector<8x384xf32>
    %cst_41 = arith.constant 0.000000e+00 : f32
    %110 = vector.broadcast %cst_41 : f32 to vector<8x384xf32>
    %111 = arith.maximumf %109, %110 : vector<8x384xf32>
    %c0_42 = arith.constant 0 : index
    %c19_43 = arith.constant 19 : index
    %112 = vector.load %arg7[%c0_42, %c19_43] : memref<16x512xf32, #tpu.memory_space<vmem>>, vector<8x384xf32>
    tpu.vector_store %arg7[%c0_42, %c19_43], %111 {strides = array<i32>} : memref<16x512xf32, #tpu.memory_space<vmem>>, vector<8x384xf32>,
    %c0_44 = arith.constant 0 : index
    %c0_45 = arith.constant 0 : index
    %113 = vector.load %arg7[%c0_44, %c0_45] : memref<16x512xf32, #tpu.memory_space<vmem>>, vector<8x512xf32>
    %cst_46 = arith.constant 0.000000e+00 : f32
    %114 = vector.broadcast %cst_46 : f32 to vector<8x2xf32>
    %115 = vector.extract_strided_slice %113 {offsets = [0, 2], sizes = [8, 510], strides = [1, 1]} : vector<8x512xf32> to vector<8x510xf32>
    %116 = tpu.concatenate %115, %114 in 1 : vector<8x510xf32>, vector<8x2xf32> -> vector<8x512xf32>
    %117 = vector.shape_cast %42 : vector<1x512xi1> to vector<1x512xi1>
    %118 = vector.broadcast %117 : vector<1x512xi1> to vector<8x512xi1>
    %c0_47 = arith.constant 0 : index
    %c0_48 = arith.constant 0 : index
    %119 = vector.load %arg7[%c0_47, %c0_48] : memref<16x512xf32, #tpu.memory_space<vmem>>, vector<8x512xf32>
    tpu.vector_store %arg7[%c0_47, %c0_48], %116 masked %118 {strides = array<i32>} : memref<16x512xf32, #tpu.memory_space<vmem>>, vector<8x512xf32>, vector<8x512xi1>
    %120 = vector.extract_strided_slice %113 {offsets = [0, 0], sizes = [8, 510], strides = [1, 1]} : vector<8x512xf32> to vector<8x510xf32>
    %121 = tpu.concatenate %114, %120 in 1 : vector<8x2xf32>, vector<8x510xf32> -> vector<8x512xf32>
    %122 = vector.shape_cast %44 : vector<1x512xi1> to vector<1x512xi1>
    %123 = vector.broadcast %122 : vector<1x512xi1> to vector<8x512xi1>
    %c0_49 = arith.constant 0 : index
    %c0_50 = arith.constant 0 : index
    %124 = vector.load %arg7[%c0_49, %c0_50] : memref<16x512xf32, #tpu.memory_space<vmem>>, vector<8x512xf32>
    tpu.vector_store %arg7[%c0_49, %c0_50], %121 masked %123 {strides = array<i32>} : memref<16x512xf32, #tpu.memory_space<vmem>>, vector<8x512xf32>, vector<8x512xi1>
    %c0_51 = arith.constant 0 : index
    %c36_52 = arith.constant 36 : index
    %125 = vector.load %arg7[%c0_51, %c36_52] : memref<16x512xf32, #tpu.memory_space<vmem>>, vector<8x18xf32>
    %c0_53 = arith.constant 0 : index
    %c0_54 = arith.constant 0 : index
    %126 = vector.load %arg7[%c0_53, %c0_54] : memref<16x512xf32, #tpu.memory_space<vmem>>, vector<8x18xf32>
    tpu.vector_store %arg7[%c0_53, %c0_54], %125 {strides = array<i32>} : memref<16x512xf32, #tpu.memory_space<vmem>>, vector<8x18xf32>,
    %c0_55 = arith.constant 0 : index
    %c270_56 = arith.constant 270 : index
    %127 = vector.load %arg7[%c0_55, %c270_56] : memref<16x512xf32, #tpu.memory_space<vmem>>, vector<8x18xf32>
    %c0_57 = arith.constant 0 : index
    %c306_58 = arith.constant 306 : index
    %128 = vector.load %arg7[%c0_57, %c306_58] : memref<16x512xf32, #tpu.memory_space<vmem>>, vector<8x18xf32>
    tpu.vector_store %arg7[%c0_57, %c306_58], %127 {strides = array<i32>} : memref<16x512xf32, #tpu.memory_space<vmem>>, vector<8x18xf32>,
    %c0_59 = arith.constant 0 : index
    %c0_60 = arith.constant 0 : index
    %129 = vector.load %arg7[%c0_59, %c0_60] : memref<16x512xf32, #tpu.memory_space<vmem>>, vector<8x512xf32>
    %130 = vector.extract_strided_slice %129 {offsets = [0, 0], sizes = [8, 384], strides = [1, 1]} : vector<8x512xf32> to vector<8x384xf32>
    %131 = vector.extract_strided_slice %129 {offsets = [0, 1], sizes = [8, 384], strides = [1, 1]} : vector<8x512xf32> to vector<8x384xf32>
    %132 = vector.extract_strided_slice %129 {offsets = [0, 2], sizes = [8, 384], strides = [1, 1]} : vector<8x512xf32> to vector<8x384xf32>
    %133 = vector.extract_strided_slice %129 {offsets = [0, 18], sizes = [8, 384], strides = [1, 1]} : vector<8x512xf32> to vector<8x384xf32>
    %134 = vector.extract_strided_slice %129 {offsets = [0, 19], sizes = [8, 384], strides = [1, 1]} : vector<8x512xf32> to vector<8x384xf32>
    %135 = vector.extract_strided_slice %129 {offsets = [0, 20], sizes = [8, 384], strides = [1, 1]} : vector<8x512xf32> to vector<8x384xf32>
    %136 = vector.extract_strided_slice %129 {offsets = [0, 36], sizes = [8, 384], strides = [1, 1]} : vector<8x512xf32> to vector<8x384xf32>
    %137 = vector.extract_strided_slice %129 {offsets = [0, 37], sizes = [8, 384], strides = [1, 1]} : vector<8x512xf32> to vector<8x384xf32>
    %138 = vector.extract_strided_slice %129 {offsets = [0, 38], sizes = [8, 384], strides = [1, 1]} : vector<8x512xf32> to vector<8x384xf32>
    %c0_61 = arith.constant 0 : index
    %c0_62 = arith.constant 0 : index
    %139 = vector.load %arg4[%c0_61, %c0_62] : memref<3x72xbf16, #tpu.memory_space<vmem>>, vector<3x72xbf16>
    %c0_63 = arith.constant 0 : index
    %c0_64 = arith.constant 0 : index
    %140 = vector.load %arg5[%c0_63, %c0_64] : memref<3x2xf32, #tpu.memory_space<vmem>>, vector<3x2xf32>
    %141 = tpu.concatenate %130, %131, %132, %133, %134, %135, %136, %137, %138 in 0 : vector<8x384xf32>, vector<8x384xf32>, vector<8x384xf32>, vector<8x384xf32>, vector<8x384xf32>, vector<8x384xf32>, vector<8x384xf32>, vector<8x384xf32>, vector<8x384xf32> -> vector<72x384xf32>
    %142 = arith.truncf %141 : vector<72x384xf32> to vector<72x384xbf16>
    %cst_65 = arith.constant dense<0.000000e+00> : vector<3x384xf32>
    %143 = tpu.matmul %139, %142, %cst_65 {dimension_numbers = #tpu.dot_dimension_numbers<[1], [0], [0], [1], [0, 0, 1, 1], [], []>} : vector<3x72xbf16>, vector<72x384xbf16>, vector<3x384xf32> -> vector<3x384xf32>
    %cst_66 = arith.constant 0.000000e+00 : f32
    %144 = vector.shape_cast %21 : vector<1x384xi1> to vector<1x384xi1>
    %145 = vector.broadcast %144 : vector<1x384xi1> to vector<3x384xi1>
    %146 = vector.broadcast %cst_66 : f32 to vector<3x384xf32>
    %147 = arith.select %145, %143, %146 : vector<3x384xi1>, vector<3x384xf32>
    %cst_67 = arith.constant dense<0.000000e+00> : vector<3xf32>
    %148 = vector.multi_reduction <add>, %147, %cst_67 [1] : vector<3x384xf32> to vector<3xf32>
    %149 = vector.shape_cast %148 : vector<3xf32> to vector<3x1xf32>
    %cst_68 = arith.constant 3.906250e-03 : f32
    %150 = vector.broadcast %cst_68 : f32 to vector<3x1xf32>
    %151 = arith.mulf %149, %150 : vector<3x1xf32>
    %152 = arith.mulf %147, %147 : vector<3x384xf32>
    %cst_69 = arith.constant dense<0.000000e+00> : vector<3xf32>
    %153 = vector.multi_reduction <add>, %152, %cst_69 [1] : vector<3x384xf32> to vector<3xf32>
    %154 = vector.shape_cast %153 : vector<3xf32> to vector<3x1xf32>
    %cst_70 = arith.constant 3.906250e-03 : f32
    %155 = vector.broadcast %cst_70 : f32 to vector<3x1xf32>
    %156 = arith.mulf %154, %155 : vector<3x1xf32>
    %157 = arith.mulf %151, %151 : vector<3x1xf32>
    %158 = arith.subf %156, %157 : vector<3x1xf32>
    %cst_71 = arith.constant 0.000000e+00 : f32
    %159 = vector.broadcast %cst_71 : f32 to vector<3x1xf32>
    %160 = arith.maximumf %158, %159 : vector<3x1xf32>
    %161 = vector.broadcast %151 : vector<3x1xf32> to vector<3x384xf32>
    %162 = arith.subf %147, %161 : vector<3x384xf32>
    %cst_72 = arith.constant 9.99999974E-6 : f32
    %163 = vector.broadcast %cst_72 : f32 to vector<3x1xf32>
    %164 = arith.addf %160, %163 : vector<3x1xf32>
    %165 = math.rsqrt %164 : vector<3x1xf32>
    %166 = vector.broadcast %165 : vector<3x1xf32> to vector<3x384xf32>
    %167 = arith.mulf %162, %166 : vector<3x384xf32>
    %168 = vector.extract_strided_slice %140 {offsets = [0, 0], sizes = [3, 1], strides = [1, 1]} : vector<3x2xf32> to vector<3x1xf32>
    %169 = vector.broadcast %168 : vector<3x1xf32> to vector<3x384xf32>
    %170 = arith.mulf %167, %169 : vector<3x384xf32>
    %171 = vector.extract_strided_slice %140 {offsets = [0, 1], sizes = [3, 1], strides = [1, 1]} : vector<3x2xf32> to vector<3x1xf32>
    %172 = vector.broadcast %171 : vector<3x1xf32> to vector<3x384xf32>
    %173 = arith.addf %170, %172 : vector<3x384xf32>
    %174 = math.tanh %173 : vector<3x384xf32>
    %cst_73 = arith.constant 0.000000e+00 : f32
    %175 = vector.broadcast %cst_73 : f32 to vector<5x384xf32>
    %176 = tpu.concatenate %174, %175 in 0 : vector<3x384xf32>, vector<5x384xf32> -> vector<8x384xf32>
    %c0_74 = arith.constant 0 : index
    %c0_75 = arith.constant 0 : index
    %c0_76 = arith.constant 0 : index
    %177 = vector.load %arg6[%c0_74, %c0_75, %c0_76] : memref<1x8x384xf32, #tpu.memory_space<vmem>>, vector<1x8x384xf32>
    %178 = vector.shape_cast %177 : vector<1x8x384xf32> to vector<8x384xf32>
    %179 = vector.shape_cast %176 : vector<8x384xf32> to vector<1x8x384xf32>
    tpu.vector_store %arg6[%c0_74, %c0_75, %c0_76], %179 {strides = array<i32>} : memref<1x8x384xf32, #tpu.memory_space<vmem>>, vector<1x8x384xf32>,
    return
  }
  func.func @transform_0(%arg0: i32) -> (i32, i32, i32) {
    %c0_i32 = arith.constant 0 : i32
    %c0_i32_0 = arith.constant 0 : i32
    %c0_i32_1 = arith.constant 0 : i32
    return %arg0, %c0_i32, %c0_i32_0 : i32, i32, i32
  }
  func.func @transform_1(%arg0: i32) -> (i32, i32) {
    %c0_i32 = arith.constant 0 : i32
    %c0_i32_0 = arith.constant 0 : i32
    %c0_i32_1 = arith.constant 0 : i32
    return %c0_i32, %c0_i32_0 : i32, i32
  }
  func.func @transform_2(%arg0: i32) -> (i32, i32) {
    %c0_i32 = arith.constant 0 : i32
    %c0_i32_0 = arith.constant 0 : i32
    %c0_i32_1 = arith.constant 0 : i32
    return %c0_i32, %c0_i32_0 : i32, i32
  }
  func.func @transform_3(%arg0: i32) -> (i32, i32) {
    %c0_i32 = arith.constant 0 : i32
    %c0_i32_0 = arith.constant 0 : i32
    %c0_i32_1 = arith.constant 0 : i32
    return %c0_i32, %c0_i32_0 : i32, i32
  }
  func.func @transform_4(%arg0: i32) -> (i32, i32) {
    %c0_i32 = arith.constant 0 : i32
    %c0_i32_0 = arith.constant 0 : i32
    %c0_i32_1 = arith.constant 0 : i32
    return %c0_i32, %c0_i32_0 : i32, i32
  }
  func.func @transform_5(%arg0: i32) -> (i32, i32, i32) {
    %c0_i32 = arith.constant 0 : i32
    %c0_i32_0 = arith.constant 0 : i32
    %c0_i32_1 = arith.constant 0 : i32
    return %arg0, %c0_i32, %c0_i32_0 : i32, i32, i32
  }
}

</mosaic_0001>

<llo_original>
// kernel: stylizing_network.5
$region0: #{stylizing_network.5}
  #allocation0 [shape = 'u32[]', space=smem, size = 0x4, offset = 0x4, fixed_abs, tag = 'smem constant byte address 0x4 - core index']
  #allocation1 [shape = 'u32[144,128]{1,0:T(1,128)}', space=vmem, size = 0x12000, scoped, tag = 'internal scratch']
  #allocation2 [shape = 'f32[8,512]{1,0:T(8,128)}', space=vmem, size = 0x4000, scoped, tag = 'scratch operand']
  %s0 = inlined_call_operand.vmem [shape: bf16[2,3,384], index: 0, kind: input, shape index: {}]
  %s1 = inlined_call_operand.vmem [shape: bf16[8,27], index: 1, kind: input, shape index: {}]
  %s2 = inlined_call_operand.vmem [shape: f32[8,2], index: 2, kind: input, shape index: {}]
  %s3 = inlined_call_operand.vmem [shape: bf16[2,8,384], index: 3, kind: output, shape index: {}]
  %s4 = sld [smem:[#allocation0]]
  $region45: #{stylizing_network.5} parent=0
    _
  %s6 = ssub.s32 1, %s4
  %s7 = scalar_select 0, %s6, %s4
  loop: start=0, step=1, limit=4
  $region2: #{stylizing_network.5} parent=0 // loop_pre_header
    _
  $region3: #{stylizing_network.5} parent=0 // loop_header
    %s9 = sphi 0, %s13
    %p10 = scmp.ge.s32.totalorder %s9, 4
    %s19 = sphi 0, %s21
    %s22 = sphi 0, %s19
    %s23 = sphi 0, %s22
    %s39 = sphi 0, %s23
    %s43 = sphi 0, %s43
    %s45 = sphi 0, %s43
    %s46 = sphi 0, %s45
    %s60 = sphi 0, %s46
    %s64 = sphi 0, %s64
    %s66 = sphi 0, %s64
    %s67 = sphi 0, %s66
    %s81 = sphi 0, %s67
    %s87 = sphi 0, %s89
    %s90 = sphi 0, %s87
    %s91 = sphi 0, %s90
    %s107 = sphi 0, %s91
  $region4: #{stylizing_network.5} parent=0 // loop_header_branch
    %12 = sbr.rel (%p10) target = $region8
  $region5: #{stylizing_network.5} parent=0 // loop_body
    %s14 = ssub.s32 %s9, 1
    %s15 = ssub.s32 %s9, 2
    %s16 = sadd.s32 %s9, 1
    %s17 = ssub.s32 %s9, %s16
    %p18 = scmp.eq.s32.totalorder %s17, 0
    %s20 = sadd.s32 %s19, 1
    %s21 = scalar_select %p18, %s19, %s20
    %p24 = pneg %p18
    %p25 = scmp.eq.s32.totalorder %s9, 1
    %p26 = por %p24, %p25
    %p27 = scmp.ne.s32.totalorder %s19, %s22
    %p28 = scmp.eq.s32.totalorder %s9, 0
    %p29 = por %p27, %p28
    %p30 = scmp.ne.s32.totalorder %s19, %s22
    %p31 = scmp.eq.s32.totalorder %s14, 1
    %p32 = por %p30, %p31
    %p33 = scmp.ne.s32.totalorder %s22, %s23
    %p34 = scmp.eq.s32.totalorder %s14, 0
    %p35 = por %p33, %p34
    %p36 = scmp.ne.s32.totalorder %s22, %s23
    %p37 = scmp.eq.s32.totalorder %s15, 1
    %p38 = por %p36, %p37
    %p40 = scmp.ne.s32.totalorder %s23, %s39
    %p41 = scmp.eq.s32.totalorder %s15, 0
    %p42 = por %p40, %p41
    %s44 = sadd.s32 %s43, 1
    %p47 = scmp.eq.s32.totalorder %s9, 1
    %p48 = scmp.ne.s32.totalorder %s43, %s45
    %p49 = scmp.eq.s32.totalorder %s9, 0
    %p50 = por %p48, %p49
    %p51 = scmp.ne.s32.totalorder %s43, %s45
    %p52 = scmp.eq.s32.totalorder %s14, 1
    %p53 = por %p51, %p52
    %p54 = scmp.ne.s32.totalorder %s45, %s46
    %p55 = scmp.eq.s32.totalorder %s14, 0
    %p56 = por %p54, %p55
    %p57 = scmp.ne.s32.totalorder %s45, %s46
    %p58 = scmp.eq.s32.totalorder %s15, 1
    %p59 = por %p57, %p58
    %p61 = scmp.ne.s32.totalorder %s46, %s60
    %p62 = scmp.eq.s32.totalorder %s15, 0
    %p63 = por %p61, %p62
    %s65 = sadd.s32 %s64, 1
    %p68 = scmp.eq.s32.totalorder %s9, 1
    %p69 = scmp.ne.s32.totalorder %s64, %s66
    %p70 = scmp.eq.s32.totalorder %s9, 0
    %p71 = por %p69, %p70
    %p72 = scmp.ne.s32.totalorder %s64, %s66
    %p73 = scmp.eq.s32.totalorder %s14, 1
    %p74 = por %p72, %p73
    %p75 = scmp.ne.s32.totalorder %s66, %s67
    %p76 = scmp.eq.s32.totalorder %s14, 0
    %p77 = por %p75, %p76
    %p78 = scmp.ne.s32.totalorder %s66, %s67
    %p79 = scmp.eq.s32.totalorder %s15, 1
    %p80 = por %p78, %p79
    %p82 = scmp.ne.s32.totalorder %s67, %s81
    %p83 = scmp.eq.s32.totalorder %s15, 0
    %p84 = por %p82, %p83
    %s85 = ssub.s32 %s9, %s16
    %p86 = scmp.eq.s32.totalorder %s85, 0
    %s88 = sadd.s32 %s87, 1
    %s89 = scalar_select %p86, %s87, %s88
    %p92 = pneg %p86
    %p93 = scmp.eq.s32.totalorder %s9, 1
    %p94 = por %p92, %p93
    %p95 = scmp.ne.s32.totalorder %s87, %s90
    %p96 = scmp.eq.s32.totalorder %s9, 0
    %p97 = por %p95, %p96
    %p98 = scmp.ne.s32.totalorder %s87, %s90
    %p99 = scmp.eq.s32.totalorder %s14, 1
    %p100 = por %p98, %p99
    %p101 = scmp.ne.s32.totalorder %s90, %s91
    %p102 = scmp.eq.s32.totalorder %s14, 0
    %p103 = por %p101, %p102
    %p104 = scmp.ne.s32.totalorder %s90, %s91
    %p105 = scmp.eq.s32.totalorder %s15, 1
    %p106 = por %p104, %p105
    %p108 = scmp.ne.s32.totalorder %s91, %s107
    %p109 = scmp.eq.s32.totalorder %s15, 0
    %p110 = por %p108, %p109
    %p111 = scmp.le.s32.totalorder 1, %s9
    %p112 = scmp.lt.s32.totalorder %s9, 3
    %p113 = pnand %p111, %p112
    %p114 = pneg %p113
    // Predicated region
    $region9: #{stylizing_network.5} parent=5 // pred_check
      _
    $region10: #{stylizing_network.5} parent=5 // pred_check_branch
      %116 = sbr.rel (%p113) target = $region12
    $region11: #{stylizing_network.5} parent=5 // pred_region
      %s117 = ssub.s32 %s9, 1
      // Predicated region
      $region13: #{stylizing_network.5} parent=11 // pred_check
        %p118 = pneg %p56
      $region14: #{stylizing_network.5} parent=11 // pred_check_branch
        %120 = sbr.rel (%p118) target = $region16
      $region15: #{stylizing_network.5} parent=11 // pred_region
        _
      $region16: #{stylizing_network.5} parent=11 // pred_fallthru
        _
      // Predicated region
      $region17: #{stylizing_network.5} parent=11 // pred_check
        %p121 = pneg %p77
      $region18: #{stylizing_network.5} parent=11 // pred_check_branch
        %123 = sbr.rel (%p121) target = $region20
      $region19: #{stylizing_network.5} parent=11 // pred_region
        _
      $region20: #{stylizing_network.5} parent=11 // pred_fallthru
        _
    $region12: #{stylizing_network.5} parent=5 // pred_fallthru
      _
    %p124 = scmp.lt.s32.totalorder %s9, 2
    // Predicated region
    $region21: #{stylizing_network.5} parent=5 // pred_check
      %p125 = pneg %p124
    $region22: #{stylizing_network.5} parent=5 // pred_check_branch
      %127 = sbr.rel (%p125) target = $region24
    $region23: #{stylizing_network.5} parent=5 // pred_region
      // Predicated region
      $region25: #{stylizing_network.5} parent=23 // pred_check
        %p128 = pneg %p29
      $region26: #{stylizing_network.5} parent=23 // pred_check_branch
        %130 = sbr.rel (%p128) target = $region28
      $region27: #{stylizing_network.5} parent=23 // pred_region
        %p131 = scmp.lt.s32.totalorder %s9, 1
        %s132 = scalar_select %p131, %s9, 1
        %s133 = smul.addr %s132, 3
        %s134 = smul.addr %s133, 2
        %s135 = scalar_lea.vmem %s0, %s134
      $region28: #{stylizing_network.5} parent=23 // pred_fallthru
        _
    $region24: #{stylizing_network.5} parent=5 // pred_fallthru
      _
    %p136 = scmp.le.s32.totalorder 1, %s9
    %p137 = scmp.lt.s32.totalorder %s9, 3
    %p138 = pnand %p136, %p137
    %p139 = pneg %p138
    // Predicated region
    $region29: #{stylizing_network.5} parent=5 // pred_check
      _
    $region30: #{stylizing_network.5} parent=5 // pred_check_branch
      %141 = sbr.rel (%p138) target = $region32
    $region31: #{stylizing_network.5} parent=5 // pred_region
      %s142 = ssub.s32 %s9, 1
      %p143 = scmp.lt.s32.totalorder %s14, 1
      %s144 = scalar_select %p143, %s14, 1
      %s145 = smul.addr %s144, 3
      %s146 = smul.addr %s145, 2
      %s147 = scalar_lea.vmem %s0, %s146
      %p148 = pneg %p35
      %p149 = pneg %p32
      %p150 = pneg %p56
      %p151 = pneg %p53
      %p152 = pneg %p77
      %p153 = pneg %p74
      %p154 = pneg %p103
      %p155 = pneg %p100
      %p156 = scmp.lt.s32.totalorder %s14, 1
      %s157 = scalar_select %p156, %s14, 1
      %s158 = smul.addr %s157, 3
      %s159 = smul.addr %s158, 4
      %s160 = scalar_lea.vmem %s3, %s159
      %p161 = scmp.lt.s32.totalorder %s14, 1
      %s162 = scalar_select %p161, %s14, 1
      %s163 = smul.addr %s162, 3
      %s164 = smul.addr %s163, 2
      %s165 = scalar_lea.vmem %s0, %s164
      %p166 = scmp.lt.s32.totalorder %s14, 1
      %s167 = scalar_select %p166, %s14, 1
      %s168 = smul.addr %s167, 3
      %s169 = smul.addr %s168, 4
      %s170 = scalar_lea.vmem %s3, %s169
      %v172 = vlaneseq
      %v173 = vand.u32 %v172, 127
      %v174 = vadd.s32 %v173, 128
      %v175 = vadd.s32 %v173, 256
      %vm176 = vcmp.lt.s32.totalorder %v173, 0
      %v177 = vsub.s32 0, %v173
      %v178 = vsel %vm176, %v177, %v173
      %v179 = vmul.u32.u64.compose %v178, 3817748708
      %v180 = vextract.low.u32 %v179
      %v181 = vextract.high.u32 %v179
      %v182 = vshrl.u32 %v181, 4
      %v183 = vmul.u32 %v182, 18
      %v184 = vsub.s32 %v178, %v183
      %v185 = vsub.s32 0, %v184
      %v186 = vsel %vm176, %v185, %v184
      %vm187 = vcmp.lt.s32.totalorder %v174, 0
      %v188 = vsub.s32 0, %v174
      %v189 = vsel %vm187, %v188, %v174
      %v190 = vmul.u32.u64.compose %v189, 3817748708
      %v191 = vextract.low.u32 %v190
      %v192 = vextract.high.u32 %v190
      %v193 = vshrl.u32 %v192, 4
      %v194 = vmul.u32 %v193, 18
      %v195 = vsub.s32 %v189, %v194
      %v196 = vsub.s32 0, %v195
      %v197 = vsel %vm187, %v196, %v195
      %vm198 = vcmp.lt.s32.totalorder %v175, 0
      %v199 = vsub.s32 0, %v175
      %v200 = vsel %vm198, %v199, %v175
      %v201 = vmul.u32.u64.compose %v200, 3817748708
      %v202 = vextract.low.u32 %v201
      %v203 = vextract.high.u32 %v201
      %v204 = vshrl.u32 %v203, 4
      %v205 = vmul.u32 %v204, 18
      %v206 = vsub.s32 %v200, %v205
      %v207 = vsub.s32 0, %v206
      %v208 = vsel %vm198, %v207, %v206
      %vm209 = vcmp.ne.s32.totalorder %v186, 0
      %vm210 = vcmp.ne.s32.totalorder %v197, 0
      %vm211 = vcmp.ne.s32.totalorder %v208, 0
      %vm212 = vcmp.lt.s32.totalorder %v186, 0
      %vm213 = vcmp.lt.s32.totalorder %v197, 0
      %vm214 = vcmp.lt.s32.totalorder %v208, 0
      %vm215 = vmand %vm212, %vm209
      %vm216 = vmand %vm213, %vm210
      %vm217 = vmand %vm214, %vm211
      %v218 = vadd.s32 %v186, 18
      %v219 = vadd.s32 %v197, 18
      %v220 = vadd.s32 %v208, 18
      %v221 = vsel %vm215, %v218, %v186
      %v222 = vsel %vm216, %v219, %v197
      %v223 = vsel %vm217, %v220, %v208
      %vm224 = vcmp.lt.s32.totalorder %v221, 16
      %vm225 = vcmp.lt.s32.totalorder %v222, 16
      %vm226 = vcmp.lt.s32.totalorder %v223, 16
      %vm227 = vcmp.lt.s32.totalorder %v173, 288
      %vm228 = vcmp.lt.s32.totalorder %v174, 288
      %vm229 = vcmp.lt.s32.totalorder %v175, 288
      %vm230 = vmand %vm224, %vm227
      %vm231 = vmand %vm225, %vm228
      %vm232 = vmand %vm226, %vm229
      %233 = vst [vmem:[#allocation2] sm:$0xff] 0.0
      %234 = vst [vmem:[#allocation2 + $0x8] sm:$0xff] 0.0
      %235 = vst [vmem:[#allocation2 + $0x10] sm:$0xff] 0.0
      %236 = vst [vmem:[#allocation2 + $0x18] sm:$0xff] 0.0
      %v237 = vadd.s32 %v173, 384
      %vm238 = vcmp.lt.s32.totalorder %v237, 0
      %v239 = vsub.s32 0, %v237
      %v240 = vsel %vm238, %v239, %v237
      %v241 = vmul.u32.u64.compose %v240, 3817748708
      %v242 = vextract.low.u32 %v241
      %v243 = vextract.high.u32 %v241
      %v244 = vshrl.u32 %v243, 4
      %v245 = vmul.u32 %v244, 18
      %v246 = vsub.s32 %v240, %v245
      %v247 = vsub.s32 0, %v246
      %v248 = vsel %vm238, %v247, %v246
      %vm249 = vcmp.ne.s32.totalorder %v248, 0
      %vm250 = vcmp.lt.s32.totalorder %v248, 0
      %vm251 = vmand %vm250, %vm249
      %v252 = vadd.s32 %v248, 18
      %v253 = vsel %vm251, %v252, %v248
      %vm254 = vcmp.eq.s32.totalorder %v221, 0
      %vm255 = vcmp.eq.s32.totalorder %v222, 0
      %vm256 = vcmp.eq.s32.totalorder %v223, 0
      %vm257 = vcmp.eq.s32.totalorder %v253, 0
      %vm258 = vcmp.eq.s32.totalorder %v221, 17
      %vm259 = vcmp.eq.s32.totalorder %v222, 17
      %vm260 = vcmp.eq.s32.totalorder %v223, 17
      %vm261 = vcmp.eq.s32.totalorder %v253, 17
      %v262 = vld [vmem:[%s165] sm:$0x3f]
      %v263 = vunpack.c.l.bf16 %v262
      %v264 = vunpack.c.h.bf16 %v262
      %v267 = vcombine.high %v263, %v263
      %268 = vrot.lane.b32.xlu0 %v263, 19
      %v269 = vpop.permute.xlu0 %268
      %270 = vrot.lane.b32.xlu0 %v267, 19
      %v271 = vpop.permute.xlu0 %270
      %272 = vrot.lane.b32.xlu0 %v264, 19
      %v273 = vpop.permute.xlu0 %272
      %vm274 = vcmask 154624
      %v275 = vsel %vm274, %v269, %v271
      %v276 = vsel %vm274, %v271, %v273
      %vm281 = vcmask 1042584
      %282 = vst.msk [vmem:[#allocation2] sm:$0x7] %vm281, %v269
      %283 = vst [vmem:[#allocation2 + $0x8] sm:$0x7] %v275
      %284 = vst [vmem:[#allocation2 + $0x10] sm:$0x7] %v276
      %vm285 = vcmask 149504
      %286 = vst.msk [vmem:[#allocation2 + $0x18] sm:$0x7] %vm285, %v273
      %v287 = vld [vmem:[#allocation2] sm:$0x7]
      %v288 = vld [vmem:[#allocation2 + $0x8] sm:$0x7]
      %v289 = vld [vmem:[#allocation2 + $0x10] sm:$0x7]
      %v290 = vld [vmem:[#allocation2 + $0x18] sm:$0x7]
      %295 = vrot.lane.b32.xlu0 %v287, 126
      %v296 = vpop.permute.xlu0 %295
      %297 = vrot.lane.b32.xlu0 %v288, 126
      %v298 = vpop.permute.xlu0 %297
      %299 = vrot.lane.b32.xlu0 %v289, 126
      %v300 = vpop.permute.xlu0 %299
      %301 = vrot.lane.b32.xlu0 %v290, 126
      %v302 = vpop.permute.xlu0 %301
      %vm303 = vcmask 1031168
      %v304 = vsel %vm303, %v296, %v298
      %v305 = vsel %vm303, %v298, %v300
      %v306 = vsel %vm303, %v300, %v302
      %v311 = vsel %vm303, %v302, 0.0
      %v312 = vsel %vm254, 1, 0
      %v313 = vsel %vm255, 1, 0
      %v314 = vsel %vm256, 1, 0
      %v315 = vsel %vm257, 1, 0
      %vm316 = vcmp.eq.s32.totalorder %v312, 1
      %vm317 = vcmp.eq.s32.totalorder %v313, 1
      %vm318 = vcmp.eq.s32.totalorder %v314, 1
      %vm319 = vcmp.eq.s32.totalorder %v315, 1
      %320 = vst.msk [vmem:[#allocation2] sm:$0x7] %vm316, %v304
      %321 = vst.msk [vmem:[#allocation2 + $0x8] sm:$0x7] %vm317, %v305
      %322 = vst.msk [vmem:[#allocation2 + $0x10] sm:$0x7] %vm318, %v306
      %323 = vst.msk [vmem:[#allocation2 + $0x18] sm:$0x7] %vm319, %v311
      %324 = vrot.lane.b32.xlu0 %v287, 2
      %v325 = vpop.permute.xlu0 %324
      %326 = vrot.lane.b32.xlu0 %v288, 2
      %v327 = vpop.permute.xlu0 %326
      %328 = vrot.lane.b32.xlu0 %v289, 2
      %v329 = vpop.permute.xlu0 %328
      %330 = vrot.lane.b32.xlu0 %v290, 2
      %v331 = vpop.permute.xlu0 %330
      %vm332 = vcmask 15360
      %v333 = vsel %vm332, %v325, %v327
      %v334 = vsel %vm332, %v327, %v329
      %v335 = vsel %vm332, %v329, %v331
      %v340 = vsel %vm332, 0.0, %v325
      %v341 = vsel %vm258, 1, 0
      %v342 = vsel %vm259, 1, 0
      %v343 = vsel %vm260, 1, 0
      %v344 = vsel %vm261, 1, 0
      %vm345 = vcmp.eq.s32.totalorder %v341, 1
      %vm346 = vcmp.eq.s32.totalorder %v342, 1
      %vm347 = vcmp.eq.s32.totalorder %v343, 1
      %vm348 = vcmp.eq.s32.totalorder %v344, 1
      %349 = vst.msk [vmem:[#allocation2] sm:$0x7] %vm345, %v340
      %350 = vst.msk [vmem:[#allocation2 + $0x8] sm:$0x7] %vm346, %v333
      %351 = vst.msk [vmem:[#allocation2 + $0x10] sm:$0x7] %vm347, %v334
      %352 = vst.msk [vmem:[#allocation2 + $0x18] sm:$0x7] %vm348, %v335
      %v353 = vld [vmem:[#allocation2] sm:$0x7]
      %355 = vrot.lane.b32.xlu0 %v353, 92
      %v356 = vpop.permute.xlu0 %355
      %vm358 = vcmask 141312
      %359 = vst.msk [vmem:[#allocation2] sm:$0x7] %vm358, %v356
      %v360 = vld [vmem:[#allocation2 + $0x10] sm:$0x7]
      %362 = vrot.lane.b32.xlu0 %v360, 36
      %v363 = vpop.permute.xlu0 %362
      %vm365 = vcmask 551312
      %366 = vst.msk [vmem:[#allocation2 + $0x10] sm:$0x7] %vm365, %v363
      %v367 = vld [vmem:[#allocation2] sm:$0x7]
      %v368 = vld [vmem:[#allocation2 + $0x8] sm:$0x7]
      %v369 = vld [vmem:[#allocation2 + $0x10] sm:$0x7]
      %v370 = vld [vmem:[#allocation2 + $0x18] sm:$0x7]
      %v371 = vld [vmem:[%s1] sm:$0xf]
      %v372 = vld [vmem:[%s2] sm:$0xff]
      %v377 = vrot.slane %v367, 5
      %v378 = vrot.slane %v368, 5
      %v379 = vrot.slane %v369, 5
      %v380 = vrot.slane %v370, 5
      %381 = vrot.lane.b32.xlu0 %v377, 127
      %v382 = vpop.permute.xlu0 %381
      %383 = vrot.lane.b32.xlu0 %v378, 127
      %v384 = vpop.permute.xlu0 %383
      %385 = vrot.lane.b32.xlu0 %v379, 127
      %v386 = vpop.permute.xlu0 %385
      %387 = vrot.lane.b32.xlu0 %v380, 127
      %v388 = vpop.permute.xlu0 %387
      %vm389 = vcmask 1039360
      %v390 = vsel %vm389, %v382, %v384
      %v391 = vsel %vm389, %v384, %v386
      %v392 = vsel %vm389, %v386, %v388
      %v396 = vrot.slane %v367, 2
      %v397 = vrot.slane %v368, 2
      %v398 = vrot.slane %v369, 2
      %v399 = vrot.slane %v370, 2
      %400 = vrot.lane.b32.xlu0 %v396, 126
      %v401 = vpop.permute.xlu0 %400
      %402 = vrot.lane.b32.xlu0 %v397, 126
      %v403 = vpop.permute.xlu0 %402
      %404 = vrot.lane.b32.xlu0 %v398, 126
      %v405 = vpop.permute.xlu0 %404
      %406 = vrot.lane.b32.xlu0 %v399, 126
      %v407 = vpop.permute.xlu0 %406
      %v408 = vsel %vm303, %v401, %v403
      %v409 = vsel %vm303, %v403, %v405
      %v410 = vsel %vm303, %v405, %v407
      %v414 = vrot.slane %v367, 7
      %v415 = vrot.slane %v368, 7
      %v416 = vrot.slane %v369, 7
      %v417 = vrot.slane %v370, 7
      %418 = vrot.lane.b32.xlu0 %v414, 110
      %v419 = vpop.permute.xlu0 %418
      %420 = vrot.lane.b32.xlu0 %v415, 110
      %v421 = vpop.permute.xlu0 %420
      %422 = vrot.lane.b32.xlu0 %v416, 110
      %v423 = vpop.permute.xlu0 %422
      %424 = vrot.lane.b32.xlu0 %v417, 110
      %v425 = vpop.permute.xlu0 %424
      %vm426 = vcmask 900096
      %v427 = vsel %vm426, %v419, %v421
      %v428 = vsel %vm426, %v421, %v423
      %v429 = vsel %vm426, %v423, %v425
      %v433 = vrot.slane %v367, 4
      %v434 = vrot.slane %v368, 4
      %v435 = vrot.slane %v369, 4
      %v436 = vrot.slane %v370, 4
      %437 = vrot.lane.b32.xlu0 %v433, 109
      %v438 = vpop.permute.xlu0 %437
      %439 = vrot.lane.b32.xlu0 %v434, 109
      %v440 = vpop.permute.xlu0 %439
      %441 = vrot.lane.b32.xlu0 %v435, 109
      %v442 = vpop.permute.xlu0 %441
      %443 = vrot.lane.b32.xlu0 %v436, 109
      %v444 = vpop.permute.xlu0 %443
      %vm445 = vcmask 891904
      %v446 = vsel %vm445, %v438, %v440
      %v447 = vsel %vm445, %v440, %v442
      %v448 = vsel %vm445, %v442, %v444
      %v452 = vrot.slane %v367, 1
      %v453 = vrot.slane %v368, 1
      %v454 = vrot.slane %v369, 1
      %v455 = vrot.slane %v370, 1
      %456 = vrot.lane.b32.xlu0 %v452, 108
      %v457 = vpop.permute.xlu0 %456
      %458 = vrot.lane.b32.xlu0 %v453, 108
      %v459 = vpop.permute.xlu0 %458
      %460 = vrot.lane.b32.xlu0 %v454, 108
      %v461 = vpop.permute.xlu0 %460
      %462 = vrot.lane.b32.xlu0 %v455, 108
      %v463 = vpop.permute.xlu0 %462
      %vm464 = vcmask 883712
      %v465 = vsel %vm464, %v457, %v459
      %v466 = vsel %vm464, %v459, %v461
      %v467 = vsel %vm464, %v461, %v463
      %v471 = vrot.slane %v367, 6
      %v472 = vrot.slane %v368, 6
      %v473 = vrot.slane %v369, 6
      %v474 = vrot.slane %v370, 6
      %475 = vrot.lane.b32.xlu0 %v471, 92
      %v476 = vpop.permute.xlu0 %475
      %477 = vrot.lane.b32.xlu0 %v472, 92
      %v478 = vpop.permute.xlu0 %477
      %479 = vrot.lane.b32.xlu0 %v473, 92
      %v480 = vpop.permute.xlu0 %479
      %481 = vrot.lane.b32.xlu0 %v474, 92
      %v482 = vpop.permute.xlu0 %481
      %vm483 = vcmask 752640
      %v484 = vsel %vm483, %v476, %v478
      %v485 = vsel %vm483, %v478, %v480
      %v486 = vsel %vm483, %v480, %v482
      %v490 = vrot.slane %v367, 3
      %v491 = vrot.slane %v368, 3
      %v492 = vrot.slane %v369, 3
      %v493 = vrot.slane %v370, 3
      %494 = vrot.lane.b32.xlu0 %v490, 91
      %v495 = vpop.permute.xlu0 %494
      %496 = vrot.lane.b32.xlu0 %v491, 91
      %v497 = vpop.permute.xlu0 %496
      %498 = vrot.lane.b32.xlu0 %v492, 91
      %v499 = vpop.permute.xlu0 %498
      %500 = vrot.lane.b32.xlu0 %v493, 91
      %v501 = vpop.permute.xlu0 %500
      %vm502 = vcmask 744448
      %v503 = vsel %vm502, %v495, %v497
      %v504 = vsel %vm502, %v497, %v499
      %v505 = vsel %vm502, %v499, %v501
      %509 = vrot.lane.b32.xlu0 %v367, 90
      %v510 = vpop.permute.xlu0 %509
      %511 = vrot.lane.b32.xlu0 %v368, 90
      %v512 = vpop.permute.xlu0 %511
      %513 = vrot.lane.b32.xlu0 %v369, 90
      %v514 = vpop.permute.xlu0 %513
      %515 = vrot.lane.b32.xlu0 %v370, 90
      %v516 = vpop.permute.xlu0 %515
      %vm517 = vcmask 736256
      %v518 = vsel %vm517, %v510, %v512
      %v519 = vsel %vm517, %v512, %v514
      %v520 = vsel %vm517, %v514, %v516
      %vm524 = vcmask 1042432
      %v525 = vsel %vm524, %v367, %v390
      %v526 = vsel %vm524, %v368, %v391
      %v527 = vsel %vm524, %v369, %v392
      %vm528 = vcmask 1045504
      %v529 = vsel %vm528, %v525, %v408
      %v530 = vsel %vm528, %v526, %v409
      %v531 = vsel %vm528, %v527, %v410
      %vm532 = vcmask 1040384
      %v533 = vsel %vm532, %v408, %v427
      %v534 = vsel %vm532, %v409, %v428
      %v535 = vsel %vm532, %v410, %v429
      %vm536 = vcmask 1043456
      %v537 = vsel %vm536, %v533, %v446
      %v538 = vsel %vm536, %v534, %v447
      %v539 = vsel %vm536, %v535, %v448
      %vm540 = vcmask 1046528
      %v541 = vsel %vm540, %v537, %v465
      %v542 = vsel %vm540, %v538, %v466
      %v543 = vsel %vm540, %v539, %v467
      %vm544 = vcmask 1041408
      %v545 = vsel %vm544, %v465, %v484
      %v546 = vsel %vm544, %v466, %v485
      %v547 = vsel %vm544, %v467, %v486
      %vm548 = vcmask 1044480
      %v549 = vsel %vm548, %v545, %v503
      %v550 = vsel %vm548, %v546, %v504
      %v551 = vsel %vm548, %v547, %v505
      %v552 = vpack.c.bf16 %v541, %v529
      %v553 = vpack.c.bf16 %v542, %v530
      %v554 = vpack.c.bf16 %v543, %v531
      %v555 = vpack.c.bf16 %v518, %v549
      %v556 = vpack.c.bf16 %v519, %v550
      %v557 = vpack.c.bf16 %v520, %v551
      %vm558 = vcmask 220160
      %v560 = vsel %vm558, %v371, 0
      %v562 = vsel %vm548, 4294967295, 65535
      %v563 = vsel %vm528, %v562, 0
      %v565 = vand.u32 %v555, %v563
      %v568 = vand.u32 %v556, %v563
      %v571 = vand.u32 %v557, %v563
      %573 = vmatprep.subr.bf16.mxu0 %v553
      %574 = vmatpush1.bf16.msra.mxu0 %v552
      %575 = vmatprep.subr.bf16.mxu0 %v568
      %576 = vmatpush1.bf16.msra.mxu0 %v565
      %577 = vmatprep.subr.bf16.mxu0 0
      %578 = vmatpush1.bf16.msra.mxu0 0
      %579 = vmatprep.subr.bf16.mxu0 0
      %580 = vmatpush1.bf16.msra.mxu0 0
      %581 = vmatprep.subr.bf16.mxu0 0
      %582 = vmatpush1.bf16.msra.mxu0 0
      %583 = vmatprep.subr.bf16.mxu0 0
      %584 = vmatpush1.bf16.msra.mxu0 0
      %585 = vmatprep.subr.bf16.mxu0 0
      %586 = vmatpush1.bf16.msra.mxu0 0
      %587 = vmatprep.subr.bf16.mxu0 0
      %588 = vmatpush1.bf16.msra.mxu0 0
      %589 = vmatprep.subr.bf16.mxu0 0
      %590 = vmatpush1.bf16.msra.mxu0 0
      %591 = vmatprep.subr.bf16.mxu0 0
      %592 = vmatpush1.bf16.msra.mxu0 0
      %593 = vmatprep.subr.bf16.mxu0 0
      %594 = vmatpush1.bf16.msra.mxu0 0
      %595 = vmatprep.subr.bf16.mxu0 0
      %596 = vmatpush1.bf16.msra.mxu0 0
      %597 = vmatprep.subr.bf16.mxu0 0
      %598 = vmatpush1.bf16.msra.mxu0 0
      %599 = vmatprep.subr.bf16.mxu0 0
      %600 = vmatpush1.bf16.msra.mxu0 0
      %601 = vmatprep.subr.bf16.mxu0 0
      %602 = vmatpush1.bf16.msra.mxu0 0
      %603 = vmatprep.subr.bf16.mxu0 0
      %604 = vmatpush1.bf16.msra.mxu0 0
      %605 = vmatprep.mubr.bf16.mxu0 0
      %606 = vmatmul.mubr.bf16.gmra.mrb[0].mxu0 %v560
      %v607 = vpop.f32.mrb[0].mxu0
      %v608 = vadd.f32 0.0, %v607
      %v609 = vpop.f32.mrb[0].mxu0
      %v610 = vadd.f32 0.0, %v609
      %v611 = vpop.f32.mrb[0].mxu0
      %v612 = vpop.f32.mrb[0].mxu0
      %613 = vdwg.mxu0
      %614 = vmatprep.subr.bf16.mxu0 0
      %615 = vmatpush1.bf16.msra.mxu0 %v554
      %616 = vmatprep.subr.bf16.mxu0 0
      %617 = vmatpush1.bf16.msra.mxu0 %v571
      %618 = vmatprep.subr.bf16.mxu0 0
      %619 = vmatpush1.bf16.msra.mxu0 0
      %620 = vmatprep.subr.bf16.mxu0 0
      %621 = vmatpush1.bf16.msra.mxu0 0
      %622 = vmatprep.subr.bf16.mxu0 0
      %623 = vmatpush1.bf16.msra.mxu0 0
      %624 = vmatprep.subr.bf16.mxu0 0
      %625 = vmatpush1.bf16.msra.mxu0 0
      %626 = vmatprep.subr.bf16.mxu0 0
      %627 = vmatpush1.bf16.msra.mxu0 0
      %628 = vmatprep.subr.bf16.mxu0 0
      %629 = vmatpush1.bf16.msra.mxu0 0
      %630 = vmatprep.subr.bf16.mxu0 0
      %631 = vmatpush1.bf16.msra.mxu0 0
      %632 = vmatprep.subr.bf16.mxu0 0
      %633 = vmatpush1.bf16.msra.mxu0 0
      %634 = vmatprep.subr.bf16.mxu0 0
      %635 = vmatpush1.bf16.msra.mxu0 0
      %636 = vmatprep.subr.bf16.mxu0 0
      %637 = vmatpush1.bf16.msra.mxu0 0
      %638 = vmatprep.subr.bf16.mxu0 0
      %639 = vmatpush1.bf16.msra.mxu0 0
      %640 = vmatprep.subr.bf16.mxu0 0
      %641 = vmatpush1.bf16.msra.mxu0 0
      %642 = vmatprep.subr.bf16.mxu0 0
      %643 = vmatpush1.bf16.msra.mxu0 0
      %644 = vmatprep.subr.bf16.mxu0 0
      %645 = vmatpush1.bf16.msra.mxu0 0
      %646 = vmatprep.mubr.bf16.mxu0 0
      %647 = vmatmul.mubr.bf16.gmra.mrb[0].mxu0 %v560
      %v648 = vpop.f32.mrb[0].mxu0
      %v649 = vadd.f32 0.0, %v648
      %v650 = vpop.f32.mrb[0].mxu0
      %v651 = vpop.f32.mrb[0].mxu0
      %v652 = vpop.f32.mrb[0].mxu0
      %653 = vdwg.mxu0
      %v654 = vsel %vm230, 1, 0
      %v655 = vsel %vm231, 1, 0
      %v656 = vsel %vm232, 1, 0
      %vm657 = vcmp.eq.s32.totalorder %v654, 1
      %vm658 = vcmp.eq.s32.totalorder %v655, 1
      %vm659 = vcmp.eq.s32.totalorder %v656, 1
      %v660 = vsel %vm657, %v608, 0.0
      %v661 = vsel %vm658, %v610, 0.0
      %v662 = vsel %vm659, %v649, 0.0
      %v663 = vadd.f32 %v660, %v661
      %v664 = vadd.f32 %v663, %v662
      %665 = vadd.xlane.f32.xlu0 %v664
      %v666 = vpop.xlane.xlu0 %665
      %v667 = vmul.f32 %v666, 0.00390625
      %v668 = vmul.f32 %v660, %v660
      %v669 = vmul.f32 %v661, %v661
      %v670 = vmul.f32 %v662, %v662
      %v671 = vadd.f32 %v668, %v669
      %v672 = vadd.f32 %v671, %v670
      %673 = vadd.xlane.f32.xlu0 %v672
      %v674 = vpop.xlane.xlu0 %673
      %v675 = vmul.f32 %v674, 0.00390625
      %v676 = vmul.f32 %v667, %v667
      %v677 = vsub.f32 %v675, %v676
      %v678 = vmax.f32 %v677, 0.0
      %v679 = vsub.f32 %v660, %v667
      %v680 = vsub.f32 %v661, %v667
      %v681 = vsub.f32 %v662, %v667
      %v682 = vadd.f32 %v678, 1e-05
      %v683 = vrsqrt.pop %v682
      %v684 = vmul.f32 %v679, %v683
      %v685 = vmul.f32 %v680, %v683
      %v686 = vmul.f32 %v681, %v683
      %688 = vset.pattern.permute.xlu0 0
      %689 = vperm.xlu0 %688, %v372
      %v690 = vpop.permute.xlu0 %689
      %v692 = vmul.f32 %v684, %v690
      %v693 = vmul.f32 %v685, %v690
      %v694 = vmul.f32 %v686, %v690
      %695 = vset.pattern.permute.xlu0 1
      %696 = vperm.xlu0 %695, %v372
      %v697 = vpop.permute.xlu0 %696
      %v699 = vadd.f32 %v692, %v697
      %v700 = vadd.f32 %v693, %v697
      %v701 = vadd.f32 %v694, %v697
      %v702 = vmax.f32 %v699, 0.0
      %v703 = vmax.f32 %v700, 0.0
      %v704 = vmax.f32 %v701, 0.0
      %v705 = vpack.c.bf16 %v702, %v702
      %v706 = vpack.c.bf16 %v703, %v703
      %v707 = vpack.c.bf16 %v704, %v704
      %v711 = vunpack.c.l.b16 %v705
      %v712 = vunpack.c.l.b16 %v706
      %v713 = vunpack.c.l.b16 %v707
      %v714 = vpack.c.b16 %v712, %v711
      %v715 = vpack.c.b16 %v713, %v713
      %718 = vst [vmem:[%s170] sm:$0xff] %v714
      %719 = vst [vmem:[%s170 + $0x8] sm:$0xf] %v715
      %p720 = scmp.lt.s32.totalorder %s14, 1
      %s721 = scalar_select %p720, %s14, 1
      %s722 = smul.addr %s721, 3
      %s723 = smul.addr %s722, 4
      %s724 = scalar_lea.vmem %s3, %s723
      // Predicated region
      $region33: #{stylizing_network.5} parent=31 // pred_check
        %p725 = pneg %p100
      $region34: #{stylizing_network.5} parent=31 // pred_check_branch
        %727 = sbr.rel (%p725) target = $region36
      $region35: #{stylizing_network.5} parent=31 // pred_region
        _
      $region36: #{stylizing_network.5} parent=31 // pred_fallthru
        _
    $region32: #{stylizing_network.5} parent=5 // pred_fallthru
      _
    %p728 = scmp.le.s32.totalorder 2, %s9
    // Predicated region
    $region37: #{stylizing_network.5} parent=5 // pred_check
      %p729 = pneg %p728
    $region38: #{stylizing_network.5} parent=5 // pred_check_branch
      %731 = sbr.rel (%p729) target = $region40
    $region39: #{stylizing_network.5} parent=5 // pred_region
      %s732 = ssub.s32 %s9, 2
      // Predicated region
      $region41: #{stylizing_network.5} parent=39 // pred_check
        %p733 = pneg %p106
      $region42: #{stylizing_network.5} parent=39 // pred_check_branch
        %735 = sbr.rel (%p733) target = $region44
      $region43: #{stylizing_network.5} parent=39 // pred_region
        %p736 = scmp.lt.s32.totalorder %s15, 1
        %s737 = scalar_select %p736, %s15, 1
        %s738 = smul.addr %s737, 3
        %s739 = smul.addr %s738, 4
        %s740 = scalar_lea.vmem %s3, %s739
      $region44: #{stylizing_network.5} parent=39 // pred_fallthru
        _
    $region40: #{stylizing_network.5} parent=5 // pred_fallthru
      _
  $region6: #{stylizing_network.5} parent=0 // loop_footer
    %s13 = sadd.s32 1, %s9
  $region7: #{stylizing_network.5} parent=0 // loop_footer_branch
    %8 = sbr.rel target = $region3
  $region8: #{stylizing_network.5} parent=0 // loop_exit
    _

// kernel: stylizing_network.6
$region0: #{stylizing_network.6}
  #allocation0 [shape = 'u32[]', space=smem, size = 0x4, offset = 0x4, fixed_abs, tag = 'smem constant byte address 0x4 - core index']
  #allocation1 [shape = 'u32[144,128]{1,0:T(1,128)}', space=vmem, size = 0x12000, scoped, tag = 'internal scratch']
  #allocation2 [shape = 'f32[16,256]{1,0:T(8,128)}', space=vmem, size = 0x4000, scoped, tag = 'scratch operand']
  %s0 = inlined_call_operand.vmem [shape: bf16[2,4,8,256], index: 0, kind: input, shape index: {}]
  %s1 = inlined_call_operand.vmem [shape: bf16[16,72], index: 1, kind: input, shape index: {}]
  %s2 = inlined_call_operand.vmem [shape: f32[16,2], index: 2, kind: input, shape index: {}]
  %s3 = inlined_call_operand.vmem [shape: bf16[2,16,128], index: 3, kind: output, shape index: {}]
  %s4 = sld [smem:[#allocation0]]
  $region45: #{stylizing_network.6} parent=0
    _
  %s6 = ssub.s32 1, %s4
  %s7 = scalar_select 0, %s6, %s4
  loop: start=0, step=1, limit=4
  $region2: #{stylizing_network.6} parent=0 // loop_pre_header
    _
  $region3: #{stylizing_network.6} parent=0 // loop_header
    %s9 = sphi 0, %s13
    %p10 = scmp.ge.s32.totalorder %s9, 4
    %s19 = sphi 0, %s21
    %s22 = sphi 0, %s19
    %s23 = sphi 0, %s22
    %s39 = sphi 0, %s23
    %s43 = sphi 0, %s43
    %s45 = sphi 0, %s43
    %s46 = sphi 0, %s45
    %s60 = sphi 0, %s46
    %s64 = sphi 0, %s64
    %s66 = sphi 0, %s64
    %s67 = sphi 0, %s66
    %s81 = sphi 0, %s67
    %s87 = sphi 0, %s89
    %s90 = sphi 0, %s87
    %s91 = sphi 0, %s90
    %s107 = sphi 0, %s91
  $region4: #{stylizing_network.6} parent=0 // loop_header_branch
    %12 = sbr.rel (%p10) target = $region8
  $region5: #{stylizing_network.6} parent=0 // loop_body
    %s14 = ssub.s32 %s9, 1
    %s15 = ssub.s32 %s9, 2
    %s16 = sadd.s32 %s9, 1
    %s17 = ssub.s32 %s9, %s16
    %p18 = scmp.eq.s32.totalorder %s17, 0
    %s20 = sadd.s32 %s19, 1
    %s21 = scalar_select %p18, %s19, %s20
    %p24 = pneg %p18
    %p25 = scmp.eq.s32.totalorder %s9, 1
    %p26 = por %p24, %p25
    %p27 = scmp.ne.s32.totalorder %s19, %s22
    %p28 = scmp.eq.s32.totalorder %s9, 0
    %p29 = por %p27, %p28
    %p30 = scmp.ne.s32.totalorder %s19, %s22
    %p31 = scmp.eq.s32.totalorder %s14, 1
    %p32 = por %p30, %p31
    %p33 = scmp.ne.s32.totalorder %s22, %s23
    %p34 = scmp.eq.s32.totalorder %s14, 0
    %p35 = por %p33, %p34
    %p36 = scmp.ne.s32.totalorder %s22, %s23
    %p37 = scmp.eq.s32.totalorder %s15, 1
    %p38 = por %p36, %p37
    %p40 = scmp.ne.s32.totalorder %s23, %s39
    %p41 = scmp.eq.s32.totalorder %s15, 0
    %p42 = por %p40, %p41
    %s44 = sadd.s32 %s43, 1
    %p47 = scmp.eq.s32.totalorder %s9, 1
    %p48 = scmp.ne.s32.totalorder %s43, %s45
    %p49 = scmp.eq.s32.totalorder %s9, 0
    %p50 = por %p48, %p49
    %p51 = scmp.ne.s32.totalorder %s43, %s45
    %p52 = scmp.eq.s32.totalorder %s14, 1
    %p53 = por %p51, %p52
    %p54 = scmp.ne.s32.totalorder %s45, %s46
    %p55 = scmp.eq.s32.totalorder %s14, 0
    %p56 = por %p54, %p55
    %p57 = scmp.ne.s32.totalorder %s45, %s46
    %p58 = scmp.eq.s32.totalorder %s15, 1
    %p59 = por %p57, %p58
    %p61 = scmp.ne.s32.totalorder %s46, %s60
    %p62 = scmp.eq.s32.totalorder %s15, 0
    %p63 = por %p61, %p62
    %s65 = sadd.s32 %s64, 1
    %p68 = scmp.eq.s32.totalorder %s9, 1
    %p69 = scmp.ne.s32.totalorder %s64, %s66
    %p70 = scmp.eq.s32.totalorder %s9, 0
    %p71 = por %p69, %p70
    %p72 = scmp.ne.s32.totalorder %s64, %s66
    %p73 = scmp.eq.s32.totalorder %s14, 1
    %p74 = por %p72, %p73
    %p75 = scmp.ne.s32.totalorder %s66, %s67
    %p76 = scmp.eq.s32.totalorder %s14, 0
    %p77 = por %p75, %p76
    %p78 = scmp.ne.s32.totalorder %s66, %s67
    %p79 = scmp.eq.s32.totalorder %s15, 1
    %p80 = por %p78, %p79
    %p82 = scmp.ne.s32.totalorder %s67, %s81
    %p83 = scmp.eq.s32.totalorder %s15, 0
    %p84 = por %p82, %p83
    %s85 = ssub.s32 %s9, %s16
    %p86 = scmp.eq.s32.totalorder %s85, 0
    %s88 = sadd.s32 %s87, 1
    %s89 = scalar_select %p86, %s87, %s88
    %p92 = pneg %p86
    %p93 = scmp.eq.s32.totalorder %s9, 1
    %p94 = por %p92, %p93
    %p95 = scmp.ne.s32.totalorder %s87, %s90
    %p96 = scmp.eq.s32.totalorder %s9, 0
    %p97 = por %p95, %p96
    %p98 = scmp.ne.s32.totalorder %s87, %s90
    %p99 = scmp.eq.s32.totalorder %s14, 1
    %p100 = por %p98, %p99
    %p101 = scmp.ne.s32.totalorder %s90, %s91
    %p102 = scmp.eq.s32.totalorder %s14, 0
    %p103 = por %p101, %p102
    %p104 = scmp.ne.s32.totalorder %s90, %s91
    %p105 = scmp.eq.s32.totalorder %s15, 1
    %p106 = por %p104, %p105
    %p108 = scmp.ne.s32.totalorder %s91, %s107
    %p109 = scmp.eq.s32.totalorder %s15, 0
    %p110 = por %p108, %p109
    %p111 = scmp.le.s32.totalorder 1, %s9
    %p112 = scmp.lt.s32.totalorder %s9, 3
    %p113 = pnand %p111, %p112
    %p114 = pneg %p113
    // Predicated region
    $region9: #{stylizing_network.6} parent=5 // pred_check
      _
    $region10: #{stylizing_network.6} parent=5 // pred_check_branch
      %116 = sbr.rel (%p113) target = $region12
    $region11: #{stylizing_network.6} parent=5 // pred_region
      %s117 = ssub.s32 %s9, 1
      // Predicated region
      $region13: #{stylizing_network.6} parent=11 // pred_check
        %p118 = pneg %p56
      $region14: #{stylizing_network.6} parent=11 // pred_check_branch
        %120 = sbr.rel (%p118) target = $region16
      $region15: #{stylizing_network.6} parent=11 // pred_region
        _
      $region16: #{stylizing_network.6} parent=11 // pred_fallthru
        _
      // Predicated region
      $region17: #{stylizing_network.6} parent=11 // pred_check
        %p121 = pneg %p77
      $region18: #{stylizing_network.6} parent=11 // pred_check_branch
        %123 = sbr.rel (%p121) target = $region20
      $region19: #{stylizing_network.6} parent=11 // pred_region
        _
      $region20: #{stylizing_network.6} parent=11 // pred_fallthru
        _
    $region12: #{stylizing_network.6} parent=5 // pred_fallthru
      _
    %p124 = scmp.lt.s32.totalorder %s9, 2
    // Predicated region
    $region21: #{stylizing_network.6} parent=5 // pred_check
      %p125 = pneg %p124
    $region22: #{stylizing_network.6} parent=5 // pred_check_branch
      %127 = sbr.rel (%p125) target = $region24
    $region23: #{stylizing_network.6} parent=5 // pred_region
      // Predicated region
      $region25: #{stylizing_network.6} parent=23 // pred_check
        %p128 = pneg %p29
      $region26: #{stylizing_network.6} parent=23 // pred_check_branch
        %130 = sbr.rel (%p128) target = $region28
      $region27: #{stylizing_network.6} parent=23 // pred_region
        %p131 = scmp.lt.s32.totalorder %s9, 1
        %s132 = scalar_select %p131, %s9, 1
        %s133 = smul.addr %s132, 8
        %s134 = smul.addr %s133, 4
        %s135 = scalar_lea.vmem %s0, %s134
      $region28: #{stylizing_network.6} parent=23 // pred_fallthru
        _
    $region24: #{stylizing_network.6} parent=5 // pred_fallthru
      _
    %p136 = scmp.le.s32.totalorder 1, %s9
    %p137 = scmp.lt.s32.totalorder %s9, 3
    %p138 = pnand %p136, %p137
    %p139 = pneg %p138
    // Predicated region
    $region29: #{stylizing_network.6} parent=5 // pred_check
      _
    $region30: #{stylizing_network.6} parent=5 // pred_check_branch
      %141 = sbr.rel (%p138) target = $region32
    $region31: #{stylizing_network.6} parent=5 // pred_region
      %s142 = ssub.s32 %s9, 1
      %p143 = scmp.lt.s32.totalorder %s14, 1
      %s144 = scalar_select %p143, %s14, 1
      %s145 = smul.addr %s144, 8
      %s146 = smul.addr %s145, 4
      %s147 = scalar_lea.vmem %s0, %s146
      %p148 = pneg %p35
      %p149 = pneg %p32
      %p150 = pneg %p56
      %p151 = pneg %p53
      %p152 = pneg %p77
      %p153 = pneg %p74
      %p154 = pneg %p103
      %p155 = pneg %p100
      %p156 = scmp.lt.s32.totalorder %s14, 1
      %s157 = scalar_select %p156, %s14, 1
      %s158 = smul.addr %s157, 2
      %s159 = smul.addr %s158, 4
      %s160 = scalar_lea.vmem %s3, %s159
      %p161 = scmp.lt.s32.totalorder %s14, 1
      %s162 = scalar_select %p161, %s14, 1
      %s163 = smul.addr %s162, 8
      %s164 = smul.addr %s163, 4
      %s165 = scalar_lea.vmem %s0, %s164
      %p166 = scmp.lt.s32.totalorder %s14, 1
      %s167 = scalar_select %p166, %s14, 1
      %s168 = smul.addr %s167, 2
      %s169 = smul.addr %s168, 4
      %s170 = scalar_lea.vmem %s3, %s169
      %v172 = vlaneseq
      %v173 = vand.u32 %v172, 127
      %vm174 = vcmp.lt.s32.totalorder %v173, 0
      %v175 = vsub.s32 0, %v173
      %v176 = vsel %vm174, %v175, %v173
      %v177 = vmul.u32.u64.compose %v176, 3435973837
      %v178 = vextract.low.u32 %v177
      %v179 = vextract.high.u32 %v177
      %v180 = vshrl.u32 %v179, 3
      %v181 = vmul.u32 %v180, 10
      %v182 = vsub.s32 %v176, %v181
      %v183 = vsub.s32 0, %v182
      %v184 = vsel %vm174, %v183, %v182
      %vm185 = vcmp.ne.s32.totalorder %v184, 0
      %vm186 = vcmp.lt.s32.totalorder %v184, 0
      %vm187 = vmand %vm186, %vm185
      %v188 = vadd.s32 %v184, 10
      %v189 = vsel %vm187, %v188, %v184
      %vm190 = vcmp.lt.s32.totalorder %v189, 8
      %vm191 = vcmp.lt.s32.totalorder %v173, 80
      %vm192 = vmand %vm190, %vm191
      %v193 = vld [vmem:[%s165] sm:$0xff]
      %v194 = vld [vmem:[%s165 + $0x8] sm:$0xff]
      %v195 = vld [vmem:[%s165 + $0x10] sm:$0xff]
      %v196 = vld [vmem:[%s165 + $0x18] sm:$0xff]
      %v197 = vld [vmem:[%s1] sm:$0xf]
      %v198 = vld [vmem:[%s1 + $0x4] sm:$0xf]
      %v199 = vld [vmem:[%s2] sm:$0xff]
      %v200 = vld [vmem:[%s2 + $0x8] sm:$0xff]
      %v202 = vunpack.c.l.b16 %v194
      %v203 = vpack.c.b16 %v202, %v202
      %v205 = vunpack.c.l.b16 %v193
      %v206 = vunpack.c.h.b16 %v193
      %v207 = vpack.c.b16 %v205, %v205
      %v208 = vpack.c.b16 %v206, %v206
      %209 = vrot.lane.b32.xlu0 %v207, 127
      %v210 = vpop.permute.xlu0 %209
      %211 = vrot.lane.b32.xlu0 %v208, 127
      %v212 = vpop.permute.xlu0 %211
      %vm213 = vcmask 1039360
      %v214 = vsel %vm213, %v210, %v212
      %v216 = vunpack.c.l.b16 %v195
      %v217 = vpack.c.b16 %v216, %v216
      %v218 = vunpack.c.h.b16 %v195
      %v219 = vpack.c.b16 %v218, %v218
      %220 = vrot.lane.b32.xlu0 %v217, 127
      %v221 = vpop.permute.xlu0 %220
      %222 = vrot.lane.b32.xlu0 %v219, 127
      %v223 = vpop.permute.xlu0 %222
      %v224 = vsel %vm213, %v221, %v223
      %225 = vrot.lane.b32.xlu0 %v207, 118
      %v226 = vpop.permute.xlu0 %225
      %227 = vrot.lane.b32.xlu0 %v208, 118
      %v228 = vpop.permute.xlu0 %227
      %vm229 = vcmask 965632
      %v230 = vsel %vm229, %v226, %v228
      %v231 = vunpack.c.h.b16 %v194
      %v232 = vpack.c.b16 %v231, %v231
      %233 = vrot.lane.b32.xlu0 %v203, 118
      %v234 = vpop.permute.xlu0 %233
      %235 = vrot.lane.b32.xlu0 %v232, 118
      %v236 = vpop.permute.xlu0 %235
      %v237 = vsel %vm229, %v234, %v236
      %238 = vrot.lane.b32.xlu0 %v207, 117
      %v239 = vpop.permute.xlu0 %238
      %240 = vrot.lane.b32.xlu0 %v208, 117
      %v241 = vpop.permute.xlu0 %240
      %vm242 = vcmask 957440
      %v243 = vsel %vm242, %v239, %v241
      %vm244 = vcmask 1043456
      %v247 = vsel %vm244, %v193, %v203
      %v251 = vsel %vm244, %v214, %v217
      %v255 = vsel %vm244, %v196, %v224
      %v259 = vsel %vm244, %v230, %v237
      %v263 = vunpack.c.l.b16 %v197
      %v264 = vunpack.c.l.b16 %v198
      %v265 = vpack.c.b16 %v264, %v263
      %vm266 = vcmask 588800
      %v268 = vsel %vm266, %v265, 0
      %v271 = vsel %vm244, %v243, 0
      %273 = vmatprep.subr.bf16.mxu0 0
      %274 = vmatpush1.bf16.msra.mxu0 %v247
      %275 = vmatprep.subr.bf16.mxu0 0
      %276 = vmatpush1.bf16.msra.mxu0 %v251
      %277 = vmatprep.subr.bf16.mxu0 0
      %278 = vmatpush1.bf16.msra.mxu0 %v255
      %279 = vmatprep.subr.bf16.mxu0 0
      %280 = vmatpush1.bf16.msra.mxu0 %v259
      %281 = vmatprep.subr.bf16.mxu0 0
      %282 = vmatpush1.bf16.msra.mxu0 %v271
      %283 = vmatprep.subr.bf16.mxu0 0
      %284 = vmatpush1.bf16.msra.mxu0 0
      %285 = vmatprep.subr.bf16.mxu0 0
      %286 = vmatpush1.bf16.msra.mxu0 0
      %287 = vmatprep.subr.bf16.mxu0 0
      %288 = vmatpush1.bf16.msra.mxu0 0
      %289 = vmatprep.subr.bf16.mxu0 0
      %290 = vmatpush1.bf16.msra.mxu0 0
      %291 = vmatprep.subr.bf16.mxu0 0
      %292 = vmatpush1.bf16.msra.mxu0 0
      %293 = vmatprep.subr.bf16.mxu0 0
      %294 = vmatpush1.bf16.msra.mxu0 0
      %295 = vmatprep.subr.bf16.mxu0 0
      %296 = vmatpush1.bf16.msra.mxu0 0
      %297 = vmatprep.subr.bf16.mxu0 0
      %298 = vmatpush1.bf16.msra.mxu0 0
      %299 = vmatprep.subr.bf16.mxu0 0
      %300 = vmatpush1.bf16.msra.mxu0 0
      %301 = vmatprep.subr.bf16.mxu0 0
      %302 = vmatpush1.bf16.msra.mxu0 0
      %303 = vmatprep.subr.bf16.mxu0 0
      %304 = vmatpush1.bf16.msra.mxu0 0
      %305 = vmatprep.mubr.bf16.mxu0 0
      %306 = vmatmul.mubr.bf16.gmra.mrb[0].mxu0 %v268
      %v307 = vpop.f32.mrb[0].mxu0
      %v308 = vadd.f32 0.0, %v307
      %v309 = vpop.f32.mrb[0].mxu0
      %v310 = vpop.f32.mrb[0].mxu0
      %v311 = vadd.f32 0.0, %v310
      %v312 = vpop.f32.mrb[0].mxu0
      %313 = vdwg.mxu0
      %v314 = vsel %vm192, 1, 0
      %vm315 = vcmp.eq.s32.totalorder %v314, 1
      %v316 = vsel %vm315, %v308, 0.0
      %v317 = vsel %vm315, %v311, 0.0
      %318 = vadd.xlane.f32.xlu0 %v316
      %v319 = vpop.xlane.xlu0 %318
      %320 = vadd.xlane.f32.xlu0 %v317
      %v321 = vpop.xlane.xlu0 %320
      %v322 = vmul.f32 %v319, 0.015625
      %v323 = vmul.f32 %v321, 0.015625
      %v324 = vmul.f32 %v316, %v316
      %v325 = vmul.f32 %v317, %v317
      %326 = vadd.xlane.f32.xlu0 %v324
      %v327 = vpop.xlane.xlu0 %326
      %328 = vadd.xlane.f32.xlu0 %v325
      %v329 = vpop.xlane.xlu0 %328
      %v330 = vmul.f32 %v327, 0.015625
      %v331 = vmul.f32 %v329, 0.015625
      %v332 = vmul.f32 %v322, %v322
      %v333 = vmul.f32 %v323, %v323
      %v334 = vsub.f32 %v330, %v332
      %v335 = vsub.f32 %v331, %v333
      %v336 = vmax.f32 %v334, 0.0
      %v337 = vmax.f32 %v335, 0.0
      %v338 = vsub.f32 %v316, %v322
      %v339 = vsub.f32 %v317, %v323
      %v340 = vadd.f32 %v336, 1e-05
      %v341 = vadd.f32 %v337, 1e-05
      %v342 = vrsqrt.pop %v340
      %v343 = vrsqrt.pop %v341
      %v344 = vmul.f32 %v338, %v342
      %v345 = vmul.f32 %v339, %v343
      %347 = vset.pattern.permute.xlu0 0
      %348 = vperm.xlu0 %347, %v199
      %v349 = vpop.permute.xlu0 %348
      %352 = vset.pattern.permute.xlu0 0
      %353 = vperm.xlu0 %352, %v200
      %v354 = vpop.permute.xlu0 %353
      %v356 = vmul.f32 %v344, %v349
      %v357 = vmul.f32 %v345, %v354
      %358 = vset.pattern.permute.xlu0 1
      %359 = vperm.xlu0 %358, %v199
      %v360 = vpop.permute.xlu0 %359
      %362 = vset.pattern.permute.xlu0 1
      %363 = vperm.xlu0 %362, %v200
      %v364 = vpop.permute.xlu0 %363
      %v366 = vadd.f32 %v356, %v360
      %v367 = vadd.f32 %v357, %v364
      %v368 = vmax.f32 %v366, 0.0
      %v369 = vmax.f32 %v367, 0.0
      %v370 = vpack.c.bf16 %v369, %v368
      %v372 = vunpack.c.l.b16 %v370
      %v373 = vunpack.c.h.b16 %v370
      %v374 = vpack.c.b16 %v372, %v372
      %v375 = vpack.c.b16 %v373, %v373
      %378 = vst [vmem:[%s170] sm:$0xf] %v374
      %379 = vst [vmem:[%s170 + $0x4] sm:$0xf] %v375
      %p380 = scmp.lt.s32.totalorder %s14, 1
      %s381 = scalar_select %p380, %s14, 1
      %s382 = smul.addr %s381, 2
      %s383 = smul.addr %s382, 4
      %s384 = scalar_lea.vmem %s3, %s383
      // Predicated region
      $region33: #{stylizing_network.6} parent=31 // pred_check
        %p385 = pneg %p100
      $region34: #{stylizing_network.6} parent=31 // pred_check_branch
        %387 = sbr.rel (%p385) target = $region36
      $region35: #{stylizing_network.6} parent=31 // pred_region
        _
      $region36: #{stylizing_network.6} parent=31 // pred_fallthru
        _
    $region32: #{stylizing_network.6} parent=5 // pred_fallthru
      _
    %p388 = scmp.le.s32.totalorder 2, %s9
    // Predicated region
    $region37: #{stylizing_network.6} parent=5 // pred_check
      %p389 = pneg %p388
    $region38: #{stylizing_network.6} parent=5 // pred_check_branch
      %391 = sbr.rel (%p389) target = $region40
    $region39: #{stylizing_network.6} parent=5 // pred_region
      %s392 = ssub.s32 %s9, 2
      // Predicated region
      $region41: #{stylizing_network.6} parent=39 // pred_check
        %p393 = pneg %p106
      $region42: #{stylizing_network.6} parent=39 // pred_check_branch
        %395 = sbr.rel (%p393) target = $region44
      $region43: #{stylizing_network.6} parent=39 // pred_region
        %p396 = scmp.lt.s32.totalorder %s15, 1
        %s397 = scalar_select %p396, %s15, 1
        %s398 = smul.addr %s397, 2
        %s399 = smul.addr %s398, 4
        %s400 = scalar_lea.vmem %s3, %s399
      $region44: #{stylizing_network.6} parent=39 // pred_fallthru
        _
    $region40: #{stylizing_network.6} parent=5 // pred_fallthru
      _
  $region6: #{stylizing_network.6} parent=0 // loop_footer
    %s13 = sadd.s32 1, %s9
  $region7: #{stylizing_network.6} parent=0 // loop_footer_branch
    %8 = sbr.rel target = $region3
  $region8: #{stylizing_network.6} parent=0 // loop_exit
    _

// kernel: stylizing_network.8
$region0: #{stylizing_network.8}
  #allocation0 [shape = 'u32[]', space=smem, size = 0x4, offset = 0x4, fixed_abs, tag = 'smem constant byte address 0x4 - core index']
  #allocation1 [shape = 'u32[144,128]{1,0:T(1,128)}', space=vmem, size = 0x12000, scoped, tag = 'internal scratch']
  #allocation2 [shape = 'f32[32,256]{1,0:T(8,128)}', space=vmem, size = 0x8000, scoped, tag = 'scratch operand']
  %s0 = inlined_call_operand.vmem [shape: bf16[2,32,128], index: 0, kind: input, shape index: {}]
  %s1 = inlined_call_operand.vmem [shape: bf16[16,288], index: 1, kind: input, shape index: {}]
  %s2 = inlined_call_operand.vmem [shape: f32[16,2], index: 2, kind: input, shape index: {}]
  %s3 = inlined_call_operand.vmem [shape: bf16[2,16,128], index: 3, kind: output, shape index: {}]
  %s4 = sld [smem:[#allocation0]]
  $region45: #{stylizing_network.8} parent=0
    _
  %s6 = ssub.s32 1, %s4
  %s7 = scalar_select 0, %s6, %s4
  loop: start=0, step=1, limit=4
  $region2: #{stylizing_network.8} parent=0 // loop_pre_header
    _
  $region3: #{stylizing_network.8} parent=0 // loop_header
    %s9 = sphi 0, %s13
    %p10 = scmp.ge.s32.totalorder %s9, 4
    %s19 = sphi 0, %s21
    %s22 = sphi 0, %s19
    %s23 = sphi 0, %s22
    %s39 = sphi 0, %s23
    %s43 = sphi 0, %s43
    %s45 = sphi 0, %s43
    %s46 = sphi 0, %s45
    %s60 = sphi 0, %s46
    %s64 = sphi 0, %s64
    %s66 = sphi 0, %s64
    %s67 = sphi 0, %s66
    %s81 = sphi 0, %s67
    %s87 = sphi 0, %s89
    %s90 = sphi 0, %s87
    %s91 = sphi 0, %s90
    %s107 = sphi 0, %s91
  $region4: #{stylizing_network.8} parent=0 // loop_header_branch
    %12 = sbr.rel (%p10) target = $region8
  $region5: #{stylizing_network.8} parent=0 // loop_body
    %s14 = ssub.s32 %s9, 1
    %s15 = ssub.s32 %s9, 2
    %s16 = sadd.s32 %s9, 1
    %s17 = ssub.s32 %s9, %s16
    %p18 = scmp.eq.s32.totalorder %s17, 0
    %s20 = sadd.s32 %s19, 1
    %s21 = scalar_select %p18, %s19, %s20
    %p24 = pneg %p18
    %p25 = scmp.eq.s32.totalorder %s9, 1
    %p26 = por %p24, %p25
    %p27 = scmp.ne.s32.totalorder %s19, %s22
    %p28 = scmp.eq.s32.totalorder %s9, 0
    %p29 = por %p27, %p28
    %p30 = scmp.ne.s32.totalorder %s19, %s22
    %p31 = scmp.eq.s32.totalorder %s14, 1
    %p32 = por %p30, %p31
    %p33 = scmp.ne.s32.totalorder %s22, %s23
    %p34 = scmp.eq.s32.totalorder %s14, 0
    %p35 = por %p33, %p34
    %p36 = scmp.ne.s32.totalorder %s22, %s23
    %p37 = scmp.eq.s32.totalorder %s15, 1
    %p38 = por %p36, %p37
    %p40 = scmp.ne.s32.totalorder %s23, %s39
    %p41 = scmp.eq.s32.totalorder %s15, 0
    %p42 = por %p40, %p41
    %s44 = sadd.s32 %s43, 1
    %p47 = scmp.eq.s32.totalorder %s9, 1
    %p48 = scmp.ne.s32.totalorder %s43, %s45
    %p49 = scmp.eq.s32.totalorder %s9, 0
    %p50 = por %p48, %p49
    %p51 = scmp.ne.s32.totalorder %s43, %s45
    %p52 = scmp.eq.s32.totalorder %s14, 1
    %p53 = por %p51, %p52
    %p54 = scmp.ne.s32.totalorder %s45, %s46
    %p55 = scmp.eq.s32.totalorder %s14, 0
    %p56 = por %p54, %p55
    %p57 = scmp.ne.s32.totalorder %s45, %s46
    %p58 = scmp.eq.s32.totalorder %s15, 1
    %p59 = por %p57, %p58
    %p61 = scmp.ne.s32.totalorder %s46, %s60
    %p62 = scmp.eq.s32.totalorder %s15, 0
    %p63 = por %p61, %p62
    %s65 = sadd.s32 %s64, 1
    %p68 = scmp.eq.s32.totalorder %s9, 1
    %p69 = scmp.ne.s32.totalorder %s64, %s66
    %p70 = scmp.eq.s32.totalorder %s9, 0
    %p71 = por %p69, %p70
    %p72 = scmp.ne.s32.totalorder %s64, %s66
    %p73 = scmp.eq.s32.totalorder %s14, 1
    %p74 = por %p72, %p73
    %p75 = scmp.ne.s32.totalorder %s66, %s67
    %p76 = scmp.eq.s32.totalorder %s14, 0
    %p77 = por %p75, %p76
    %p78 = scmp.ne.s32.totalorder %s66, %s67
    %p79 = scmp.eq.s32.totalorder %s15, 1
    %p80 = por %p78, %p79
    %p82 = scmp.ne.s32.totalorder %s67, %s81
    %p83 = scmp.eq.s32.totalorder %s15, 0
    %p84 = por %p82, %p83
    %s85 = ssub.s32 %s9, %s16
    %p86 = scmp.eq.s32.totalorder %s85, 0
    %s88 = sadd.s32 %s87, 1
    %s89 = scalar_select %p86, %s87, %s88
    %p92 = pneg %p86
    %p93 = scmp.eq.s32.totalorder %s9, 1
    %p94 = por %p92, %p93
    %p95 = scmp.ne.s32.totalorder %s87, %s90
    %p96 = scmp.eq.s32.totalorder %s9, 0
    %p97 = por %p95, %p96
    %p98 = scmp.ne.s32.totalorder %s87, %s90
    %p99 = scmp.eq.s32.totalorder %s14, 1
    %p100 = por %p98, %p99
    %p101 = scmp.ne.s32.totalorder %s90, %s91
    %p102 = scmp.eq.s32.totalorder %s14, 0
    %p103 = por %p101, %p102
    %p104 = scmp.ne.s32.totalorder %s90, %s91
    %p105 = scmp.eq.s32.totalorder %s15, 1
    %p106 = por %p104, %p105
    %p108 = scmp.ne.s32.totalorder %s91, %s107
    %p109 = scmp.eq.s32.totalorder %s15, 0
    %p110 = por %p108, %p109
    %p111 = scmp.le.s32.totalorder 1, %s9
    %p112 = scmp.lt.s32.totalorder %s9, 3
    %p113 = pnand %p111, %p112
    %p114 = pneg %p113
    // Predicated region
    $region9: #{stylizing_network.8} parent=5 // pred_check
      _
    $region10: #{stylizing_network.8} parent=5 // pred_check_branch
      %116 = sbr.rel (%p113) target = $region12
    $region11: #{stylizing_network.8} parent=5 // pred_region
      %s117 = ssub.s32 %s9, 1
      // Predicated region
      $region13: #{stylizing_network.8} parent=11 // pred_check
        %p118 = pneg %p56
      $region14: #{stylizing_network.8} parent=11 // pred_check_branch
        %120 = sbr.rel (%p118) target = $region16
      $region15: #{stylizing_network.8} parent=11 // pred_region
        _
      $region16: #{stylizing_network.8} parent=11 // pred_fallthru
        _
      // Predicated region
      $region17: #{stylizing_network.8} parent=11 // pred_check
        %p121 = pneg %p77
      $region18: #{stylizing_network.8} parent=11 // pred_check_branch
        %123 = sbr.rel (%p121) target = $region20
      $region19: #{stylizing_network.8} parent=11 // pred_region
        _
      $region20: #{stylizing_network.8} parent=11 // pred_fallthru
        _
    $region12: #{stylizing_network.8} parent=5 // pred_fallthru
      _
    %p124 = scmp.lt.s32.totalorder %s9, 2
    // Predicated region
    $region21: #{stylizing_network.8} parent=5 // pred_check
      %p125 = pneg %p124
    $region22: #{stylizing_network.8} parent=5 // pred_check_branch
      %127 = sbr.rel (%p125) target = $region24
    $region23: #{stylizing_network.8} parent=5 // pred_region
      // Predicated region
      $region25: #{stylizing_network.8} parent=23 // pred_check
        %p128 = pneg %p29
      $region26: #{stylizing_network.8} parent=23 // pred_check_branch
        %130 = sbr.rel (%p128) target = $region28
      $region27: #{stylizing_network.8} parent=23 // pred_region
        %p131 = scmp.lt.s32.totalorder %s9, 1
        %s132 = scalar_select %p131, %s9, 1
        %s133 = smul.addr %s132, 4
        %s134 = smul.addr %s133, 4
        %s135 = scalar_lea.vmem %s0, %s134
      $region28: #{stylizing_network.8} parent=23 // pred_fallthru
        _
    $region24: #{stylizing_network.8} parent=5 // pred_fallthru
      _
    %p136 = scmp.le.s32.totalorder 1, %s9
    %p137 = scmp.lt.s32.totalorder %s9, 3
    %p138 = pnand %p136, %p137
    %p139 = pneg %p138
    // Predicated region
    $region29: #{stylizing_network.8} parent=5 // pred_check
      _
    $region30: #{stylizing_network.8} parent=5 // pred_check_branch
      %141 = sbr.rel (%p138) target = $region32
    $region31: #{stylizing_network.8} parent=5 // pred_region
      %s142 = ssub.s32 %s9, 1
      %p143 = scmp.lt.s32.totalorder %s14, 1
      %s144 = scalar_select %p143, %s14, 1
      %s145 = smul.addr %s144, 4
      %s146 = smul.addr %s145, 4
      %s147 = scalar_lea.vmem %s0, %s146
      %p148 = pneg %p35
      %p149 = pneg %p32
      %p150 = pneg %p56
      %p151 = pneg %p53
      %p152 = pneg %p77
      %p153 = pneg %p74
      %p154 = pneg %p103
      %p155 = pneg %p100
      %p156 = scmp.lt.s32.totalorder %s14, 1
      %s157 = scalar_select %p156, %s14, 1
      %s158 = smul.addr %s157, 2
      %s159 = smul.addr %s158, 4
      %s160 = scalar_lea.vmem %s3, %s159
      %p161 = scmp.lt.s32.totalorder %s14, 1
      %s162 = scalar_select %p161, %s14, 1
      %s163 = smul.addr %s162, 4
      %s164 = smul.addr %s163, 4
      %s165 = scalar_lea.vmem %s0, %s164
      %p166 = scmp.lt.s32.totalorder %s14, 1
      %s167 = scalar_select %p166, %s14, 1
      %s168 = smul.addr %s167, 2
      %s169 = smul.addr %s168, 4
      %s170 = scalar_lea.vmem %s3, %s169
      %v172 = vlaneseq
      %v173 = vand.u32 %v172, 127
      %vm174 = vcmp.lt.s32.totalorder %v173, 0
      %v175 = vsub.s32 0, %v173
      %v176 = vsel %vm174, %v175, %v173
      %v177 = vmul.u32.u64.compose %v176, 3435973837
      %v178 = vextract.low.u32 %v177
      %v179 = vextract.high.u32 %v177
      %v180 = vshrl.u32 %v179, 3
      %v181 = vmul.u32 %v180, 10
      %v182 = vsub.s32 %v176, %v181
      %v183 = vsub.s32 0, %v182
      %v184 = vsel %vm174, %v183, %v182
      %vm185 = vcmp.ne.s32.totalorder %v184, 0
      %vm186 = vcmp.lt.s32.totalorder %v184, 0
      %vm187 = vmand %vm186, %vm185
      %v188 = vadd.s32 %v184, 10
      %v189 = vsel %vm187, %v188, %v184
      %vm190 = vcmp.lt.s32.totalorder %v189, 8
      %vm191 = vcmp.lt.s32.totalorder %v173, 80
      %vm192 = vmand %vm190, %vm191
      %193 = vst [vmem:[#allocation2] sm:$0xff] 0.0
      %194 = vst [vmem:[#allocation2 + $0x8] sm:$0xff] 0.0
      %195 = vst [vmem:[#allocation2 + $0x10] sm:$0xff] 0.0
      %196 = vst [vmem:[#allocation2 + $0x18] sm:$0xff] 0.0
      %197 = vst [vmem:[#allocation2 + $0x20] sm:$0xff] 0.0
      %198 = vst [vmem:[#allocation2 + $0x28] sm:$0xff] 0.0
      %199 = vst [vmem:[#allocation2 + $0x30] sm:$0xff] 0.0
      %200 = vst [vmem:[#allocation2 + $0x38] sm:$0xff] 0.0
      %v201 = vadd.s32 %v173, 128
      %vm202 = vcmp.lt.s32.totalorder %v201, 0
      %v203 = vsub.s32 0, %v201
      %v204 = vsel %vm202, %v203, %v201
      %v205 = vmul.u32.u64.compose %v204, 3435973837
      %v206 = vextract.low.u32 %v205
      %v207 = vextract.high.u32 %v205
      %v208 = vshrl.u32 %v207, 3
      %v209 = vmul.u32 %v208, 10
      %v210 = vsub.s32 %v204, %v209
      %v211 = vsub.s32 0, %v210
      %v212 = vsel %vm202, %v211, %v210
      %vm213 = vcmp.ne.s32.totalorder %v212, 0
      %vm214 = vcmp.lt.s32.totalorder %v212, 0
      %vm215 = vmand %vm214, %vm213
      %v216 = vadd.s32 %v212, 10
      %v217 = vsel %vm215, %v216, %v212
      %vm218 = vcmp.eq.s32.totalorder %v189, 0
      %vm219 = vcmp.eq.s32.totalorder %v217, 0
      %vm220 = vcmp.eq.s32.totalorder %v189, 9
      %vm221 = vcmp.eq.s32.totalorder %v217, 9
      %v222 = vld [vmem:[%s165] sm:$0xf]
      %v223 = vld [vmem:[%s165 + $0x4] sm:$0xf]
      %v224 = vld [vmem:[%s165 + $0x8] sm:$0xf]
      %v225 = vld [vmem:[%s165 + $0xc] sm:$0xf]
      %v226 = vunpack.c.l.bf16 %v222
      %v227 = vunpack.c.l.bf16 %v223
      %v228 = vunpack.c.l.bf16 %v224
      %v229 = vunpack.c.l.bf16 %v225
      %234 = vrot.lane.b32.xlu0 %v226, 11
      %v235 = vpop.permute.xlu0 %234
      %236 = vrot.lane.b32.xlu0 %v227, 11
      %v237 = vpop.permute.xlu0 %236
      %238 = vrot.lane.b32.xlu0 %v228, 11
      %v239 = vpop.permute.xlu0 %238
      %240 = vrot.lane.b32.xlu0 %v229, 11
      %v241 = vpop.permute.xlu0 %240
      %vm246 = vcmask 1047640
      %247 = vst.msk [vmem:[#allocation2] sm:$0xff] %vm246, %v235
      %vm248 = vcmask 89088
      %249 = vst.msk [vmem:[#allocation2 + $0x8] sm:$0xff] %vm248, %v235
      %250 = vst.msk [vmem:[#allocation2 + $0x10] sm:$0xff] %vm246, %v237
      %251 = vst.msk [vmem:[#allocation2 + $0x18] sm:$0xff] %vm248, %v237
      %252 = vst.msk [vmem:[#allocation2 + $0x20] sm:$0xff] %vm246, %v239
      %253 = vst.msk [vmem:[#allocation2 + $0x28] sm:$0xff] %vm248, %v239
      %254 = vst.msk [vmem:[#allocation2 + $0x30] sm:$0xff] %vm246, %v241
      %255 = vst.msk [vmem:[#allocation2 + $0x38] sm:$0xff] %vm248, %v241
      %v256 = vld [vmem:[#allocation2] sm:$0xff]
      %v257 = vld [vmem:[#allocation2 + $0x8] sm:$0xff]
      %v258 = vld [vmem:[#allocation2 + $0x10] sm:$0xff]
      %v259 = vld [vmem:[#allocation2 + $0x18] sm:$0xff]
      %v260 = vld [vmem:[#allocation2 + $0x20] sm:$0xff]
      %v261 = vld [vmem:[#allocation2 + $0x28] sm:$0xff]
      %v262 = vld [vmem:[#allocation2 + $0x30] sm:$0xff]
      %v263 = vld [vmem:[#allocation2 + $0x38] sm:$0xff]
      %272 = vrot.lane.b32.xlu0 %v256, 126
      %v273 = vpop.permute.xlu0 %272
      %274 = vrot.lane.b32.xlu0 %v257, 126
      %v275 = vpop.permute.xlu0 %274
      %276 = vrot.lane.b32.xlu0 %v258, 126
      %v277 = vpop.permute.xlu0 %276
      %278 = vrot.lane.b32.xlu0 %v259, 126
      %v279 = vpop.permute.xlu0 %278
      %280 = vrot.lane.b32.xlu0 %v260, 126
      %v281 = vpop.permute.xlu0 %280
      %282 = vrot.lane.b32.xlu0 %v261, 126
      %v283 = vpop.permute.xlu0 %282
      %284 = vrot.lane.b32.xlu0 %v262, 126
      %v285 = vpop.permute.xlu0 %284
      %286 = vrot.lane.b32.xlu0 %v263, 126
      %v287 = vpop.permute.xlu0 %286
      %vm288 = vcmask 1031168
      %v289 = vsel %vm288, %v273, %v275
      %v290 = vsel %vm288, %v277, %v279
      %v291 = vsel %vm288, %v281, %v283
      %v292 = vsel %vm288, %v285, %v287
      %v301 = vsel %vm288, %v275, 0.0
      %v302 = vsel %vm288, %v279, 0.0
      %v303 = vsel %vm288, %v283, 0.0
      %v304 = vsel %vm288, %v287, 0.0
      %v305 = vsel %vm218, 1, 0
      %v306 = vsel %vm219, 1, 0
      %vm307 = vcmp.eq.s32.totalorder %v305, 1
      %vm308 = vcmp.eq.s32.totalorder %v306, 1
      %309 = vst.msk [vmem:[#allocation2] sm:$0xff] %vm307, %v289
      %310 = vst.msk [vmem:[#allocation2 + $0x8] sm:$0xff] %vm308, %v301
      %311 = vst.msk [vmem:[#allocation2 + $0x10] sm:$0xff] %vm307, %v290
      %312 = vst.msk [vmem:[#allocation2 + $0x18] sm:$0xff] %vm308, %v302
      %313 = vst.msk [vmem:[#allocation2 + $0x20] sm:$0xff] %vm307, %v291
      %314 = vst.msk [vmem:[#allocation2 + $0x28] sm:$0xff] %vm308, %v303
      %315 = vst.msk [vmem:[#allocation2 + $0x30] sm:$0xff] %vm307, %v292
      %316 = vst.msk [vmem:[#allocation2 + $0x38] sm:$0xff] %vm308, %v304
      %317 = vrot.lane.b32.xlu0 %v256, 2
      %v318 = vpop.permute.xlu0 %317
      %319 = vrot.lane.b32.xlu0 %v257, 2
      %v320 = vpop.permute.xlu0 %319
      %321 = vrot.lane.b32.xlu0 %v258, 2
      %v322 = vpop.permute.xlu0 %321
      %323 = vrot.lane.b32.xlu0 %v259, 2
      %v324 = vpop.permute.xlu0 %323
      %325 = vrot.lane.b32.xlu0 %v260, 2
      %v326 = vpop.permute.xlu0 %325
      %327 = vrot.lane.b32.xlu0 %v261, 2
      %v328 = vpop.permute.xlu0 %327
      %329 = vrot.lane.b32.xlu0 %v262, 2
      %v330 = vpop.permute.xlu0 %329
      %331 = vrot.lane.b32.xlu0 %v263, 2
      %v332 = vpop.permute.xlu0 %331
      %vm333 = vcmask 15360
      %v334 = vsel %vm333, %v318, %v320
      %v335 = vsel %vm333, %v322, %v324
      %v336 = vsel %vm333, %v326, %v328
      %v337 = vsel %vm333, %v330, %v332
      %v346 = vsel %vm333, 0.0, %v318
      %v347 = vsel %vm333, 0.0, %v322
      %v348 = vsel %vm333, 0.0, %v326
      %v349 = vsel %vm333, 0.0, %v330
      %v350 = vsel %vm220, 1, 0
      %v351 = vsel %vm221, 1, 0
      %vm352 = vcmp.eq.s32.totalorder %v350, 1
      %vm353 = vcmp.eq.s32.totalorder %v351, 1
      %354 = vst.msk [vmem:[#allocation2] sm:$0xff] %vm352, %v346
      %355 = vst.msk [vmem:[#allocation2 + $0x8] sm:$0xff] %vm353, %v334
      %356 = vst.msk [vmem:[#allocation2 + $0x10] sm:$0xff] %vm352, %v347
      %357 = vst.msk [vmem:[#allocation2 + $0x18] sm:$0xff] %vm353, %v335
      %358 = vst.msk [vmem:[#allocation2 + $0x20] sm:$0xff] %vm352, %v348
      %359 = vst.msk [vmem:[#allocation2 + $0x28] sm:$0xff] %vm353, %v336
      %360 = vst.msk [vmem:[#allocation2 + $0x30] sm:$0xff] %vm352, %v349
      %361 = vst.msk [vmem:[#allocation2 + $0x38] sm:$0xff] %vm353, %v337
      %v362 = vld [vmem:[#allocation2] sm:$0xff]
      %v363 = vld [vmem:[#allocation2 + $0x10] sm:$0xff]
      %v364 = vld [vmem:[#allocation2 + $0x20] sm:$0xff]
      %v365 = vld [vmem:[#allocation2 + $0x30] sm:$0xff]
      %370 = vrot.lane.b32.xlu0 %v362, 108
      %v371 = vpop.permute.xlu0 %370
      %372 = vrot.lane.b32.xlu0 %v363, 108
      %v373 = vpop.permute.xlu0 %372
      %374 = vrot.lane.b32.xlu0 %v364, 108
      %v375 = vpop.permute.xlu0 %374
      %376 = vrot.lane.b32.xlu0 %v365, 108
      %v377 = vpop.permute.xlu0 %376
      %vm382 = vcmask 80896
      %383 = vst.msk [vmem:[#allocation2] sm:$0xff] %vm382, %v371
      %384 = vst.msk [vmem:[#allocation2 + $0x10] sm:$0xff] %vm382, %v373
      %385 = vst.msk [vmem:[#allocation2 + $0x20] sm:$0xff] %vm382, %v375
      %386 = vst.msk [vmem:[#allocation2 + $0x30] sm:$0xff] %vm382, %v377
      %v387 = vld [vmem:[#allocation2] sm:$0xff]
      %v388 = vld [vmem:[#allocation2 + $0x10] sm:$0xff]
      %v389 = vld [vmem:[#allocation2 + $0x20] sm:$0xff]
      %v390 = vld [vmem:[#allocation2 + $0x30] sm:$0xff]
      %395 = vrot.lane.b32.xlu0 %v387, 20
      %v396 = vpop.permute.xlu0 %395
      %397 = vrot.lane.b32.xlu0 %v388, 20
      %v398 = vpop.permute.xlu0 %397
      %399 = vrot.lane.b32.xlu0 %v389, 20
      %v400 = vpop.permute.xlu0 %399
      %401 = vrot.lane.b32.xlu0 %v390, 20
      %v402 = vpop.permute.xlu0 %401
      %vm407 = vcmask 818896
      %408 = vst.msk [vmem:[#allocation2] sm:$0xff] %vm407, %v396
      %409 = vst.msk [vmem:[#allocation2 + $0x10] sm:$0xff] %vm407, %v398
      %410 = vst.msk [vmem:[#allocation2 + $0x20] sm:$0xff] %vm407, %v400
      %411 = vst.msk [vmem:[#allocation2 + $0x30] sm:$0xff] %vm407, %v402
      %v412 = vld [vmem:[#allocation2] sm:$0xff]
      %v413 = vld [vmem:[#allocation2 + $0x8] sm:$0xff]
      %v414 = vld [vmem:[#allocation2 + $0x10] sm:$0xff]
      %v415 = vld [vmem:[#allocation2 + $0x18] sm:$0xff]
      %v416 = vld [vmem:[#allocation2 + $0x20] sm:$0xff]
      %v417 = vld [vmem:[#allocation2 + $0x28] sm:$0xff]
      %v418 = vld [vmem:[#allocation2 + $0x30] sm:$0xff]
      %v419 = vld [vmem:[#allocation2 + $0x38] sm:$0xff]
      %v420 = vld [vmem:[%s1] sm:$0xff]
      %v421 = vld [vmem:[%s1 + $0x8] sm:$0xf]
      %v422 = vld [vmem:[%s1 + $0xc] sm:$0xff]
      %v423 = vld [vmem:[%s1 + $0x14] sm:$0xf]
      %v424 = vld [vmem:[%s2] sm:$0xff]
      %v425 = vld [vmem:[%s2 + $0x8] sm:$0xff]
      %434 = vrot.lane.b32.xlu0 %v412, 127
      %v435 = vpop.permute.xlu0 %434
      %436 = vrot.lane.b32.xlu0 %v413, 127
      %v437 = vpop.permute.xlu0 %436
      %438 = vrot.lane.b32.xlu0 %v414, 127
      %v439 = vpop.permute.xlu0 %438
      %440 = vrot.lane.b32.xlu0 %v415, 127
      %v441 = vpop.permute.xlu0 %440
      %442 = vrot.lane.b32.xlu0 %v416, 127
      %v443 = vpop.permute.xlu0 %442
      %444 = vrot.lane.b32.xlu0 %v417, 127
      %v445 = vpop.permute.xlu0 %444
      %446 = vrot.lane.b32.xlu0 %v418, 127
      %v447 = vpop.permute.xlu0 %446
      %448 = vrot.lane.b32.xlu0 %v419, 127
      %v449 = vpop.permute.xlu0 %448
      %vm450 = vcmask 1039360
      %v451 = vsel %vm450, %v435, %v437
      %v452 = vsel %vm450, %v439, %v441
      %v453 = vsel %vm450, %v443, %v445
      %v454 = vsel %vm450, %v447, %v449
      %459 = vrot.lane.b32.xlu0 %v412, 126
      %v460 = vpop.permute.xlu0 %459
      %461 = vrot.lane.b32.xlu0 %v413, 126
      %v462 = vpop.permute.xlu0 %461
      %463 = vrot.lane.b32.xlu0 %v414, 126
      %v464 = vpop.permute.xlu0 %463
      %465 = vrot.lane.b32.xlu0 %v415, 126
      %v466 = vpop.permute.xlu0 %465
      %467 = vrot.lane.b32.xlu0 %v416, 126
      %v468 = vpop.permute.xlu0 %467
      %469 = vrot.lane.b32.xlu0 %v417, 126
      %v470 = vpop.permute.xlu0 %469
      %471 = vrot.lane.b32.xlu0 %v418, 126
      %v472 = vpop.permute.xlu0 %471
      %473 = vrot.lane.b32.xlu0 %v419, 126
      %v474 = vpop.permute.xlu0 %473
      %v475 = vsel %vm288, %v460, %v462
      %v476 = vsel %vm288, %v464, %v466
      %v477 = vsel %vm288, %v468, %v470
      %v478 = vsel %vm288, %v472, %v474
      %483 = vrot.lane.b32.xlu0 %v412, 118
      %v484 = vpop.permute.xlu0 %483
      %485 = vrot.lane.b32.xlu0 %v413, 118
      %v486 = vpop.permute.xlu0 %485
      %487 = vrot.lane.b32.xlu0 %v414, 118
      %v488 = vpop.permute.xlu0 %487
      %489 = vrot.lane.b32.xlu0 %v415, 118
      %v490 = vpop.permute.xlu0 %489
      %491 = vrot.lane.b32.xlu0 %v416, 118
      %v492 = vpop.permute.xlu0 %491
      %493 = vrot.lane.b32.xlu0 %v417, 118
      %v494 = vpop.permute.xlu0 %493
      %495 = vrot.lane.b32.xlu0 %v418, 118
      %v496 = vpop.permute.xlu0 %495
      %497 = vrot.lane.b32.xlu0 %v419, 118
      %v498 = vpop.permute.xlu0 %497
      %vm499 = vcmask 965632
      %v500 = vsel %vm499, %v484, %v486
      %v501 = vsel %vm499, %v488, %v490
      %v502 = vsel %vm499, %v492, %v494
      %v503 = vsel %vm499, %v496, %v498
      %508 = vrot.lane.b32.xlu0 %v412, 117
      %v509 = vpop.permute.xlu0 %508
      %510 = vrot.lane.b32.xlu0 %v413, 117
      %v511 = vpop.permute.xlu0 %510
      %512 = vrot.lane.b32.xlu0 %v414, 117
      %v513 = vpop.permute.xlu0 %512
      %514 = vrot.lane.b32.xlu0 %v415, 117
      %v515 = vpop.permute.xlu0 %514
      %516 = vrot.lane.b32.xlu0 %v416, 117
      %v517 = vpop.permute.xlu0 %516
      %518 = vrot.lane.b32.xlu0 %v417, 117
      %v519 = vpop.permute.xlu0 %518
      %520 = vrot.lane.b32.xlu0 %v418, 117
      %v521 = vpop.permute.xlu0 %520
      %522 = vrot.lane.b32.xlu0 %v419, 117
      %v523 = vpop.permute.xlu0 %522
      %vm524 = vcmask 957440
      %v525 = vsel %vm524, %v509, %v511
      %v526 = vsel %vm524, %v513, %v515
      %v527 = vsel %vm524, %v517, %v519
      %v528 = vsel %vm524, %v521, %v523
      %533 = vrot.lane.b32.xlu0 %v412, 116
      %v534 = vpop.permute.xlu0 %533
      %535 = vrot.lane.b32.xlu0 %v413, 116
      %v536 = vpop.permute.xlu0 %535
      %537 = vrot.lane.b32.xlu0 %v414, 116
      %v538 = vpop.permute.xlu0 %537
      %539 = vrot.lane.b32.xlu0 %v415, 116
      %v540 = vpop.permute.xlu0 %539
      %541 = vrot.lane.b32.xlu0 %v416, 116
      %v542 = vpop.permute.xlu0 %541
      %543 = vrot.lane.b32.xlu0 %v417, 116
      %v544 = vpop.permute.xlu0 %543
      %545 = vrot.lane.b32.xlu0 %v418, 116
      %v546 = vpop.permute.xlu0 %545
      %547 = vrot.lane.b32.xlu0 %v419, 116
      %v548 = vpop.permute.xlu0 %547
      %vm549 = vcmask 949248
      %v550 = vsel %vm549, %v534, %v536
      %v551 = vsel %vm549, %v538, %v540
      %v552 = vsel %vm549, %v542, %v544
      %v553 = vsel %vm549, %v546, %v548
      %558 = vrot.lane.b32.xlu0 %v412, 108
      %v559 = vpop.permute.xlu0 %558
      %560 = vrot.lane.b32.xlu0 %v413, 108
      %v561 = vpop.permute.xlu0 %560
      %562 = vrot.lane.b32.xlu0 %v414, 108
      %v563 = vpop.permute.xlu0 %562
      %564 = vrot.lane.b32.xlu0 %v415, 108
      %v565 = vpop.permute.xlu0 %564
      %566 = vrot.lane.b32.xlu0 %v416, 108
      %v567 = vpop.permute.xlu0 %566
      %568 = vrot.lane.b32.xlu0 %v417, 108
      %v569 = vpop.permute.xlu0 %568
      %570 = vrot.lane.b32.xlu0 %v418, 108
      %v571 = vpop.permute.xlu0 %570
      %572 = vrot.lane.b32.xlu0 %v419, 108
      %v573 = vpop.permute.xlu0 %572
      %vm574 = vcmask 883712
      %v575 = vsel %vm574, %v559, %v561
      %v576 = vsel %vm574, %v563, %v565
      %v577 = vsel %vm574, %v567, %v569
      %v578 = vsel %vm574, %v571, %v573
      %583 = vrot.lane.b32.xlu0 %v412, 107
      %v584 = vpop.permute.xlu0 %583
      %585 = vrot.lane.b32.xlu0 %v413, 107
      %v586 = vpop.permute.xlu0 %585
      %587 = vrot.lane.b32.xlu0 %v414, 107
      %v588 = vpop.permute.xlu0 %587
      %589 = vrot.lane.b32.xlu0 %v415, 107
      %v590 = vpop.permute.xlu0 %589
      %591 = vrot.lane.b32.xlu0 %v416, 107
      %v592 = vpop.permute.xlu0 %591
      %593 = vrot.lane.b32.xlu0 %v417, 107
      %v594 = vpop.permute.xlu0 %593
      %595 = vrot.lane.b32.xlu0 %v418, 107
      %v596 = vpop.permute.xlu0 %595
      %597 = vrot.lane.b32.xlu0 %v419, 107
      %v598 = vpop.permute.xlu0 %597
      %vm599 = vcmask 875520
      %v600 = vsel %vm599, %v584, %v586
      %v601 = vsel %vm599, %v588, %v590
      %v602 = vsel %vm599, %v592, %v594
      %v603 = vsel %vm599, %v596, %v598
      %608 = vrot.lane.b32.xlu0 %v412, 106
      %v609 = vpop.permute.xlu0 %608
      %610 = vrot.lane.b32.xlu0 %v413, 106
      %v611 = vpop.permute.xlu0 %610
      %612 = vrot.lane.b32.xlu0 %v414, 106
      %v613 = vpop.permute.xlu0 %612
      %614 = vrot.lane.b32.xlu0 %v415, 106
      %v615 = vpop.permute.xlu0 %614
      %616 = vrot.lane.b32.xlu0 %v416, 106
      %v617 = vpop.permute.xlu0 %616
      %618 = vrot.lane.b32.xlu0 %v417, 106
      %v619 = vpop.permute.xlu0 %618
      %620 = vrot.lane.b32.xlu0 %v418, 106
      %v621 = vpop.permute.xlu0 %620
      %622 = vrot.lane.b32.xlu0 %v419, 106
      %v623 = vpop.permute.xlu0 %622
      %vm624 = vcmask 867328
      %v625 = vsel %vm624, %v609, %v611
      %v626 = vsel %vm624, %v613, %v615
      %v627 = vsel %vm624, %v617, %v619
      %v628 = vsel %vm624, %v621, %v623
      %v633 = vpack.c.bf16 %v414, %v412
      %v634 = vpack.c.bf16 %v418, %v416
      %v635 = vpack.c.bf16 %v452, %v451
      %v636 = vpack.c.bf16 %v454, %v453
      %v637 = vpack.c.bf16 %v476, %v475
      %v638 = vpack.c.bf16 %v478, %v477
      %v639 = vpack.c.bf16 %v501, %v500
      %v640 = vpack.c.bf16 %v503, %v502
      %v641 = vpack.c.bf16 %v526, %v525
      %v642 = vpack.c.bf16 %v528, %v527
      %v643 = vpack.c.bf16 %v551, %v550
      %v644 = vpack.c.bf16 %v553, %v552
      %v645 = vpack.c.bf16 %v576, %v575
      %v646 = vpack.c.bf16 %v578, %v577
      %v647 = vpack.c.bf16 %v601, %v600
      %v648 = vpack.c.bf16 %v603, %v602
      %v649 = vpack.c.bf16 %v626, %v625
      %v650 = vpack.c.bf16 %v628, %v627
      %v655 = vunpack.c.l.b16 %v420
      %v656 = vunpack.c.h.b16 %v420
      %v657 = vunpack.c.l.b16 %v421
      %v658 = vunpack.c.l.b16 %v422
      %v659 = vunpack.c.h.b16 %v422
      %v660 = vunpack.c.l.b16 %v423
      %v661 = vpack.c.b16 %v658, %v655
      %v662 = vpack.c.b16 %v659, %v656
      %v663 = vpack.c.b16 %v660, %v657
      %vm666 = vcmask 261120
      %v668 = vsel %vm666, %v663, 0
      %670 = vmatprep.subr.bf16.mxu0 0
      %671 = vmatpush1.bf16.msra.mxu0 %v633
      %672 = vmatprep.subr.bf16.mxu0 0
      %673 = vmatpush1.bf16.msra.mxu0 %v634
      %674 = vmatprep.subr.bf16.mxu0 0
      %675 = vmatpush1.bf16.msra.mxu0 %v635
      %676 = vmatprep.subr.bf16.mxu0 0
      %677 = vmatpush1.bf16.msra.mxu0 %v636
      %678 = vmatprep.subr.bf16.mxu0 0
      %679 = vmatpush1.bf16.msra.mxu0 %v637
      %680 = vmatprep.subr.bf16.mxu0 0
      %681 = vmatpush1.bf16.msra.mxu0 %v638
      %682 = vmatprep.subr.bf16.mxu0 0
      %683 = vmatpush1.bf16.msra.mxu0 %v639
      %684 = vmatprep.subr.bf16.mxu0 0
      %685 = vmatpush1.bf16.msra.mxu0 %v640
      %686 = vmatprep.subr.bf16.mxu0 0
      %687 = vmatpush1.bf16.msra.mxu0 %v641
      %688 = vmatprep.subr.bf16.mxu0 0
      %689 = vmatpush1.bf16.msra.mxu0 %v642
      %690 = vmatprep.subr.bf16.mxu0 0
      %691 = vmatpush1.bf16.msra.mxu0 %v643
      %692 = vmatprep.subr.bf16.mxu0 0
      %693 = vmatpush1.bf16.msra.mxu0 %v644
      %694 = vmatprep.subr.bf16.mxu0 0
      %695 = vmatpush1.bf16.msra.mxu0 %v645
      %696 = vmatprep.subr.bf16.mxu0 0
      %697 = vmatpush1.bf16.msra.mxu0 %v646
      %698 = vmatprep.subr.bf16.mxu0 0
      %699 = vmatpush1.bf16.msra.mxu0 %v647
      %700 = vmatprep.subr.bf16.mxu0 0
      %701 = vmatpush1.bf16.msra.mxu0 %v648
      %702 = vmatprep.mubr.bf16.mxu0 %v662
      %703 = vmatmul.mubr.bf16.gmra.mrb[0].mxu0 %v661
      %v704 = vpop.f32.mrb[0].mxu0
      %v705 = vadd.f32 0.0, %v704
      %v706 = vpop.f32.mrb[0].mxu0
      %v707 = vpop.f32.mrb[0].mxu0
      %v708 = vadd.f32 0.0, %v707
      %v709 = vpop.f32.mrb[0].mxu0
      %710 = vdwg.mxu0
      %711 = vmatprep.subr.bf16.mxu0 0
      %712 = vmatpush1.bf16.msra.mxu0 %v649
      %713 = vmatprep.subr.bf16.mxu0 0
      %714 = vmatpush1.bf16.msra.mxu0 %v650
      %715 = vmatprep.subr.bf16.mxu0 0
      %716 = vmatpush1.bf16.msra.mxu0 0
      %717 = vmatprep.subr.bf16.mxu0 0
      %718 = vmatpush1.bf16.msra.mxu0 0
      %719 = vmatprep.subr.bf16.mxu0 0
      %720 = vmatpush1.bf16.msra.mxu0 0
      %721 = vmatprep.subr.bf16.mxu0 0
      %722 = vmatpush1.bf16.msra.mxu0 0
      %723 = vmatprep.subr.bf16.mxu0 0
      %724 = vmatpush1.bf16.msra.mxu0 0
      %725 = vmatprep.subr.bf16.mxu0 0
      %726 = vmatpush1.bf16.msra.mxu0 0
      %727 = vmatprep.subr.bf16.mxu0 0
      %728 = vmatpush1.bf16.msra.mxu0 0
      %729 = vmatprep.subr.bf16.mxu0 0
      %730 = vmatpush1.bf16.msra.mxu0 0
      %731 = vmatprep.subr.bf16.mxu0 0
      %732 = vmatpush1.bf16.msra.mxu0 0
      %733 = vmatprep.subr.bf16.mxu0 0
      %734 = vmatpush1.bf16.msra.mxu0 0
      %735 = vmatprep.subr.bf16.mxu0 0
      %736 = vmatpush1.bf16.msra.mxu0 0
      %737 = vmatprep.subr.bf16.mxu0 0
      %738 = vmatpush1.bf16.msra.mxu0 0
      %739 = vmatprep.subr.bf16.mxu0 0
      %740 = vmatpush1.bf16.msra.mxu0 0
      %741 = vmatprep.subr.bf16.mxu0 0
      %742 = vmatpush1.bf16.msra.mxu0 0
      %743 = vmatprep.mubr.bf16.mxu0 0
      %744 = vmatmul.mubr.bf16.gmra.mrb[0].mxu0 %v668
      %v745 = vpop.f32.mrb[0].mxu0
      %v746 = vadd.f32 %v705, %v745
      %v747 = vpop.f32.mrb[0].mxu0
      %v748 = vpop.f32.mrb[0].mxu0
      %v749 = vadd.f32 %v708, %v748
      %v750 = vpop.f32.mrb[0].mxu0
      %751 = vdwg.mxu0
      %v752 = vsel %vm192, 1, 0
      %vm753 = vcmp.eq.s32.totalorder %v752, 1
      %v754 = vsel %vm753, %v746, 0.0
      %v755 = vsel %vm753, %v749, 0.0
      %756 = vadd.xlane.f32.xlu0 %v754
      %v757 = vpop.xlane.xlu0 %756
      %758 = vadd.xlane.f32.xlu0 %v755
      %v759 = vpop.xlane.xlu0 %758
      %v760 = vmul.f32 %v757, 0.015625
      %v761 = vmul.f32 %v759, 0.015625
      %v762 = vmul.f32 %v754, %v754
      %v763 = vmul.f32 %v755, %v755
      %764 = vadd.xlane.f32.xlu0 %v762
      %v765 = vpop.xlane.xlu0 %764
      %766 = vadd.xlane.f32.xlu0 %v763
      %v767 = vpop.xlane.xlu0 %766
      %v768 = vmul.f32 %v765, 0.015625
      %v769 = vmul.f32 %v767, 0.015625
      %v770 = vmul.f32 %v760, %v760
      %v771 = vmul.f32 %v761, %v761
      %v772 = vsub.f32 %v768, %v770
      %v773 = vsub.f32 %v769, %v771
      %v774 = vmax.f32 %v772, 0.0
      %v775 = vmax.f32 %v773, 0.0
      %v776 = vsub.f32 %v754, %v760
      %v777 = vsub.f32 %v755, %v761
      %v778 = vadd.f32 %v774, 1e-05
      %v779 = vadd.f32 %v775, 1e-05
      %v780 = vrsqrt.pop %v778
      %v781 = vrsqrt.pop %v779
      %v782 = vmul.f32 %v776, %v780
      %v783 = vmul.f32 %v777, %v781
      %785 = vset.pattern.permute.xlu0 0
      %786 = vperm.xlu0 %785, %v424
      %v787 = vpop.permute.xlu0 %786
      %790 = vset.pattern.permute.xlu0 0
      %791 = vperm.xlu0 %790, %v425
      %v792 = vpop.permute.xlu0 %791
      %v794 = vmul.f32 %v782, %v787
      %v795 = vmul.f32 %v783, %v792
      %796 = vset.pattern.permute.xlu0 1
      %797 = vperm.xlu0 %796, %v424
      %v798 = vpop.permute.xlu0 %797
      %800 = vset.pattern.permute.xlu0 1
      %801 = vperm.xlu0 %800, %v425
      %v802 = vpop.permute.xlu0 %801
      %v804 = vadd.f32 %v794, %v798
      %v805 = vadd.f32 %v795, %v802
      %v806 = vmax.f32 %v804, 0.0
      %v807 = vmax.f32 %v805, 0.0
      %v808 = vpack.c.bf16 %v807, %v806
      %v810 = vunpack.c.l.b16 %v808
      %v811 = vunpack.c.h.b16 %v808
      %v812 = vpack.c.b16 %v810, %v810
      %v813 = vpack.c.b16 %v811, %v811
      %816 = vst [vmem:[%s170] sm:$0xf] %v812
      %817 = vst [vmem:[%s170 + $0x4] sm:$0xf] %v813
      %p818 = scmp.lt.s32.totalorder %s14, 1
      %s819 = scalar_select %p818, %s14, 1
      %s820 = smul.addr %s819, 2
      %s821 = smul.addr %s820, 4
      %s822 = scalar_lea.vmem %s3, %s821
      // Predicated region
      $region33: #{stylizing_network.8} parent=31 // pred_check
        %p823 = pneg %p100
      $region34: #{stylizing_network.8} parent=31 // pred_check_branch
        %825 = sbr.rel (%p823) target = $region36
      $region35: #{stylizing_network.8} parent=31 // pred_region
        _
      $region36: #{stylizing_network.8} parent=31 // pred_fallthru
        _
    $region32: #{stylizing_network.8} parent=5 // pred_fallthru
      _
    %p826 = scmp.le.s32.totalorder 2, %s9
    // Predicated region
    $region37: #{stylizing_network.8} parent=5 // pred_check
      %p827 = pneg %p826
    $region38: #{stylizing_network.8} parent=5 // pred_check_branch
      %829 = sbr.rel (%p827) target = $region40
    $region39: #{stylizing_network.8} parent=5 // pred_region
      %s830 = ssub.s32 %s9, 2
      // Predicated region
      $region41: #{stylizing_network.8} parent=39 // pred_check
        %p831 = pneg %p106
      $region42: #{stylizing_network.8} parent=39 // pred_check_branch
        %833 = sbr.rel (%p831) target = $region44
      $region43: #{stylizing_network.8} parent=39 // pred_region
        %p834 = scmp.lt.s32.totalorder %s15, 1
        %s835 = scalar_select %p834, %s15, 1
        %s836 = smul.addr %s835, 2
        %s837 = smul.addr %s836, 4
        %s838 = scalar_lea.vmem %s3, %s837
      $region44: #{stylizing_network.8} parent=39 // pred_fallthru
        _
    $region40: #{stylizing_network.8} parent=5 // pred_fallthru
      _
  $region6: #{stylizing_network.8} parent=0 // loop_footer
    %s13 = sadd.s32 1, %s9
  $region7: #{stylizing_network.8} parent=0 // loop_footer_branch
    %8 = sbr.rel target = $region3
  $region8: #{stylizing_network.8} parent=0 // loop_exit
    _

// kernel: stylizing_network.7
$region0: #{stylizing_network.7}
  #allocation0 [shape = 'u32[]', space=smem, size = 0x4, offset = 0x4, fixed_abs, tag = 'smem constant byte address 0x4 - core index']
  #allocation1 [shape = 'u32[144,128]{1,0:T(1,128)}', space=vmem, size = 0x12000, scoped, tag = 'internal scratch']
  #allocation2 [shape = 'f32[32,256]{1,0:T(8,128)}', space=vmem, size = 0x8000, scoped, tag = 'scratch operand']
  %s0 = inlined_call_operand.vmem [shape: bf16[2,4,16,256], index: 0, kind: input, shape index: {}]
  %s1 = inlined_call_operand.vmem [shape: bf16[32,144], index: 1, kind: input, shape index: {}]
  %s2 = inlined_call_operand.vmem [shape: f32[32,2], index: 2, kind: input, shape index: {}]
  %s3 = inlined_call_operand.vmem [shape: bf16[32,288], index: 3, kind: input, shape index: {}]
  %s4 = inlined_call_operand.vmem [shape: f32[32,2], index: 4, kind: input, shape index: {}]
  %s5 = inlined_call_operand.vmem [shape: bf16[32,288], index: 5, kind: input, shape index: {}]
  %s6 = inlined_call_operand.vmem [shape: f32[32,2], index: 6, kind: input, shape index: {}]
  %s7 = inlined_call_operand.vmem [shape: bf16[32,288], index: 7, kind: input, shape index: {}]
  %s8 = inlined_call_operand.vmem [shape: f32[32,2], index: 8, kind: input, shape index: {}]
  %s9 = inlined_call_operand.vmem [shape: bf16[32,288], index: 9, kind: input, shape index: {}]
  %s10 = inlined_call_operand.vmem [shape: f32[32,2], index: 10, kind: input, shape index: {}]
  %s11 = inlined_call_operand.vmem [shape: bf16[2,32,128], index: 11, kind: output, shape index: {}]
  %s12 = sld [smem:[#allocation0]]
  $region77: #{stylizing_network.7} parent=0
    _
  %s14 = ssub.s32 1, %s12
  %s15 = scalar_select 0, %s14, %s12
  loop: start=0, step=1, limit=4
  $region2: #{stylizing_network.7} parent=0 // loop_pre_header
    _
  $region3: #{stylizing_network.7} parent=0 // loop_header
    %s17 = sphi 0, %s21
    %p18 = scmp.ge.s32.totalorder %s17, 4
    %s27 = sphi 0, %s29
    %s30 = sphi 0, %s27
    %s31 = sphi 0, %s30
    %s47 = sphi 0, %s31
    %s51 = sphi 0, %s51
    %s53 = sphi 0, %s51
    %s54 = sphi 0, %s53
    %s68 = sphi 0, %s54
    %s72 = sphi 0, %s72
    %s74 = sphi 0, %s72
    %s75 = sphi 0, %s74
    %s89 = sphi 0, %s75
    %s93 = sphi 0, %s93
    %s95 = sphi 0, %s93
    %s96 = sphi 0, %s95
    %s110 = sphi 0, %s96
    %s114 = sphi 0, %s114
    %s116 = sphi 0, %s114
    %s117 = sphi 0, %s116
    %s131 = sphi 0, %s117
    %s135 = sphi 0, %s135
    %s137 = sphi 0, %s135
    %s138 = sphi 0, %s137
    %s152 = sphi 0, %s138
    %s156 = sphi 0, %s156
    %s158 = sphi 0, %s156
    %s159 = sphi 0, %s158
    %s173 = sphi 0, %s159
    %s177 = sphi 0, %s177
    %s179 = sphi 0, %s177
    %s180 = sphi 0, %s179
    %s194 = sphi 0, %s180
    %s198 = sphi 0, %s198
    %s200 = sphi 0, %s198
    %s201 = sphi 0, %s200
    %s215 = sphi 0, %s201
    %s219 = sphi 0, %s219
    %s221 = sphi 0, %s219
    %s222 = sphi 0, %s221
    %s236 = sphi 0, %s222
    %s240 = sphi 0, %s240
    %s242 = sphi 0, %s240
    %s243 = sphi 0, %s242
    %s257 = sphi 0, %s243
    %s263 = sphi 0, %s265
    %s266 = sphi 0, %s263
    %s267 = sphi 0, %s266
    %s283 = sphi 0, %s267
  $region4: #{stylizing_network.7} parent=0 // loop_header_branch
    %20 = sbr.rel (%p18) target = $region8
  $region5: #{stylizing_network.7} parent=0 // loop_body
    %s22 = ssub.s32 %s17, 1
    %s23 = ssub.s32 %s17, 2
    %s24 = sadd.s32 %s17, 1
    %s25 = ssub.s32 %s17, %s24
    %p26 = scmp.eq.s32.totalorder %s25, 0
    %s28 = sadd.s32 %s27, 1
    %s29 = scalar_select %p26, %s27, %s28
    %p32 = pneg %p26
    %p33 = scmp.eq.s32.totalorder %s17, 1
    %p34 = por %p32, %p33
    %p35 = scmp.ne.s32.totalorder %s27, %s30
    %p36 = scmp.eq.s32.totalorder %s17, 0
    %p37 = por %p35, %p36
    %p38 = scmp.ne.s32.totalorder %s27, %s30
    %p39 = scmp.eq.s32.totalorder %s22, 1
    %p40 = por %p38, %p39
    %p41 = scmp.ne.s32.totalorder %s30, %s31
    %p42 = scmp.eq.s32.totalorder %s22, 0
    %p43 = por %p41, %p42
    %p44 = scmp.ne.s32.totalorder %s30, %s31
    %p45 = scmp.eq.s32.totalorder %s23, 1
    %p46 = por %p44, %p45
    %p48 = scmp.ne.s32.totalorder %s31, %s47
    %p49 = scmp.eq.s32.totalorder %s23, 0
    %p50 = por %p48, %p49
    %s52 = sadd.s32 %s51, 1
    %p55 = scmp.eq.s32.totalorder %s17, 1
    %p56 = scmp.ne.s32.totalorder %s51, %s53
    %p57 = scmp.eq.s32.totalorder %s17, 0
    %p58 = por %p56, %p57
    %p59 = scmp.ne.s32.totalorder %s51, %s53
    %p60 = scmp.eq.s32.totalorder %s22, 1
    %p61 = por %p59, %p60
    %p62 = scmp.ne.s32.totalorder %s53, %s54
    %p63 = scmp.eq.s32.totalorder %s22, 0
    %p64 = por %p62, %p63
    %p65 = scmp.ne.s32.totalorder %s53, %s54
    %p66 = scmp.eq.s32.totalorder %s23, 1
    %p67 = por %p65, %p66
    %p69 = scmp.ne.s32.totalorder %s54, %s68
    %p70 = scmp.eq.s32.totalorder %s23, 0
    %p71 = por %p69, %p70
    %s73 = sadd.s32 %s72, 1
    %p76 = scmp.eq.s32.totalorder %s17, 1
    %p77 = scmp.ne.s32.totalorder %s72, %s74
    %p78 = scmp.eq.s32.totalorder %s17, 0
    %p79 = por %p77, %p78
    %p80 = scmp.ne.s32.totalorder %s72, %s74
    %p81 = scmp.eq.s32.totalorder %s22, 1
    %p82 = por %p80, %p81
    %p83 = scmp.ne.s32.totalorder %s74, %s75
    %p84 = scmp.eq.s32.totalorder %s22, 0
    %p85 = por %p83, %p84
    %p86 = scmp.ne.s32.totalorder %s74, %s75
    %p87 = scmp.eq.s32.totalorder %s23, 1
    %p88 = por %p86, %p87
    %p90 = scmp.ne.s32.totalorder %s75, %s89
    %p91 = scmp.eq.s32.totalorder %s23, 0
    %p92 = por %p90, %p91
    %s94 = sadd.s32 %s93, 1
    %p97 = scmp.eq.s32.totalorder %s17, 1
    %p98 = scmp.ne.s32.totalorder %s93, %s95
    %p99 = scmp.eq.s32.totalorder %s17, 0
    %p100 = por %p98, %p99
    %p101 = scmp.ne.s32.totalorder %s93, %s95
    %p102 = scmp.eq.s32.totalorder %s22, 1
    %p103 = por %p101, %p102
    %p104 = scmp.ne.s32.totalorder %s95, %s96
    %p105 = scmp.eq.s32.totalorder %s22, 0
    %p106 = por %p104, %p105
    %p107 = scmp.ne.s32.totalorder %s95, %s96
    %p108 = scmp.eq.s32.totalorder %s23, 1
    %p109 = por %p107, %p108
    %p111 = scmp.ne.s32.totalorder %s96, %s110
    %p112 = scmp.eq.s32.totalorder %s23, 0
    %p113 = por %p111, %p112
    %s115 = sadd.s32 %s114, 1
    %p118 = scmp.eq.s32.totalorder %s17, 1
    %p119 = scmp.ne.s32.totalorder %s114, %s116
    %p120 = scmp.eq.s32.totalorder %s17, 0
    %p121 = por %p119, %p120
    %p122 = scmp.ne.s32.totalorder %s114, %s116
    %p123 = scmp.eq.s32.totalorder %s22, 1
    %p124 = por %p122, %p123
    %p125 = scmp.ne.s32.totalorder %s116, %s117
    %p126 = scmp.eq.s32.totalorder %s22, 0
    %p127 = por %p125, %p126
    %p128 = scmp.ne.s32.totalorder %s116, %s117
    %p129 = scmp.eq.s32.totalorder %s23, 1
    %p130 = por %p128, %p129
    %p132 = scmp.ne.s32.totalorder %s117, %s131
    %p133 = scmp.eq.s32.totalorder %s23, 0
    %p134 = por %p132, %p133
    %s136 = sadd.s32 %s135, 1
    %p139 = scmp.eq.s32.totalorder %s17, 1
    %p140 = scmp.ne.s32.totalorder %s135, %s137
    %p141 = scmp.eq.s32.totalorder %s17, 0
    %p142 = por %p140, %p141
    %p143 = scmp.ne.s32.totalorder %s135, %s137
    %p144 = scmp.eq.s32.totalorder %s22, 1
    %p145 = por %p143, %p144
    %p146 = scmp.ne.s32.totalorder %s137, %s138
    %p147 = scmp.eq.s32.totalorder %s22, 0
    %p148 = por %p146, %p147
    %p149 = scmp.ne.s32.totalorder %s137, %s138
    %p150 = scmp.eq.s32.totalorder %s23, 1
    %p151 = por %p149, %p150
    %p153 = scmp.ne.s32.totalorder %s138, %s152
    %p154 = scmp.eq.s32.totalorder %s23, 0
    %p155 = por %p153, %p154
    %s157 = sadd.s32 %s156, 1
    %p160 = scmp.eq.s32.totalorder %s17, 1
    %p161 = scmp.ne.s32.totalorder %s156, %s158
    %p162 = scmp.eq.s32.totalorder %s17, 0
    %p163 = por %p161, %p162
    %p164 = scmp.ne.s32.totalorder %s156, %s158
    %p165 = scmp.eq.s32.totalorder %s22, 1
    %p166 = por %p164, %p165
    %p167 = scmp.ne.s32.totalorder %s158, %s159
    %p168 = scmp.eq.s32.totalorder %s22, 0
    %p169 = por %p167, %p168
    %p170 = scmp.ne.s32.totalorder %s158, %s159
    %p171 = scmp.eq.s32.totalorder %s23, 1
    %p172 = por %p170, %p171
    %p174 = scmp.ne.s32.totalorder %s159, %s173
    %p175 = scmp.eq.s32.totalorder %s23, 0
    %p176 = por %p174, %p175
    %s178 = sadd.s32 %s177, 1
    %p181 = scmp.eq.s32.totalorder %s17, 1
    %p182 = scmp.ne.s32.totalorder %s177, %s179
    %p183 = scmp.eq.s32.totalorder %s17, 0
    %p184 = por %p182, %p183
    %p185 = scmp.ne.s32.totalorder %s177, %s179
    %p186 = scmp.eq.s32.totalorder %s22, 1
    %p187 = por %p185, %p186
    %p188 = scmp.ne.s32.totalorder %s179, %s180
    %p189 = scmp.eq.s32.totalorder %s22, 0
    %p190 = por %p188, %p189
    %p191 = scmp.ne.s32.totalorder %s179, %s180
    %p192 = scmp.eq.s32.totalorder %s23, 1
    %p193 = por %p191, %p192
    %p195 = scmp.ne.s32.totalorder %s180, %s194
    %p196 = scmp.eq.s32.totalorder %s23, 0
    %p197 = por %p195, %p196
    %s199 = sadd.s32 %s198, 1
    %p202 = scmp.eq.s32.totalorder %s17, 1
    %p203 = scmp.ne.s32.totalorder %s198, %s200
    %p204 = scmp.eq.s32.totalorder %s17, 0
    %p205 = por %p203, %p204
    %p206 = scmp.ne.s32.totalorder %s198, %s200
    %p207 = scmp.eq.s32.totalorder %s22, 1
    %p208 = por %p206, %p207
    %p209 = scmp.ne.s32.totalorder %s200, %s201
    %p210 = scmp.eq.s32.totalorder %s22, 0
    %p211 = por %p209, %p210
    %p212 = scmp.ne.s32.totalorder %s200, %s201
    %p213 = scmp.eq.s32.totalorder %s23, 1
    %p214 = por %p212, %p213
    %p216 = scmp.ne.s32.totalorder %s201, %s215
    %p217 = scmp.eq.s32.totalorder %s23, 0
    %p218 = por %p216, %p217
    %s220 = sadd.s32 %s219, 1
    %p223 = scmp.eq.s32.totalorder %s17, 1
    %p224 = scmp.ne.s32.totalorder %s219, %s221
    %p225 = scmp.eq.s32.totalorder %s17, 0
    %p226 = por %p224, %p225
    %p227 = scmp.ne.s32.totalorder %s219, %s221
    %p228 = scmp.eq.s32.totalorder %s22, 1
    %p229 = por %p227, %p228
    %p230 = scmp.ne.s32.totalorder %s221, %s222
    %p231 = scmp.eq.s32.totalorder %s22, 0
    %p232 = por %p230, %p231
    %p233 = scmp.ne.s32.totalorder %s221, %s222
    %p234 = scmp.eq.s32.totalorder %s23, 1
    %p235 = por %p233, %p234
    %p237 = scmp.ne.s32.totalorder %s222, %s236
    %p238 = scmp.eq.s32.totalorder %s23, 0
    %p239 = por %p237, %p238
    %s241 = sadd.s32 %s240, 1
    %p244 = scmp.eq.s32.totalorder %s17, 1
    %p245 = scmp.ne.s32.totalorder %s240, %s242
    %p246 = scmp.eq.s32.totalorder %s17, 0
    %p247 = por %p245, %p246
    %p248 = scmp.ne.s32.totalorder %s240, %s242
    %p249 = scmp.eq.s32.totalorder %s22, 1
    %p250 = por %p248, %p249
    %p251 = scmp.ne.s32.totalorder %s242, %s243
    %p252 = scmp.eq.s32.totalorder %s22, 0
    %p253 = por %p251, %p252
    %p254 = scmp.ne.s32.totalorder %s242, %s243
    %p255 = scmp.eq.s32.totalorder %s23, 1
    %p256 = por %p254, %p255
    %p258 = scmp.ne.s32.totalorder %s243, %s257
    %p259 = scmp.eq.s32.totalorder %s23, 0
    %p260 = por %p258, %p259
    %s261 = ssub.s32 %s17, %s24
    %p262 = scmp.eq.s32.totalorder %s261, 0
    %s264 = sadd.s32 %s263, 1
    %s265 = scalar_select %p262, %s263, %s264
    %p268 = pneg %p262
    %p269 = scmp.eq.s32.totalorder %s17, 1
    %p270 = por %p268, %p269
    %p271 = scmp.ne.s32.totalorder %s263, %s266
    %p272 = scmp.eq.s32.totalorder %s17, 0
    %p273 = por %p271, %p272
    %p274 = scmp.ne.s32.totalorder %s263, %s266
    %p275 = scmp.eq.s32.totalorder %s22, 1
    %p276 = por %p274, %p275
    %p277 = scmp.ne.s32.totalorder %s266, %s267
    %p278 = scmp.eq.s32.totalorder %s22, 0
    %p279 = por %p277, %p278
    %p280 = scmp.ne.s32.totalorder %s266, %s267
    %p281 = scmp.eq.s32.totalorder %s23, 1
    %p282 = por %p280, %p281
    %p284 = scmp.ne.s32.totalorder %s267, %s283
    %p285 = scmp.eq.s32.totalorder %s23, 0
    %p286 = por %p284, %p285
    %p287 = scmp.le.s32.totalorder 1, %s17
    %p288 = scmp.lt.s32.totalorder %s17, 3
    %p289 = pnand %p287, %p288
    %p290 = pneg %p289
    // Predicated region
    $region9: #{stylizing_network.7} parent=5 // pred_check
      _
    $region10: #{stylizing_network.7} parent=5 // pred_check_branch
      %292 = sbr.rel (%p289) target = $region12
    $region11: #{stylizing_network.7} parent=5 // pred_region
      %s293 = ssub.s32 %s17, 1
      // Predicated region
      $region13: #{stylizing_network.7} parent=11 // pred_check
        %p294 = pneg %p64
      $region14: #{stylizing_network.7} parent=11 // pred_check_branch
        %296 = sbr.rel (%p294) target = $region16
      $region15: #{stylizing_network.7} parent=11 // pred_region
        _
      $region16: #{stylizing_network.7} parent=11 // pred_fallthru
        _
      // Predicated region
      $region17: #{stylizing_network.7} parent=11 // pred_check
        %p297 = pneg %p85
      $region18: #{stylizing_network.7} parent=11 // pred_check_branch
        %299 = sbr.rel (%p297) target = $region20
      $region19: #{stylizing_network.7} parent=11 // pred_region
        _
      $region20: #{stylizing_network.7} parent=11 // pred_fallthru
        _
      // Predicated region
      $region21: #{stylizing_network.7} parent=11 // pred_check
        %p300 = pneg %p106
      $region22: #{stylizing_network.7} parent=11 // pred_check_branch
        %302 = sbr.rel (%p300) target = $region24
      $region23: #{stylizing_network.7} parent=11 // pred_region
        _
      $region24: #{stylizing_network.7} parent=11 // pred_fallthru
        _
      // Predicated region
      $region25: #{stylizing_network.7} parent=11 // pred_check
        %p303 = pneg %p127
      $region26: #{stylizing_network.7} parent=11 // pred_check_branch
        %305 = sbr.rel (%p303) target = $region28
      $region27: #{stylizing_network.7} parent=11 // pred_region
        _
      $region28: #{stylizing_network.7} parent=11 // pred_fallthru
        _
      // Predicated region
      $region29: #{stylizing_network.7} parent=11 // pred_check
        %p306 = pneg %p148
      $region30: #{stylizing_network.7} parent=11 // pred_check_branch
        %308 = sbr.rel (%p306) target = $region32
      $region31: #{stylizing_network.7} parent=11 // pred_region
        _
      $region32: #{stylizing_network.7} parent=11 // pred_fallthru
        _
      // Predicated region
      $region33: #{stylizing_network.7} parent=11 // pred_check
        %p309 = pneg %p169
      $region34: #{stylizing_network.7} parent=11 // pred_check_branch
        %311 = sbr.rel (%p309) target = $region36
      $region35: #{stylizing_network.7} parent=11 // pred_region
        _
      $region36: #{stylizing_network.7} parent=11 // pred_fallthru
        _
      // Predicated region
      $region37: #{stylizing_network.7} parent=11 // pred_check
        %p312 = pneg %p190
      $region38: #{stylizing_network.7} parent=11 // pred_check_branch
        %314 = sbr.rel (%p312) target = $region40
      $region39: #{stylizing_network.7} parent=11 // pred_region
        _
      $region40: #{stylizing_network.7} parent=11 // pred_fallthru
        _
      // Predicated region
      $region41: #{stylizing_network.7} parent=11 // pred_check
        %p315 = pneg %p211
      $region42: #{stylizing_network.7} parent=11 // pred_check_branch
        %317 = sbr.rel (%p315) target = $region44
      $region43: #{stylizing_network.7} parent=11 // pred_region
        _
      $region44: #{stylizing_network.7} parent=11 // pred_fallthru
        _
      // Predicated region
      $region45: #{stylizing_network.7} parent=11 // pred_check
        %p318 = pneg %p232
      $region46: #{stylizing_network.7} parent=11 // pred_check_branch
        %320 = sbr.rel (%p318) target = $region48
      $region47: #{stylizing_network.7} parent=11 // pred_region
        _
      $region48: #{stylizing_network.7} parent=11 // pred_fallthru
        _
      // Predicated region
      $region49: #{stylizing_network.7} parent=11 // pred_check
        %p321 = pneg %p253
      $region50: #{stylizing_network.7} parent=11 // pred_check_branch
        %323 = sbr.rel (%p321) target = $region52
      $region51: #{stylizing_network.7} parent=11 // pred_region
        _
      $region52: #{stylizing_network.7} parent=11 // pred_fallthru
        _
    $region12: #{stylizing_network.7} parent=5 // pred_fallthru
      _
    %p324 = scmp.lt.s32.totalorder %s17, 2
    // Predicated region
    $region53: #{stylizing_network.7} parent=5 // pred_check
      %p325 = pneg %p324
    $region54: #{stylizing_network.7} parent=5 // pred_check_branch
      %327 = sbr.rel (%p325) target = $region56
    $region55: #{stylizing_network.7} parent=5 // pred_region
      // Predicated region
      $region57: #{stylizing_network.7} parent=55 // pred_check
        %p328 = pneg %p37
      $region58: #{stylizing_network.7} parent=55 // pred_check_branch
        %330 = sbr.rel (%p328) target = $region60
      $region59: #{stylizing_network.7} parent=55 // pred_region
        %p331 = scmp.lt.s32.totalorder %s17, 1
        %s332 = scalar_select %p331, %s17, 1
        %s333 = smul.addr %s332, 16
        %s334 = smul.addr %s333, 4
        %s335 = scalar_lea.vmem %s0, %s334
      $region60: #{stylizing_network.7} parent=55 // pred_fallthru
        _
    $region56: #{stylizing_network.7} parent=5 // pred_fallthru
      _
    %p336 = scmp.le.s32.totalorder 1, %s17
    %p337 = scmp.lt.s32.totalorder %s17, 3
    %p338 = pnand %p336, %p337
    %p339 = pneg %p338
    // Predicated region
    $region61: #{stylizing_network.7} parent=5 // pred_check
      _
    $region62: #{stylizing_network.7} parent=5 // pred_check_branch
      %341 = sbr.rel (%p338) target = $region64
    $region63: #{stylizing_network.7} parent=5 // pred_region
      %s342 = ssub.s32 %s17, 1
      %p343 = scmp.lt.s32.totalorder %s22, 1
      %s344 = scalar_select %p343, %s22, 1
      %s345 = smul.addr %s344, 16
      %s346 = smul.addr %s345, 4
      %s347 = scalar_lea.vmem %s0, %s346
      %p348 = pneg %p43
      %p349 = pneg %p40
      %p350 = pneg %p64
      %p351 = pneg %p61
      %p352 = pneg %p85
      %p353 = pneg %p82
      %p354 = pneg %p106
      %p355 = pneg %p103
      %p356 = pneg %p127
      %p357 = pneg %p124
      %p358 = pneg %p148
      %p359 = pneg %p145
      %p360 = pneg %p169
      %p361 = pneg %p166
      %p362 = pneg %p190
      %p363 = pneg %p187
      %p364 = pneg %p211
      %p365 = pneg %p208
      %p366 = pneg %p232
      %p367 = pneg %p229
      %p368 = pneg %p253
      %p369 = pneg %p250
      %p370 = pneg %p279
      %p371 = pneg %p276
      %p372 = scmp.lt.s32.totalorder %s22, 1
      %s373 = scalar_select %p372, %s22, 1
      %s374 = smul.addr %s373, 4
      %s375 = smul.addr %s374, 4
      %s376 = scalar_lea.vmem %s11, %s375
      %p377 = scmp.lt.s32.totalorder %s22, 1
      %s378 = scalar_select %p377, %s22, 1
      %s379 = smul.addr %s378, 16
      %s380 = smul.addr %s379, 4
      %s381 = scalar_lea.vmem %s0, %s380
      %p382 = scmp.lt.s32.totalorder %s22, 1
      %s383 = scalar_select %p382, %s22, 1
      %s384 = smul.addr %s383, 4
      %s385 = smul.addr %s384, 4
      %s386 = scalar_lea.vmem %s11, %s385
      %v388 = vlaneseq
      %v389 = vand.u32 %v388, 127
      %vm390 = vcmp.lt.s32.totalorder %v389, 0
      %v391 = vsub.s32 0, %v389
      %v392 = vsel %vm390, %v391, %v389
      %v393 = vmul.u32.u64.compose %v392, 2863311531
      %v394 = vextract.low.u32 %v393
      %v395 = vextract.high.u32 %v393
      %v396 = vshrl.u32 %v395, 2
      %v397 = vmul.u32 %v396, 6
      %v398 = vsub.s32 %v392, %v397
      %v399 = vsub.s32 0, %v398
      %v400 = vsel %vm390, %v399, %v398
      %vm401 = vcmp.ne.s32.totalorder %v400, 0
      %vm402 = vcmp.lt.s32.totalorder %v400, 0
      %vm403 = vmand %vm402, %vm401
      %v404 = vadd.s32 %v400, 6
      %v405 = vsel %vm403, %v404, %v400
      %vm406 = vcmp.lt.s32.totalorder %v405, 4
      %vm407 = vcmp.lt.s32.totalorder %v389, 24
      %vm408 = vmand %vm406, %vm407
      %409 = vst [vmem:[#allocation2] sm:$0xff] 0.0
      %410 = vst [vmem:[#allocation2 + $0x8] sm:$0xff] 0.0
      %411 = vst [vmem:[#allocation2 + $0x10] sm:$0xff] 0.0
      %412 = vst [vmem:[#allocation2 + $0x18] sm:$0xff] 0.0
      %413 = vst [vmem:[#allocation2 + $0x20] sm:$0xff] 0.0
      %414 = vst [vmem:[#allocation2 + $0x28] sm:$0xff] 0.0
      %415 = vst [vmem:[#allocation2 + $0x30] sm:$0xff] 0.0
      %416 = vst [vmem:[#allocation2 + $0x38] sm:$0xff] 0.0
      %v417 = vadd.s32 %v389, 128
      %vm418 = vcmp.lt.s32.totalorder %v417, 0
      %v419 = vsub.s32 0, %v417
      %v420 = vsel %vm418, %v419, %v417
      %v421 = vmul.u32.u64.compose %v420, 2863311531
      %v422 = vextract.low.u32 %v421
      %v423 = vextract.high.u32 %v421
      %v424 = vshrl.u32 %v423, 2
      %v425 = vmul.u32 %v424, 6
      %v426 = vsub.s32 %v420, %v425
      %v427 = vsub.s32 0, %v426
      %v428 = vsel %vm418, %v427, %v426
      %vm429 = vcmp.ne.s32.totalorder %v428, 0
      %vm430 = vcmp.lt.s32.totalorder %v428, 0
      %vm431 = vmand %vm430, %vm429
      %v432 = vadd.s32 %v428, 6
      %v433 = vsel %vm431, %v432, %v428
      %vm434 = vcmp.eq.s32.totalorder %v405, 0
      %vm435 = vcmp.eq.s32.totalorder %v433, 0
      %vm436 = vcmp.eq.s32.totalorder %v405, 5
      %vm437 = vcmp.eq.s32.totalorder %v433, 5
      %v438 = vld [vmem:[%s381] sm:$0xff]
      %v439 = vld [vmem:[%s381 + $0x8] sm:$0xff]
      %v440 = vld [vmem:[%s381 + $0x10] sm:$0xff]
      %v441 = vld [vmem:[%s381 + $0x18] sm:$0xff]
      %v442 = vld [vmem:[%s381 + $0x20] sm:$0xff]
      %v443 = vld [vmem:[%s381 + $0x28] sm:$0xff]
      %v444 = vld [vmem:[%s381 + $0x30] sm:$0xff]
      %v445 = vld [vmem:[%s381 + $0x38] sm:$0xff]
      %v446 = vld [vmem:[%s1] sm:$0xff]
      %v447 = vld [vmem:[%s1 + $0x8] sm:$0xff]
      %v448 = vld [vmem:[%s1 + $0x10] sm:$0xff]
      %v449 = vld [vmem:[%s1 + $0x18] sm:$0xff]
      %v450 = vld [vmem:[%s2] sm:$0xff]
      %v451 = vld [vmem:[%s2 + $0x8] sm:$0xff]
      %v452 = vld [vmem:[%s2 + $0x10] sm:$0xff]
      %v453 = vld [vmem:[%s2 + $0x18] sm:$0xff]
      %v456 = vunpack.c.l.b16 %v438
      %v457 = vunpack.c.l.b16 %v439
      %v458 = vpack.c.b16 %v457, %v456
      %v462 = vunpack.c.l.b16 %v440
      %v463 = vunpack.c.l.b16 %v441
      %v464 = vpack.c.b16 %v463, %v462
      %v466 = vunpack.c.h.b16 %v438
      %v467 = vunpack.c.h.b16 %v439
      %v468 = vpack.c.b16 %v467, %v466
      %469 = vrot.lane.b32.xlu0 %v458, 127
      %v470 = vpop.permute.xlu0 %469
      %471 = vrot.lane.b32.xlu0 %v468, 127
      %v472 = vpop.permute.xlu0 %471
      %vm473 = vcmask 1039360
      %v474 = vsel %vm473, %v470, %v472
      %v478 = vunpack.c.l.b16 %v442
      %v479 = vunpack.c.l.b16 %v443
      %v480 = vpack.c.b16 %v479, %v478
      %v484 = vunpack.c.l.b16 %v444
      %v485 = vunpack.c.l.b16 %v445
      %v486 = vpack.c.b16 %v485, %v484
      %v488 = vunpack.c.h.b16 %v442
      %v489 = vunpack.c.h.b16 %v443
      %v490 = vpack.c.b16 %v489, %v488
      %491 = vrot.lane.b32.xlu0 %v480, 127
      %v492 = vpop.permute.xlu0 %491
      %493 = vrot.lane.b32.xlu0 %v490, 127
      %v494 = vpop.permute.xlu0 %493
      %v495 = vsel %vm473, %v492, %v494
      %497 = vrot.lane.b32.xlu0 %v458, 122
      %v498 = vpop.permute.xlu0 %497
      %499 = vrot.lane.b32.xlu0 %v468, 122
      %v500 = vpop.permute.xlu0 %499
      %vm501 = vcmask 998400
      %v502 = vsel %vm501, %v498, %v500
      %v504 = vunpack.c.h.b16 %v440
      %v505 = vunpack.c.h.b16 %v441
      %v506 = vpack.c.b16 %v505, %v504
      %507 = vrot.lane.b32.xlu0 %v464, 122
      %v508 = vpop.permute.xlu0 %507
      %509 = vrot.lane.b32.xlu0 %v506, 122
      %v510 = vpop.permute.xlu0 %509
      %v511 = vsel %vm501, %v508, %v510
      %513 = vrot.lane.b32.xlu0 %v458, 121
      %v514 = vpop.permute.xlu0 %513
      %515 = vrot.lane.b32.xlu0 %v468, 121
      %v516 = vpop.permute.xlu0 %515
      %vm517 = vcmask 990208
      %v518 = vsel %vm517, %v514, %v516
      %v524 = vunpack.c.l.b16 %v446
      %v525 = vunpack.c.h.b16 %v446
      %v526 = vunpack.c.l.b16 %v447
      %v527 = vunpack.c.h.b16 %v447
      %v528 = vunpack.c.l.b16 %v448
      %v529 = vunpack.c.h.b16 %v448
      %v530 = vunpack.c.l.b16 %v449
      %v531 = vunpack.c.h.b16 %v449
      %v532 = vpack.c.b16 %v526, %v524
      %v533 = vpack.c.b16 %v527, %v525
      %v534 = vpack.c.b16 %v530, %v528
      %v535 = vpack.c.b16 %v531, %v529
      %vm538 = vcmask 130048
      %v540 = vsel %vm538, %v533, 0
      %v543 = vsel %vm538, %v535, 0
      %545 = vmatprep.subr.bf16.mxu0 0
      %546 = vmatpush1.bf16.msra.mxu0 %v458
      %547 = vmatprep.subr.bf16.mxu0 0
      %548 = vmatpush1.bf16.msra.mxu0 %v464
      %549 = vmatprep.subr.bf16.mxu0 0
      %550 = vmatpush1.bf16.msra.mxu0 %v474
      %551 = vmatprep.subr.bf16.mxu0 0
      %552 = vmatpush1.bf16.msra.mxu0 %v480
      %553 = vmatprep.subr.bf16.mxu0 0
      %554 = vmatpush1.bf16.msra.mxu0 %v486
      %555 = vmatprep.subr.bf16.mxu0 0
      %556 = vmatpush1.bf16.msra.mxu0 %v495
      %557 = vmatprep.subr.bf16.mxu0 0
      %558 = vmatpush1.bf16.msra.mxu0 %v502
      %559 = vmatprep.subr.bf16.mxu0 0
      %560 = vmatpush1.bf16.msra.mxu0 %v511
      %561 = vmatprep.subr.bf16.mxu0 0
      %562 = vmatpush1.bf16.msra.mxu0 %v518
      %563 = vmatprep.subr.bf16.mxu0 0
      %564 = vmatpush1.bf16.msra.mxu0 0
      %565 = vmatprep.subr.bf16.mxu0 0
      %566 = vmatpush1.bf16.msra.mxu0 0
      %567 = vmatprep.subr.bf16.mxu0 0
      %568 = vmatpush1.bf16.msra.mxu0 0
      %569 = vmatprep.subr.bf16.mxu0 0
      %570 = vmatpush1.bf16.msra.mxu0 0
      %571 = vmatprep.subr.bf16.mxu0 0
      %572 = vmatpush1.bf16.msra.mxu0 0
      %573 = vmatprep.subr.bf16.mxu0 0
      %574 = vmatpush1.bf16.msra.mxu0 0
      %575 = vmatprep.subr.bf16.mxu0 0
      %576 = vmatpush1.bf16.msra.mxu0 0
      %577 = vmatprep.mubr.bf16.mxu0 %v540
      %578 = vmatmul.mubr.bf16.gmra.mrb[0].mxu0 %v532
      %v579 = vpop.f32.mrb[0].mxu0
      %v580 = vadd.f32 0.0, %v579
      %v581 = vpop.f32.mrb[0].mxu0
      %v582 = vpop.f32.mrb[0].mxu0
      %v583 = vadd.f32 0.0, %v582
      %v584 = vpop.f32.mrb[0].mxu0
      %585 = vmatprep.mubr.bf16.mxu0 %v543
      %586 = vmatmul.mubr.bf16.gmra.mrb[0].mxu0 %v534
      %v587 = vpop.f32.mrb[0].mxu0
      %v588 = vadd.f32 0.0, %v587
      %v589 = vpop.f32.mrb[0].mxu0
      %v590 = vpop.f32.mrb[0].mxu0
      %v591 = vadd.f32 0.0, %v590
      %v592 = vpop.f32.mrb[0].mxu0
      %593 = vdwg.mxu0
      %v594 = vsel %vm408, 1, 0
      %vm595 = vcmp.eq.s32.totalorder %v594, 1
      %v596 = vsel %vm595, %v580, 0.0
      %v597 = vsel %vm595, %v583, 0.0
      %v598 = vsel %vm595, %v588, 0.0
      %v599 = vsel %vm595, %v591, 0.0
      %600 = vadd.xlane.f32.xlu0 %v596
      %v601 = vpop.xlane.xlu0 %600
      %602 = vadd.xlane.f32.xlu0 %v597
      %v603 = vpop.xlane.xlu0 %602
      %604 = vadd.xlane.f32.xlu0 %v598
      %v605 = vpop.xlane.xlu0 %604
      %606 = vadd.xlane.f32.xlu0 %v599
      %v607 = vpop.xlane.xlu0 %606
      %v608 = vmul.f32 %v601, 0.0625
      %v609 = vmul.f32 %v603, 0.0625
      %v610 = vmul.f32 %v605, 0.0625
      %v611 = vmul.f32 %v607, 0.0625
      %v612 = vmul.f32 %v596, %v596
      %v613 = vmul.f32 %v597, %v597
      %v614 = vmul.f32 %v598, %v598
      %v615 = vmul.f32 %v599, %v599
      %616 = vadd.xlane.f32.xlu0 %v612
      %v617 = vpop.xlane.xlu0 %616
      %618 = vadd.xlane.f32.xlu0 %v613
      %v619 = vpop.xlane.xlu0 %618
      %620 = vadd.xlane.f32.xlu0 %v614
      %v621 = vpop.xlane.xlu0 %620
      %622 = vadd.xlane.f32.xlu0 %v615
      %v623 = vpop.xlane.xlu0 %622
      %v624 = vmul.f32 %v617, 0.0625
      %v625 = vmul.f32 %v619, 0.0625
      %v626 = vmul.f32 %v621, 0.0625
      %v627 = vmul.f32 %v623, 0.0625
      %v628 = vmul.f32 %v608, %v608
      %v629 = vmul.f32 %v609, %v609
      %v630 = vmul.f32 %v610, %v610
      %v631 = vmul.f32 %v611, %v611
      %v632 = vsub.f32 %v624, %v628
      %v633 = vsub.f32 %v625, %v629
      %v634 = vsub.f32 %v626, %v630
      %v635 = vsub.f32 %v627, %v631
      %v636 = vmax.f32 %v632, 0.0
      %v637 = vmax.f32 %v633, 0.0
      %v638 = vmax.f32 %v634, 0.0
      %v639 = vmax.f32 %v635, 0.0
      %v640 = vsub.f32 %v596, %v608
      %v641 = vsub.f32 %v597, %v609
      %v642 = vsub.f32 %v598, %v610
      %v643 = vsub.f32 %v599, %v611
      %v644 = vadd.f32 %v636, 1e-05
      %v645 = vadd.f32 %v637, 1e-05
      %v646 = vadd.f32 %v638, 1e-05
      %v647 = vadd.f32 %v639, 1e-05
      %v648 = vrsqrt.pop %v644
      %v649 = vrsqrt.pop %v645
      %v650 = vrsqrt.pop %v646
      %v651 = vrsqrt.pop %v647
      %v652 = vmul.f32 %v640, %v648
      %v653 = vmul.f32 %v641, %v649
      %v654 = vmul.f32 %v642, %v650
      %v655 = vmul.f32 %v643, %v651
      %657 = vset.pattern.permute.xlu0 0
      %658 = vperm.xlu0 %657, %v450
      %v659 = vpop.permute.xlu0 %658
      %662 = vset.pattern.permute.xlu0 0
      %663 = vperm.xlu0 %662, %v451
      %v664 = vpop.permute.xlu0 %663
      %667 = vset.pattern.permute.xlu0 0
      %668 = vperm.xlu0 %667, %v452
      %v669 = vpop.permute.xlu0 %668
      %672 = vset.pattern.permute.xlu0 0
      %673 = vperm.xlu0 %672, %v453
      %v674 = vpop.permute.xlu0 %673
      %v676 = vmul.f32 %v652, %v659
      %v677 = vmul.f32 %v653, %v664
      %v678 = vmul.f32 %v654, %v669
      %v679 = vmul.f32 %v655, %v674
      %680 = vset.pattern.permute.xlu0 1
      %681 = vperm.xlu0 %680, %v450
      %v682 = vpop.permute.xlu0 %681
      %684 = vset.pattern.permute.xlu0 1
      %685 = vperm.xlu0 %684, %v451
      %v686 = vpop.permute.xlu0 %685
      %688 = vset.pattern.permute.xlu0 1
      %689 = vperm.xlu0 %688, %v452
      %v690 = vpop.permute.xlu0 %689
      %692 = vset.pattern.permute.xlu0 1
      %693 = vperm.xlu0 %692, %v453
      %v694 = vpop.permute.xlu0 %693
      %v696 = vadd.f32 %v676, %v682
      %v697 = vadd.f32 %v677, %v686
      %v698 = vadd.f32 %v678, %v690
      %v699 = vadd.f32 %v679, %v694
      %v700 = vmax.f32 %v696, 0.0
      %v701 = vmax.f32 %v697, 0.0
      %v702 = vmax.f32 %v698, 0.0
      %v703 = vmax.f32 %v699, 0.0
      %708 = vrot.lane.b32.xlu0 %v700, 7
      %v709 = vpop.permute.xlu0 %708
      %710 = vrot.lane.b32.xlu0 %v701, 7
      %v711 = vpop.permute.xlu0 %710
      %712 = vrot.lane.b32.xlu0 %v702, 7
      %v713 = vpop.permute.xlu0 %712
      %714 = vrot.lane.b32.xlu0 %v703, 7
      %v715 = vpop.permute.xlu0 %714
      %vm720 = vcmask 1047608
      %721 = vst.msk [vmem:[#allocation2] sm:$0xff] %vm720, %v709
      %vm722 = vcmask 56320
      %723 = vst.msk [vmem:[#allocation2 + $0x8] sm:$0xff] %vm722, %v709
      %724 = vst.msk [vmem:[#allocation2 + $0x10] sm:$0xff] %vm720, %v711
      %725 = vst.msk [vmem:[#allocation2 + $0x18] sm:$0xff] %vm722, %v711
      %726 = vst.msk [vmem:[#allocation2 + $0x20] sm:$0xff] %vm720, %v713
      %727 = vst.msk [vmem:[#allocation2 + $0x28] sm:$0xff] %vm722, %v713
      %728 = vst.msk [vmem:[#allocation2 + $0x30] sm:$0xff] %vm720, %v715
      %729 = vst.msk [vmem:[#allocation2 + $0x38] sm:$0xff] %vm722, %v715
      %v730 = vld [vmem:[#allocation2] sm:$0xff]
      %v731 = vld [vmem:[#allocation2 + $0x8] sm:$0xff]
      %v732 = vld [vmem:[#allocation2 + $0x10] sm:$0xff]
      %v733 = vld [vmem:[#allocation2 + $0x18] sm:$0xff]
      %v734 = vld [vmem:[#allocation2 + $0x20] sm:$0xff]
      %v735 = vld [vmem:[#allocation2 + $0x28] sm:$0xff]
      %v736 = vld [vmem:[#allocation2 + $0x30] sm:$0xff]
      %v737 = vld [vmem:[#allocation2 + $0x38] sm:$0xff]
      %746 = vrot.lane.b32.xlu0 %v730, 126
      %v747 = vpop.permute.xlu0 %746
      %748 = vrot.lane.b32.xlu0 %v731, 126
      %v749 = vpop.permute.xlu0 %748
      %750 = vrot.lane.b32.xlu0 %v732, 126
      %v751 = vpop.permute.xlu0 %750
      %752 = vrot.lane.b32.xlu0 %v733, 126
      %v753 = vpop.permute.xlu0 %752
      %754 = vrot.lane.b32.xlu0 %v734, 126
      %v755 = vpop.permute.xlu0 %754
      %756 = vrot.lane.b32.xlu0 %v735, 126
      %v757 = vpop.permute.xlu0 %756
      %758 = vrot.lane.b32.xlu0 %v736, 126
      %v759 = vpop.permute.xlu0 %758
      %760 = vrot.lane.b32.xlu0 %v737, 126
      %v761 = vpop.permute.xlu0 %760
      %vm762 = vcmask 1031168
      %v763 = vsel %vm762, %v747, %v749
      %v764 = vsel %vm762, %v751, %v753
      %v765 = vsel %vm762, %v755, %v757
      %v766 = vsel %vm762, %v759, %v761
      %v775 = vsel %vm762, %v749, 0.0
      %v776 = vsel %vm762, %v753, 0.0
      %v777 = vsel %vm762, %v757, 0.0
      %v778 = vsel %vm762, %v761, 0.0
      %v779 = vsel %vm434, 1, 0
      %v780 = vsel %vm435, 1, 0
      %vm781 = vcmp.eq.s32.totalorder %v779, 1
      %vm782 = vcmp.eq.s32.totalorder %v780, 1
      %783 = vst.msk [vmem:[#allocation2] sm:$0xff] %vm781, %v763
      %784 = vst.msk [vmem:[#allocation2 + $0x8] sm:$0xff] %vm782, %v775
      %785 = vst.msk [vmem:[#allocation2 + $0x10] sm:$0xff] %vm781, %v764
      %786 = vst.msk [vmem:[#allocation2 + $0x18] sm:$0xff] %vm782, %v776
      %787 = vst.msk [vmem:[#allocation2 + $0x20] sm:$0xff] %vm781, %v765
      %788 = vst.msk [vmem:[#allocation2 + $0x28] sm:$0xff] %vm782, %v777
      %789 = vst.msk [vmem:[#allocation2 + $0x30] sm:$0xff] %vm781, %v766
      %790 = vst.msk [vmem:[#allocation2 + $0x38] sm:$0xff] %vm782, %v778
      %791 = vrot.lane.b32.xlu0 %v730, 2
      %v792 = vpop.permute.xlu0 %791
      %793 = vrot.lane.b32.xlu0 %v731, 2
      %v794 = vpop.permute.xlu0 %793
      %795 = vrot.lane.b32.xlu0 %v732, 2
      %v796 = vpop.permute.xlu0 %795
      %797 = vrot.lane.b32.xlu0 %v733, 2
      %v798 = vpop.permute.xlu0 %797
      %799 = vrot.lane.b32.xlu0 %v734, 2
      %v800 = vpop.permute.xlu0 %799
      %801 = vrot.lane.b32.xlu0 %v735, 2
      %v802 = vpop.permute.xlu0 %801
      %803 = vrot.lane.b32.xlu0 %v736, 2
      %v804 = vpop.permute.xlu0 %803
      %805 = vrot.lane.b32.xlu0 %v737, 2
      %v806 = vpop.permute.xlu0 %805
      %vm807 = vcmask 15360
      %v808 = vsel %vm807, %v792, %v794
      %v809 = vsel %vm807, %v796, %v798
      %v810 = vsel %vm807, %v800, %v802
      %v811 = vsel %vm807, %v804, %v806
      %v820 = vsel %vm807, 0.0, %v792
      %v821 = vsel %vm807, 0.0, %v796
      %v822 = vsel %vm807, 0.0, %v800
      %v823 = vsel %vm807, 0.0, %v804
      %v824 = vsel %vm436, 1, 0
      %v825 = vsel %vm437, 1, 0
      %vm826 = vcmp.eq.s32.totalorder %v824, 1
      %vm827 = vcmp.eq.s32.totalorder %v825, 1
      %828 = vst.msk [vmem:[#allocation2] sm:$0xff] %vm826, %v820
      %829 = vst.msk [vmem:[#allocation2 + $0x8] sm:$0xff] %vm827, %v808
      %830 = vst.msk [vmem:[#allocation2 + $0x10] sm:$0xff] %vm826, %v821
      %831 = vst.msk [vmem:[#allocation2 + $0x18] sm:$0xff] %vm827, %v809
      %832 = vst.msk [vmem:[#allocation2 + $0x20] sm:$0xff] %vm826, %v822
      %833 = vst.msk [vmem:[#allocation2 + $0x28] sm:$0xff] %vm827, %v810
      %834 = vst.msk [vmem:[#allocation2 + $0x30] sm:$0xff] %vm826, %v823
      %835 = vst.msk [vmem:[#allocation2 + $0x38] sm:$0xff] %vm827, %v811
      %v836 = vld [vmem:[#allocation2] sm:$0xff]
      %v837 = vld [vmem:[#allocation2 + $0x10] sm:$0xff]
      %v838 = vld [vmem:[#allocation2 + $0x20] sm:$0xff]
      %v839 = vld [vmem:[#allocation2 + $0x30] sm:$0xff]
      %844 = vrot.lane.b32.xlu0 %v836, 116
      %v845 = vpop.permute.xlu0 %844
      %846 = vrot.lane.b32.xlu0 %v837, 116
      %v847 = vpop.permute.xlu0 %846
      %848 = vrot.lane.b32.xlu0 %v838, 116
      %v849 = vpop.permute.xlu0 %848
      %850 = vrot.lane.b32.xlu0 %v839, 116
      %v851 = vpop.permute.xlu0 %850
      %vm856 = vcmask 48128
      %857 = vst.msk [vmem:[#allocation2] sm:$0xff] %vm856, %v845
      %858 = vst.msk [vmem:[#allocation2 + $0x10] sm:$0xff] %vm856, %v847
      %859 = vst.msk [vmem:[#allocation2 + $0x20] sm:$0xff] %vm856, %v849
      %860 = vst.msk [vmem:[#allocation2 + $0x30] sm:$0xff] %vm856, %v851
      %v861 = vld [vmem:[#allocation2] sm:$0xff]
      %v862 = vld [vmem:[#allocation2 + $0x10] sm:$0xff]
      %v863 = vld [vmem:[#allocation2 + $0x20] sm:$0xff]
      %v864 = vld [vmem:[#allocation2 + $0x30] sm:$0xff]
      %869 = vrot.lane.b32.xlu0 %v861, 12
      %v870 = vpop.permute.xlu0 %869
      %871 = vrot.lane.b32.xlu0 %v862, 12
      %v872 = vpop.permute.xlu0 %871
      %873 = vrot.lane.b32.xlu0 %v863, 12
      %v874 = vpop.permute.xlu0 %873
      %875 = vrot.lane.b32.xlu0 %v864, 12
      %v876 = vpop.permute.xlu0 %875
      %vm881 = vcmask 294128
      %882 = vst.msk [vmem:[#allocation2] sm:$0xff] %vm881, %v870
      %883 = vst.msk [vmem:[#allocation2 + $0x10] sm:$0xff] %vm881, %v872
      %884 = vst.msk [vmem:[#allocation2 + $0x20] sm:$0xff] %vm881, %v874
      %885 = vst.msk [vmem:[#allocation2 + $0x30] sm:$0xff] %vm881, %v876
      %v886 = vld [vmem:[#allocation2] sm:$0xff]
      %v887 = vld [vmem:[#allocation2 + $0x8] sm:$0xff]
      %v888 = vld [vmem:[#allocation2 + $0x10] sm:$0xff]
      %v889 = vld [vmem:[#allocation2 + $0x18] sm:$0xff]
      %v890 = vld [vmem:[#allocation2 + $0x20] sm:$0xff]
      %v891 = vld [vmem:[#allocation2 + $0x28] sm:$0xff]
      %v892 = vld [vmem:[#allocation2 + $0x30] sm:$0xff]
      %v893 = vld [vmem:[#allocation2 + $0x38] sm:$0xff]
      %v894 = vld [vmem:[%s3] sm:$0xff]
      %v895 = vld [vmem:[%s3 + $0x8] sm:$0xf]
      %v896 = vld [vmem:[%s3 + $0xc] sm:$0xff]
      %v897 = vld [vmem:[%s3 + $0x14] sm:$0xf]
      %v898 = vld [vmem:[%s3 + $0x18] sm:$0xff]
      %v899 = vld [vmem:[%s3 + $0x20] sm:$0xf]
      %v900 = vld [vmem:[%s3 + $0x24] sm:$0xff]
      %v901 = vld [vmem:[%s3 + $0x2c] sm:$0xf]
      %v902 = vld [vmem:[%s4] sm:$0xff]
      %v903 = vld [vmem:[%s4 + $0x8] sm:$0xff]
      %v904 = vld [vmem:[%s4 + $0x10] sm:$0xff]
      %v905 = vld [vmem:[%s4 + $0x18] sm:$0xff]
      %914 = vrot.lane.b32.xlu0 %v886, 127
      %v915 = vpop.permute.xlu0 %914
      %916 = vrot.lane.b32.xlu0 %v887, 127
      %v917 = vpop.permute.xlu0 %916
      %918 = vrot.lane.b32.xlu0 %v888, 127
      %v919 = vpop.permute.xlu0 %918
      %920 = vrot.lane.b32.xlu0 %v889, 127
      %v921 = vpop.permute.xlu0 %920
      %922 = vrot.lane.b32.xlu0 %v890, 127
      %v923 = vpop.permute.xlu0 %922
      %924 = vrot.lane.b32.xlu0 %v891, 127
      %v925 = vpop.permute.xlu0 %924
      %926 = vrot.lane.b32.xlu0 %v892, 127
      %v927 = vpop.permute.xlu0 %926
      %928 = vrot.lane.b32.xlu0 %v893, 127
      %v929 = vpop.permute.xlu0 %928
      %vm930 = vcmask 1039360
      %v931 = vsel %vm930, %v915, %v917
      %v932 = vsel %vm930, %v919, %v921
      %v933 = vsel %vm930, %v923, %v925
      %v934 = vsel %vm930, %v927, %v929
      %939 = vrot.lane.b32.xlu0 %v886, 126
      %v940 = vpop.permute.xlu0 %939
      %941 = vrot.lane.b32.xlu0 %v887, 126
      %v942 = vpop.permute.xlu0 %941
      %943 = vrot.lane.b32.xlu0 %v888, 126
      %v944 = vpop.permute.xlu0 %943
      %945 = vrot.lane.b32.xlu0 %v889, 126
      %v946 = vpop.permute.xlu0 %945
      %947 = vrot.lane.b32.xlu0 %v890, 126
      %v948 = vpop.permute.xlu0 %947
      %949 = vrot.lane.b32.xlu0 %v891, 126
      %v950 = vpop.permute.xlu0 %949
      %951 = vrot.lane.b32.xlu0 %v892, 126
      %v952 = vpop.permute.xlu0 %951
      %953 = vrot.lane.b32.xlu0 %v893, 126
      %v954 = vpop.permute.xlu0 %953
      %v955 = vsel %vm762, %v940, %v942
      %v956 = vsel %vm762, %v944, %v946
      %v957 = vsel %vm762, %v948, %v950
      %v958 = vsel %vm762, %v952, %v954
      %963 = vrot.lane.b32.xlu0 %v886, 122
      %v964 = vpop.permute.xlu0 %963
      %965 = vrot.lane.b32.xlu0 %v887, 122
      %v966 = vpop.permute.xlu0 %965
      %967 = vrot.lane.b32.xlu0 %v888, 122
      %v968 = vpop.permute.xlu0 %967
      %969 = vrot.lane.b32.xlu0 %v889, 122
      %v970 = vpop.permute.xlu0 %969
      %971 = vrot.lane.b32.xlu0 %v890, 122
      %v972 = vpop.permute.xlu0 %971
      %973 = vrot.lane.b32.xlu0 %v891, 122
      %v974 = vpop.permute.xlu0 %973
      %975 = vrot.lane.b32.xlu0 %v892, 122
      %v976 = vpop.permute.xlu0 %975
      %977 = vrot.lane.b32.xlu0 %v893, 122
      %v978 = vpop.permute.xlu0 %977
      %vm979 = vcmask 998400
      %v980 = vsel %vm979, %v964, %v966
      %v981 = vsel %vm979, %v968, %v970
      %v982 = vsel %vm979, %v972, %v974
      %v983 = vsel %vm979, %v976, %v978
      %988 = vrot.lane.b32.xlu0 %v886, 121
      %v989 = vpop.permute.xlu0 %988
      %990 = vrot.lane.b32.xlu0 %v887, 121
      %v991 = vpop.permute.xlu0 %990
      %992 = vrot.lane.b32.xlu0 %v888, 121
      %v993 = vpop.permute.xlu0 %992
      %994 = vrot.lane.b32.xlu0 %v889, 121
      %v995 = vpop.permute.xlu0 %994
      %996 = vrot.lane.b32.xlu0 %v890, 121
      %v997 = vpop.permute.xlu0 %996
      %998 = vrot.lane.b32.xlu0 %v891, 121
      %v999 = vpop.permute.xlu0 %998
      %1000 = vrot.lane.b32.xlu0 %v892, 121
      %v1001 = vpop.permute.xlu0 %1000
      %1002 = vrot.lane.b32.xlu0 %v893, 121
      %v1003 = vpop.permute.xlu0 %1002
      %vm1004 = vcmask 990208
      %v1005 = vsel %vm1004, %v989, %v991
      %v1006 = vsel %vm1004, %v993, %v995
      %v1007 = vsel %vm1004, %v997, %v999
      %v1008 = vsel %vm1004, %v1001, %v1003
      %1013 = vrot.lane.b32.xlu0 %v886, 120
      %v1014 = vpop.permute.xlu0 %1013
      %1015 = vrot.lane.b32.xlu0 %v887, 120
      %v1016 = vpop.permute.xlu0 %1015
      %1017 = vrot.lane.b32.xlu0 %v888, 120
      %v1018 = vpop.permute.xlu0 %1017
      %1019 = vrot.lane.b32.xlu0 %v889, 120
      %v1020 = vpop.permute.xlu0 %1019
      %1021 = vrot.lane.b32.xlu0 %v890, 120
      %v1022 = vpop.permute.xlu0 %1021
      %1023 = vrot.lane.b32.xlu0 %v891, 120
      %v1024 = vpop.permute.xlu0 %1023
      %1025 = vrot.lane.b32.xlu0 %v892, 120
      %v1026 = vpop.permute.xlu0 %1025
      %1027 = vrot.lane.b32.xlu0 %v893, 120
      %v1028 = vpop.permute.xlu0 %1027
      %vm1029 = vcmask 982016
      %v1030 = vsel %vm1029, %v1014, %v1016
      %v1031 = vsel %vm1029, %v1018, %v1020
      %v1032 = vsel %vm1029, %v1022, %v1024
      %v1033 = vsel %vm1029, %v1026, %v1028
      %1038 = vrot.lane.b32.xlu0 %v886, 116
      %v1039 = vpop.permute.xlu0 %1038
      %1040 = vrot.lane.b32.xlu0 %v887, 116
      %v1041 = vpop.permute.xlu0 %1040
      %1042 = vrot.lane.b32.xlu0 %v888, 116
      %v1043 = vpop.permute.xlu0 %1042
      %1044 = vrot.lane.b32.xlu0 %v889, 116
      %v1045 = vpop.permute.xlu0 %1044
      %1046 = vrot.lane.b32.xlu0 %v890, 116
      %v1047 = vpop.permute.xlu0 %1046
      %1048 = vrot.lane.b32.xlu0 %v891, 116
      %v1049 = vpop.permute.xlu0 %1048
      %1050 = vrot.lane.b32.xlu0 %v892, 116
      %v1051 = vpop.permute.xlu0 %1050
      %1052 = vrot.lane.b32.xlu0 %v893, 116
      %v1053 = vpop.permute.xlu0 %1052
      %vm1054 = vcmask 949248
      %v1055 = vsel %vm1054, %v1039, %v1041
      %v1056 = vsel %vm1054, %v1043, %v1045
      %v1057 = vsel %vm1054, %v1047, %v1049
      %v1058 = vsel %vm1054, %v1051, %v1053
      %1063 = vrot.lane.b32.xlu0 %v886, 115
      %v1064 = vpop.permute.xlu0 %1063
      %1065 = vrot.lane.b32.xlu0 %v887, 115
      %v1066 = vpop.permute.xlu0 %1065
      %1067 = vrot.lane.b32.xlu0 %v888, 115
      %v1068 = vpop.permute.xlu0 %1067
      %1069 = vrot.lane.b32.xlu0 %v889, 115
      %v1070 = vpop.permute.xlu0 %1069
      %1071 = vrot.lane.b32.xlu0 %v890, 115
      %v1072 = vpop.permute.xlu0 %1071
      %1073 = vrot.lane.b32.xlu0 %v891, 115
      %v1074 = vpop.permute.xlu0 %1073
      %1075 = vrot.lane.b32.xlu0 %v892, 115
      %v1076 = vpop.permute.xlu0 %1075
      %1077 = vrot.lane.b32.xlu0 %v893, 115
      %v1078 = vpop.permute.xlu0 %1077
      %vm1079 = vcmask 941056
      %v1080 = vsel %vm1079, %v1064, %v1066
      %v1081 = vsel %vm1079, %v1068, %v1070
      %v1082 = vsel %vm1079, %v1072, %v1074
      %v1083 = vsel %vm1079, %v1076, %v1078
      %1088 = vrot.lane.b32.xlu0 %v886, 114
      %v1089 = vpop.permute.xlu0 %1088
      %1090 = vrot.lane.b32.xlu0 %v887, 114
      %v1091 = vpop.permute.xlu0 %1090
      %1092 = vrot.lane.b32.xlu0 %v888, 114
      %v1093 = vpop.permute.xlu0 %1092
      %1094 = vrot.lane.b32.xlu0 %v889, 114
      %v1095 = vpop.permute.xlu0 %1094
      %1096 = vrot.lane.b32.xlu0 %v890, 114
      %v1097 = vpop.permute.xlu0 %1096
      %1098 = vrot.lane.b32.xlu0 %v891, 114
      %v1099 = vpop.permute.xlu0 %1098
      %1100 = vrot.lane.b32.xlu0 %v892, 114
      %v1101 = vpop.permute.xlu0 %1100
      %1102 = vrot.lane.b32.xlu0 %v893, 114
      %v1103 = vpop.permute.xlu0 %1102
      %vm1104 = vcmask 932864
      %v1105 = vsel %vm1104, %v1089, %v1091
      %v1106 = vsel %vm1104, %v1093, %v1095
      %v1107 = vsel %vm1104, %v1097, %v1099
      %v1108 = vsel %vm1104, %v1101, %v1103
      %v1113 = vpack.c.bf16 %v888, %v886
      %v1114 = vpack.c.bf16 %v892, %v890
      %v1115 = vpack.c.bf16 %v932, %v931
      %v1116 = vpack.c.bf16 %v934, %v933
      %v1117 = vpack.c.bf16 %v956, %v955
      %v1118 = vpack.c.bf16 %v958, %v957
      %v1119 = vpack.c.bf16 %v981, %v980
      %v1120 = vpack.c.bf16 %v983, %v982
      %v1121 = vpack.c.bf16 %v1006, %v1005
      %v1122 = vpack.c.bf16 %v1008, %v1007
      %v1123 = vpack.c.bf16 %v1031, %v1030
      %v1124 = vpack.c.bf16 %v1033, %v1032
      %v1125 = vpack.c.bf16 %v1056, %v1055
      %v1126 = vpack.c.bf16 %v1058, %v1057
      %v1127 = vpack.c.bf16 %v1081, %v1080
      %v1128 = vpack.c.bf16 %v1083, %v1082
      %v1129 = vpack.c.bf16 %v1106, %v1105
      %v1130 = vpack.c.bf16 %v1108, %v1107
      %v1139 = vunpack.c.l.b16 %v894
      %v1140 = vunpack.c.h.b16 %v894
      %v1141 = vunpack.c.l.b16 %v895
      %v1142 = vunpack.c.l.b16 %v896
      %v1143 = vunpack.c.h.b16 %v896
      %v1144 = vunpack.c.l.b16 %v897
      %v1145 = vunpack.c.l.b16 %v898
      %v1146 = vunpack.c.h.b16 %v898
      %v1147 = vunpack.c.l.b16 %v899
      %v1148 = vunpack.c.l.b16 %v900
      %v1149 = vunpack.c.h.b16 %v900
      %v1150 = vunpack.c.l.b16 %v901
      %v1151 = vpack.c.b16 %v1142, %v1139
      %v1152 = vpack.c.b16 %v1143, %v1140
      %v1153 = vpack.c.b16 %v1144, %v1141
      %v1154 = vpack.c.b16 %v1148, %v1145
      %v1155 = vpack.c.b16 %v1149, %v1146
      %v1156 = vpack.c.b16 %v1150, %v1147
      %vm1161 = vcmask 261120
      %v1163 = vsel %vm1161, %v1153, 0
      %v1166 = vsel %vm1161, %v1156, 0
      %1168 = vmatprep.subr.bf16.mxu0 0
      %1169 = vmatpush1.bf16.msra.mxu0 %v1113
      %1170 = vmatprep.subr.bf16.mxu0 0
      %1171 = vmatpush1.bf16.msra.mxu0 %v1114
      %1172 = vmatprep.subr.bf16.mxu0 0
      %1173 = vmatpush1.bf16.msra.mxu0 %v1115
      %1174 = vmatprep.subr.bf16.mxu0 0
      %1175 = vmatpush1.bf16.msra.mxu0 %v1116
      %1176 = vmatprep.subr.bf16.mxu0 0
      %1177 = vmatpush1.bf16.msra.mxu0 %v1117
      %1178 = vmatprep.subr.bf16.mxu0 0
      %1179 = vmatpush1.bf16.msra.mxu0 %v1118
      %1180 = vmatprep.subr.bf16.mxu0 0
      %1181 = vmatpush1.bf16.msra.mxu0 %v1119
      %1182 = vmatprep.subr.bf16.mxu0 0
      %1183 = vmatpush1.bf16.msra.mxu0 %v1120
      %1184 = vmatprep.subr.bf16.mxu0 0
      %1185 = vmatpush1.bf16.msra.mxu0 %v1121
      %1186 = vmatprep.subr.bf16.mxu0 0
      %1187 = vmatpush1.bf16.msra.mxu0 %v1122
      %1188 = vmatprep.subr.bf16.mxu0 0
      %1189 = vmatpush1.bf16.msra.mxu0 %v1123
      %1190 = vmatprep.subr.bf16.mxu0 0
      %1191 = vmatpush1.bf16.msra.mxu0 %v1124
      %1192 = vmatprep.subr.bf16.mxu0 0
      %1193 = vmatpush1.bf16.msra.mxu0 %v1125
      %1194 = vmatprep.subr.bf16.mxu0 0
      %1195 = vmatpush1.bf16.msra.mxu0 %v1126
      %1196 = vmatprep.subr.bf16.mxu0 0
      %1197 = vmatpush1.bf16.msra.mxu0 %v1127
      %1198 = vmatprep.subr.bf16.mxu0 0
      %1199 = vmatpush1.bf16.msra.mxu0 %v1128
      %1200 = vmatprep.mubr.bf16.mxu0 %v1152
      %1201 = vmatmul.mubr.bf16.gmra.mrb[0].mxu0 %v1151
      %v1202 = vpop.f32.mrb[0].mxu0
      %v1203 = vadd.f32 0.0, %v1202
      %v1204 = vpop.f32.mrb[0].mxu0
      %v1205 = vpop.f32.mrb[0].mxu0
      %v1206 = vadd.f32 0.0, %v1205
      %v1207 = vpop.f32.mrb[0].mxu0
      %1208 = vmatprep.mubr.bf16.mxu0 %v1155
      %1209 = vmatmul.mubr.bf16.gmra.mrb[0].mxu0 %v1154
      %v1210 = vpop.f32.mrb[0].mxu0
      %v1211 = vadd.f32 0.0, %v1210
      %v1212 = vpop.f32.mrb[0].mxu0
      %v1213 = vpop.f32.mrb[0].mxu0
      %v1214 = vadd.f32 0.0, %v1213
      %v1215 = vpop.f32.mrb[0].mxu0
      %1216 = vdwg.mxu0
      %1217 = vmatprep.subr.bf16.mxu0 0
      %1218 = vmatpush1.bf16.msra.mxu0 %v1129
      %1219 = vmatprep.subr.bf16.mxu0 0
      %1220 = vmatpush1.bf16.msra.mxu0 %v1130
      %1221 = vmatprep.subr.bf16.mxu0 0
      %1222 = vmatpush1.bf16.msra.mxu0 0
      %1223 = vmatprep.subr.bf16.mxu0 0
      %1224 = vmatpush1.bf16.msra.mxu0 0
      %1225 = vmatprep.subr.bf16.mxu0 0
      %1226 = vmatpush1.bf16.msra.mxu0 0
      %1227 = vmatprep.subr.bf16.mxu0 0
      %1228 = vmatpush1.bf16.msra.mxu0 0
      %1229 = vmatprep.subr.bf16.mxu0 0
      %1230 = vmatpush1.bf16.msra.mxu0 0
      %1231 = vmatprep.subr.bf16.mxu0 0
      %1232 = vmatpush1.bf16.msra.mxu0 0
      %1233 = vmatprep.subr.bf16.mxu0 0
      %1234 = vmatpush1.bf16.msra.mxu0 0
      %1235 = vmatprep.subr.bf16.mxu0 0
      %1236 = vmatpush1.bf16.msra.mxu0 0
      %1237 = vmatprep.subr.bf16.mxu0 0
      %1238 = vmatpush1.bf16.msra.mxu0 0
      %1239 = vmatprep.subr.bf16.mxu0 0
      %1240 = vmatpush1.bf16.msra.mxu0 0
      %1241 = vmatprep.subr.bf16.mxu0 0
      %1242 = vmatpush1.bf16.msra.mxu0 0
      %1243 = vmatprep.subr.bf16.mxu0 0
      %1244 = vmatpush1.bf16.msra.mxu0 0
      %1245 = vmatprep.subr.bf16.mxu0 0
      %1246 = vmatpush1.bf16.msra.mxu0 0
      %1247 = vmatprep.subr.bf16.mxu0 0
      %1248 = vmatpush1.bf16.msra.mxu0 0
      %1249 = vmatprep.mubr.bf16.mxu0 0
      %1250 = vmatmul.mubr.bf16.gmra.mrb[0].mxu0 %v1163
      %v1251 = vpop.f32.mrb[0].mxu0
      %v1252 = vadd.f32 %v1203, %v1251
      %v1253 = vpop.f32.mrb[0].mxu0
      %v1254 = vpop.f32.mrb[0].mxu0
      %v1255 = vadd.f32 %v1206, %v1254
      %v1256 = vpop.f32.mrb[0].mxu0
      %1257 = vmatprep.mubr.bf16.mxu0 0
      %1258 = vmatmul.mubr.bf16.gmra.mrb[0].mxu0 %v1166
      %v1259 = vpop.f32.mrb[0].mxu0
      %v1260 = vadd.f32 %v1211, %v1259
      %v1261 = vpop.f32.mrb[0].mxu0
      %v1262 = vpop.f32.mrb[0].mxu0
      %v1263 = vadd.f32 %v1214, %v1262
      %v1264 = vpop.f32.mrb[0].mxu0
      %1265 = vdwg.mxu0
      %v1266 = vsel %vm595, %v1252, 0.0
      %v1267 = vsel %vm595, %v1255, 0.0
      %v1268 = vsel %vm595, %v1260, 0.0
      %v1269 = vsel %vm595, %v1263, 0.0
      %1270 = vadd.xlane.f32.xlu0 %v1266
      %v1271 = vpop.xlane.xlu0 %1270
      %1272 = vadd.xlane.f32.xlu0 %v1267
      %v1273 = vpop.xlane.xlu0 %1272
      %1274 = vadd.xlane.f32.xlu0 %v1268
      %v1275 = vpop.xlane.xlu0 %1274
      %1276 = vadd.xlane.f32.xlu0 %v1269
      %v1277 = vpop.xlane.xlu0 %1276
      %v1278 = vmul.f32 %v1271, 0.0625
      %v1279 = vmul.f32 %v1273, 0.0625
      %v1280 = vmul.f32 %v1275, 0.0625
      %v1281 = vmul.f32 %v1277, 0.0625
      %v1282 = vmul.f32 %v1266, %v1266
      %v1283 = vmul.f32 %v1267, %v1267
      %v1284 = vmul.f32 %v1268, %v1268
      %v1285 = vmul.f32 %v1269, %v1269
      %1286 = vadd.xlane.f32.xlu0 %v1282
      %v1287 = vpop.xlane.xlu0 %1286
      %1288 = vadd.xlane.f32.xlu0 %v1283
      %v1289 = vpop.xlane.xlu0 %1288
      %1290 = vadd.xlane.f32.xlu0 %v1284
      %v1291 = vpop.xlane.xlu0 %1290
      %1292 = vadd.xlane.f32.xlu0 %v1285
      %v1293 = vpop.xlane.xlu0 %1292
      %v1294 = vmul.f32 %v1287, 0.0625
      %v1295 = vmul.f32 %v1289, 0.0625
      %v1296 = vmul.f32 %v1291, 0.0625
      %v1297 = vmul.f32 %v1293, 0.0625
      %v1298 = vmul.f32 %v1278, %v1278
      %v1299 = vmul.f32 %v1279, %v1279
      %v1300 = vmul.f32 %v1280, %v1280
      %v1301 = vmul.f32 %v1281, %v1281
      %v1302 = vsub.f32 %v1294, %v1298
      %v1303 = vsub.f32 %v1295, %v1299
      %v1304 = vsub.f32 %v1296, %v1300
      %v1305 = vsub.f32 %v1297, %v1301
      %v1306 = vmax.f32 %v1302, 0.0
      %v1307 = vmax.f32 %v1303, 0.0
      %v1308 = vmax.f32 %v1304, 0.0
      %v1309 = vmax.f32 %v1305, 0.0
      %v1310 = vsub.f32 %v1266, %v1278
      %v1311 = vsub.f32 %v1267, %v1279
      %v1312 = vsub.f32 %v1268, %v1280
      %v1313 = vsub.f32 %v1269, %v1281
      %v1314 = vadd.f32 %v1306, 1e-05
      %v1315 = vadd.f32 %v1307, 1e-05
      %v1316 = vadd.f32 %v1308, 1e-05
      %v1317 = vadd.f32 %v1309, 1e-05
      %v1318 = vrsqrt.pop %v1314
      %v1319 = vrsqrt.pop %v1315
      %v1320 = vrsqrt.pop %v1316
      %v1321 = vrsqrt.pop %v1317
      %v1322 = vmul.f32 %v1310, %v1318
      %v1323 = vmul.f32 %v1311, %v1319
      %v1324 = vmul.f32 %v1312, %v1320
      %v1325 = vmul.f32 %v1313, %v1321
      %1327 = vset.pattern.permute.xlu0 0
      %1328 = vperm.xlu0 %1327, %v902
      %v1329 = vpop.permute.xlu0 %1328
      %1332 = vset.pattern.permute.xlu0 0
      %1333 = vperm.xlu0 %1332, %v903
      %v1334 = vpop.permute.xlu0 %1333
      %1337 = vset.pattern.permute.xlu0 0
      %1338 = vperm.xlu0 %1337, %v904
      %v1339 = vpop.permute.xlu0 %1338
      %1342 = vset.pattern.permute.xlu0 0
      %1343 = vperm.xlu0 %1342, %v905
      %v1344 = vpop.permute.xlu0 %1343
      %v1346 = vmul.f32 %v1322, %v1329
      %v1347 = vmul.f32 %v1323, %v1334
      %v1348 = vmul.f32 %v1324, %v1339
      %v1349 = vmul.f32 %v1325, %v1344
      %1350 = vset.pattern.permute.xlu0 1
      %1351 = vperm.xlu0 %1350, %v902
      %v1352 = vpop.permute.xlu0 %1351
      %1354 = vset.pattern.permute.xlu0 1
      %1355 = vperm.xlu0 %1354, %v903
      %v1356 = vpop.permute.xlu0 %1355
      %1358 = vset.pattern.permute.xlu0 1
      %1359 = vperm.xlu0 %1358, %v904
      %v1360 = vpop.permute.xlu0 %1359
      %1362 = vset.pattern.permute.xlu0 1
      %1363 = vperm.xlu0 %1362, %v905
      %v1364 = vpop.permute.xlu0 %1363
      %v1366 = vadd.f32 %v1346, %v1352
      %v1367 = vadd.f32 %v1347, %v1356
      %v1368 = vadd.f32 %v1348, %v1360
      %v1369 = vadd.f32 %v1349, %v1364
      %v1370 = vmax.f32 %v1366, 0.0
      %v1371 = vmax.f32 %v1367, 0.0
      %v1372 = vmax.f32 %v1368, 0.0
      %v1373 = vmax.f32 %v1369, 0.0
      %1378 = vrot.lane.b32.xlu0 %v1370, 7
      %v1379 = vpop.permute.xlu0 %1378
      %1380 = vrot.lane.b32.xlu0 %v1371, 7
      %v1381 = vpop.permute.xlu0 %1380
      %1382 = vrot.lane.b32.xlu0 %v1372, 7
      %v1383 = vpop.permute.xlu0 %1382
      %1384 = vrot.lane.b32.xlu0 %v1373, 7
      %v1385 = vpop.permute.xlu0 %1384
      %1390 = vst.msk [vmem:[#allocation2] sm:$0xff] %vm720, %v1379
      %1391 = vst.msk [vmem:[#allocation2 + $0x8] sm:$0xff] %vm722, %v1379
      %1392 = vst.msk [vmem:[#allocation2 + $0x10] sm:$0xff] %vm720, %v1381
      %1393 = vst.msk [vmem:[#allocation2 + $0x18] sm:$0xff] %vm722, %v1381
      %1394 = vst.msk [vmem:[#allocation2 + $0x20] sm:$0xff] %vm720, %v1383
      %1395 = vst.msk [vmem:[#allocation2 + $0x28] sm:$0xff] %vm722, %v1383
      %1396 = vst.msk [vmem:[#allocation2 + $0x30] sm:$0xff] %vm720, %v1385
      %1397 = vst.msk [vmem:[#allocation2 + $0x38] sm:$0xff] %vm722, %v1385
      %v1398 = vld [vmem:[#allocation2] sm:$0xff]
      %v1399 = vld [vmem:[#allocation2 + $0x8] sm:$0xff]
      %v1400 = vld [vmem:[#allocation2 + $0x10] sm:$0xff]
      %v1401 = vld [vmem:[#allocation2 + $0x18] sm:$0xff]
      %v1402 = vld [vmem:[#allocation2 + $0x20] sm:$0xff]
      %v1403 = vld [vmem:[#allocation2 + $0x28] sm:$0xff]
      %v1404 = vld [vmem:[#allocation2 + $0x30] sm:$0xff]
      %v1405 = vld [vmem:[#allocation2 + $0x38] sm:$0xff]
      %1414 = vrot.lane.b32.xlu0 %v1398, 126
      %v1415 = vpop.permute.xlu0 %1414
      %1416 = vrot.lane.b32.xlu0 %v1399, 126
      %v1417 = vpop.permute.xlu0 %1416
      %1418 = vrot.lane.b32.xlu0 %v1400, 126
      %v1419 = vpop.permute.xlu0 %1418
      %1420 = vrot.lane.b32.xlu0 %v1401, 126
      %v1421 = vpop.permute.xlu0 %1420
      %1422 = vrot.lane.b32.xlu0 %v1402, 126
      %v1423 = vpop.permute.xlu0 %1422
      %1424 = vrot.lane.b32.xlu0 %v1403, 126
      %v1425 = vpop.permute.xlu0 %1424
      %1426 = vrot.lane.b32.xlu0 %v1404, 126
      %v1427 = vpop.permute.xlu0 %1426
      %1428 = vrot.lane.b32.xlu0 %v1405, 126
      %v1429 = vpop.permute.xlu0 %1428
      %v1430 = vsel %vm762, %v1415, %v1417
      %v1431 = vsel %vm762, %v1419, %v1421
      %v1432 = vsel %vm762, %v1423, %v1425
      %v1433 = vsel %vm762, %v1427, %v1429
      %v1442 = vsel %vm762, %v1417, 0.0
      %v1443 = vsel %vm762, %v1421, 0.0
      %v1444 = vsel %vm762, %v1425, 0.0
      %v1445 = vsel %vm762, %v1429, 0.0
      %1446 = vst.msk [vmem:[#allocation2] sm:$0xff] %vm781, %v1430
      %1447 = vst.msk [vmem:[#allocation2 + $0x8] sm:$0xff] %vm782, %v1442
      %1448 = vst.msk [vmem:[#allocation2 + $0x10] sm:$0xff] %vm781, %v1431
      %1449 = vst.msk [vmem:[#allocation2 + $0x18] sm:$0xff] %vm782, %v1443
      %1450 = vst.msk [vmem:[#allocation2 + $0x20] sm:$0xff] %vm781, %v1432
      %1451 = vst.msk [vmem:[#allocation2 + $0x28] sm:$0xff] %vm782, %v1444
      %1452 = vst.msk [vmem:[#allocation2 + $0x30] sm:$0xff] %vm781, %v1433
      %1453 = vst.msk [vmem:[#allocation2 + $0x38] sm:$0xff] %vm782, %v1445
      %1454 = vrot.lane.b32.xlu0 %v1398, 2
      %v1455 = vpop.permute.xlu0 %1454
      %1456 = vrot.lane.b32.xlu0 %v1399, 2
      %v1457 = vpop.permute.xlu0 %1456
      %1458 = vrot.lane.b32.xlu0 %v1400, 2
      %v1459 = vpop.permute.xlu0 %1458
      %1460 = vrot.lane.b32.xlu0 %v1401, 2
      %v1461 = vpop.permute.xlu0 %1460
      %1462 = vrot.lane.b32.xlu0 %v1402, 2
      %v1463 = vpop.permute.xlu0 %1462
      %1464 = vrot.lane.b32.xlu0 %v1403, 2
      %v1465 = vpop.permute.xlu0 %1464
      %1466 = vrot.lane.b32.xlu0 %v1404, 2
      %v1467 = vpop.permute.xlu0 %1466
      %1468 = vrot.lane.b32.xlu0 %v1405, 2
      %v1469 = vpop.permute.xlu0 %1468
      %v1470 = vsel %vm807, %v1455, %v1457
      %v1471 = vsel %vm807, %v1459, %v1461
      %v1472 = vsel %vm807, %v1463, %v1465
      %v1473 = vsel %vm807, %v1467, %v1469
      %v1482 = vsel %vm807, 0.0, %v1455
      %v1483 = vsel %vm807, 0.0, %v1459
      %v1484 = vsel %vm807, 0.0, %v1463
      %v1485 = vsel %vm807, 0.0, %v1467
      %1486 = vst.msk [vmem:[#allocation2] sm:$0xff] %vm826, %v1482
      %1487 = vst.msk [vmem:[#allocation2 + $0x8] sm:$0xff] %vm827, %v1470
      %1488 = vst.msk [vmem:[#allocation2 + $0x10] sm:$0xff] %vm826, %v1483
      %1489 = vst.msk [vmem:[#allocation2 + $0x18] sm:$0xff] %vm827, %v1471
      %1490 = vst.msk [vmem:[#allocation2 + $0x20] sm:$0xff] %vm826, %v1484
      %1491 = vst.msk [vmem:[#allocation2 + $0x28] sm:$0xff] %vm827, %v1472
      %1492 = vst.msk [vmem:[#allocation2 + $0x30] sm:$0xff] %vm826, %v1485
      %1493 = vst.msk [vmem:[#allocation2 + $0x38] sm:$0xff] %vm827, %v1473
      %v1494 = vld [vmem:[#allocation2] sm:$0xff]
      %v1495 = vld [vmem:[#allocation2 + $0x10] sm:$0xff]
      %v1496 = vld [vmem:[#allocation2 + $0x20] sm:$0xff]
      %v1497 = vld [vmem:[#allocation2 + $0x30] sm:$0xff]
      %1502 = vrot.lane.b32.xlu0 %v1494, 116
      %v1503 = vpop.permute.xlu0 %1502
      %1504 = vrot.lane.b32.xlu0 %v1495, 116
      %v1505 = vpop.permute.xlu0 %1504
      %1506 = vrot.lane.b32.xlu0 %v1496, 116
      %v1507 = vpop.permute.xlu0 %1506
      %1508 = vrot.lane.b32.xlu0 %v1497, 116
      %v1509 = vpop.permute.xlu0 %1508
      %1514 = vst.msk [vmem:[#allocation2] sm:$0xff] %vm856, %v1503
      %1515 = vst.msk [vmem:[#allocation2 + $0x10] sm:$0xff] %vm856, %v1505
      %1516 = vst.msk [vmem:[#allocation2 + $0x20] sm:$0xff] %vm856, %v1507
      %1517 = vst.msk [vmem:[#allocation2 + $0x30] sm:$0xff] %vm856, %v1509
      %v1518 = vld [vmem:[#allocation2] sm:$0xff]
      %v1519 = vld [vmem:[#allocation2 + $0x10] sm:$0xff]
      %v1520 = vld [vmem:[#allocation2 + $0x20] sm:$0xff]
      %v1521 = vld [vmem:[#allocation2 + $0x30] sm:$0xff]
      %1526 = vrot.lane.b32.xlu0 %v1518, 12
      %v1527 = vpop.permute.xlu0 %1526
      %1528 = vrot.lane.b32.xlu0 %v1519, 12
      %v1529 = vpop.permute.xlu0 %1528
      %1530 = vrot.lane.b32.xlu0 %v1520, 12
      %v1531 = vpop.permute.xlu0 %1530
      %1532 = vrot.lane.b32.xlu0 %v1521, 12
      %v1533 = vpop.permute.xlu0 %1532
      %1538 = vst.msk [vmem:[#allocation2] sm:$0xff] %vm881, %v1527
      %1539 = vst.msk [vmem:[#allocation2 + $0x10] sm:$0xff] %vm881, %v1529
      %1540 = vst.msk [vmem:[#allocation2 + $0x20] sm:$0xff] %vm881, %v1531
      %1541 = vst.msk [vmem:[#allocation2 + $0x30] sm:$0xff] %vm881, %v1533
      %v1542 = vld [vmem:[#allocation2] sm:$0xff]
      %v1543 = vld [vmem:[#allocation2 + $0x8] sm:$0xff]
      %v1544 = vld [vmem:[#allocation2 + $0x10] sm:$0xff]
      %v1545 = vld [vmem:[#allocation2 + $0x18] sm:$0xff]
      %v1546 = vld [vmem:[#allocation2 + $0x20] sm:$0xff]
      %v1547 = vld [vmem:[#allocation2 + $0x28] sm:$0xff]
      %v1548 = vld [vmem:[#allocation2 + $0x30] sm:$0xff]
      %v1549 = vld [vmem:[#allocation2 + $0x38] sm:$0xff]
      %v1550 = vld [vmem:[%s5] sm:$0xff]
      %v1551 = vld [vmem:[%s5 + $0x8] sm:$0xf]
      %v1552 = vld [vmem:[%s5 + $0xc] sm:$0xff]
      %v1553 = vld [vmem:[%s5 + $0x14] sm:$0xf]
      %v1554 = vld [vmem:[%s5 + $0x18] sm:$0xff]
      %v1555 = vld [vmem:[%s5 + $0x20] sm:$0xf]
      %v1556 = vld [vmem:[%s5 + $0x24] sm:$0xff]
      %v1557 = vld [vmem:[%s5 + $0x2c] sm:$0xf]
      %v1558 = vld [vmem:[%s6] sm:$0xff]
      %v1559 = vld [vmem:[%s6 + $0x8] sm:$0xff]
      %v1560 = vld [vmem:[%s6 + $0x10] sm:$0xff]
      %v1561 = vld [vmem:[%s6 + $0x18] sm:$0xff]
      %1570 = vrot.lane.b32.xlu0 %v1542, 127
      %v1571 = vpop.permute.xlu0 %1570
      %1572 = vrot.lane.b32.xlu0 %v1543, 127
      %v1573 = vpop.permute.xlu0 %1572
      %1574 = vrot.lane.b32.xlu0 %v1544, 127
      %v1575 = vpop.permute.xlu0 %1574
      %1576 = vrot.lane.b32.xlu0 %v1545, 127
      %v1577 = vpop.permute.xlu0 %1576
      %1578 = vrot.lane.b32.xlu0 %v1546, 127
      %v1579 = vpop.permute.xlu0 %1578
      %1580 = vrot.lane.b32.xlu0 %v1547, 127
      %v1581 = vpop.permute.xlu0 %1580
      %1582 = vrot.lane.b32.xlu0 %v1548, 127
      %v1583 = vpop.permute.xlu0 %1582
      %1584 = vrot.lane.b32.xlu0 %v1549, 127
      %v1585 = vpop.permute.xlu0 %1584
      %v1586 = vsel %vm930, %v1571, %v1573
      %v1587 = vsel %vm930, %v1575, %v1577
      %v1588 = vsel %vm930, %v1579, %v1581
      %v1589 = vsel %vm930, %v1583, %v1585
      %1594 = vrot.lane.b32.xlu0 %v1542, 126
      %v1595 = vpop.permute.xlu0 %1594
      %1596 = vrot.lane.b32.xlu0 %v1543, 126
      %v1597 = vpop.permute.xlu0 %1596
      %1598 = vrot.lane.b32.xlu0 %v1544, 126
      %v1599 = vpop.permute.xlu0 %1598
      %1600 = vrot.lane.b32.xlu0 %v1545, 126
      %v1601 = vpop.permute.xlu0 %1600
      %1602 = vrot.lane.b32.xlu0 %v1546, 126
      %v1603 = vpop.permute.xlu0 %1602
      %1604 = vrot.lane.b32.xlu0 %v1547, 126
      %v1605 = vpop.permute.xlu0 %1604
      %1606 = vrot.lane.b32.xlu0 %v1548, 126
      %v1607 = vpop.permute.xlu0 %1606
      %1608 = vrot.lane.b32.xlu0 %v1549, 126
      %v1609 = vpop.permute.xlu0 %1608
      %v1610 = vsel %vm762, %v1595, %v1597
      %v1611 = vsel %vm762, %v1599, %v1601
      %v1612 = vsel %vm762, %v1603, %v1605
      %v1613 = vsel %vm762, %v1607, %v1609
      %1618 = vrot.lane.b32.xlu0 %v1542, 122
      %v1619 = vpop.permute.xlu0 %1618
      %1620 = vrot.lane.b32.xlu0 %v1543, 122
      %v1621 = vpop.permute.xlu0 %1620
      %1622 = vrot.lane.b32.xlu0 %v1544, 122
      %v1623 = vpop.permute.xlu0 %1622
      %1624 = vrot.lane.b32.xlu0 %v1545, 122
      %v1625 = vpop.permute.xlu0 %1624
      %1626 = vrot.lane.b32.xlu0 %v1546, 122
      %v1627 = vpop.permute.xlu0 %1626
      %1628 = vrot.lane.b32.xlu0 %v1547, 122
      %v1629 = vpop.permute.xlu0 %1628
      %1630 = vrot.lane.b32.xlu0 %v1548, 122
      %v1631 = vpop.permute.xlu0 %1630
      %1632 = vrot.lane.b32.xlu0 %v1549, 122
      %v1633 = vpop.permute.xlu0 %1632
      %v1634 = vsel %vm979, %v1619, %v1621
      %v1635 = vsel %vm979, %v1623, %v1625
      %v1636 = vsel %vm979, %v1627, %v1629
      %v1637 = vsel %vm979, %v1631, %v1633
      %1642 = vrot.lane.b32.xlu0 %v1542, 121
      %v1643 = vpop.permute.xlu0 %1642
      %1644 = vrot.lane.b32.xlu0 %v1543, 121
      %v1645 = vpop.permute.xlu0 %1644
      %1646 = vrot.lane.b32.xlu0 %v1544, 121
      %v1647 = vpop.permute.xlu0 %1646
      %1648 = vrot.lane.b32.xlu0 %v1545, 121
      %v1649 = vpop.permute.xlu0 %1648
      %1650 = vrot.lane.b32.xlu0 %v1546, 121
      %v1651 = vpop.permute.xlu0 %1650
      %1652 = vrot.lane.b32.xlu0 %v1547, 121
      %v1653 = vpop.permute.xlu0 %1652
      %1654 = vrot.lane.b32.xlu0 %v1548, 121
      %v1655 = vpop.permute.xlu0 %1654
      %1656 = vrot.lane.b32.xlu0 %v1549, 121
      %v1657 = vpop.permute.xlu0 %1656
      %v1658 = vsel %vm1004, %v1643, %v1645
      %v1659 = vsel %vm1004, %v1647, %v1649
      %v1660 = vsel %vm1004, %v1651, %v1653
      %v1661 = vsel %vm1004, %v1655, %v1657
      %1666 = vrot.lane.b32.xlu0 %v1542, 120
      %v1667 = vpop.permute.xlu0 %1666
      %1668 = vrot.lane.b32.xlu0 %v1543, 120
      %v1669 = vpop.permute.xlu0 %1668
      %1670 = vrot.lane.b32.xlu0 %v1544, 120
      %v1671 = vpop.permute.xlu0 %1670
      %1672 = vrot.lane.b32.xlu0 %v1545, 120
      %v1673 = vpop.permute.xlu0 %1672
      %1674 = vrot.lane.b32.xlu0 %v1546, 120
      %v1675 = vpop.permute.xlu0 %1674
      %1676 = vrot.lane.b32.xlu0 %v1547, 120
      %v1677 = vpop.permute.xlu0 %1676
      %1678 = vrot.lane.b32.xlu0 %v1548, 120
      %v1679 = vpop.permute.xlu0 %1678
      %1680 = vrot.lane.b32.xlu0 %v1549, 120
      %v1681 = vpop.permute.xlu0 %1680
      %v1682 = vsel %vm1029, %v1667, %v1669
      %v1683 = vsel %vm1029, %v1671, %v1673
      %v1684 = vsel %vm1029, %v1675, %v1677
      %v1685 = vsel %vm1029, %v1679, %v1681
      %1690 = vrot.lane.b32.xlu0 %v1542, 116
      %v1691 = vpop.permute.xlu0 %1690
      %1692 = vrot.lane.b32.xlu0 %v1543, 116
      %v1693 = vpop.permute.xlu0 %1692
      %1694 = vrot.lane.b32.xlu0 %v1544, 116
      %v1695 = vpop.permute.xlu0 %1694
      %1696 = vrot.lane.b32.xlu0 %v1545, 116
      %v1697 = vpop.permute.xlu0 %1696
      %1698 = vrot.lane.b32.xlu0 %v1546, 116
      %v1699 = vpop.permute.xlu0 %1698
      %1700 = vrot.lane.b32.xlu0 %v1547, 116
      %v1701 = vpop.permute.xlu0 %1700
      %1702 = vrot.lane.b32.xlu0 %v1548, 116
      %v1703 = vpop.permute.xlu0 %1702
      %1704 = vrot.lane.b32.xlu0 %v1549, 116
      %v1705 = vpop.permute.xlu0 %1704
      %v1706 = vsel %vm1054, %v1691, %v1693
      %v1707 = vsel %vm1054, %v1695, %v1697
      %v1708 = vsel %vm1054, %v1699, %v1701
      %v1709 = vsel %vm1054, %v1703, %v1705
      %1714 = vrot.lane.b32.xlu0 %v1542, 115
      %v1715 = vpop.permute.xlu0 %1714
      %1716 = vrot.lane.b32.xlu0 %v1543, 115
      %v1717 = vpop.permute.xlu0 %1716
      %1718 = vrot.lane.b32.xlu0 %v1544, 115
      %v1719 = vpop.permute.xlu0 %1718
      %1720 = vrot.lane.b32.xlu0 %v1545, 115
      %v1721 = vpop.permute.xlu0 %1720
      %1722 = vrot.lane.b32.xlu0 %v1546, 115
      %v1723 = vpop.permute.xlu0 %1722
      %1724 = vrot.lane.b32.xlu0 %v1547, 115
      %v1725 = vpop.permute.xlu0 %1724
      %1726 = vrot.lane.b32.xlu0 %v1548, 115
      %v1727 = vpop.permute.xlu0 %1726
      %1728 = vrot.lane.b32.xlu0 %v1549, 115
      %v1729 = vpop.permute.xlu0 %1728
      %v1730 = vsel %vm1079, %v1715, %v1717
      %v1731 = vsel %vm1079, %v1719, %v1721
      %v1732 = vsel %vm1079, %v1723, %v1725
      %v1733 = vsel %vm1079, %v1727, %v1729
      %1738 = vrot.lane.b32.xlu0 %v1542, 114
      %v1739 = vpop.permute.xlu0 %1738
      %1740 = vrot.lane.b32.xlu0 %v1543, 114
      %v1741 = vpop.permute.xlu0 %1740
      %1742 = vrot.lane.b32.xlu0 %v1544, 114
      %v1743 = vpop.permute.xlu0 %1742
      %1744 = vrot.lane.b32.xlu0 %v1545, 114
      %v1745 = vpop.permute.xlu0 %1744
      %1746 = vrot.lane.b32.xlu0 %v1546, 114
      %v1747 = vpop.permute.xlu0 %1746
      %1748 = vrot.lane.b32.xlu0 %v1547, 114
      %v1749 = vpop.permute.xlu0 %1748
      %1750 = vrot.lane.b32.xlu0 %v1548, 114
      %v1751 = vpop.permute.xlu0 %1750
      %1752 = vrot.lane.b32.xlu0 %v1549, 114
      %v1753 = vpop.permute.xlu0 %1752
      %v1754 = vsel %vm1104, %v1739, %v1741
      %v1755 = vsel %vm1104, %v1743, %v1745
      %v1756 = vsel %vm1104, %v1747, %v1749
      %v1757 = vsel %vm1104, %v1751, %v1753
      %v1762 = vpack.c.bf16 %v1544, %v1542
      %v1763 = vpack.c.bf16 %v1548, %v1546
      %v1764 = vpack.c.bf16 %v1587, %v1586
      %v1765 = vpack.c.bf16 %v1589, %v1588
      %v1766 = vpack.c.bf16 %v1611, %v1610
      %v1767 = vpack.c.bf16 %v1613, %v1612
      %v1768 = vpack.c.bf16 %v1635, %v1634
      %v1769 = vpack.c.bf16 %v1637, %v1636
      %v1770 = vpack.c.bf16 %v1659, %v1658
      %v1771 = vpack.c.bf16 %v1661, %v1660
      %v1772 = vpack.c.bf16 %v1683, %v1682
      %v1773 = vpack.c.bf16 %v1685, %v1684
      %v1774 = vpack.c.bf16 %v1707, %v1706
      %v1775 = vpack.c.bf16 %v1709, %v1708
      %v1776 = vpack.c.bf16 %v1731, %v1730
      %v1777 = vpack.c.bf16 %v1733, %v1732
      %v1778 = vpack.c.bf16 %v1755, %v1754
      %v1779 = vpack.c.bf16 %v1757, %v1756
      %v1788 = vunpack.c.l.b16 %v1550
      %v1789 = vunpack.c.h.b16 %v1550
      %v1790 = vunpack.c.l.b16 %v1551
      %v1791 = vunpack.c.l.b16 %v1552
      %v1792 = vunpack.c.h.b16 %v1552
      %v1793 = vunpack.c.l.b16 %v1553
      %v1794 = vunpack.c.l.b16 %v1554
      %v1795 = vunpack.c.h.b16 %v1554
      %v1796 = vunpack.c.l.b16 %v1555
      %v1797 = vunpack.c.l.b16 %v1556
      %v1798 = vunpack.c.h.b16 %v1556
      %v1799 = vunpack.c.l.b16 %v1557
      %v1800 = vpack.c.b16 %v1791, %v1788
      %v1801 = vpack.c.b16 %v1792, %v1789
      %v1802 = vpack.c.b16 %v1793, %v1790
      %v1803 = vpack.c.b16 %v1797, %v1794
      %v1804 = vpack.c.b16 %v1798, %v1795
      %v1805 = vpack.c.b16 %v1799, %v1796
      %v1811 = vsel %vm1161, %v1802, 0
      %v1814 = vsel %vm1161, %v1805, 0
      %1816 = vmatprep.subr.bf16.mxu0 0
      %1817 = vmatpush1.bf16.msra.mxu0 %v1762
      %1818 = vmatprep.subr.bf16.mxu0 0
      %1819 = vmatpush1.bf16.msra.mxu0 %v1763
      %1820 = vmatprep.subr.bf16.mxu0 0
      %1821 = vmatpush1.bf16.msra.mxu0 %v1764
      %1822 = vmatprep.subr.bf16.mxu0 0
      %1823 = vmatpush1.bf16.msra.mxu0 %v1765
      %1824 = vmatprep.subr.bf16.mxu0 0
      %1825 = vmatpush1.bf16.msra.mxu0 %v1766
      %1826 = vmatprep.subr.bf16.mxu0 0
      %1827 = vmatpush1.bf16.msra.mxu0 %v1767
      %1828 = vmatprep.subr.bf16.mxu0 0
      %1829 = vmatpush1.bf16.msra.mxu0 %v1768
      %1830 = vmatprep.subr.bf16.mxu0 0
      %1831 = vmatpush1.bf16.msra.mxu0 %v1769
      %1832 = vmatprep.subr.bf16.mxu0 0
      %1833 = vmatpush1.bf16.msra.mxu0 %v1770
      %1834 = vmatprep.subr.bf16.mxu0 0
      %1835 = vmatpush1.bf16.msra.mxu0 %v1771
      %1836 = vmatprep.subr.bf16.mxu0 0
      %1837 = vmatpush1.bf16.msra.mxu0 %v1772
      %1838 = vmatprep.subr.bf16.mxu0 0
      %1839 = vmatpush1.bf16.msra.mxu0 %v1773
      %1840 = vmatprep.subr.bf16.mxu0 0
      %1841 = vmatpush1.bf16.msra.mxu0 %v1774
      %1842 = vmatprep.subr.bf16.mxu0 0
      %1843 = vmatpush1.bf16.msra.mxu0 %v1775
      %1844 = vmatprep.subr.bf16.mxu0 0
      %1845 = vmatpush1.bf16.msra.mxu0 %v1776
      %1846 = vmatprep.subr.bf16.mxu0 0
      %1847 = vmatpush1.bf16.msra.mxu0 %v1777
      %1848 = vmatprep.mubr.bf16.mxu0 %v1801
      %1849 = vmatmul.mubr.bf16.gmra.mrb[0].mxu0 %v1800
      %v1850 = vpop.f32.mrb[0].mxu0
      %v1851 = vadd.f32 0.0, %v1850
      %v1852 = vpop.f32.mrb[0].mxu0
      %v1853 = vpop.f32.mrb[0].mxu0
      %v1854 = vadd.f32 0.0, %v1853
      %v1855 = vpop.f32.mrb[0].mxu0
      %1856 = vmatprep.mubr.bf16.mxu0 %v1804
      %1857 = vmatmul.mubr.bf16.gmra.mrb[0].mxu0 %v1803
      %v1858 = vpop.f32.mrb[0].mxu0
      %v1859 = vadd.f32 0.0, %v1858
      %v1860 = vpop.f32.mrb[0].mxu0
      %v1861 = vpop.f32.mrb[0].mxu0
      %v1862 = vadd.f32 0.0, %v1861
      %v1863 = vpop.f32.mrb[0].mxu0
      %1864 = vdwg.mxu0
      %1865 = vmatprep.subr.bf16.mxu0 0
      %1866 = vmatpush1.bf16.msra.mxu0 %v1778
      %1867 = vmatprep.subr.bf16.mxu0 0
      %1868 = vmatpush1.bf16.msra.mxu0 %v1779
      %1869 = vmatprep.subr.bf16.mxu0 0
      %1870 = vmatpush1.bf16.msra.mxu0 0
      %1871 = vmatprep.subr.bf16.mxu0 0
      %1872 = vmatpush1.bf16.msra.mxu0 0
      %1873 = vmatprep.subr.bf16.mxu0 0
      %1874 = vmatpush1.bf16.msra.mxu0 0
      %1875 = vmatprep.subr.bf16.mxu0 0
      %1876 = vmatpush1.bf16.msra.mxu0 0
      %1877 = vmatprep.subr.bf16.mxu0 0
      %1878 = vmatpush1.bf16.msra.mxu0 0
      %1879 = vmatprep.subr.bf16.mxu0 0
      %1880 = vmatpush1.bf16.msra.mxu0 0
      %1881 = vmatprep.subr.bf16.mxu0 0
      %1882 = vmatpush1.bf16.msra.mxu0 0
      %1883 = vmatprep.subr.bf16.mxu0 0
      %1884 = vmatpush1.bf16.msra.mxu0 0
      %1885 = vmatprep.subr.bf16.mxu0 0
      %1886 = vmatpush1.bf16.msra.mxu0 0
      %1887 = vmatprep.subr.bf16.mxu0 0
      %1888 = vmatpush1.bf16.msra.mxu0 0
      %1889 = vmatprep.subr.bf16.mxu0 0
      %1890 = vmatpush1.bf16.msra.mxu0 0
      %1891 = vmatprep.subr.bf16.mxu0 0
      %1892 = vmatpush1.bf16.msra.mxu0 0
      %1893 = vmatprep.subr.bf16.mxu0 0
      %1894 = vmatpush1.bf16.msra.mxu0 0
      %1895 = vmatprep.subr.bf16.mxu0 0
      %1896 = vmatpush1.bf16.msra.mxu0 0
      %1897 = vmatprep.mubr.bf16.mxu0 0
      %1898 = vmatmul.mubr.bf16.gmra.mrb[0].mxu0 %v1811
      %v1899 = vpop.f32.mrb[0].mxu0
      %v1900 = vadd.f32 %v1851, %v1899
      %v1901 = vpop.f32.mrb[0].mxu0
      %v1902 = vpop.f32.mrb[0].mxu0
      %v1903 = vadd.f32 %v1854, %v1902
      %v1904 = vpop.f32.mrb[0].mxu0
      %1905 = vmatprep.mubr.bf16.mxu0 0
      %1906 = vmatmul.mubr.bf16.gmra.mrb[0].mxu0 %v1814
      %v1907 = vpop.f32.mrb[0].mxu0
      %v1908 = vadd.f32 %v1859, %v1907
      %v1909 = vpop.f32.mrb[0].mxu0
      %v1910 = vpop.f32.mrb[0].mxu0
      %v1911 = vadd.f32 %v1862, %v1910
      %v1912 = vpop.f32.mrb[0].mxu0
      %1913 = vdwg.mxu0
      %v1914 = vsel %vm595, %v1900, 0.0
      %v1915 = vsel %vm595, %v1903, 0.0
      %v1916 = vsel %vm595, %v1908, 0.0
      %v1917 = vsel %vm595, %v1911, 0.0
      %1918 = vadd.xlane.f32.xlu0 %v1914
      %v1919 = vpop.xlane.xlu0 %1918
      %1920 = vadd.xlane.f32.xlu0 %v1915
      %v1921 = vpop.xlane.xlu0 %1920
      %1922 = vadd.xlane.f32.xlu0 %v1916
      %v1923 = vpop.xlane.xlu0 %1922
      %1924 = vadd.xlane.f32.xlu0 %v1917
      %v1925 = vpop.xlane.xlu0 %1924
      %v1926 = vmul.f32 %v1919, 0.0625
      %v1927 = vmul.f32 %v1921, 0.0625
      %v1928 = vmul.f32 %v1923, 0.0625
      %v1929 = vmul.f32 %v1925, 0.0625
      %v1930 = vmul.f32 %v1914, %v1914
      %v1931 = vmul.f32 %v1915, %v1915
      %v1932 = vmul.f32 %v1916, %v1916
      %v1933 = vmul.f32 %v1917, %v1917
      %1934 = vadd.xlane.f32.xlu0 %v1930
      %v1935 = vpop.xlane.xlu0 %1934
      %1936 = vadd.xlane.f32.xlu0 %v1931
      %v1937 = vpop.xlane.xlu0 %1936
      %1938 = vadd.xlane.f32.xlu0 %v1932
      %v1939 = vpop.xlane.xlu0 %1938
      %1940 = vadd.xlane.f32.xlu0 %v1933
      %v1941 = vpop.xlane.xlu0 %1940
      %v1942 = vmul.f32 %v1935, 0.0625
      %v1943 = vmul.f32 %v1937, 0.0625
      %v1944 = vmul.f32 %v1939, 0.0625
      %v1945 = vmul.f32 %v1941, 0.0625
      %v1946 = vmul.f32 %v1926, %v1926
      %v1947 = vmul.f32 %v1927, %v1927
      %v1948 = vmul.f32 %v1928, %v1928
      %v1949 = vmul.f32 %v1929, %v1929
      %v1950 = vsub.f32 %v1942, %v1946
      %v1951 = vsub.f32 %v1943, %v1947
      %v1952 = vsub.f32 %v1944, %v1948
      %v1953 = vsub.f32 %v1945, %v1949
      %v1954 = vmax.f32 %v1950, 0.0
      %v1955 = vmax.f32 %v1951, 0.0
      %v1956 = vmax.f32 %v1952, 0.0
      %v1957 = vmax.f32 %v1953, 0.0
      %v1958 = vsub.f32 %v1914, %v1926
      %v1959 = vsub.f32 %v1915, %v1927
      %v1960 = vsub.f32 %v1916, %v1928
      %v1961 = vsub.f32 %v1917, %v1929
      %v1962 = vadd.f32 %v1954, 1e-05
      %v1963 = vadd.f32 %v1955, 1e-05
      %v1964 = vadd.f32 %v1956, 1e-05
      %v1965 = vadd.f32 %v1957, 1e-05
      %v1966 = vrsqrt.pop %v1962
      %v1967 = vrsqrt.pop %v1963
      %v1968 = vrsqrt.pop %v1964
      %v1969 = vrsqrt.pop %v1965
      %v1970 = vmul.f32 %v1958, %v1966
      %v1971 = vmul.f32 %v1959, %v1967
      %v1972 = vmul.f32 %v1960, %v1968
      %v1973 = vmul.f32 %v1961, %v1969
      %1975 = vset.pattern.permute.xlu0 0
      %1976 = vperm.xlu0 %1975, %v1558
      %v1977 = vpop.permute.xlu0 %1976
      %1980 = vset.pattern.permute.xlu0 0
      %1981 = vperm.xlu0 %1980, %v1559
      %v1982 = vpop.permute.xlu0 %1981
      %1985 = vset.pattern.permute.xlu0 0
      %1986 = vperm.xlu0 %1985, %v1560
      %v1987 = vpop.permute.xlu0 %1986
      %1990 = vset.pattern.permute.xlu0 0
      %1991 = vperm.xlu0 %1990, %v1561
      %v1992 = vpop.permute.xlu0 %1991
      %v1994 = vmul.f32 %v1970, %v1977
      %v1995 = vmul.f32 %v1971, %v1982
      %v1996 = vmul.f32 %v1972, %v1987
      %v1997 = vmul.f32 %v1973, %v1992
      %1998 = vset.pattern.permute.xlu0 1
      %1999 = vperm.xlu0 %1998, %v1558
      %v2000 = vpop.permute.xlu0 %1999
      %2002 = vset.pattern.permute.xlu0 1
      %2003 = vperm.xlu0 %2002, %v1559
      %v2004 = vpop.permute.xlu0 %2003
      %2006 = vset.pattern.permute.xlu0 1
      %2007 = vperm.xlu0 %2006, %v1560
      %v2008 = vpop.permute.xlu0 %2007
      %2010 = vset.pattern.permute.xlu0 1
      %2011 = vperm.xlu0 %2010, %v1561
      %v2012 = vpop.permute.xlu0 %2011
      %v2014 = vadd.f32 %v1994, %v2000
      %v2015 = vadd.f32 %v1995, %v2004
      %v2016 = vadd.f32 %v1996, %v2008
      %v2017 = vadd.f32 %v1997, %v2012
      %2022 = vrot.lane.b32.xlu0 %v2014, 7
      %v2023 = vpop.permute.xlu0 %2022
      %2024 = vrot.lane.b32.xlu0 %v2015, 7
      %v2025 = vpop.permute.xlu0 %2024
      %2026 = vrot.lane.b32.xlu0 %v2016, 7
      %v2027 = vpop.permute.xlu0 %2026
      %2028 = vrot.lane.b32.xlu0 %v2017, 7
      %v2029 = vpop.permute.xlu0 %2028
      %2034 = vst.msk [vmem:[#allocation2] sm:$0xff] %vm720, %v2023
      %2035 = vst.msk [vmem:[#allocation2 + $0x8] sm:$0xff] %vm722, %v2023
      %2036 = vst.msk [vmem:[#allocation2 + $0x10] sm:$0xff] %vm720, %v2025
      %2037 = vst.msk [vmem:[#allocation2 + $0x18] sm:$0xff] %vm722, %v2025
      %2038 = vst.msk [vmem:[#allocation2 + $0x20] sm:$0xff] %vm720, %v2027
      %2039 = vst.msk [vmem:[#allocation2 + $0x28] sm:$0xff] %vm722, %v2027
      %2040 = vst.msk [vmem:[#allocation2 + $0x30] sm:$0xff] %vm720, %v2029
      %2041 = vst.msk [vmem:[#allocation2 + $0x38] sm:$0xff] %vm722, %v2029
      %v2042 = vld [vmem:[#allocation2] sm:$0xff]
      %v2043 = vld [vmem:[#allocation2 + $0x8] sm:$0xff]
      %v2044 = vld [vmem:[#allocation2 + $0x10] sm:$0xff]
      %v2045 = vld [vmem:[#allocation2 + $0x18] sm:$0xff]
      %v2046 = vld [vmem:[#allocation2 + $0x20] sm:$0xff]
      %v2047 = vld [vmem:[#allocation2 + $0x28] sm:$0xff]
      %v2048 = vld [vmem:[#allocation2 + $0x30] sm:$0xff]
      %v2049 = vld [vmem:[#allocation2 + $0x38] sm:$0xff]
      %2058 = vrot.lane.b32.xlu0 %v2042, 126
      %v2059 = vpop.permute.xlu0 %2058
      %2060 = vrot.lane.b32.xlu0 %v2043, 126
      %v2061 = vpop.permute.xlu0 %2060
      %2062 = vrot.lane.b32.xlu0 %v2044, 126
      %v2063 = vpop.permute.xlu0 %2062
      %2064 = vrot.lane.b32.xlu0 %v2045, 126
      %v2065 = vpop.permute.xlu0 %2064
      %2066 = vrot.lane.b32.xlu0 %v2046, 126
      %v2067 = vpop.permute.xlu0 %2066
      %2068 = vrot.lane.b32.xlu0 %v2047, 126
      %v2069 = vpop.permute.xlu0 %2068
      %2070 = vrot.lane.b32.xlu0 %v2048, 126
      %v2071 = vpop.permute.xlu0 %2070
      %2072 = vrot.lane.b32.xlu0 %v2049, 126
      %v2073 = vpop.permute.xlu0 %2072
      %v2074 = vsel %vm762, %v2059, %v2061
      %v2075 = vsel %vm762, %v2063, %v2065
      %v2076 = vsel %vm762, %v2067, %v2069
      %v2077 = vsel %vm762, %v2071, %v2073
      %v2086 = vsel %vm762, %v2061, 0.0
      %v2087 = vsel %vm762, %v2065, 0.0
      %v2088 = vsel %vm762, %v2069, 0.0
      %v2089 = vsel %vm762, %v2073, 0.0
      %2090 = vst.msk [vmem:[#allocation2] sm:$0xff] %vm781, %v2074
      %2091 = vst.msk [vmem:[#allocation2 + $0x8] sm:$0xff] %vm782, %v2086
      %2092 = vst.msk [vmem:[#allocation2 + $0x10] sm:$0xff] %vm781, %v2075
      %2093 = vst.msk [vmem:[#allocation2 + $0x18] sm:$0xff] %vm782, %v2087
      %2094 = vst.msk [vmem:[#allocation2 + $0x20] sm:$0xff] %vm781, %v2076
      %2095 = vst.msk [vmem:[#allocation2 + $0x28] sm:$0xff] %vm782, %v2088
      %2096 = vst.msk [vmem:[#allocation2 + $0x30] sm:$0xff] %vm781, %v2077
      %2097 = vst.msk [vmem:[#allocation2 + $0x38] sm:$0xff] %vm782, %v2089
      %2098 = vrot.lane.b32.xlu0 %v2042, 2
      %v2099 = vpop.permute.xlu0 %2098
      %2100 = vrot.lane.b32.xlu0 %v2043, 2
      %v2101 = vpop.permute.xlu0 %2100
      %2102 = vrot.lane.b32.xlu0 %v2044, 2
      %v2103 = vpop.permute.xlu0 %2102
      %2104 = vrot.lane.b32.xlu0 %v2045, 2
      %v2105 = vpop.permute.xlu0 %2104
      %2106 = vrot.lane.b32.xlu0 %v2046, 2
      %v2107 = vpop.permute.xlu0 %2106
      %2108 = vrot.lane.b32.xlu0 %v2047, 2
      %v2109 = vpop.permute.xlu0 %2108
      %2110 = vrot.lane.b32.xlu0 %v2048, 2
      %v2111 = vpop.permute.xlu0 %2110
      %2112 = vrot.lane.b32.xlu0 %v2049, 2
      %v2113 = vpop.permute.xlu0 %2112
      %v2114 = vsel %vm807, %v2099, %v2101
      %v2115 = vsel %vm807, %v2103, %v2105
      %v2116 = vsel %vm807, %v2107, %v2109
      %v2117 = vsel %vm807, %v2111, %v2113
      %v2126 = vsel %vm807, 0.0, %v2099
      %v2127 = vsel %vm807, 0.0, %v2103
      %v2128 = vsel %vm807, 0.0, %v2107
      %v2129 = vsel %vm807, 0.0, %v2111
      %2130 = vst.msk [vmem:[#allocation2] sm:$0xff] %vm826, %v2126
      %2131 = vst.msk [vmem:[#allocation2 + $0x8] sm:$0xff] %vm827, %v2114
      %2132 = vst.msk [vmem:[#allocation2 + $0x10] sm:$0xff] %vm826, %v2127
      %2133 = vst.msk [vmem:[#allocation2 + $0x18] sm:$0xff] %vm827, %v2115
      %2134 = vst.msk [vmem:[#allocation2 + $0x20] sm:$0xff] %vm826, %v2128
      %2135 = vst.msk [vmem:[#allocation2 + $0x28] sm:$0xff] %vm827, %v2116
      %2136 = vst.msk [vmem:[#allocation2 + $0x30] sm:$0xff] %vm826, %v2129
      %2137 = vst.msk [vmem:[#allocation2 + $0x38] sm:$0xff] %vm827, %v2117
      %v2138 = vld [vmem:[#allocation2] sm:$0xff]
      %v2139 = vld [vmem:[#allocation2 + $0x10] sm:$0xff]
      %v2140 = vld [vmem:[#allocation2 + $0x20] sm:$0xff]
      %v2141 = vld [vmem:[#allocation2 + $0x30] sm:$0xff]
      %2146 = vrot.lane.b32.xlu0 %v2138, 116
      %v2147 = vpop.permute.xlu0 %2146
      %2148 = vrot.lane.b32.xlu0 %v2139, 116
      %v2149 = vpop.permute.xlu0 %2148
      %2150 = vrot.lane.b32.xlu0 %v2140, 116
      %v2151 = vpop.permute.xlu0 %2150
      %2152 = vrot.lane.b32.xlu0 %v2141, 116
      %v2153 = vpop.permute.xlu0 %2152
      %2158 = vst.msk [vmem:[#allocation2] sm:$0xff] %vm856, %v2147
      %2159 = vst.msk [vmem:[#allocation2 + $0x10] sm:$0xff] %vm856, %v2149
      %2160 = vst.msk [vmem:[#allocation2 + $0x20] sm:$0xff] %vm856, %v2151
      %2161 = vst.msk [vmem:[#allocation2 + $0x30] sm:$0xff] %vm856, %v2153
      %v2162 = vld [vmem:[#allocation2] sm:$0xff]
      %v2163 = vld [vmem:[#allocation2 + $0x10] sm:$0xff]
      %v2164 = vld [vmem:[#allocation2 + $0x20] sm:$0xff]
      %v2165 = vld [vmem:[#allocation2 + $0x30] sm:$0xff]
      %2170 = vrot.lane.b32.xlu0 %v2162, 12
      %v2171 = vpop.permute.xlu0 %2170
      %2172 = vrot.lane.b32.xlu0 %v2163, 12
      %v2173 = vpop.permute.xlu0 %2172
      %2174 = vrot.lane.b32.xlu0 %v2164, 12
      %v2175 = vpop.permute.xlu0 %2174
      %2176 = vrot.lane.b32.xlu0 %v2165, 12
      %v2177 = vpop.permute.xlu0 %2176
      %2182 = vst.msk [vmem:[#allocation2] sm:$0xff] %vm881, %v2171
      %2183 = vst.msk [vmem:[#allocation2 + $0x10] sm:$0xff] %vm881, %v2173
      %2184 = vst.msk [vmem:[#allocation2 + $0x20] sm:$0xff] %vm881, %v2175
      %2185 = vst.msk [vmem:[#allocation2 + $0x30] sm:$0xff] %vm881, %v2177
      %v2186 = vld [vmem:[#allocation2] sm:$0xff]
      %v2187 = vld [vmem:[#allocation2 + $0x8] sm:$0xff]
      %v2188 = vld [vmem:[#allocation2 + $0x10] sm:$0xff]
      %v2189 = vld [vmem:[#allocation2 + $0x18] sm:$0xff]
      %v2190 = vld [vmem:[#allocation2 + $0x20] sm:$0xff]
      %v2191 = vld [vmem:[#allocation2 + $0x28] sm:$0xff]
      %v2192 = vld [vmem:[#allocation2 + $0x30] sm:$0xff]
      %v2193 = vld [vmem:[#allocation2 + $0x38] sm:$0xff]
      %v2194 = vld [vmem:[%s7] sm:$0xff]
      %v2195 = vld [vmem:[%s7 + $0x8] sm:$0xf]
      %v2196 = vld [vmem:[%s7 + $0xc] sm:$0xff]
      %v2197 = vld [vmem:[%s7 + $0x14] sm:$0xf]
      %v2198 = vld [vmem:[%s7 + $0x18] sm:$0xff]
      %v2199 = vld [vmem:[%s7 + $0x20] sm:$0xf]
      %v2200 = vld [vmem:[%s7 + $0x24] sm:$0xff]
      %v2201 = vld [vmem:[%s7 + $0x2c] sm:$0xf]
      %v2202 = vld [vmem:[%s8] sm:$0xff]
      %v2203 = vld [vmem:[%s8 + $0x8] sm:$0xff]
      %v2204 = vld [vmem:[%s8 + $0x10] sm:$0xff]
      %v2205 = vld [vmem:[%s8 + $0x18] sm:$0xff]
      %2214 = vrot.lane.b32.xlu0 %v2186, 127
      %v2215 = vpop.permute.xlu0 %2214
      %2216 = vrot.lane.b32.xlu0 %v2187, 127
      %v2217 = vpop.permute.xlu0 %2216
      %2218 = vrot.lane.b32.xlu0 %v2188, 127
      %v2219 = vpop.permute.xlu0 %2218
      %2220 = vrot.lane.b32.xlu0 %v2189, 127
      %v2221 = vpop.permute.xlu0 %2220
      %2222 = vrot.lane.b32.xlu0 %v2190, 127
      %v2223 = vpop.permute.xlu0 %2222
      %2224 = vrot.lane.b32.xlu0 %v2191, 127
      %v2225 = vpop.permute.xlu0 %2224
      %2226 = vrot.lane.b32.xlu0 %v2192, 127
      %v2227 = vpop.permute.xlu0 %2226
      %2228 = vrot.lane.b32.xlu0 %v2193, 127
      %v2229 = vpop.permute.xlu0 %2228
      %v2230 = vsel %vm930, %v2215, %v2217
      %v2231 = vsel %vm930, %v2219, %v2221
      %v2232 = vsel %vm930, %v2223, %v2225
      %v2233 = vsel %vm930, %v2227, %v2229
      %2238 = vrot.lane.b32.xlu0 %v2186, 126
      %v2239 = vpop.permute.xlu0 %2238
      %2240 = vrot.lane.b32.xlu0 %v2187, 126
      %v2241 = vpop.permute.xlu0 %2240
      %2242 = vrot.lane.b32.xlu0 %v2188, 126
      %v2243 = vpop.permute.xlu0 %2242
      %2244 = vrot.lane.b32.xlu0 %v2189, 126
      %v2245 = vpop.permute.xlu0 %2244
      %2246 = vrot.lane.b32.xlu0 %v2190, 126
      %v2247 = vpop.permute.xlu0 %2246
      %2248 = vrot.lane.b32.xlu0 %v2191, 126
      %v2249 = vpop.permute.xlu0 %2248
      %2250 = vrot.lane.b32.xlu0 %v2192, 126
      %v2251 = vpop.permute.xlu0 %2250
      %2252 = vrot.lane.b32.xlu0 %v2193, 126
      %v2253 = vpop.permute.xlu0 %2252
      %v2254 = vsel %vm762, %v2239, %v2241
      %v2255 = vsel %vm762, %v2243, %v2245
      %v2256 = vsel %vm762, %v2247, %v2249
      %v2257 = vsel %vm762, %v2251, %v2253
      %2262 = vrot.lane.b32.xlu0 %v2186, 122
      %v2263 = vpop.permute.xlu0 %2262
      %2264 = vrot.lane.b32.xlu0 %v2187, 122
      %v2265 = vpop.permute.xlu0 %2264
      %2266 = vrot.lane.b32.xlu0 %v2188, 122
      %v2267 = vpop.permute.xlu0 %2266
      %2268 = vrot.lane.b32.xlu0 %v2189, 122
      %v2269 = vpop.permute.xlu0 %2268
      %2270 = vrot.lane.b32.xlu0 %v2190, 122
      %v2271 = vpop.permute.xlu0 %2270
      %2272 = vrot.lane.b32.xlu0 %v2191, 122
      %v2273 = vpop.permute.xlu0 %2272
      %2274 = vrot.lane.b32.xlu0 %v2192, 122
      %v2275 = vpop.permute.xlu0 %2274
      %2276 = vrot.lane.b32.xlu0 %v2193, 122
      %v2277 = vpop.permute.xlu0 %2276
      %v2278 = vsel %vm979, %v2263, %v2265
      %v2279 = vsel %vm979, %v2267, %v2269
      %v2280 = vsel %vm979, %v2271, %v2273
      %v2281 = vsel %vm979, %v2275, %v2277
      %2286 = vrot.lane.b32.xlu0 %v2186, 121
      %v2287 = vpop.permute.xlu0 %2286
      %2288 = vrot.lane.b32.xlu0 %v2187, 121
      %v2289 = vpop.permute.xlu0 %2288
      %2290 = vrot.lane.b32.xlu0 %v2188, 121
      %v2291 = vpop.permute.xlu0 %2290
      %2292 = vrot.lane.b32.xlu0 %v2189, 121
      %v2293 = vpop.permute.xlu0 %2292
      %2294 = vrot.lane.b32.xlu0 %v2190, 121
      %v2295 = vpop.permute.xlu0 %2294
      %2296 = vrot.lane.b32.xlu0 %v2191, 121
      %v2297 = vpop.permute.xlu0 %2296
      %2298 = vrot.lane.b32.xlu0 %v2192, 121
      %v2299 = vpop.permute.xlu0 %2298
      %2300 = vrot.lane.b32.xlu0 %v2193, 121
      %v2301 = vpop.permute.xlu0 %2300
      %v2302 = vsel %vm1004, %v2287, %v2289
      %v2303 = vsel %vm1004, %v2291, %v2293
      %v2304 = vsel %vm1004, %v2295, %v2297
      %v2305 = vsel %vm1004, %v2299, %v2301
      %2310 = vrot.lane.b32.xlu0 %v2186, 120
      %v2311 = vpop.permute.xlu0 %2310
      %2312 = vrot.lane.b32.xlu0 %v2187, 120
      %v2313 = vpop.permute.xlu0 %2312
      %2314 = vrot.lane.b32.xlu0 %v2188, 120
      %v2315 = vpop.permute.xlu0 %2314
      %2316 = vrot.lane.b32.xlu0 %v2189, 120
      %v2317 = vpop.permute.xlu0 %2316
      %2318 = vrot.lane.b32.xlu0 %v2190, 120
      %v2319 = vpop.permute.xlu0 %2318
      %2320 = vrot.lane.b32.xlu0 %v2191, 120
      %v2321 = vpop.permute.xlu0 %2320
      %2322 = vrot.lane.b32.xlu0 %v2192, 120
      %v2323 = vpop.permute.xlu0 %2322
      %2324 = vrot.lane.b32.xlu0 %v2193, 120
      %v2325 = vpop.permute.xlu0 %2324
      %v2326 = vsel %vm1029, %v2311, %v2313
      %v2327 = vsel %vm1029, %v2315, %v2317
      %v2328 = vsel %vm1029, %v2319, %v2321
      %v2329 = vsel %vm1029, %v2323, %v2325
      %2334 = vrot.lane.b32.xlu0 %v2186, 116
      %v2335 = vpop.permute.xlu0 %2334
      %2336 = vrot.lane.b32.xlu0 %v2187, 116
      %v2337 = vpop.permute.xlu0 %2336
      %2338 = vrot.lane.b32.xlu0 %v2188, 116
      %v2339 = vpop.permute.xlu0 %2338
      %2340 = vrot.lane.b32.xlu0 %v2189, 116
      %v2341 = vpop.permute.xlu0 %2340
      %2342 = vrot.lane.b32.xlu0 %v2190, 116
      %v2343 = vpop.permute.xlu0 %2342
      %2344 = vrot.lane.b32.xlu0 %v2191, 116
      %v2345 = vpop.permute.xlu0 %2344
      %2346 = vrot.lane.b32.xlu0 %v2192, 116
      %v2347 = vpop.permute.xlu0 %2346
      %2348 = vrot.lane.b32.xlu0 %v2193, 116
      %v2349 = vpop.permute.xlu0 %2348
      %v2350 = vsel %vm1054, %v2335, %v2337
      %v2351 = vsel %vm1054, %v2339, %v2341
      %v2352 = vsel %vm1054, %v2343, %v2345
      %v2353 = vsel %vm1054, %v2347, %v2349
      %2358 = vrot.lane.b32.xlu0 %v2186, 115
      %v2359 = vpop.permute.xlu0 %2358
      %2360 = vrot.lane.b32.xlu0 %v2187, 115
      %v2361 = vpop.permute.xlu0 %2360
      %2362 = vrot.lane.b32.xlu0 %v2188, 115
      %v2363 = vpop.permute.xlu0 %2362
      %2364 = vrot.lane.b32.xlu0 %v2189, 115
      %v2365 = vpop.permute.xlu0 %2364
      %2366 = vrot.lane.b32.xlu0 %v2190, 115
      %v2367 = vpop.permute.xlu0 %2366
      %2368 = vrot.lane.b32.xlu0 %v2191, 115
      %v2369 = vpop.permute.xlu0 %2368
      %2370 = vrot.lane.b32.xlu0 %v2192, 115
      %v2371 = vpop.permute.xlu0 %2370
      %2372 = vrot.lane.b32.xlu0 %v2193, 115
      %v2373 = vpop.permute.xlu0 %2372
      %v2374 = vsel %vm1079, %v2359, %v2361
      %v2375 = vsel %vm1079, %v2363, %v2365
      %v2376 = vsel %vm1079, %v2367, %v2369
      %v2377 = vsel %vm1079, %v2371, %v2373
      %2382 = vrot.lane.b32.xlu0 %v2186, 114
      %v2383 = vpop.permute.xlu0 %2382
      %2384 = vrot.lane.b32.xlu0 %v2187, 114
      %v2385 = vpop.permute.xlu0 %2384
      %2386 = vrot.lane.b32.xlu0 %v2188, 114
      %v2387 = vpop.permute.xlu0 %2386
      %2388 = vrot.lane.b32.xlu0 %v2189, 114
      %v2389 = vpop.permute.xlu0 %2388
      %2390 = vrot.lane.b32.xlu0 %v2190, 114
      %v2391 = vpop.permute.xlu0 %2390
      %2392 = vrot.lane.b32.xlu0 %v2191, 114
      %v2393 = vpop.permute.xlu0 %2392
      %2394 = vrot.lane.b32.xlu0 %v2192, 114
      %v2395 = vpop.permute.xlu0 %2394
      %2396 = vrot.lane.b32.xlu0 %v2193, 114
      %v2397 = vpop.permute.xlu0 %2396
      %v2398 = vsel %vm1104, %v2383, %v2385
      %v2399 = vsel %vm1104, %v2387, %v2389
      %v2400 = vsel %vm1104, %v2391, %v2393
      %v2401 = vsel %vm1104, %v2395, %v2397
      %v2406 = vpack.c.bf16 %v2188, %v2186
      %v2407 = vpack.c.bf16 %v2192, %v2190
      %v2408 = vpack.c.bf16 %v2231, %v2230
      %v2409 = vpack.c.bf16 %v2233, %v2232
      %v2410 = vpack.c.bf16 %v2255, %v2254
      %v2411 = vpack.c.bf16 %v2257, %v2256
      %v2412 = vpack.c.bf16 %v2279, %v2278
      %v2413 = vpack.c.bf16 %v2281, %v2280
      %v2414 = vpack.c.bf16 %v2303, %v2302
      %v2415 = vpack.c.bf16 %v2305, %v2304
      %v2416 = vpack.c.bf16 %v2327, %v2326
      %v2417 = vpack.c.bf16 %v2329, %v2328
      %v2418 = vpack.c.bf16 %v2351, %v2350
      %v2419 = vpack.c.bf16 %v2353, %v2352
      %v2420 = vpack.c.bf16 %v2375, %v2374
      %v2421 = vpack.c.bf16 %v2377, %v2376
      %v2422 = vpack.c.bf16 %v2399, %v2398
      %v2423 = vpack.c.bf16 %v2401, %v2400
      %v2432 = vunpack.c.l.b16 %v2194
      %v2433 = vunpack.c.h.b16 %v2194
      %v2434 = vunpack.c.l.b16 %v2195
      %v2435 = vunpack.c.l.b16 %v2196
      %v2436 = vunpack.c.h.b16 %v2196
      %v2437 = vunpack.c.l.b16 %v2197
      %v2438 = vunpack.c.l.b16 %v2198
      %v2439 = vunpack.c.h.b16 %v2198
      %v2440 = vunpack.c.l.b16 %v2199
      %v2441 = vunpack.c.l.b16 %v2200
      %v2442 = vunpack.c.h.b16 %v2200
      %v2443 = vunpack.c.l.b16 %v2201
      %v2444 = vpack.c.b16 %v2435, %v2432
      %v2445 = vpack.c.b16 %v2436, %v2433
      %v2446 = vpack.c.b16 %v2437, %v2434
      %v2447 = vpack.c.b16 %v2441, %v2438
      %v2448 = vpack.c.b16 %v2442, %v2439
      %v2449 = vpack.c.b16 %v2443, %v2440
      %v2455 = vsel %vm1161, %v2446, 0
      %v2458 = vsel %vm1161, %v2449, 0
      %2460 = vmatprep.subr.bf16.mxu0 0
      %2461 = vmatpush1.bf16.msra.mxu0 %v2406
      %2462 = vmatprep.subr.bf16.mxu0 0
      %2463 = vmatpush1.bf16.msra.mxu0 %v2407
      %2464 = vmatprep.subr.bf16.mxu0 0
      %2465 = vmatpush1.bf16.msra.mxu0 %v2408
      %2466 = vmatprep.subr.bf16.mxu0 0
      %2467 = vmatpush1.bf16.msra.mxu0 %v2409
      %2468 = vmatprep.subr.bf16.mxu0 0
      %2469 = vmatpush1.bf16.msra.mxu0 %v2410
      %2470 = vmatprep.subr.bf16.mxu0 0
      %2471 = vmatpush1.bf16.msra.mxu0 %v2411
      %2472 = vmatprep.subr.bf16.mxu0 0
      %2473 = vmatpush1.bf16.msra.mxu0 %v2412
      %2474 = vmatprep.subr.bf16.mxu0 0
      %2475 = vmatpush1.bf16.msra.mxu0 %v2413
      %2476 = vmatprep.subr.bf16.mxu0 0
      %2477 = vmatpush1.bf16.msra.mxu0 %v2414
      %2478 = vmatprep.subr.bf16.mxu0 0
      %2479 = vmatpush1.bf16.msra.mxu0 %v2415
      %2480 = vmatprep.subr.bf16.mxu0 0
      %2481 = vmatpush1.bf16.msra.mxu0 %v2416
      %2482 = vmatprep.subr.bf16.mxu0 0
      %2483 = vmatpush1.bf16.msra.mxu0 %v2417
      %2484 = vmatprep.subr.bf16.mxu0 0
      %2485 = vmatpush1.bf16.msra.mxu0 %v2418
      %2486 = vmatprep.subr.bf16.mxu0 0
      %2487 = vmatpush1.bf16.msra.mxu0 %v2419
      %2488 = vmatprep.subr.bf16.mxu0 0
      %2489 = vmatpush1.bf16.msra.mxu0 %v2420
      %2490 = vmatprep.subr.bf16.mxu0 0
      %2491 = vmatpush1.bf16.msra.mxu0 %v2421
      %2492 = vmatprep.mubr.bf16.mxu0 %v2445
      %2493 = vmatmul.mubr.bf16.gmra.mrb[0].mxu0 %v2444
      %v2494 = vpop.f32.mrb[0].mxu0
      %v2495 = vadd.f32 0.0, %v2494
      %v2496 = vpop.f32.mrb[0].mxu0
      %v2497 = vpop.f32.mrb[0].mxu0
      %v2498 = vadd.f32 0.0, %v2497
      %v2499 = vpop.f32.mrb[0].mxu0
      %2500 = vmatprep.mubr.bf16.mxu0 %v2448
      %2501 = vmatmul.mubr.bf16.gmra.mrb[0].mxu0 %v2447
      %v2502 = vpop.f32.mrb[0].mxu0
      %v2503 = vadd.f32 0.0, %v2502
      %v2504 = vpop.f32.mrb[0].mxu0
      %v2505 = vpop.f32.mrb[0].mxu0
      %v2506 = vadd.f32 0.0, %v2505
      %v2507 = vpop.f32.mrb[0].mxu0
      %2508 = vdwg.mxu0
      %2509 = vmatprep.subr.bf16.mxu0 0
      %2510 = vmatpush1.bf16.msra.mxu0 %v2422
      %2511 = vmatprep.subr.bf16.mxu0 0
      %2512 = vmatpush1.bf16.msra.mxu0 %v2423
      %2513 = vmatprep.subr.bf16.mxu0 0
      %2514 = vmatpush1.bf16.msra.mxu0 0
      %2515 = vmatprep.subr.bf16.mxu0 0
      %2516 = vmatpush1.bf16.msra.mxu0 0
      %2517 = vmatprep.subr.bf16.mxu0 0
      %2518 = vmatpush1.bf16.msra.mxu0 0
      %2519 = vmatprep.subr.bf16.mxu0 0
      %2520 = vmatpush1.bf16.msra.mxu0 0
      %2521 = vmatprep.subr.bf16.mxu0 0
      %2522 = vmatpush1.bf16.msra.mxu0 0
      %2523 = vmatprep.subr.bf16.mxu0 0
      %2524 = vmatpush1.bf16.msra.mxu0 0
      %2525 = vmatprep.subr.bf16.mxu0 0
      %2526 = vmatpush1.bf16.msra.mxu0 0
      %2527 = vmatprep.subr.bf16.mxu0 0
      %2528 = vmatpush1.bf16.msra.mxu0 0
      %2529 = vmatprep.subr.bf16.mxu0 0
      %2530 = vmatpush1.bf16.msra.mxu0 0
      %2531 = vmatprep.subr.bf16.mxu0 0
      %2532 = vmatpush1.bf16.msra.mxu0 0
      %2533 = vmatprep.subr.bf16.mxu0 0
      %2534 = vmatpush1.bf16.msra.mxu0 0
      %2535 = vmatprep.subr.bf16.mxu0 0
      %2536 = vmatpush1.bf16.msra.mxu0 0
      %2537 = vmatprep.subr.bf16.mxu0 0
      %2538 = vmatpush1.bf16.msra.mxu0 0
      %2539 = vmatprep.subr.bf16.mxu0 0
      %2540 = vmatpush1.bf16.msra.mxu0 0
      %2541 = vmatprep.mubr.bf16.mxu0 0
      %2542 = vmatmul.mubr.bf16.gmra.mrb[0].mxu0 %v2455
      %v2543 = vpop.f32.mrb[0].mxu0
      %v2544 = vadd.f32 %v2495, %v2543
      %v2545 = vpop.f32.mrb[0].mxu0
      %v2546 = vpop.f32.mrb[0].mxu0
      %v2547 = vadd.f32 %v2498, %v2546
      %v2548 = vpop.f32.mrb[0].mxu0
      %2549 = vmatprep.mubr.bf16.mxu0 0
      %2550 = vmatmul.mubr.bf16.gmra.mrb[0].mxu0 %v2458
      %v2551 = vpop.f32.mrb[0].mxu0
      %v2552 = vadd.f32 %v2503, %v2551
      %v2553 = vpop.f32.mrb[0].mxu0
      %v2554 = vpop.f32.mrb[0].mxu0
      %v2555 = vadd.f32 %v2506, %v2554
      %v2556 = vpop.f32.mrb[0].mxu0
      %2557 = vdwg.mxu0
      %v2558 = vsel %vm595, %v2544, 0.0
      %v2559 = vsel %vm595, %v2547, 0.0
      %v2560 = vsel %vm595, %v2552, 0.0
      %v2561 = vsel %vm595, %v2555, 0.0
      %2562 = vadd.xlane.f32.xlu0 %v2558
      %v2563 = vpop.xlane.xlu0 %2562
      %2564 = vadd.xlane.f32.xlu0 %v2559
      %v2565 = vpop.xlane.xlu0 %2564
      %2566 = vadd.xlane.f32.xlu0 %v2560
      %v2567 = vpop.xlane.xlu0 %2566
      %2568 = vadd.xlane.f32.xlu0 %v2561
      %v2569 = vpop.xlane.xlu0 %2568
      %v2570 = vmul.f32 %v2563, 0.0625
      %v2571 = vmul.f32 %v2565, 0.0625
      %v2572 = vmul.f32 %v2567, 0.0625
      %v2573 = vmul.f32 %v2569, 0.0625
      %v2574 = vmul.f32 %v2558, %v2558
      %v2575 = vmul.f32 %v2559, %v2559
      %v2576 = vmul.f32 %v2560, %v2560
      %v2577 = vmul.f32 %v2561, %v2561
      %2578 = vadd.xlane.f32.xlu0 %v2574
      %v2579 = vpop.xlane.xlu0 %2578
      %2580 = vadd.xlane.f32.xlu0 %v2575
      %v2581 = vpop.xlane.xlu0 %2580
      %2582 = vadd.xlane.f32.xlu0 %v2576
      %v2583 = vpop.xlane.xlu0 %2582
      %2584 = vadd.xlane.f32.xlu0 %v2577
      %v2585 = vpop.xlane.xlu0 %2584
      %v2586 = vmul.f32 %v2579, 0.0625
      %v2587 = vmul.f32 %v2581, 0.0625
      %v2588 = vmul.f32 %v2583, 0.0625
      %v2589 = vmul.f32 %v2585, 0.0625
      %v2590 = vmul.f32 %v2570, %v2570
      %v2591 = vmul.f32 %v2571, %v2571
      %v2592 = vmul.f32 %v2572, %v2572
      %v2593 = vmul.f32 %v2573, %v2573
      %v2594 = vsub.f32 %v2586, %v2590
      %v2595 = vsub.f32 %v2587, %v2591
      %v2596 = vsub.f32 %v2588, %v2592
      %v2597 = vsub.f32 %v2589, %v2593
      %v2598 = vmax.f32 %v2594, 0.0
      %v2599 = vmax.f32 %v2595, 0.0
      %v2600 = vmax.f32 %v2596, 0.0
      %v2601 = vmax.f32 %v2597, 0.0
      %v2602 = vsub.f32 %v2558, %v2570
      %v2603 = vsub.f32 %v2559, %v2571
      %v2604 = vsub.f32 %v2560, %v2572
      %v2605 = vsub.f32 %v2561, %v2573
      %v2606 = vadd.f32 %v2598, 1e-05
      %v2607 = vadd.f32 %v2599, 1e-05
      %v2608 = vadd.f32 %v2600, 1e-05
      %v2609 = vadd.f32 %v2601, 1e-05
      %v2610 = vrsqrt.pop %v2606
      %v2611 = vrsqrt.pop %v2607
      %v2612 = vrsqrt.pop %v2608
      %v2613 = vrsqrt.pop %v2609
      %v2614 = vmul.f32 %v2602, %v2610
      %v2615 = vmul.f32 %v2603, %v2611
      %v2616 = vmul.f32 %v2604, %v2612
      %v2617 = vmul.f32 %v2605, %v2613
      %2619 = vset.pattern.permute.xlu0 0
      %2620 = vperm.xlu0 %2619, %v2202
      %v2621 = vpop.permute.xlu0 %2620
      %2624 = vset.pattern.permute.xlu0 0
      %2625 = vperm.xlu0 %2624, %v2203
      %v2626 = vpop.permute.xlu0 %2625
      %2629 = vset.pattern.permute.xlu0 0
      %2630 = vperm.xlu0 %2629, %v2204
      %v2631 = vpop.permute.xlu0 %2630
      %2634 = vset.pattern.permute.xlu0 0
      %2635 = vperm.xlu0 %2634, %v2205
      %v2636 = vpop.permute.xlu0 %2635
      %v2638 = vmul.f32 %v2614, %v2621
      %v2639 = vmul.f32 %v2615, %v2626
      %v2640 = vmul.f32 %v2616, %v2631
      %v2641 = vmul.f32 %v2617, %v2636
      %2642 = vset.pattern.permute.xlu0 1
      %2643 = vperm.xlu0 %2642, %v2202
      %v2644 = vpop.permute.xlu0 %2643
      %2646 = vset.pattern.permute.xlu0 1
      %2647 = vperm.xlu0 %2646, %v2203
      %v2648 = vpop.permute.xlu0 %2647
      %2650 = vset.pattern.permute.xlu0 1
      %2651 = vperm.xlu0 %2650, %v2204
      %v2652 = vpop.permute.xlu0 %2651
      %2654 = vset.pattern.permute.xlu0 1
      %2655 = vperm.xlu0 %2654, %v2205
      %v2656 = vpop.permute.xlu0 %2655
      %v2658 = vadd.f32 %v2638, %v2644
      %v2659 = vadd.f32 %v2639, %v2648
      %v2660 = vadd.f32 %v2640, %v2652
      %v2661 = vadd.f32 %v2641, %v2656
      %v2662 = vmax.f32 %v2658, 0.0
      %v2663 = vmax.f32 %v2659, 0.0
      %v2664 = vmax.f32 %v2660, 0.0
      %v2665 = vmax.f32 %v2661, 0.0
      %2670 = vrot.lane.b32.xlu0 %v2662, 7
      %v2671 = vpop.permute.xlu0 %2670
      %2672 = vrot.lane.b32.xlu0 %v2663, 7
      %v2673 = vpop.permute.xlu0 %2672
      %2674 = vrot.lane.b32.xlu0 %v2664, 7
      %v2675 = vpop.permute.xlu0 %2674
      %2676 = vrot.lane.b32.xlu0 %v2665, 7
      %v2677 = vpop.permute.xlu0 %2676
      %2682 = vst.msk [vmem:[#allocation2] sm:$0xff] %vm720, %v2671
      %2683 = vst.msk [vmem:[#allocation2 + $0x8] sm:$0xff] %vm722, %v2671
      %2684 = vst.msk [vmem:[#allocation2 + $0x10] sm:$0xff] %vm720, %v2673
      %2685 = vst.msk [vmem:[#allocation2 + $0x18] sm:$0xff] %vm722, %v2673
      %2686 = vst.msk [vmem:[#allocation2 + $0x20] sm:$0xff] %vm720, %v2675
      %2687 = vst.msk [vmem:[#allocation2 + $0x28] sm:$0xff] %vm722, %v2675
      %2688 = vst.msk [vmem:[#allocation2 + $0x30] sm:$0xff] %vm720, %v2677
      %2689 = vst.msk [vmem:[#allocation2 + $0x38] sm:$0xff] %vm722, %v2677
      %v2690 = vld [vmem:[#allocation2] sm:$0xff]
      %v2691 = vld [vmem:[#allocation2 + $0x8] sm:$0xff]
      %v2692 = vld [vmem:[#allocation2 + $0x10] sm:$0xff]
      %v2693 = vld [vmem:[#allocation2 + $0x18] sm:$0xff]
      %v2694 = vld [vmem:[#allocation2 + $0x20] sm:$0xff]
      %v2695 = vld [vmem:[#allocation2 + $0x28] sm:$0xff]
      %v2696 = vld [vmem:[#allocation2 + $0x30] sm:$0xff]
      %v2697 = vld [vmem:[#allocation2 + $0x38] sm:$0xff]
      %2706 = vrot.lane.b32.xlu0 %v2690, 126
      %v2707 = vpop.permute.xlu0 %2706
      %2708 = vrot.lane.b32.xlu0 %v2691, 126
      %v2709 = vpop.permute.xlu0 %2708
      %2710 = vrot.lane.b32.xlu0 %v2692, 126
      %v2711 = vpop.permute.xlu0 %2710
      %2712 = vrot.lane.b32.xlu0 %v2693, 126
      %v2713 = vpop.permute.xlu0 %2712
      %2714 = vrot.lane.b32.xlu0 %v2694, 126
      %v2715 = vpop.permute.xlu0 %2714
      %2716 = vrot.lane.b32.xlu0 %v2695, 126
      %v2717 = vpop.permute.xlu0 %2716
      %2718 = vrot.lane.b32.xlu0 %v2696, 126
      %v2719 = vpop.permute.xlu0 %2718
      %2720 = vrot.lane.b32.xlu0 %v2697, 126
      %v2721 = vpop.permute.xlu0 %2720
      %v2722 = vsel %vm762, %v2707, %v2709
      %v2723 = vsel %vm762, %v2711, %v2713
      %v2724 = vsel %vm762, %v2715, %v2717
      %v2725 = vsel %vm762, %v2719, %v2721
      %v2734 = vsel %vm762, %v2709, 0.0
      %v2735 = vsel %vm762, %v2713, 0.0
      %v2736 = vsel %vm762, %v2717, 0.0
      %v2737 = vsel %vm762, %v2721, 0.0
      %2738 = vst.msk [vmem:[#allocation2] sm:$0xff] %vm781, %v2722
      %2739 = vst.msk [vmem:[#allocation2 + $0x8] sm:$0xff] %vm782, %v2734
      %2740 = vst.msk [vmem:[#allocation2 + $0x10] sm:$0xff] %vm781, %v2723
      %2741 = vst.msk [vmem:[#allocation2 + $0x18] sm:$0xff] %vm782, %v2735
      %2742 = vst.msk [vmem:[#allocation2 + $0x20] sm:$0xff] %vm781, %v2724
      %2743 = vst.msk [vmem:[#allocation2 + $0x28] sm:$0xff] %vm782, %v2736
      %2744 = vst.msk [vmem:[#allocation2 + $0x30] sm:$0xff] %vm781, %v2725
      %2745 = vst.msk [vmem:[#allocation2 + $0x38] sm:$0xff] %vm782, %v2737
      %2746 = vrot.lane.b32.xlu0 %v2690, 2
      %v2747 = vpop.permute.xlu0 %2746
      %2748 = vrot.lane.b32.xlu0 %v2691, 2
      %v2749 = vpop.permute.xlu0 %2748
      %2750 = vrot.lane.b32.xlu0 %v2692, 2
      %v2751 = vpop.permute.xlu0 %2750
      %2752 = vrot.lane.b32.xlu0 %v2693, 2
      %v2753 = vpop.permute.xlu0 %2752
      %2754 = vrot.lane.b32.xlu0 %v2694, 2
      %v2755 = vpop.permute.xlu0 %2754
      %2756 = vrot.lane.b32.xlu0 %v2695, 2
      %v2757 = vpop.permute.xlu0 %2756
      %2758 = vrot.lane.b32.xlu0 %v2696, 2
      %v2759 = vpop.permute.xlu0 %2758
      %2760 = vrot.lane.b32.xlu0 %v2697, 2
      %v2761 = vpop.permute.xlu0 %2760
      %v2762 = vsel %vm807, %v2747, %v2749
      %v2763 = vsel %vm807, %v2751, %v2753
      %v2764 = vsel %vm807, %v2755, %v2757
      %v2765 = vsel %vm807, %v2759, %v2761
      %v2774 = vsel %vm807, 0.0, %v2747
      %v2775 = vsel %vm807, 0.0, %v2751
      %v2776 = vsel %vm807, 0.0, %v2755
      %v2777 = vsel %vm807, 0.0, %v2759
      %2778 = vst.msk [vmem:[#allocation2] sm:$0xff] %vm826, %v2774
      %2779 = vst.msk [vmem:[#allocation2 + $0x8] sm:$0xff] %vm827, %v2762
      %2780 = vst.msk [vmem:[#allocation2 + $0x10] sm:$0xff] %vm826, %v2775
      %2781 = vst.msk [vmem:[#allocation2 + $0x18] sm:$0xff] %vm827, %v2763
      %2782 = vst.msk [vmem:[#allocation2 + $0x20] sm:$0xff] %vm826, %v2776
      %2783 = vst.msk [vmem:[#allocation2 + $0x28] sm:$0xff] %vm827, %v2764
      %2784 = vst.msk [vmem:[#allocation2 + $0x30] sm:$0xff] %vm826, %v2777
      %2785 = vst.msk [vmem:[#allocation2 + $0x38] sm:$0xff] %vm827, %v2765
      %v2786 = vld [vmem:[#allocation2] sm:$0xff]
      %v2787 = vld [vmem:[#allocation2 + $0x10] sm:$0xff]
      %v2788 = vld [vmem:[#allocation2 + $0x20] sm:$0xff]
      %v2789 = vld [vmem:[#allocation2 + $0x30] sm:$0xff]
      %2794 = vrot.lane.b32.xlu0 %v2786, 116
      %v2795 = vpop.permute.xlu0 %2794
      %2796 = vrot.lane.b32.xlu0 %v2787, 116
      %v2797 = vpop.permute.xlu0 %2796
      %2798 = vrot.lane.b32.xlu0 %v2788, 116
      %v2799 = vpop.permute.xlu0 %2798
      %2800 = vrot.lane.b32.xlu0 %v2789, 116
      %v2801 = vpop.permute.xlu0 %2800
      %2806 = vst.msk [vmem:[#allocation2] sm:$0xff] %vm856, %v2795
      %2807 = vst.msk [vmem:[#allocation2 + $0x10] sm:$0xff] %vm856, %v2797
      %2808 = vst.msk [vmem:[#allocation2 + $0x20] sm:$0xff] %vm856, %v2799
      %2809 = vst.msk [vmem:[#allocation2 + $0x30] sm:$0xff] %vm856, %v2801
      %v2810 = vld [vmem:[#allocation2] sm:$0xff]
      %v2811 = vld [vmem:[#allocation2 + $0x10] sm:$0xff]
      %v2812 = vld [vmem:[#allocation2 + $0x20] sm:$0xff]
      %v2813 = vld [vmem:[#allocation2 + $0x30] sm:$0xff]
      %2818 = vrot.lane.b32.xlu0 %v2810, 12
      %v2819 = vpop.permute.xlu0 %2818
      %2820 = vrot.lane.b32.xlu0 %v2811, 12
      %v2821 = vpop.permute.xlu0 %2820
      %2822 = vrot.lane.b32.xlu0 %v2812, 12
      %v2823 = vpop.permute.xlu0 %2822
      %2824 = vrot.lane.b32.xlu0 %v2813, 12
      %v2825 = vpop.permute.xlu0 %2824
      %2830 = vst.msk [vmem:[#allocation2] sm:$0xff] %vm881, %v2819
      %2831 = vst.msk [vmem:[#allocation2 + $0x10] sm:$0xff] %vm881, %v2821
      %2832 = vst.msk [vmem:[#allocation2 + $0x20] sm:$0xff] %vm881, %v2823
      %2833 = vst.msk [vmem:[#allocation2 + $0x30] sm:$0xff] %vm881, %v2825
      %v2834 = vld [vmem:[#allocation2] sm:$0xff]
      %v2835 = vld [vmem:[#allocation2 + $0x8] sm:$0xff]
      %v2836 = vld [vmem:[#allocation2 + $0x10] sm:$0xff]
      %v2837 = vld [vmem:[#allocation2 + $0x18] sm:$0xff]
      %v2838 = vld [vmem:[#allocation2 + $0x20] sm:$0xff]
      %v2839 = vld [vmem:[#allocation2 + $0x28] sm:$0xff]
      %v2840 = vld [vmem:[#allocation2 + $0x30] sm:$0xff]
      %v2841 = vld [vmem:[#allocation2 + $0x38] sm:$0xff]
      %v2842 = vld [vmem:[%s9] sm:$0xff]
      %v2843 = vld [vmem:[%s9 + $0x8] sm:$0xf]
      %v2844 = vld [vmem:[%s9 + $0xc] sm:$0xff]
      %v2845 = vld [vmem:[%s9 + $0x14] sm:$0xf]
      %v2846 = vld [vmem:[%s9 + $0x18] sm:$0xff]
      %v2847 = vld [vmem:[%s9 + $0x20] sm:$0xf]
      %v2848 = vld [vmem:[%s9 + $0x24] sm:$0xff]
      %v2849 = vld [vmem:[%s9 + $0x2c] sm:$0xf]
      %v2850 = vld [vmem:[%s10] sm:$0xff]
      %v2851 = vld [vmem:[%s10 + $0x8] sm:$0xff]
      %v2852 = vld [vmem:[%s10 + $0x10] sm:$0xff]
      %v2853 = vld [vmem:[%s10 + $0x18] sm:$0xff]
      %2862 = vrot.lane.b32.xlu0 %v2834, 127
      %v2863 = vpop.permute.xlu0 %2862
      %2864 = vrot.lane.b32.xlu0 %v2835, 127
      %v2865 = vpop.permute.xlu0 %2864
      %2866 = vrot.lane.b32.xlu0 %v2836, 127
      %v2867 = vpop.permute.xlu0 %2866
      %2868 = vrot.lane.b32.xlu0 %v2837, 127
      %v2869 = vpop.permute.xlu0 %2868
      %2870 = vrot.lane.b32.xlu0 %v2838, 127
      %v2871 = vpop.permute.xlu0 %2870
      %2872 = vrot.lane.b32.xlu0 %v2839, 127
      %v2873 = vpop.permute.xlu0 %2872
      %2874 = vrot.lane.b32.xlu0 %v2840, 127
      %v2875 = vpop.permute.xlu0 %2874
      %2876 = vrot.lane.b32.xlu0 %v2841, 127
      %v2877 = vpop.permute.xlu0 %2876
      %v2878 = vsel %vm930, %v2863, %v2865
      %v2879 = vsel %vm930, %v2867, %v2869
      %v2880 = vsel %vm930, %v2871, %v2873
      %v2881 = vsel %vm930, %v2875, %v2877
      %2886 = vrot.lane.b32.xlu0 %v2834, 126
      %v2887 = vpop.permute.xlu0 %2886
      %2888 = vrot.lane.b32.xlu0 %v2835, 126
      %v2889 = vpop.permute.xlu0 %2888
      %2890 = vrot.lane.b32.xlu0 %v2836, 126
      %v2891 = vpop.permute.xlu0 %2890
      %2892 = vrot.lane.b32.xlu0 %v2837, 126
      %v2893 = vpop.permute.xlu0 %2892
      %2894 = vrot.lane.b32.xlu0 %v2838, 126
      %v2895 = vpop.permute.xlu0 %2894
      %2896 = vrot.lane.b32.xlu0 %v2839, 126
      %v2897 = vpop.permute.xlu0 %2896
      %2898 = vrot.lane.b32.xlu0 %v2840, 126
      %v2899 = vpop.permute.xlu0 %2898
      %2900 = vrot.lane.b32.xlu0 %v2841, 126
      %v2901 = vpop.permute.xlu0 %2900
      %v2902 = vsel %vm762, %v2887, %v2889
      %v2903 = vsel %vm762, %v2891, %v2893
      %v2904 = vsel %vm762, %v2895, %v2897
      %v2905 = vsel %vm762, %v2899, %v2901
      %2910 = vrot.lane.b32.xlu0 %v2834, 122
      %v2911 = vpop.permute.xlu0 %2910
      %2912 = vrot.lane.b32.xlu0 %v2835, 122
      %v2913 = vpop.permute.xlu0 %2912
      %2914 = vrot.lane.b32.xlu0 %v2836, 122
      %v2915 = vpop.permute.xlu0 %2914
      %2916 = vrot.lane.b32.xlu0 %v2837, 122
      %v2917 = vpop.permute.xlu0 %2916
      %2918 = vrot.lane.b32.xlu0 %v2838, 122
      %v2919 = vpop.permute.xlu0 %2918
      %2920 = vrot.lane.b32.xlu0 %v2839, 122
      %v2921 = vpop.permute.xlu0 %2920
      %2922 = vrot.lane.b32.xlu0 %v2840, 122
      %v2923 = vpop.permute.xlu0 %2922
      %2924 = vrot.lane.b32.xlu0 %v2841, 122
      %v2925 = vpop.permute.xlu0 %2924
      %v2926 = vsel %vm979, %v2911, %v2913
      %v2927 = vsel %vm979, %v2915, %v2917
      %v2928 = vsel %vm979, %v2919, %v2921
      %v2929 = vsel %vm979, %v2923, %v2925
      %2934 = vrot.lane.b32.xlu0 %v2834, 121
      %v2935 = vpop.permute.xlu0 %2934
      %2936 = vrot.lane.b32.xlu0 %v2835, 121
      %v2937 = vpop.permute.xlu0 %2936
      %2938 = vrot.lane.b32.xlu0 %v2836, 121
      %v2939 = vpop.permute.xlu0 %2938
      %2940 = vrot.lane.b32.xlu0 %v2837, 121
      %v2941 = vpop.permute.xlu0 %2940
      %2942 = vrot.lane.b32.xlu0 %v2838, 121
      %v2943 = vpop.permute.xlu0 %2942
      %2944 = vrot.lane.b32.xlu0 %v2839, 121
      %v2945 = vpop.permute.xlu0 %2944
      %2946 = vrot.lane.b32.xlu0 %v2840, 121
      %v2947 = vpop.permute.xlu0 %2946
      %2948 = vrot.lane.b32.xlu0 %v2841, 121
      %v2949 = vpop.permute.xlu0 %2948
      %v2950 = vsel %vm1004, %v2935, %v2937
      %v2951 = vsel %vm1004, %v2939, %v2941
      %v2952 = vsel %vm1004, %v2943, %v2945
      %v2953 = vsel %vm1004, %v2947, %v2949
      %2958 = vrot.lane.b32.xlu0 %v2834, 120
      %v2959 = vpop.permute.xlu0 %2958
      %2960 = vrot.lane.b32.xlu0 %v2835, 120
      %v2961 = vpop.permute.xlu0 %2960
      %2962 = vrot.lane.b32.xlu0 %v2836, 120
      %v2963 = vpop.permute.xlu0 %2962
      %2964 = vrot.lane.b32.xlu0 %v2837, 120
      %v2965 = vpop.permute.xlu0 %2964
      %2966 = vrot.lane.b32.xlu0 %v2838, 120
      %v2967 = vpop.permute.xlu0 %2966
      %2968 = vrot.lane.b32.xlu0 %v2839, 120
      %v2969 = vpop.permute.xlu0 %2968
      %2970 = vrot.lane.b32.xlu0 %v2840, 120
      %v2971 = vpop.permute.xlu0 %2970
      %2972 = vrot.lane.b32.xlu0 %v2841, 120
      %v2973 = vpop.permute.xlu0 %2972
      %v2974 = vsel %vm1029, %v2959, %v2961
      %v2975 = vsel %vm1029, %v2963, %v2965
      %v2976 = vsel %vm1029, %v2967, %v2969
      %v2977 = vsel %vm1029, %v2971, %v2973
      %2982 = vrot.lane.b32.xlu0 %v2834, 116
      %v2983 = vpop.permute.xlu0 %2982
      %2984 = vrot.lane.b32.xlu0 %v2835, 116
      %v2985 = vpop.permute.xlu0 %2984
      %2986 = vrot.lane.b32.xlu0 %v2836, 116
      %v2987 = vpop.permute.xlu0 %2986
      %2988 = vrot.lane.b32.xlu0 %v2837, 116
      %v2989 = vpop.permute.xlu0 %2988
      %2990 = vrot.lane.b32.xlu0 %v2838, 116
      %v2991 = vpop.permute.xlu0 %2990
      %2992 = vrot.lane.b32.xlu0 %v2839, 116
      %v2993 = vpop.permute.xlu0 %2992
      %2994 = vrot.lane.b32.xlu0 %v2840, 116
      %v2995 = vpop.permute.xlu0 %2994
      %2996 = vrot.lane.b32.xlu0 %v2841, 116
      %v2997 = vpop.permute.xlu0 %2996
      %v2998 = vsel %vm1054, %v2983, %v2985
      %v2999 = vsel %vm1054, %v2987, %v2989
      %v3000 = vsel %vm1054, %v2991, %v2993
      %v3001 = vsel %vm1054, %v2995, %v2997
      %3006 = vrot.lane.b32.xlu0 %v2834, 115
      %v3007 = vpop.permute.xlu0 %3006
      %3008 = vrot.lane.b32.xlu0 %v2835, 115
      %v3009 = vpop.permute.xlu0 %3008
      %3010 = vrot.lane.b32.xlu0 %v2836, 115
      %v3011 = vpop.permute.xlu0 %3010
      %3012 = vrot.lane.b32.xlu0 %v2837, 115
      %v3013 = vpop.permute.xlu0 %3012
      %3014 = vrot.lane.b32.xlu0 %v2838, 115
      %v3015 = vpop.permute.xlu0 %3014
      %3016 = vrot.lane.b32.xlu0 %v2839, 115
      %v3017 = vpop.permute.xlu0 %3016
      %3018 = vrot.lane.b32.xlu0 %v2840, 115
      %v3019 = vpop.permute.xlu0 %3018
      %3020 = vrot.lane.b32.xlu0 %v2841, 115
      %v3021 = vpop.permute.xlu0 %3020
      %v3022 = vsel %vm1079, %v3007, %v3009
      %v3023 = vsel %vm1079, %v3011, %v3013
      %v3024 = vsel %vm1079, %v3015, %v3017
      %v3025 = vsel %vm1079, %v3019, %v3021
      %3030 = vrot.lane.b32.xlu0 %v2834, 114
      %v3031 = vpop.permute.xlu0 %3030
      %3032 = vrot.lane.b32.xlu0 %v2835, 114
      %v3033 = vpop.permute.xlu0 %3032
      %3034 = vrot.lane.b32.xlu0 %v2836, 114
      %v3035 = vpop.permute.xlu0 %3034
      %3036 = vrot.lane.b32.xlu0 %v2837, 114
      %v3037 = vpop.permute.xlu0 %3036
      %3038 = vrot.lane.b32.xlu0 %v2838, 114
      %v3039 = vpop.permute.xlu0 %3038
      %3040 = vrot.lane.b32.xlu0 %v2839, 114
      %v3041 = vpop.permute.xlu0 %3040
      %3042 = vrot.lane.b32.xlu0 %v2840, 114
      %v3043 = vpop.permute.xlu0 %3042
      %3044 = vrot.lane.b32.xlu0 %v2841, 114
      %v3045 = vpop.permute.xlu0 %3044
      %v3046 = vsel %vm1104, %v3031, %v3033
      %v3047 = vsel %vm1104, %v3035, %v3037
      %v3048 = vsel %vm1104, %v3039, %v3041
      %v3049 = vsel %vm1104, %v3043, %v3045
      %v3054 = vpack.c.bf16 %v2836, %v2834
      %v3055 = vpack.c.bf16 %v2840, %v2838
      %v3056 = vpack.c.bf16 %v2879, %v2878
      %v3057 = vpack.c.bf16 %v2881, %v2880
      %v3058 = vpack.c.bf16 %v2903, %v2902
      %v3059 = vpack.c.bf16 %v2905, %v2904
      %v3060 = vpack.c.bf16 %v2927, %v2926
      %v3061 = vpack.c.bf16 %v2929, %v2928
      %v3062 = vpack.c.bf16 %v2951, %v2950
      %v3063 = vpack.c.bf16 %v2953, %v2952
      %v3064 = vpack.c.bf16 %v2975, %v2974
      %v3065 = vpack.c.bf16 %v2977, %v2976
      %v3066 = vpack.c.bf16 %v2999, %v2998
      %v3067 = vpack.c.bf16 %v3001, %v3000
      %v3068 = vpack.c.bf16 %v3023, %v3022
      %v3069 = vpack.c.bf16 %v3025, %v3024
      %v3070 = vpack.c.bf16 %v3047, %v3046
      %v3071 = vpack.c.bf16 %v3049, %v3048
      %v3080 = vunpack.c.l.b16 %v2842
      %v3081 = vunpack.c.h.b16 %v2842
      %v3082 = vunpack.c.l.b16 %v2843
      %v3083 = vunpack.c.l.b16 %v2844
      %v3084 = vunpack.c.h.b16 %v2844
      %v3085 = vunpack.c.l.b16 %v2845
      %v3086 = vunpack.c.l.b16 %v2846
      %v3087 = vunpack.c.h.b16 %v2846
      %v3088 = vunpack.c.l.b16 %v2847
      %v3089 = vunpack.c.l.b16 %v2848
      %v3090 = vunpack.c.h.b16 %v2848
      %v3091 = vunpack.c.l.b16 %v2849
      %v3092 = vpack.c.b16 %v3083, %v3080
      %v3093 = vpack.c.b16 %v3084, %v3081
      %v3094 = vpack.c.b16 %v3085, %v3082
      %v3095 = vpack.c.b16 %v3089, %v3086
      %v3096 = vpack.c.b16 %v3090, %v3087
      %v3097 = vpack.c.b16 %v3091, %v3088
      %v3103 = vsel %vm1161, %v3094, 0
      %v3106 = vsel %vm1161, %v3097, 0
      %3108 = vmatprep.subr.bf16.mxu0 0
      %3109 = vmatpush1.bf16.msra.mxu0 %v3054
      %3110 = vmatprep.subr.bf16.mxu0 0
      %3111 = vmatpush1.bf16.msra.mxu0 %v3055
      %3112 = vmatprep.subr.bf16.mxu0 0
      %3113 = vmatpush1.bf16.msra.mxu0 %v3056
      %3114 = vmatprep.subr.bf16.mxu0 0
      %3115 = vmatpush1.bf16.msra.mxu0 %v3057
      %3116 = vmatprep.subr.bf16.mxu0 0
      %3117 = vmatpush1.bf16.msra.mxu0 %v3058
      %3118 = vmatprep.subr.bf16.mxu0 0
      %3119 = vmatpush1.bf16.msra.mxu0 %v3059
      %3120 = vmatprep.subr.bf16.mxu0 0
      %3121 = vmatpush1.bf16.msra.mxu0 %v3060
      %3122 = vmatprep.subr.bf16.mxu0 0
      %3123 = vmatpush1.bf16.msra.mxu0 %v3061
      %3124 = vmatprep.subr.bf16.mxu0 0
      %3125 = vmatpush1.bf16.msra.mxu0 %v3062
      %3126 = vmatprep.subr.bf16.mxu0 0
      %3127 = vmatpush1.bf16.msra.mxu0 %v3063
      %3128 = vmatprep.subr.bf16.mxu0 0
      %3129 = vmatpush1.bf16.msra.mxu0 %v3064
      %3130 = vmatprep.subr.bf16.mxu0 0
      %3131 = vmatpush1.bf16.msra.mxu0 %v3065
      %3132 = vmatprep.subr.bf16.mxu0 0
      %3133 = vmatpush1.bf16.msra.mxu0 %v3066
      %3134 = vmatprep.subr.bf16.mxu0 0
      %3135 = vmatpush1.bf16.msra.mxu0 %v3067
      %3136 = vmatprep.subr.bf16.mxu0 0
      %3137 = vmatpush1.bf16.msra.mxu0 %v3068
      %3138 = vmatprep.subr.bf16.mxu0 0
      %3139 = vmatpush1.bf16.msra.mxu0 %v3069
      %3140 = vmatprep.mubr.bf16.mxu0 %v3093
      %3141 = vmatmul.mubr.bf16.gmra.mrb[0].mxu0 %v3092
      %v3142 = vpop.f32.mrb[0].mxu0
      %v3143 = vadd.f32 0.0, %v3142
      %v3144 = vpop.f32.mrb[0].mxu0
      %v3145 = vpop.f32.mrb[0].mxu0
      %v3146 = vadd.f32 0.0, %v3145
      %v3147 = vpop.f32.mrb[0].mxu0
      %3148 = vmatprep.mubr.bf16.mxu0 %v3096
      %3149 = vmatmul.mubr.bf16.gmra.mrb[0].mxu0 %v3095
      %v3150 = vpop.f32.mrb[0].mxu0
      %v3151 = vadd.f32 0.0, %v3150
      %v3152 = vpop.f32.mrb[0].mxu0
      %v3153 = vpop.f32.mrb[0].mxu0
      %v3154 = vadd.f32 0.0, %v3153
      %v3155 = vpop.f32.mrb[0].mxu0
      %3156 = vdwg.mxu0
      %3157 = vmatprep.subr.bf16.mxu0 0
      %3158 = vmatpush1.bf16.msra.mxu0 %v3070
      %3159 = vmatprep.subr.bf16.mxu0 0
      %3160 = vmatpush1.bf16.msra.mxu0 %v3071
      %3161 = vmatprep.subr.bf16.mxu0 0
      %3162 = vmatpush1.bf16.msra.mxu0 0
      %3163 = vmatprep.subr.bf16.mxu0 0
      %3164 = vmatpush1.bf16.msra.mxu0 0
      %3165 = vmatprep.subr.bf16.mxu0 0
      %3166 = vmatpush1.bf16.msra.mxu0 0
      %3167 = vmatprep.subr.bf16.mxu0 0
      %3168 = vmatpush1.bf16.msra.mxu0 0
      %3169 = vmatprep.subr.bf16.mxu0 0
      %3170 = vmatpush1.bf16.msra.mxu0 0
      %3171 = vmatprep.subr.bf16.mxu0 0
      %3172 = vmatpush1.bf16.msra.mxu0 0
      %3173 = vmatprep.subr.bf16.mxu0 0
      %3174 = vmatpush1.bf16.msra.mxu0 0
      %3175 = vmatprep.subr.bf16.mxu0 0
      %3176 = vmatpush1.bf16.msra.mxu0 0
      %3177 = vmatprep.subr.bf16.mxu0 0
      %3178 = vmatpush1.bf16.msra.mxu0 0
      %3179 = vmatprep.subr.bf16.mxu0 0
      %3180 = vmatpush1.bf16.msra.mxu0 0
      %3181 = vmatprep.subr.bf16.mxu0 0
      %3182 = vmatpush1.bf16.msra.mxu0 0
      %3183 = vmatprep.subr.bf16.mxu0 0
      %3184 = vmatpush1.bf16.msra.mxu0 0
      %3185 = vmatprep.subr.bf16.mxu0 0
      %3186 = vmatpush1.bf16.msra.mxu0 0
      %3187 = vmatprep.subr.bf16.mxu0 0
      %3188 = vmatpush1.bf16.msra.mxu0 0
      %3189 = vmatprep.mubr.bf16.mxu0 0
      %3190 = vmatmul.mubr.bf16.gmra.mrb[0].mxu0 %v3103
      %v3191 = vpop.f32.mrb[0].mxu0
      %v3192 = vadd.f32 %v3143, %v3191
      %v3193 = vpop.f32.mrb[0].mxu0
      %v3194 = vpop.f32.mrb[0].mxu0
      %v3195 = vadd.f32 %v3146, %v3194
      %v3196 = vpop.f32.mrb[0].mxu0
      %3197 = vmatprep.mubr.bf16.mxu0 0
      %3198 = vmatmul.mubr.bf16.gmra.mrb[0].mxu0 %v3106
      %v3199 = vpop.f32.mrb[0].mxu0
      %v3200 = vadd.f32 %v3151, %v3199
      %v3201 = vpop.f32.mrb[0].mxu0
      %v3202 = vpop.f32.mrb[0].mxu0
      %v3203 = vadd.f32 %v3154, %v3202
      %v3204 = vpop.f32.mrb[0].mxu0
      %3205 = vdwg.mxu0
      %v3206 = vsel %vm595, %v3192, 0.0
      %v3207 = vsel %vm595, %v3195, 0.0
      %v3208 = vsel %vm595, %v3200, 0.0
      %v3209 = vsel %vm595, %v3203, 0.0
      %3210 = vadd.xlane.f32.xlu0 %v3206
      %v3211 = vpop.xlane.xlu0 %3210
      %3212 = vadd.xlane.f32.xlu0 %v3207
      %v3213 = vpop.xlane.xlu0 %3212
      %3214 = vadd.xlane.f32.xlu0 %v3208
      %v3215 = vpop.xlane.xlu0 %3214
      %3216 = vadd.xlane.f32.xlu0 %v3209
      %v3217 = vpop.xlane.xlu0 %3216
      %v3218 = vmul.f32 %v3211, 0.0625
      %v3219 = vmul.f32 %v3213, 0.0625
      %v3220 = vmul.f32 %v3215, 0.0625
      %v3221 = vmul.f32 %v3217, 0.0625
      %v3222 = vmul.f32 %v3206, %v3206
      %v3223 = vmul.f32 %v3207, %v3207
      %v3224 = vmul.f32 %v3208, %v3208
      %v3225 = vmul.f32 %v3209, %v3209
      %3226 = vadd.xlane.f32.xlu0 %v3222
      %v3227 = vpop.xlane.xlu0 %3226
      %3228 = vadd.xlane.f32.xlu0 %v3223
      %v3229 = vpop.xlane.xlu0 %3228
      %3230 = vadd.xlane.f32.xlu0 %v3224
      %v3231 = vpop.xlane.xlu0 %3230
      %3232 = vadd.xlane.f32.xlu0 %v3225
      %v3233 = vpop.xlane.xlu0 %3232
      %v3234 = vmul.f32 %v3227, 0.0625
      %v3235 = vmul.f32 %v3229, 0.0625
      %v3236 = vmul.f32 %v3231, 0.0625
      %v3237 = vmul.f32 %v3233, 0.0625
      %v3238 = vmul.f32 %v3218, %v3218
      %v3239 = vmul.f32 %v3219, %v3219
      %v3240 = vmul.f32 %v3220, %v3220
      %v3241 = vmul.f32 %v3221, %v3221
      %v3242 = vsub.f32 %v3234, %v3238
      %v3243 = vsub.f32 %v3235, %v3239
      %v3244 = vsub.f32 %v3236, %v3240
      %v3245 = vsub.f32 %v3237, %v3241
      %v3246 = vmax.f32 %v3242, 0.0
      %v3247 = vmax.f32 %v3243, 0.0
      %v3248 = vmax.f32 %v3244, 0.0
      %v3249 = vmax.f32 %v3245, 0.0
      %v3250 = vsub.f32 %v3206, %v3218
      %v3251 = vsub.f32 %v3207, %v3219
      %v3252 = vsub.f32 %v3208, %v3220
      %v3253 = vsub.f32 %v3209, %v3221
      %v3254 = vadd.f32 %v3246, 1e-05
      %v3255 = vadd.f32 %v3247, 1e-05
      %v3256 = vadd.f32 %v3248, 1e-05
      %v3257 = vadd.f32 %v3249, 1e-05
      %v3258 = vrsqrt.pop %v3254
      %v3259 = vrsqrt.pop %v3255
      %v3260 = vrsqrt.pop %v3256
      %v3261 = vrsqrt.pop %v3257
      %v3262 = vmul.f32 %v3250, %v3258
      %v3263 = vmul.f32 %v3251, %v3259
      %v3264 = vmul.f32 %v3252, %v3260
      %v3265 = vmul.f32 %v3253, %v3261
      %3267 = vset.pattern.permute.xlu0 0
      %3268 = vperm.xlu0 %3267, %v2850
      %v3269 = vpop.permute.xlu0 %3268
      %3272 = vset.pattern.permute.xlu0 0
      %3273 = vperm.xlu0 %3272, %v2851
      %v3274 = vpop.permute.xlu0 %3273
      %3277 = vset.pattern.permute.xlu0 0
      %3278 = vperm.xlu0 %3277, %v2852
      %v3279 = vpop.permute.xlu0 %3278
      %3282 = vset.pattern.permute.xlu0 0
      %3283 = vperm.xlu0 %3282, %v2853
      %v3284 = vpop.permute.xlu0 %3283
      %v3286 = vmul.f32 %v3262, %v3269
      %v3287 = vmul.f32 %v3263, %v3274
      %v3288 = vmul.f32 %v3264, %v3279
      %v3289 = vmul.f32 %v3265, %v3284
      %3290 = vset.pattern.permute.xlu0 1
      %3291 = vperm.xlu0 %3290, %v2850
      %v3292 = vpop.permute.xlu0 %3291
      %3294 = vset.pattern.permute.xlu0 1
      %3295 = vperm.xlu0 %3294, %v2851
      %v3296 = vpop.permute.xlu0 %3295
      %3298 = vset.pattern.permute.xlu0 1
      %3299 = vperm.xlu0 %3298, %v2852
      %v3300 = vpop.permute.xlu0 %3299
      %3302 = vset.pattern.permute.xlu0 1
      %3303 = vperm.xlu0 %3302, %v2853
      %v3304 = vpop.permute.xlu0 %3303
      %v3306 = vadd.f32 %v3286, %v3292
      %v3307 = vadd.f32 %v3287, %v3296
      %v3308 = vadd.f32 %v3288, %v3300
      %v3309 = vadd.f32 %v3289, %v3304
      %v3310 = vpack.c.bf16 %v3307, %v3306
      %v3311 = vpack.c.bf16 %v3309, %v3308
      %v3314 = vunpack.c.l.b16 %v3310
      %v3315 = vunpack.c.h.b16 %v3310
      %v3316 = vunpack.c.l.b16 %v3311
      %v3317 = vunpack.c.h.b16 %v3311
      %v3318 = vpack.c.b16 %v3314, %v3314
      %v3319 = vpack.c.b16 %v3315, %v3315
      %v3320 = vpack.c.b16 %v3316, %v3316
      %v3321 = vpack.c.b16 %v3317, %v3317
      %3326 = vst [vmem:[%s386] sm:$0xf] %v3318
      %3327 = vst [vmem:[%s386 + $0x4] sm:$0xf] %v3319
      %3328 = vst [vmem:[%s386 + $0x8] sm:$0xf] %v3320
      %3329 = vst [vmem:[%s386 + $0xc] sm:$0xf] %v3321
      %p3330 = scmp.lt.s32.totalorder %s22, 1
      %s3331 = scalar_select %p3330, %s22, 1
      %s3332 = smul.addr %s3331, 4
      %s3333 = smul.addr %s3332, 4
      %s3334 = scalar_lea.vmem %s11, %s3333
      // Predicated region
      $region65: #{stylizing_network.7} parent=63 // pred_check
        %p3335 = pneg %p276
      $region66: #{stylizing_network.7} parent=63 // pred_check_branch
        %3337 = sbr.rel (%p3335) target = $region68
      $region67: #{stylizing_network.7} parent=63 // pred_region
        _
      $region68: #{stylizing_network.7} parent=63 // pred_fallthru
        _
    $region64: #{stylizing_network.7} parent=5 // pred_fallthru
      _
    %p3338 = scmp.le.s32.totalorder 2, %s17
    // Predicated region
    $region69: #{stylizing_network.7} parent=5 // pred_check
      %p3339 = pneg %p3338
    $region70: #{stylizing_network.7} parent=5 // pred_check_branch
      %3341 = sbr.rel (%p3339) target = $region72
    $region71: #{stylizing_network.7} parent=5 // pred_region
      %s3342 = ssub.s32 %s17, 2
      // Predicated region
      $region73: #{stylizing_network.7} parent=71 // pred_check
        %p3343 = pneg %p282
      $region74: #{stylizing_network.7} parent=71 // pred_check_branch
        %3345 = sbr.rel (%p3343) target = $region76
      $region75: #{stylizing_network.7} parent=71 // pred_region
        %p3346 = scmp.lt.s32.totalorder %s23, 1
        %s3347 = scalar_select %p3346, %s23, 1
        %s3348 = smul.addr %s3347, 4
        %s3349 = smul.addr %s3348, 4
        %s3350 = scalar_lea.vmem %s11, %s3349
      $region76: #{stylizing_network.7} parent=71 // pred_fallthru
        _
    $region72: #{stylizing_network.7} parent=5 // pred_fallthru
      _
  $region6: #{stylizing_network.7} parent=0 // loop_footer
    %s21 = sadd.s32 1, %s17
  $region7: #{stylizing_network.7} parent=0 // loop_footer_branch
    %16 = sbr.rel target = $region3
  $region8: #{stylizing_network.7} parent=0 // loop_exit
    _

// kernel: stylizing_network.9
$region0: #{stylizing_network.9}
  #allocation0 [shape = 'u32[]', space=smem, size = 0x4, offset = 0x4, fixed_abs, tag = 'smem constant byte address 0x4 - core index']
  #allocation1 [shape = 'u32[144,128]{1,0:T(1,128)}', space=vmem, size = 0x12000, scoped, tag = 'internal scratch']
  #allocation2 [shape = 'f32[16,512]{1,0:T(8,128)}', space=vmem, size = 0x8000, scoped, tag = 'scratch operand']
  %s0 = inlined_call_operand.vmem [shape: bf16[2,16,384], index: 0, kind: input, shape index: {}]
  %s1 = inlined_call_operand.vmem [shape: bf16[8,144], index: 1, kind: input, shape index: {}]
  %s2 = inlined_call_operand.vmem [shape: f32[8,2], index: 2, kind: input, shape index: {}]
  %s3 = inlined_call_operand.vmem [shape: bf16[3,72], index: 3, kind: input, shape index: {}]
  %s4 = inlined_call_operand.vmem [shape: f32[3,2], index: 4, kind: input, shape index: {}]
  %s5 = inlined_call_operand.vmem [shape: f32[2,8,384], index: 5, kind: output, shape index: {}]
  %s6 = sld [smem:[#allocation0]]
  $region53: #{stylizing_network.9} parent=0
    _
  %s8 = ssub.s32 1, %s6
  %s9 = scalar_select 0, %s8, %s6
  loop: start=0, step=1, limit=4
  $region2: #{stylizing_network.9} parent=0 // loop_pre_header
    _
  $region3: #{stylizing_network.9} parent=0 // loop_header
    %s11 = sphi 0, %s15
    %p12 = scmp.ge.s32.totalorder %s11, 4
    %s21 = sphi 0, %s23
    %s24 = sphi 0, %s21
    %s25 = sphi 0, %s24
    %s41 = sphi 0, %s25
    %s45 = sphi 0, %s45
    %s47 = sphi 0, %s45
    %s48 = sphi 0, %s47
    %s62 = sphi 0, %s48
    %s66 = sphi 0, %s66
    %s68 = sphi 0, %s66
    %s69 = sphi 0, %s68
    %s83 = sphi 0, %s69
    %s87 = sphi 0, %s87
    %s89 = sphi 0, %s87
    %s90 = sphi 0, %s89
    %s104 = sphi 0, %s90
    %s108 = sphi 0, %s108
    %s110 = sphi 0, %s108
    %s111 = sphi 0, %s110
    %s125 = sphi 0, %s111
    %s131 = sphi 0, %s133
    %s134 = sphi 0, %s131
    %s135 = sphi 0, %s134
    %s151 = sphi 0, %s135
  $region4: #{stylizing_network.9} parent=0 // loop_header_branch
    %14 = sbr.rel (%p12) target = $region8
  $region5: #{stylizing_network.9} parent=0 // loop_body
    %s16 = ssub.s32 %s11, 1
    %s17 = ssub.s32 %s11, 2
    %s18 = sadd.s32 %s11, 1
    %s19 = ssub.s32 %s11, %s18
    %p20 = scmp.eq.s32.totalorder %s19, 0
    %s22 = sadd.s32 %s21, 1
    %s23 = scalar_select %p20, %s21, %s22
    %p26 = pneg %p20
    %p27 = scmp.eq.s32.totalorder %s11, 1
    %p28 = por %p26, %p27
    %p29 = scmp.ne.s32.totalorder %s21, %s24
    %p30 = scmp.eq.s32.totalorder %s11, 0
    %p31 = por %p29, %p30
    %p32 = scmp.ne.s32.totalorder %s21, %s24
    %p33 = scmp.eq.s32.totalorder %s16, 1
    %p34 = por %p32, %p33
    %p35 = scmp.ne.s32.totalorder %s24, %s25
    %p36 = scmp.eq.s32.totalorder %s16, 0
    %p37 = por %p35, %p36
    %p38 = scmp.ne.s32.totalorder %s24, %s25
    %p39 = scmp.eq.s32.totalorder %s17, 1
    %p40 = por %p38, %p39
    %p42 = scmp.ne.s32.totalorder %s25, %s41
    %p43 = scmp.eq.s32.totalorder %s17, 0
    %p44 = por %p42, %p43
    %s46 = sadd.s32 %s45, 1
    %p49 = scmp.eq.s32.totalorder %s11, 1
    %p50 = scmp.ne.s32.totalorder %s45, %s47
    %p51 = scmp.eq.s32.totalorder %s11, 0
    %p52 = por %p50, %p51
    %p53 = scmp.ne.s32.totalorder %s45, %s47
    %p54 = scmp.eq.s32.totalorder %s16, 1
    %p55 = por %p53, %p54
    %p56 = scmp.ne.s32.totalorder %s47, %s48
    %p57 = scmp.eq.s32.totalorder %s16, 0
    %p58 = por %p56, %p57
    %p59 = scmp.ne.s32.totalorder %s47, %s48
    %p60 = scmp.eq.s32.totalorder %s17, 1
    %p61 = por %p59, %p60
    %p63 = scmp.ne.s32.totalorder %s48, %s62
    %p64 = scmp.eq.s32.totalorder %s17, 0
    %p65 = por %p63, %p64
    %s67 = sadd.s32 %s66, 1
    %p70 = scmp.eq.s32.totalorder %s11, 1
    %p71 = scmp.ne.s32.totalorder %s66, %s68
    %p72 = scmp.eq.s32.totalorder %s11, 0
    %p73 = por %p71, %p72
    %p74 = scmp.ne.s32.totalorder %s66, %s68
    %p75 = scmp.eq.s32.totalorder %s16, 1
    %p76 = por %p74, %p75
    %p77 = scmp.ne.s32.totalorder %s68, %s69
    %p78 = scmp.eq.s32.totalorder %s16, 0
    %p79 = por %p77, %p78
    %p80 = scmp.ne.s32.totalorder %s68, %s69
    %p81 = scmp.eq.s32.totalorder %s17, 1
    %p82 = por %p80, %p81
    %p84 = scmp.ne.s32.totalorder %s69, %s83
    %p85 = scmp.eq.s32.totalorder %s17, 0
    %p86 = por %p84, %p85
    %s88 = sadd.s32 %s87, 1
    %p91 = scmp.eq.s32.totalorder %s11, 1
    %p92 = scmp.ne.s32.totalorder %s87, %s89
    %p93 = scmp.eq.s32.totalorder %s11, 0
    %p94 = por %p92, %p93
    %p95 = scmp.ne.s32.totalorder %s87, %s89
    %p96 = scmp.eq.s32.totalorder %s16, 1
    %p97 = por %p95, %p96
    %p98 = scmp.ne.s32.totalorder %s89, %s90
    %p99 = scmp.eq.s32.totalorder %s16, 0
    %p100 = por %p98, %p99
    %p101 = scmp.ne.s32.totalorder %s89, %s90
    %p102 = scmp.eq.s32.totalorder %s17, 1
    %p103 = por %p101, %p102
    %p105 = scmp.ne.s32.totalorder %s90, %s104
    %p106 = scmp.eq.s32.totalorder %s17, 0
    %p107 = por %p105, %p106
    %s109 = sadd.s32 %s108, 1
    %p112 = scmp.eq.s32.totalorder %s11, 1
    %p113 = scmp.ne.s32.totalorder %s108, %s110
    %p114 = scmp.eq.s32.totalorder %s11, 0
    %p115 = por %p113, %p114
    %p116 = scmp.ne.s32.totalorder %s108, %s110
    %p117 = scmp.eq.s32.totalorder %s16, 1
    %p118 = por %p116, %p117
    %p119 = scmp.ne.s32.totalorder %s110, %s111
    %p120 = scmp.eq.s32.totalorder %s16, 0
    %p121 = por %p119, %p120
    %p122 = scmp.ne.s32.totalorder %s110, %s111
    %p123 = scmp.eq.s32.totalorder %s17, 1
    %p124 = por %p122, %p123
    %p126 = scmp.ne.s32.totalorder %s111, %s125
    %p127 = scmp.eq.s32.totalorder %s17, 0
    %p128 = por %p126, %p127
    %s129 = ssub.s32 %s11, %s18
    %p130 = scmp.eq.s32.totalorder %s129, 0
    %s132 = sadd.s32 %s131, 1
    %s133 = scalar_select %p130, %s131, %s132
    %p136 = pneg %p130
    %p137 = scmp.eq.s32.totalorder %s11, 1
    %p138 = por %p136, %p137
    %p139 = scmp.ne.s32.totalorder %s131, %s134
    %p140 = scmp.eq.s32.totalorder %s11, 0
    %p141 = por %p139, %p140
    %p142 = scmp.ne.s32.totalorder %s131, %s134
    %p143 = scmp.eq.s32.totalorder %s16, 1
    %p144 = por %p142, %p143
    %p145 = scmp.ne.s32.totalorder %s134, %s135
    %p146 = scmp.eq.s32.totalorder %s16, 0
    %p147 = por %p145, %p146
    %p148 = scmp.ne.s32.totalorder %s134, %s135
    %p149 = scmp.eq.s32.totalorder %s17, 1
    %p150 = por %p148, %p149
    %p152 = scmp.ne.s32.totalorder %s135, %s151
    %p153 = scmp.eq.s32.totalorder %s17, 0
    %p154 = por %p152, %p153
    %p155 = scmp.le.s32.totalorder 1, %s11
    %p156 = scmp.lt.s32.totalorder %s11, 3
    %p157 = pnand %p155, %p156
    %p158 = pneg %p157
    // Predicated region
    $region9: #{stylizing_network.9} parent=5 // pred_check
      _
    $region10: #{stylizing_network.9} parent=5 // pred_check_branch
      %160 = sbr.rel (%p157) target = $region12
    $region11: #{stylizing_network.9} parent=5 // pred_region
      %s161 = ssub.s32 %s11, 1
      // Predicated region
      $region13: #{stylizing_network.9} parent=11 // pred_check
        %p162 = pneg %p58
      $region14: #{stylizing_network.9} parent=11 // pred_check_branch
        %164 = sbr.rel (%p162) target = $region16
      $region15: #{stylizing_network.9} parent=11 // pred_region
        _
      $region16: #{stylizing_network.9} parent=11 // pred_fallthru
        _
      // Predicated region
      $region17: #{stylizing_network.9} parent=11 // pred_check
        %p165 = pneg %p79
      $region18: #{stylizing_network.9} parent=11 // pred_check_branch
        %167 = sbr.rel (%p165) target = $region20
      $region19: #{stylizing_network.9} parent=11 // pred_region
        _
      $region20: #{stylizing_network.9} parent=11 // pred_fallthru
        _
      // Predicated region
      $region21: #{stylizing_network.9} parent=11 // pred_check
        %p168 = pneg %p100
      $region22: #{stylizing_network.9} parent=11 // pred_check_branch
        %170 = sbr.rel (%p168) target = $region24
      $region23: #{stylizing_network.9} parent=11 // pred_region
        _
      $region24: #{stylizing_network.9} parent=11 // pred_fallthru
        _
      // Predicated region
      $region25: #{stylizing_network.9} parent=11 // pred_check
        %p171 = pneg %p121
      $region26: #{stylizing_network.9} parent=11 // pred_check_branch
        %173 = sbr.rel (%p171) target = $region28
      $region27: #{stylizing_network.9} parent=11 // pred_region
        _
      $region28: #{stylizing_network.9} parent=11 // pred_fallthru
        _
    $region12: #{stylizing_network.9} parent=5 // pred_fallthru
      _
    %p174 = scmp.lt.s32.totalorder %s11, 2
    // Predicated region
    $region29: #{stylizing_network.9} parent=5 // pred_check
      %p175 = pneg %p174
    $region30: #{stylizing_network.9} parent=5 // pred_check_branch
      %177 = sbr.rel (%p175) target = $region32
    $region31: #{stylizing_network.9} parent=5 // pred_region
      // Predicated region
      $region33: #{stylizing_network.9} parent=31 // pred_check
        %p178 = pneg %p31
      $region34: #{stylizing_network.9} parent=31 // pred_check_branch
        %180 = sbr.rel (%p178) target = $region36
      $region35: #{stylizing_network.9} parent=31 // pred_region
        %p181 = scmp.lt.s32.totalorder %s11, 1
        %s182 = scalar_select %p181, %s11, 1
        %s183 = smul.addr %s182, 6
        %s184 = smul.addr %s183, 4
        %s185 = scalar_lea.vmem %s0, %s184
      $region36: #{stylizing_network.9} parent=31 // pred_fallthru
        _
    $region32: #{stylizing_network.9} parent=5 // pred_fallthru
      _
    %p186 = scmp.le.s32.totalorder 1, %s11
    %p187 = scmp.lt.s32.totalorder %s11, 3
    %p188 = pnand %p186, %p187
    %p189 = pneg %p188
    // Predicated region
    $region37: #{stylizing_network.9} parent=5 // pred_check
      _
    $region38: #{stylizing_network.9} parent=5 // pred_check_branch
      %191 = sbr.rel (%p188) target = $region40
    $region39: #{stylizing_network.9} parent=5 // pred_region
      %s192 = ssub.s32 %s11, 1
      %p193 = scmp.lt.s32.totalorder %s16, 1
      %s194 = scalar_select %p193, %s16, 1
      %s195 = smul.addr %s194, 6
      %s196 = smul.addr %s195, 4
      %s197 = scalar_lea.vmem %s0, %s196
      %p198 = pneg %p37
      %p199 = pneg %p34
      %p200 = pneg %p58
      %p201 = pneg %p55
      %p202 = pneg %p79
      %p203 = pneg %p76
      %p204 = pneg %p100
      %p205 = pneg %p97
      %p206 = pneg %p121
      %p207 = pneg %p118
      %p208 = pneg %p147
      %p209 = pneg %p144
      %p210 = scmp.lt.s32.totalorder %s16, 1
      %s211 = scalar_select %p210, %s16, 1
      %s212 = smul.addr %s211, 3
      %s213 = smul.addr %s212, 8
      %s214 = scalar_lea.vmem %s5, %s213
      %p215 = scmp.lt.s32.totalorder %s16, 1
      %s216 = scalar_select %p215, %s16, 1
      %s217 = smul.addr %s216, 6
      %s218 = smul.addr %s217, 4
      %s219 = scalar_lea.vmem %s0, %s218
      %p220 = scmp.lt.s32.totalorder %s16, 1
      %s221 = scalar_select %p220, %s16, 1
      %s222 = smul.addr %s221, 3
      %s223 = smul.addr %s222, 8
      %s224 = scalar_lea.vmem %s5, %s223
      %v226 = vlaneseq
      %v227 = vand.u32 %v226, 127
      %v228 = vadd.s32 %v227, 128
      %v229 = vadd.s32 %v227, 256
      %vm230 = vcmp.lt.s32.totalorder %v227, 0
      %v231 = vsub.s32 0, %v227
      %v232 = vsel %vm230, %v231, %v227
      %v233 = vmul.u32.u64.compose %v232, 3817748708
      %v234 = vextract.low.u32 %v233
      %v235 = vextract.high.u32 %v233
      %v236 = vshrl.u32 %v235, 4
      %v237 = vmul.u32 %v236, 18
      %v238 = vsub.s32 %v232, %v237
      %v239 = vsub.s32 0, %v238
      %v240 = vsel %vm230, %v239, %v238
      %vm241 = vcmp.lt.s32.totalorder %v228, 0
      %v242 = vsub.s32 0, %v228
      %v243 = vsel %vm241, %v242, %v228
      %v244 = vmul.u32.u64.compose %v243, 3817748708
      %v245 = vextract.low.u32 %v244
      %v246 = vextract.high.u32 %v244
      %v247 = vshrl.u32 %v246, 4
      %v248 = vmul.u32 %v247, 18
      %v249 = vsub.s32 %v243, %v248
      %v250 = vsub.s32 0, %v249
      %v251 = vsel %vm241, %v250, %v249
      %vm252 = vcmp.lt.s32.totalorder %v229, 0
      %v253 = vsub.s32 0, %v229
      %v254 = vsel %vm252, %v253, %v229
      %v255 = vmul.u32.u64.compose %v254, 3817748708
      %v256 = vextract.low.u32 %v255
      %v257 = vextract.high.u32 %v255
      %v258 = vshrl.u32 %v257, 4
      %v259 = vmul.u32 %v258, 18
      %v260 = vsub.s32 %v254, %v259
      %v261 = vsub.s32 0, %v260
      %v262 = vsel %vm252, %v261, %v260
      %vm263 = vcmp.ne.s32.totalorder %v240, 0
      %vm264 = vcmp.ne.s32.totalorder %v251, 0
      %vm265 = vcmp.ne.s32.totalorder %v262, 0
      %vm266 = vcmp.lt.s32.totalorder %v240, 0
      %vm267 = vcmp.lt.s32.totalorder %v251, 0
      %vm268 = vcmp.lt.s32.totalorder %v262, 0
      %vm269 = vmand %vm266, %vm263
      %vm270 = vmand %vm267, %vm264
      %vm271 = vmand %vm268, %vm265
      %v272 = vadd.s32 %v240, 18
      %v273 = vadd.s32 %v251, 18
      %v274 = vadd.s32 %v262, 18
      %v275 = vsel %vm269, %v272, %v240
      %v276 = vsel %vm270, %v273, %v251
      %v277 = vsel %vm271, %v274, %v262
      %vm278 = vcmp.lt.s32.totalorder %v275, 16
      %vm279 = vcmp.lt.s32.totalorder %v276, 16
      %vm280 = vcmp.lt.s32.totalorder %v277, 16
      %vm281 = vcmp.lt.s32.totalorder %v227, 288
      %vm282 = vcmp.lt.s32.totalorder %v228, 288
      %vm283 = vcmp.lt.s32.totalorder %v229, 288
      %vm284 = vmand %vm278, %vm281
      %vm285 = vmand %vm279, %vm282
      %vm286 = vmand %vm280, %vm283
      %287 = vst [vmem:[#allocation2] sm:$0xff] 0.0
      %288 = vst [vmem:[#allocation2 + $0x8] sm:$0xff] 0.0
      %289 = vst [vmem:[#allocation2 + $0x10] sm:$0xff] 0.0
      %290 = vst [vmem:[#allocation2 + $0x18] sm:$0xff] 0.0
      %291 = vst [vmem:[#allocation2 + $0x20] sm:$0xff] 0.0
      %292 = vst [vmem:[#allocation2 + $0x28] sm:$0xff] 0.0
      %293 = vst [vmem:[#allocation2 + $0x30] sm:$0xff] 0.0
      %294 = vst [vmem:[#allocation2 + $0x38] sm:$0xff] 0.0
      %v295 = vadd.s32 %v227, 384
      %vm296 = vcmp.lt.s32.totalorder %v295, 0
      %v297 = vsub.s32 0, %v295
      %v298 = vsel %vm296, %v297, %v295
      %v299 = vmul.u32.u64.compose %v298, 3817748708
      %v300 = vextract.low.u32 %v299
      %v301 = vextract.high.u32 %v299
      %v302 = vshrl.u32 %v301, 4
      %v303 = vmul.u32 %v302, 18
      %v304 = vsub.s32 %v298, %v303
      %v305 = vsub.s32 0, %v304
      %v306 = vsel %vm296, %v305, %v304
      %vm307 = vcmp.ne.s32.totalorder %v306, 0
      %vm308 = vcmp.lt.s32.totalorder %v306, 0
      %vm309 = vmand %vm308, %vm307
      %v310 = vadd.s32 %v306, 18
      %v311 = vsel %vm309, %v310, %v306
      %vm312 = vcmp.eq.s32.totalorder %v275, 0
      %vm313 = vcmp.eq.s32.totalorder %v276, 0
      %vm314 = vcmp.eq.s32.totalorder %v277, 0
      %vm315 = vcmp.eq.s32.totalorder %v311, 0
      %vm316 = vcmp.eq.s32.totalorder %v275, 17
      %vm317 = vcmp.eq.s32.totalorder %v276, 17
      %vm318 = vcmp.eq.s32.totalorder %v277, 17
      %vm319 = vcmp.eq.s32.totalorder %v311, 17
      %v320 = vld [vmem:[%s219] sm:$0xff]
      %v321 = vld [vmem:[%s219 + $0x8] sm:$0xf]
      %v322 = vld [vmem:[%s219 + $0xc] sm:$0xff]
      %v323 = vld [vmem:[%s219 + $0x14] sm:$0xf]
      %v324 = vunpack.c.l.bf16 %v320
      %v325 = vunpack.c.h.bf16 %v320
      %v326 = vunpack.c.l.bf16 %v321
      %v327 = vunpack.c.l.bf16 %v322
      %v328 = vunpack.c.h.bf16 %v322
      %v329 = vunpack.c.l.bf16 %v323
      %336 = vrot.lane.b32.xlu0 %v324, 19
      %v337 = vpop.permute.xlu0 %336
      %338 = vrot.lane.b32.xlu0 %v325, 19
      %v339 = vpop.permute.xlu0 %338
      %340 = vrot.lane.b32.xlu0 %v326, 19
      %v341 = vpop.permute.xlu0 %340
      %342 = vrot.lane.b32.xlu0 %v327, 19
      %v343 = vpop.permute.xlu0 %342
      %344 = vrot.lane.b32.xlu0 %v328, 19
      %v345 = vpop.permute.xlu0 %344
      %346 = vrot.lane.b32.xlu0 %v329, 19
      %v347 = vpop.permute.xlu0 %346
      %vm348 = vcmask 154624
      %v349 = vsel %vm348, %v337, %v339
      %v350 = vsel %vm348, %v339, %v341
      %v351 = vsel %vm348, %v343, %v345
      %v352 = vsel %vm348, %v345, %v347
      %vm361 = vcmask 1047704
      %362 = vst.msk [vmem:[#allocation2] sm:$0xff] %vm361, %v337
      %363 = vst [vmem:[#allocation2 + $0x8] sm:$0xff] %v349
      %364 = vst [vmem:[#allocation2 + $0x10] sm:$0xff] %v350
      %365 = vst.msk [vmem:[#allocation2 + $0x18] sm:$0xff] %vm348, %v341
      %366 = vst.msk [vmem:[#allocation2 + $0x20] sm:$0xff] %vm361, %v343
      %367 = vst [vmem:[#allocation2 + $0x28] sm:$0xff] %v351
      %368 = vst [vmem:[#allocation2 + $0x30] sm:$0xff] %v352
      %369 = vst.msk [vmem:[#allocation2 + $0x38] sm:$0xff] %vm348, %v347
      %v370 = vld [vmem:[#allocation2] sm:$0xff]
      %v371 = vld [vmem:[#allocation2 + $0x8] sm:$0xff]
      %v372 = vld [vmem:[#allocation2 + $0x10] sm:$0xff]
      %v373 = vld [vmem:[#allocation2 + $0x18] sm:$0xff]
      %v374 = vld [vmem:[#allocation2 + $0x20] sm:$0xff]
      %v375 = vld [vmem:[#allocation2 + $0x28] sm:$0xff]
      %v376 = vld [vmem:[#allocation2 + $0x30] sm:$0xff]
      %v377 = vld [vmem:[#allocation2 + $0x38] sm:$0xff]
      %386 = vrot.lane.b32.xlu0 %v370, 126
      %v387 = vpop.permute.xlu0 %386
      %388 = vrot.lane.b32.xlu0 %v371, 126
      %v389 = vpop.permute.xlu0 %388
      %390 = vrot.lane.b32.xlu0 %v372, 126
      %v391 = vpop.permute.xlu0 %390
      %392 = vrot.lane.b32.xlu0 %v373, 126
      %v393 = vpop.permute.xlu0 %392
      %394 = vrot.lane.b32.xlu0 %v374, 126
      %v395 = vpop.permute.xlu0 %394
      %396 = vrot.lane.b32.xlu0 %v375, 126
      %v397 = vpop.permute.xlu0 %396
      %398 = vrot.lane.b32.xlu0 %v376, 126
      %v399 = vpop.permute.xlu0 %398
      %400 = vrot.lane.b32.xlu0 %v377, 126
      %v401 = vpop.permute.xlu0 %400
      %vm402 = vcmask 1031168
      %v403 = vsel %vm402, %v387, %v389
      %v404 = vsel %vm402, %v389, %v391
      %v405 = vsel %vm402, %v391, %v393
      %v406 = vsel %vm402, %v395, %v397
      %v407 = vsel %vm402, %v397, %v399
      %v408 = vsel %vm402, %v399, %v401
      %v417 = vsel %vm402, %v393, 0.0
      %v418 = vsel %vm402, %v401, 0.0
      %v419 = vsel %vm312, 1, 0
      %v420 = vsel %vm313, 1, 0
      %v421 = vsel %vm314, 1, 0
      %v422 = vsel %vm315, 1, 0
      %vm423 = vcmp.eq.s32.totalorder %v419, 1
      %vm424 = vcmp.eq.s32.totalorder %v420, 1
      %vm425 = vcmp.eq.s32.totalorder %v421, 1
      %vm426 = vcmp.eq.s32.totalorder %v422, 1
      %427 = vst.msk [vmem:[#allocation2] sm:$0xff] %vm423, %v403
      %428 = vst.msk [vmem:[#allocation2 + $0x8] sm:$0xff] %vm424, %v404
      %429 = vst.msk [vmem:[#allocation2 + $0x10] sm:$0xff] %vm425, %v405
      %430 = vst.msk [vmem:[#allocation2 + $0x18] sm:$0xff] %vm426, %v417
      %431 = vst.msk [vmem:[#allocation2 + $0x20] sm:$0xff] %vm423, %v406
      %432 = vst.msk [vmem:[#allocation2 + $0x28] sm:$0xff] %vm424, %v407
      %433 = vst.msk [vmem:[#allocation2 + $0x30] sm:$0xff] %vm425, %v408
      %434 = vst.msk [vmem:[#allocation2 + $0x38] sm:$0xff] %vm426, %v418
      %435 = vrot.lane.b32.xlu0 %v370, 2
      %v436 = vpop.permute.xlu0 %435
      %437 = vrot.lane.b32.xlu0 %v371, 2
      %v438 = vpop.permute.xlu0 %437
      %439 = vrot.lane.b32.xlu0 %v372, 2
      %v440 = vpop.permute.xlu0 %439
      %441 = vrot.lane.b32.xlu0 %v373, 2
      %v442 = vpop.permute.xlu0 %441
      %443 = vrot.lane.b32.xlu0 %v374, 2
      %v444 = vpop.permute.xlu0 %443
      %445 = vrot.lane.b32.xlu0 %v375, 2
      %v446 = vpop.permute.xlu0 %445
      %447 = vrot.lane.b32.xlu0 %v376, 2
      %v448 = vpop.permute.xlu0 %447
      %449 = vrot.lane.b32.xlu0 %v377, 2
      %v450 = vpop.permute.xlu0 %449
      %vm451 = vcmask 15360
      %v452 = vsel %vm451, %v436, %v438
      %v453 = vsel %vm451, %v438, %v440
      %v454 = vsel %vm451, %v440, %v442
      %v455 = vsel %vm451, %v444, %v446
      %v456 = vsel %vm451, %v446, %v448
      %v457 = vsel %vm451, %v448, %v450
      %v466 = vsel %vm451, 0.0, %v436
      %v467 = vsel %vm451, 0.0, %v444
      %v468 = vsel %vm316, 1, 0
      %v469 = vsel %vm317, 1, 0
      %v470 = vsel %vm318, 1, 0
      %v471 = vsel %vm319, 1, 0
      %vm472 = vcmp.eq.s32.totalorder %v468, 1
      %vm473 = vcmp.eq.s32.totalorder %v469, 1
      %vm474 = vcmp.eq.s32.totalorder %v470, 1
      %vm475 = vcmp.eq.s32.totalorder %v471, 1
      %476 = vst.msk [vmem:[#allocation2] sm:$0xff] %vm472, %v466
      %477 = vst.msk [vmem:[#allocation2 + $0x8] sm:$0xff] %vm473, %v452
      %478 = vst.msk [vmem:[#allocation2 + $0x10] sm:$0xff] %vm474, %v453
      %479 = vst.msk [vmem:[#allocation2 + $0x18] sm:$0xff] %vm475, %v454
      %480 = vst.msk [vmem:[#allocation2 + $0x20] sm:$0xff] %vm472, %v467
      %481 = vst.msk [vmem:[#allocation2 + $0x28] sm:$0xff] %vm473, %v455
      %482 = vst.msk [vmem:[#allocation2 + $0x30] sm:$0xff] %vm474, %v456
      %483 = vst.msk [vmem:[#allocation2 + $0x38] sm:$0xff] %vm475, %v457
      %v484 = vld [vmem:[#allocation2] sm:$0xff]
      %v485 = vld [vmem:[#allocation2 + $0x20] sm:$0xff]
      %488 = vrot.lane.b32.xlu0 %v484, 92
      %v489 = vpop.permute.xlu0 %488
      %490 = vrot.lane.b32.xlu0 %v485, 92
      %v491 = vpop.permute.xlu0 %490
      %vm494 = vcmask 146432
      %495 = vst.msk [vmem:[#allocation2] sm:$0xff] %vm494, %v489
      %496 = vst.msk [vmem:[#allocation2 + $0x20] sm:$0xff] %vm494, %v491
      %v497 = vld [vmem:[#allocation2 + $0x10] sm:$0xff]
      %v498 = vld [vmem:[#allocation2 + $0x30] sm:$0xff]
      %501 = vrot.lane.b32.xlu0 %v497, 36
      %v502 = vpop.permute.xlu0 %501
      %503 = vrot.lane.b32.xlu0 %v498, 36
      %v504 = vpop.permute.xlu0 %503
      %vm507 = vcmask 556432
      %508 = vst.msk [vmem:[#allocation2 + $0x10] sm:$0xff] %vm507, %v502
      %509 = vst.msk [vmem:[#allocation2 + $0x30] sm:$0xff] %vm507, %v504
      %v510 = vld [vmem:[#allocation2] sm:$0xff]
      %v511 = vld [vmem:[#allocation2 + $0x8] sm:$0xff]
      %v512 = vld [vmem:[#allocation2 + $0x10] sm:$0xff]
      %v513 = vld [vmem:[#allocation2 + $0x18] sm:$0xff]
      %v514 = vld [vmem:[#allocation2 + $0x20] sm:$0xff]
      %v515 = vld [vmem:[#allocation2 + $0x28] sm:$0xff]
      %v516 = vld [vmem:[#allocation2 + $0x30] sm:$0xff]
      %v517 = vld [vmem:[#allocation2 + $0x38] sm:$0xff]
      %v518 = vld [vmem:[%s1] sm:$0xff]
      %v519 = vld [vmem:[%s2] sm:$0xff]
      %528 = vrot.lane.b32.xlu0 %v510, 127
      %v529 = vpop.permute.xlu0 %528
      %530 = vrot.lane.b32.xlu0 %v511, 127
      %v531 = vpop.permute.xlu0 %530
      %532 = vrot.lane.b32.xlu0 %v512, 127
      %v533 = vpop.permute.xlu0 %532
      %534 = vrot.lane.b32.xlu0 %v513, 127
      %v535 = vpop.permute.xlu0 %534
      %536 = vrot.lane.b32.xlu0 %v514, 127
      %v537 = vpop.permute.xlu0 %536
      %538 = vrot.lane.b32.xlu0 %v515, 127
      %v539 = vpop.permute.xlu0 %538
      %540 = vrot.lane.b32.xlu0 %v516, 127
      %v541 = vpop.permute.xlu0 %540
      %542 = vrot.lane.b32.xlu0 %v517, 127
      %v543 = vpop.permute.xlu0 %542
      %vm544 = vcmask 1039360
      %v545 = vsel %vm544, %v529, %v531
      %v546 = vsel %vm544, %v531, %v533
      %v547 = vsel %vm544, %v533, %v535
      %v548 = vsel %vm544, %v537, %v539
      %v549 = vsel %vm544, %v539, %v541
      %v550 = vsel %vm544, %v541, %v543
      %557 = vrot.lane.b32.xlu0 %v510, 126
      %v558 = vpop.permute.xlu0 %557
      %559 = vrot.lane.b32.xlu0 %v511, 126
      %v560 = vpop.permute.xlu0 %559
      %561 = vrot.lane.b32.xlu0 %v512, 126
      %v562 = vpop.permute.xlu0 %561
      %563 = vrot.lane.b32.xlu0 %v513, 126
      %v564 = vpop.permute.xlu0 %563
      %565 = vrot.lane.b32.xlu0 %v514, 126
      %v566 = vpop.permute.xlu0 %565
      %567 = vrot.lane.b32.xlu0 %v515, 126
      %v568 = vpop.permute.xlu0 %567
      %569 = vrot.lane.b32.xlu0 %v516, 126
      %v570 = vpop.permute.xlu0 %569
      %571 = vrot.lane.b32.xlu0 %v517, 126
      %v572 = vpop.permute.xlu0 %571
      %v573 = vsel %vm402, %v558, %v560
      %v574 = vsel %vm402, %v560, %v562
      %v575 = vsel %vm402, %v562, %v564
      %v576 = vsel %vm402, %v566, %v568
      %v577 = vsel %vm402, %v568, %v570
      %v578 = vsel %vm402, %v570, %v572
      %585 = vrot.lane.b32.xlu0 %v510, 110
      %v586 = vpop.permute.xlu0 %585
      %587 = vrot.lane.b32.xlu0 %v511, 110
      %v588 = vpop.permute.xlu0 %587
      %589 = vrot.lane.b32.xlu0 %v512, 110
      %v590 = vpop.permute.xlu0 %589
      %591 = vrot.lane.b32.xlu0 %v513, 110
      %v592 = vpop.permute.xlu0 %591
      %593 = vrot.lane.b32.xlu0 %v514, 110
      %v594 = vpop.permute.xlu0 %593
      %595 = vrot.lane.b32.xlu0 %v515, 110
      %v596 = vpop.permute.xlu0 %595
      %597 = vrot.lane.b32.xlu0 %v516, 110
      %v598 = vpop.permute.xlu0 %597
      %599 = vrot.lane.b32.xlu0 %v517, 110
      %v600 = vpop.permute.xlu0 %599
      %vm601 = vcmask 900096
      %v602 = vsel %vm601, %v586, %v588
      %v603 = vsel %vm601, %v588, %v590
      %v604 = vsel %vm601, %v590, %v592
      %v605 = vsel %vm601, %v594, %v596
      %v606 = vsel %vm601, %v596, %v598
      %v607 = vsel %vm601, %v598, %v600
      %614 = vrot.lane.b32.xlu0 %v510, 109
      %v615 = vpop.permute.xlu0 %614
      %616 = vrot.lane.b32.xlu0 %v511, 109
      %v617 = vpop.permute.xlu0 %616
      %618 = vrot.lane.b32.xlu0 %v512, 109
      %v619 = vpop.permute.xlu0 %618
      %620 = vrot.lane.b32.xlu0 %v513, 109
      %v621 = vpop.permute.xlu0 %620
      %622 = vrot.lane.b32.xlu0 %v514, 109
      %v623 = vpop.permute.xlu0 %622
      %624 = vrot.lane.b32.xlu0 %v515, 109
      %v625 = vpop.permute.xlu0 %624
      %626 = vrot.lane.b32.xlu0 %v516, 109
      %v627 = vpop.permute.xlu0 %626
      %628 = vrot.lane.b32.xlu0 %v517, 109
      %v629 = vpop.permute.xlu0 %628
      %vm630 = vcmask 891904
      %v631 = vsel %vm630, %v615, %v617
      %v632 = vsel %vm630, %v617, %v619
      %v633 = vsel %vm630, %v619, %v621
      %v634 = vsel %vm630, %v623, %v625
      %v635 = vsel %vm630, %v625, %v627
      %v636 = vsel %vm630, %v627, %v629
      %643 = vrot.lane.b32.xlu0 %v510, 108
      %v644 = vpop.permute.xlu0 %643
      %645 = vrot.lane.b32.xlu0 %v511, 108
      %v646 = vpop.permute.xlu0 %645
      %647 = vrot.lane.b32.xlu0 %v512, 108
      %v648 = vpop.permute.xlu0 %647
      %649 = vrot.lane.b32.xlu0 %v513, 108
      %v650 = vpop.permute.xlu0 %649
      %651 = vrot.lane.b32.xlu0 %v514, 108
      %v652 = vpop.permute.xlu0 %651
      %653 = vrot.lane.b32.xlu0 %v515, 108
      %v654 = vpop.permute.xlu0 %653
      %655 = vrot.lane.b32.xlu0 %v516, 108
      %v656 = vpop.permute.xlu0 %655
      %657 = vrot.lane.b32.xlu0 %v517, 108
      %v658 = vpop.permute.xlu0 %657
      %vm659 = vcmask 883712
      %v660 = vsel %vm659, %v644, %v646
      %v661 = vsel %vm659, %v646, %v648
      %v662 = vsel %vm659, %v648, %v650
      %v663 = vsel %vm659, %v652, %v654
      %v664 = vsel %vm659, %v654, %v656
      %v665 = vsel %vm659, %v656, %v658
      %672 = vrot.lane.b32.xlu0 %v510, 92
      %v673 = vpop.permute.xlu0 %672
      %674 = vrot.lane.b32.xlu0 %v511, 92
      %v675 = vpop.permute.xlu0 %674
      %676 = vrot.lane.b32.xlu0 %v512, 92
      %v677 = vpop.permute.xlu0 %676
      %678 = vrot.lane.b32.xlu0 %v513, 92
      %v679 = vpop.permute.xlu0 %678
      %680 = vrot.lane.b32.xlu0 %v514, 92
      %v681 = vpop.permute.xlu0 %680
      %682 = vrot.lane.b32.xlu0 %v515, 92
      %v683 = vpop.permute.xlu0 %682
      %684 = vrot.lane.b32.xlu0 %v516, 92
      %v685 = vpop.permute.xlu0 %684
      %686 = vrot.lane.b32.xlu0 %v517, 92
      %v687 = vpop.permute.xlu0 %686
      %vm688 = vcmask 752640
      %v689 = vsel %vm688, %v673, %v675
      %v690 = vsel %vm688, %v675, %v677
      %v691 = vsel %vm688, %v677, %v679
      %v692 = vsel %vm688, %v681, %v683
      %v693 = vsel %vm688, %v683, %v685
      %v694 = vsel %vm688, %v685, %v687
      %701 = vrot.lane.b32.xlu0 %v510, 91
      %v702 = vpop.permute.xlu0 %701
      %703 = vrot.lane.b32.xlu0 %v511, 91
      %v704 = vpop.permute.xlu0 %703
      %705 = vrot.lane.b32.xlu0 %v512, 91
      %v706 = vpop.permute.xlu0 %705
      %707 = vrot.lane.b32.xlu0 %v513, 91
      %v708 = vpop.permute.xlu0 %707
      %709 = vrot.lane.b32.xlu0 %v514, 91
      %v710 = vpop.permute.xlu0 %709
      %711 = vrot.lane.b32.xlu0 %v515, 91
      %v712 = vpop.permute.xlu0 %711
      %713 = vrot.lane.b32.xlu0 %v516, 91
      %v714 = vpop.permute.xlu0 %713
      %715 = vrot.lane.b32.xlu0 %v517, 91
      %v716 = vpop.permute.xlu0 %715
      %vm717 = vcmask 744448
      %v718 = vsel %vm717, %v702, %v704
      %v719 = vsel %vm717, %v704, %v706
      %v720 = vsel %vm717, %v706, %v708
      %v721 = vsel %vm717, %v710, %v712
      %v722 = vsel %vm717, %v712, %v714
      %v723 = vsel %vm717, %v714, %v716
      %730 = vrot.lane.b32.xlu0 %v510, 90
      %v731 = vpop.permute.xlu0 %730
      %732 = vrot.lane.b32.xlu0 %v511, 90
      %v733 = vpop.permute.xlu0 %732
      %734 = vrot.lane.b32.xlu0 %v512, 90
      %v735 = vpop.permute.xlu0 %734
      %736 = vrot.lane.b32.xlu0 %v513, 90
      %v737 = vpop.permute.xlu0 %736
      %738 = vrot.lane.b32.xlu0 %v514, 90
      %v739 = vpop.permute.xlu0 %738
      %740 = vrot.lane.b32.xlu0 %v515, 90
      %v741 = vpop.permute.xlu0 %740
      %742 = vrot.lane.b32.xlu0 %v516, 90
      %v743 = vpop.permute.xlu0 %742
      %744 = vrot.lane.b32.xlu0 %v517, 90
      %v745 = vpop.permute.xlu0 %744
      %vm746 = vcmask 736256
      %v747 = vsel %vm746, %v731, %v733
      %v748 = vsel %vm746, %v733, %v735
      %v749 = vsel %vm746, %v735, %v737
      %v750 = vsel %vm746, %v739, %v741
      %v751 = vsel %vm746, %v741, %v743
      %v752 = vsel %vm746, %v743, %v745
      %v759 = vpack.c.bf16 %v514, %v510
      %v760 = vpack.c.bf16 %v515, %v511
      %v761 = vpack.c.bf16 %v516, %v512
      %v762 = vpack.c.bf16 %v548, %v545
      %v763 = vpack.c.bf16 %v549, %v546
      %v764 = vpack.c.bf16 %v550, %v547
      %v765 = vpack.c.bf16 %v576, %v573
      %v766 = vpack.c.bf16 %v577, %v574
      %v767 = vpack.c.bf16 %v578, %v575
      %v768 = vpack.c.bf16 %v605, %v602
      %v769 = vpack.c.bf16 %v606, %v603
      %v770 = vpack.c.bf16 %v607, %v604
      %v771 = vpack.c.bf16 %v634, %v631
      %v772 = vpack.c.bf16 %v635, %v632
      %v773 = vpack.c.bf16 %v636, %v633
      %v774 = vpack.c.bf16 %v663, %v660
      %v775 = vpack.c.bf16 %v664, %v661
      %v776 = vpack.c.bf16 %v665, %v662
      %v777 = vpack.c.bf16 %v692, %v689
      %v778 = vpack.c.bf16 %v693, %v690
      %v779 = vpack.c.bf16 %v694, %v691
      %v780 = vpack.c.bf16 %v721, %v718
      %v781 = vpack.c.bf16 %v722, %v719
      %v782 = vpack.c.bf16 %v723, %v720
      %v783 = vpack.c.bf16 %v750, %v747
      %v784 = vpack.c.bf16 %v751, %v748
      %v785 = vpack.c.bf16 %v752, %v749
      %v787 = vunpack.c.l.b16 %v518
      %v788 = vunpack.c.h.b16 %v518
      %v789 = vpack.c.b16 %v787, %v787
      %v790 = vpack.c.b16 %v788, %v788
      %vm792 = vcmask 130048
      %v794 = vsel %vm792, %v790, 0
      %796 = vmatprep.subr.bf16.mxu0 %v760
      %797 = vmatpush1.bf16.msra.mxu0 %v759
      %798 = vmatprep.subr.bf16.mxu0 %v763
      %799 = vmatpush1.bf16.msra.mxu0 %v762
      %800 = vmatprep.subr.bf16.mxu0 %v766
      %801 = vmatpush1.bf16.msra.mxu0 %v765
      %802 = vmatprep.subr.bf16.mxu0 %v769
      %803 = vmatpush1.bf16.msra.mxu0 %v768
      %804 = vmatprep.subr.bf16.mxu0 %v772
      %805 = vmatpush1.bf16.msra.mxu0 %v771
      %806 = vmatprep.subr.bf16.mxu0 %v775
      %807 = vmatpush1.bf16.msra.mxu0 %v774
      %808 = vmatprep.subr.bf16.mxu0 %v778
      %809 = vmatpush1.bf16.msra.mxu0 %v777
      %810 = vmatprep.subr.bf16.mxu0 %v781
      %811 = vmatpush1.bf16.msra.mxu0 %v780
      %812 = vmatprep.subr.bf16.mxu0 %v784
      %813 = vmatpush1.bf16.msra.mxu0 %v783
      %814 = vmatprep.subr.bf16.mxu0 0
      %815 = vmatpush1.bf16.msra.mxu0 0
      %816 = vmatprep.subr.bf16.mxu0 0
      %817 = vmatpush1.bf16.msra.mxu0 0
      %818 = vmatprep.subr.bf16.mxu0 0
      %819 = vmatpush1.bf16.msra.mxu0 0
      %820 = vmatprep.subr.bf16.mxu0 0
      %821 = vmatpush1.bf16.msra.mxu0 0
      %822 = vmatprep.subr.bf16.mxu0 0
      %823 = vmatpush1.bf16.msra.mxu0 0
      %824 = vmatprep.subr.bf16.mxu0 0
      %825 = vmatpush1.bf16.msra.mxu0 0
      %826 = vmatprep.subr.bf16.mxu0 0
      %827 = vmatpush1.bf16.msra.mxu0 0
      %828 = vmatprep.mubr.bf16.mxu0 %v794
      %829 = vmatmul.mubr.bf16.gmra.mrb[0].mxu0 %v789
      %v830 = vpop.f32.mrb[0].mxu0
      %v831 = vadd.f32 0.0, %v830
      %v832 = vpop.f32.mrb[0].mxu0
      %v833 = vadd.f32 0.0, %v832
      %v834 = vpop.f32.mrb[0].mxu0
      %v835 = vpop.f32.mrb[0].mxu0
      %836 = vdwg.mxu0
      %837 = vmatprep.subr.bf16.mxu0 0
      %838 = vmatpush1.bf16.msra.mxu0 %v761
      %839 = vmatprep.subr.bf16.mxu0 0
      %840 = vmatpush1.bf16.msra.mxu0 %v764
      %841 = vmatprep.subr.bf16.mxu0 0
      %842 = vmatpush1.bf16.msra.mxu0 %v767
      %843 = vmatprep.subr.bf16.mxu0 0
      %844 = vmatpush1.bf16.msra.mxu0 %v770
      %845 = vmatprep.subr.bf16.mxu0 0
      %846 = vmatpush1.bf16.msra.mxu0 %v773
      %847 = vmatprep.subr.bf16.mxu0 0
      %848 = vmatpush1.bf16.msra.mxu0 %v776
      %849 = vmatprep.subr.bf16.mxu0 0
      %850 = vmatpush1.bf16.msra.mxu0 %v779
      %851 = vmatprep.subr.bf16.mxu0 0
      %852 = vmatpush1.bf16.msra.mxu0 %v782
      %853 = vmatprep.subr.bf16.mxu0 0
      %854 = vmatpush1.bf16.msra.mxu0 %v785
      %855 = vmatprep.subr.bf16.mxu0 0
      %856 = vmatpush1.bf16.msra.mxu0 0
      %857 = vmatprep.subr.bf16.mxu0 0
      %858 = vmatpush1.bf16.msra.mxu0 0
      %859 = vmatprep.subr.bf16.mxu0 0
      %860 = vmatpush1.bf16.msra.mxu0 0
      %861 = vmatprep.subr.bf16.mxu0 0
      %862 = vmatpush1.bf16.msra.mxu0 0
      %863 = vmatprep.subr.bf16.mxu0 0
      %864 = vmatpush1.bf16.msra.mxu0 0
      %865 = vmatprep.subr.bf16.mxu0 0
      %866 = vmatpush1.bf16.msra.mxu0 0
      %867 = vmatprep.subr.bf16.mxu0 0
      %868 = vmatpush1.bf16.msra.mxu0 0
      %869 = vmatprep.mubr.bf16.mxu0 %v794
      %870 = vmatmul.mubr.bf16.gmra.mrb[0].mxu0 %v789
      %v871 = vpop.f32.mrb[0].mxu0
      %v872 = vadd.f32 0.0, %v871
      %v873 = vpop.f32.mrb[0].mxu0
      %v874 = vpop.f32.mrb[0].mxu0
      %v875 = vpop.f32.mrb[0].mxu0
      %876 = vdwg.mxu0
      %v877 = vsel %vm284, 1, 0
      %v878 = vsel %vm285, 1, 0
      %v879 = vsel %vm286, 1, 0
      %vm880 = vcmp.eq.s32.totalorder %v877, 1
      %vm881 = vcmp.eq.s32.totalorder %v878, 1
      %vm882 = vcmp.eq.s32.totalorder %v879, 1
      %v883 = vsel %vm880, %v831, 0.0
      %v884 = vsel %vm881, %v833, 0.0
      %v885 = vsel %vm882, %v872, 0.0
      %v886 = vadd.f32 %v883, %v884
      %v887 = vadd.f32 %v886, %v885
      %888 = vadd.xlane.f32.xlu0 %v887
      %v889 = vpop.xlane.xlu0 %888
      %v890 = vmul.f32 %v889, 0.00390625
      %v891 = vmul.f32 %v883, %v883
      %v892 = vmul.f32 %v884, %v884
      %v893 = vmul.f32 %v885, %v885
      %v894 = vadd.f32 %v891, %v892
      %v895 = vadd.f32 %v894, %v893
      %896 = vadd.xlane.f32.xlu0 %v895
      %v897 = vpop.xlane.xlu0 %896
      %v898 = vmul.f32 %v897, 0.00390625
      %v899 = vmul.f32 %v890, %v890
      %v900 = vsub.f32 %v898, %v899
      %v901 = vmax.f32 %v900, 0.0
      %v902 = vsub.f32 %v883, %v890
      %v903 = vsub.f32 %v884, %v890
      %v904 = vsub.f32 %v885, %v890
      %v905 = vadd.f32 %v901, 1e-05
      %v906 = vrsqrt.pop %v905
      %v907 = vmul.f32 %v902, %v906
      %v908 = vmul.f32 %v903, %v906
      %v909 = vmul.f32 %v904, %v906
      %911 = vset.pattern.permute.xlu0 0
      %912 = vperm.xlu0 %911, %v519
      %v913 = vpop.permute.xlu0 %912
      %v915 = vmul.f32 %v907, %v913
      %v916 = vmul.f32 %v908, %v913
      %v917 = vmul.f32 %v909, %v913
      %918 = vset.pattern.permute.xlu0 1
      %919 = vperm.xlu0 %918, %v519
      %v920 = vpop.permute.xlu0 %919
      %v922 = vadd.f32 %v915, %v920
      %v923 = vadd.f32 %v916, %v920
      %v924 = vadd.f32 %v917, %v920
      %v925 = vmax.f32 %v922, 0.0
      %v926 = vmax.f32 %v923, 0.0
      %v927 = vmax.f32 %v924, 0.0
      %931 = vrot.lane.b32.xlu0 %v925, 19
      %v932 = vpop.permute.xlu0 %931
      %933 = vrot.lane.b32.xlu0 %v926, 19
      %v934 = vpop.permute.xlu0 %933
      %935 = vrot.lane.b32.xlu0 %v927, 19
      %v936 = vpop.permute.xlu0 %935
      %v937 = vsel %vm348, %v932, %v934
      %v938 = vsel %vm348, %v934, %v936
      %943 = vst.msk [vmem:[#allocation2] sm:$0xff] %vm361, %v932
      %944 = vst [vmem:[#allocation2 + $0x8] sm:$0xff] %v937
      %945 = vst [vmem:[#allocation2 + $0x10] sm:$0xff] %v938
      %946 = vst.msk [vmem:[#allocation2 + $0x18] sm:$0xff] %vm348, %v936
      %v947 = vld [vmem:[#allocation2] sm:$0xff]
      %v948 = vld [vmem:[#allocation2 + $0x8] sm:$0xff]
      %v949 = vld [vmem:[#allocation2 + $0x10] sm:$0xff]
      %v950 = vld [vmem:[#allocation2 + $0x18] sm:$0xff]
      %955 = vrot.lane.b32.xlu0 %v947, 126
      %v956 = vpop.permute.xlu0 %955
      %957 = vrot.lane.b32.xlu0 %v948, 126
      %v958 = vpop.permute.xlu0 %957
      %959 = vrot.lane.b32.xlu0 %v949, 126
      %v960 = vpop.permute.xlu0 %959
      %961 = vrot.lane.b32.xlu0 %v950, 126
      %v962 = vpop.permute.xlu0 %961
      %v963 = vsel %vm402, %v956, %v958
      %v964 = vsel %vm402, %v958, %v960
      %v965 = vsel %vm402, %v960, %v962
      %v970 = vsel %vm402, %v962, 0.0
      %971 = vst.msk [vmem:[#allocation2] sm:$0xff] %vm423, %v963
      %972 = vst.msk [vmem:[#allocation2 + $0x8] sm:$0xff] %vm424, %v964
      %973 = vst.msk [vmem:[#allocation2 + $0x10] sm:$0xff] %vm425, %v965
      %974 = vst.msk [vmem:[#allocation2 + $0x18] sm:$0xff] %vm426, %v970
      %975 = vrot.lane.b32.xlu0 %v947, 2
      %v976 = vpop.permute.xlu0 %975
      %977 = vrot.lane.b32.xlu0 %v948, 2
      %v978 = vpop.permute.xlu0 %977
      %979 = vrot.lane.b32.xlu0 %v949, 2
      %v980 = vpop.permute.xlu0 %979
      %981 = vrot.lane.b32.xlu0 %v950, 2
      %v982 = vpop.permute.xlu0 %981
      %v983 = vsel %vm451, %v976, %v978
      %v984 = vsel %vm451, %v978, %v980
      %v985 = vsel %vm451, %v980, %v982
      %v990 = vsel %vm451, 0.0, %v976
      %991 = vst.msk [vmem:[#allocation2] sm:$0xff] %vm472, %v990
      %992 = vst.msk [vmem:[#allocation2 + $0x8] sm:$0xff] %vm473, %v983
      %993 = vst.msk [vmem:[#allocation2 + $0x10] sm:$0xff] %vm474, %v984
      %994 = vst.msk [vmem:[#allocation2 + $0x18] sm:$0xff] %vm475, %v985
      %v995 = vld [vmem:[#allocation2] sm:$0xff]
      %997 = vrot.lane.b32.xlu0 %v995, 92
      %v998 = vpop.permute.xlu0 %997
      %1000 = vst.msk [vmem:[#allocation2] sm:$0xff] %vm494, %v998
      %v1001 = vld [vmem:[#allocation2 + $0x10] sm:$0xff]
      %1003 = vrot.lane.b32.xlu0 %v1001, 36
      %v1004 = vpop.permute.xlu0 %1003
      %1006 = vst.msk [vmem:[#allocation2 + $0x10] sm:$0xff] %vm507, %v1004
      %v1007 = vld [vmem:[#allocation2] sm:$0xff]
      %v1008 = vld [vmem:[#allocation2 + $0x8] sm:$0xff]
      %v1009 = vld [vmem:[#allocation2 + $0x10] sm:$0xff]
      %v1010 = vld [vmem:[#allocation2 + $0x18] sm:$0xff]
      %v1011 = vld [vmem:[%s3] sm:$0x3]
      %v1012 = vld [vmem:[%s4] sm:$0x7]
      %1017 = vrot.lane.b32.xlu0 %v1007, 127
      %v1018 = vpop.permute.xlu0 %1017
      %1019 = vrot.lane.b32.xlu0 %v1008, 127
      %v1020 = vpop.permute.xlu0 %1019
      %1021 = vrot.lane.b32.xlu0 %v1009, 127
      %v1022 = vpop.permute.xlu0 %1021
      %1023 = vrot.lane.b32.xlu0 %v1010, 127
      %v1024 = vpop.permute.xlu0 %1023
      %v1025 = vsel %vm544, %v1018, %v1020
      %v1026 = vsel %vm544, %v1020, %v1022
      %v1027 = vsel %vm544, %v1022, %v1024
      %1031 = vrot.lane.b32.xlu0 %v1007, 126
      %v1032 = vpop.permute.xlu0 %1031
      %1033 = vrot.lane.b32.xlu0 %v1008, 126
      %v1034 = vpop.permute.xlu0 %1033
      %1035 = vrot.lane.b32.xlu0 %v1009, 126
      %v1036 = vpop.permute.xlu0 %1035
      %1037 = vrot.lane.b32.xlu0 %v1010, 126
      %v1038 = vpop.permute.xlu0 %1037
      %v1039 = vsel %vm402, %v1032, %v1034
      %v1040 = vsel %vm402, %v1034, %v1036
      %v1041 = vsel %vm402, %v1036, %v1038
      %1045 = vrot.lane.b32.xlu0 %v1007, 110
      %v1046 = vpop.permute.xlu0 %1045
      %1047 = vrot.lane.b32.xlu0 %v1008, 110
      %v1048 = vpop.permute.xlu0 %1047
      %1049 = vrot.lane.b32.xlu0 %v1009, 110
      %v1050 = vpop.permute.xlu0 %1049
      %1051 = vrot.lane.b32.xlu0 %v1010, 110
      %v1052 = vpop.permute.xlu0 %1051
      %v1053 = vsel %vm601, %v1046, %v1048
      %v1054 = vsel %vm601, %v1048, %v1050
      %v1055 = vsel %vm601, %v1050, %v1052
      %1059 = vrot.lane.b32.xlu0 %v1007, 109
      %v1060 = vpop.permute.xlu0 %1059
      %1061 = vrot.lane.b32.xlu0 %v1008, 109
      %v1062 = vpop.permute.xlu0 %1061
      %1063 = vrot.lane.b32.xlu0 %v1009, 109
      %v1064 = vpop.permute.xlu0 %1063
      %1065 = vrot.lane.b32.xlu0 %v1010, 109
      %v1066 = vpop.permute.xlu0 %1065
      %v1067 = vsel %vm630, %v1060, %v1062
      %v1068 = vsel %vm630, %v1062, %v1064
      %v1069 = vsel %vm630, %v1064, %v1066
      %1073 = vrot.lane.b32.xlu0 %v1007, 108
      %v1074 = vpop.permute.xlu0 %1073
      %1075 = vrot.lane.b32.xlu0 %v1008, 108
      %v1076 = vpop.permute.xlu0 %1075
      %1077 = vrot.lane.b32.xlu0 %v1009, 108
      %v1078 = vpop.permute.xlu0 %1077
      %1079 = vrot.lane.b32.xlu0 %v1010, 108
      %v1080 = vpop.permute.xlu0 %1079
      %v1081 = vsel %vm659, %v1074, %v1076
      %v1082 = vsel %vm659, %v1076, %v1078
      %v1083 = vsel %vm659, %v1078, %v1080
      %1087 = vrot.lane.b32.xlu0 %v1007, 92
      %v1088 = vpop.permute.xlu0 %1087
      %1089 = vrot.lane.b32.xlu0 %v1008, 92
      %v1090 = vpop.permute.xlu0 %1089
      %1091 = vrot.lane.b32.xlu0 %v1009, 92
      %v1092 = vpop.permute.xlu0 %1091
      %1093 = vrot.lane.b32.xlu0 %v1010, 92
      %v1094 = vpop.permute.xlu0 %1093
      %v1095 = vsel %vm688, %v1088, %v1090
      %v1096 = vsel %vm688, %v1090, %v1092
      %v1097 = vsel %vm688, %v1092, %v1094
      %1101 = vrot.lane.b32.xlu0 %v1007, 91
      %v1102 = vpop.permute.xlu0 %1101
      %1103 = vrot.lane.b32.xlu0 %v1008, 91
      %v1104 = vpop.permute.xlu0 %1103
      %1105 = vrot.lane.b32.xlu0 %v1009, 91
      %v1106 = vpop.permute.xlu0 %1105
      %1107 = vrot.lane.b32.xlu0 %v1010, 91
      %v1108 = vpop.permute.xlu0 %1107
      %v1109 = vsel %vm717, %v1102, %v1104
      %v1110 = vsel %vm717, %v1104, %v1106
      %v1111 = vsel %vm717, %v1106, %v1108
      %1115 = vrot.lane.b32.xlu0 %v1007, 90
      %v1116 = vpop.permute.xlu0 %1115
      %1117 = vrot.lane.b32.xlu0 %v1008, 90
      %v1118 = vpop.permute.xlu0 %1117
      %1119 = vrot.lane.b32.xlu0 %v1009, 90
      %v1120 = vpop.permute.xlu0 %1119
      %1121 = vrot.lane.b32.xlu0 %v1010, 90
      %v1122 = vpop.permute.xlu0 %1121
      %v1123 = vsel %vm746, %v1116, %v1118
      %v1124 = vsel %vm746, %v1118, %v1120
      %v1125 = vsel %vm746, %v1120, %v1122
      %v1129 = vpack.c.bf16 %v1025, %v1007
      %v1130 = vpack.c.bf16 %v1026, %v1008
      %v1131 = vpack.c.bf16 %v1027, %v1009
      %v1132 = vpack.c.bf16 %v1053, %v1039
      %v1133 = vpack.c.bf16 %v1054, %v1040
      %v1134 = vpack.c.bf16 %v1055, %v1041
      %v1135 = vpack.c.bf16 %v1081, %v1067
      %v1136 = vpack.c.bf16 %v1082, %v1068
      %v1137 = vpack.c.bf16 %v1083, %v1069
      %v1138 = vpack.c.bf16 %v1109, %v1095
      %v1139 = vpack.c.bf16 %v1110, %v1096
      %v1140 = vpack.c.bf16 %v1111, %v1097
      %v1141 = vpack.c.bf16 %v1123, %v1123
      %v1142 = vpack.c.bf16 %v1124, %v1124
      %v1143 = vpack.c.bf16 %v1125, %v1125
      %vm1144 = vcmask 588800
      %v1146 = vsel %vm1144, %v1011, 0
      %vm1148 = vcmask 1043456
      %v1150 = vsel %vm1148, %v1141, 0
      %v1153 = vsel %vm1148, %v1142, 0
      %v1156 = vsel %vm1148, %v1143, 0
      %1158 = vmatprep.subr.bf16.mxu0 %v1130
      %1159 = vmatpush1.bf16.msra.mxu0 %v1129
      %1160 = vmatprep.subr.bf16.mxu0 %v1133
      %1161 = vmatpush1.bf16.msra.mxu0 %v1132
      %1162 = vmatprep.subr.bf16.mxu0 %v1136
      %1163 = vmatpush1.bf16.msra.mxu0 %v1135
      %1164 = vmatprep.subr.bf16.mxu0 %v1139
      %1165 = vmatpush1.bf16.msra.mxu0 %v1138
      %1166 = vmatprep.subr.bf16.mxu0 %v1153
      %1167 = vmatpush1.bf16.msra.mxu0 %v1150
      %1168 = vmatprep.subr.bf16.mxu0 0
      %1169 = vmatpush1.bf16.msra.mxu0 0
      %1170 = vmatprep.subr.bf16.mxu0 0
      %1171 = vmatpush1.bf16.msra.mxu0 0
      %1172 = vmatprep.subr.bf16.mxu0 0
      %1173 = vmatpush1.bf16.msra.mxu0 0
      %1174 = vmatprep.subr.bf16.mxu0 0
      %1175 = vmatpush1.bf16.msra.mxu0 0
      %1176 = vmatprep.subr.bf16.mxu0 0
      %1177 = vmatpush1.bf16.msra.mxu0 0
      %1178 = vmatprep.subr.bf16.mxu0 0
      %1179 = vmatpush1.bf16.msra.mxu0 0
      %1180 = vmatprep.subr.bf16.mxu0 0
      %1181 = vmatpush1.bf16.msra.mxu0 0
      %1182 = vmatprep.subr.bf16.mxu0 0
      %1183 = vmatpush1.bf16.msra.mxu0 0
      %1184 = vmatprep.subr.bf16.mxu0 0
      %1185 = vmatpush1.bf16.msra.mxu0 0
      %1186 = vmatprep.subr.bf16.mxu0 0
      %1187 = vmatpush1.bf16.msra.mxu0 0
      %1188 = vmatprep.subr.bf16.mxu0 0
      %1189 = vmatpush1.bf16.msra.mxu0 0
      %1190 = vmatprep.mubr.bf16.mxu0 0
      %1191 = vmatmul.mubr.bf16.gmra.mrb[0].mxu0 %v1146
      %v1192 = vpop.f32.mrb[0].mxu0
      %v1193 = vadd.f32 0.0, %v1192
      %v1194 = vpop.f32.mrb[0].mxu0
      %v1195 = vadd.f32 0.0, %v1194
      %v1196 = vpop.f32.mrb[0].mxu0
      %v1197 = vpop.f32.mrb[0].mxu0
      %1198 = vdwg.mxu0
      %1199 = vmatprep.subr.bf16.mxu0 0
      %1200 = vmatpush1.bf16.msra.mxu0 %v1131
      %1201 = vmatprep.subr.bf16.mxu0 0
      %1202 = vmatpush1.bf16.msra.mxu0 %v1134
      %1203 = vmatprep.subr.bf16.mxu0 0
      %1204 = vmatpush1.bf16.msra.mxu0 %v1137
      %1205 = vmatprep.subr.bf16.mxu0 0
      %1206 = vmatpush1.bf16.msra.mxu0 %v1140
      %1207 = vmatprep.subr.bf16.mxu0 0
      %1208 = vmatpush1.bf16.msra.mxu0 %v1156
      %1209 = vmatprep.subr.bf16.mxu0 0
      %1210 = vmatpush1.bf16.msra.mxu0 0
      %1211 = vmatprep.subr.bf16.mxu0 0
      %1212 = vmatpush1.bf16.msra.mxu0 0
      %1213 = vmatprep.subr.bf16.mxu0 0
      %1214 = vmatpush1.bf16.msra.mxu0 0
      %1215 = vmatprep.subr.bf16.mxu0 0
      %1216 = vmatpush1.bf16.msra.mxu0 0
      %1217 = vmatprep.subr.bf16.mxu0 0
      %1218 = vmatpush1.bf16.msra.mxu0 0
      %1219 = vmatprep.subr.bf16.mxu0 0
      %1220 = vmatpush1.bf16.msra.mxu0 0
      %1221 = vmatprep.subr.bf16.mxu0 0
      %1222 = vmatpush1.bf16.msra.mxu0 0
      %1223 = vmatprep.subr.bf16.mxu0 0
      %1224 = vmatpush1.bf16.msra.mxu0 0
      %1225 = vmatprep.subr.bf16.mxu0 0
      %1226 = vmatpush1.bf16.msra.mxu0 0
      %1227 = vmatprep.subr.bf16.mxu0 0
      %1228 = vmatpush1.bf16.msra.mxu0 0
      %1229 = vmatprep.subr.bf16.mxu0 0
      %1230 = vmatpush1.bf16.msra.mxu0 0
      %1231 = vmatprep.mubr.bf16.mxu0 0
      %1232 = vmatmul.mubr.bf16.gmra.mrb[0].mxu0 %v1146
      %v1233 = vpop.f32.mrb[0].mxu0
      %v1234 = vadd.f32 0.0, %v1233
      %v1235 = vpop.f32.mrb[0].mxu0
      %v1236 = vpop.f32.mrb[0].mxu0
      %v1237 = vpop.f32.mrb[0].mxu0
      %1238 = vdwg.mxu0
      %v1239 = vsel %vm880, %v1193, 0.0
      %v1240 = vsel %vm881, %v1195, 0.0
      %v1241 = vsel %vm882, %v1234, 0.0
      %vm1242 = vcmask 1042432
      %v1243 = vsel %vm1242, %v1239, 0.0
      %v1244 = vsel %vm1242, %v1240, 0.0
      %v1245 = vadd.f32 %v1243, %v1244
      %v1246 = vsel %vm1242, %v1241, 0.0
      %v1247 = vadd.f32 %v1245, %v1246
      %1248 = vadd.xlane.f32.xlu0 %v1247
      %v1249 = vpop.xlane.xlu0 %1248
      %v1250 = vmul.f32 %v1249, 0.00390625
      %v1251 = vmul.f32 %v1239, %v1239
      %v1252 = vmul.f32 %v1240, %v1240
      %v1253 = vmul.f32 %v1241, %v1241
      %v1254 = vsel %vm1242, %v1251, 0.0
      %v1255 = vsel %vm1242, %v1252, 0.0
      %v1256 = vadd.f32 %v1254, %v1255
      %v1257 = vsel %vm1242, %v1253, 0.0
      %v1258 = vadd.f32 %v1256, %v1257
      %1259 = vadd.xlane.f32.xlu0 %v1258
      %v1260 = vpop.xlane.xlu0 %1259
      %v1261 = vmul.f32 %v1260, 0.00390625
      %v1262 = vmul.f32 %v1250, %v1250
      %v1263 = vsub.f32 %v1261, %v1262
      %v1264 = vmax.f32 %v1263, 0.0
      %v1265 = vsub.f32 %v1239, %v1250
      %v1266 = vsub.f32 %v1240, %v1250
      %v1267 = vsub.f32 %v1241, %v1250
      %v1268 = vadd.f32 %v1264, 1e-05
      %v1269 = vrsqrt.pop %v1268
      %v1270 = vmul.f32 %v1265, %v1269
      %v1271 = vmul.f32 %v1266, %v1269
      %v1272 = vmul.f32 %v1267, %v1269
      %1274 = vset.pattern.permute.xlu0 0
      %1275 = vperm.xlu0 %1274, %v1012
      %v1276 = vpop.permute.xlu0 %1275
      %v1278 = vmul.f32 %v1270, %v1276
      %v1279 = vmul.f32 %v1271, %v1276
      %v1280 = vmul.f32 %v1272, %v1276
      %1281 = vset.pattern.permute.xlu0 1
      %1282 = vperm.xlu0 %1281, %v1012
      %v1283 = vpop.permute.xlu0 %1282
      %v1285 = vadd.f32 %v1278, %v1283
      %v1286 = vadd.f32 %v1279, %v1283
      %v1287 = vadd.f32 %v1280, %v1283
      %v1288 = vtanh.pop %v1285
      %v1289 = vtanh.pop %v1286
      %v1290 = vtanh.pop %v1287
      %v1291 = vsel %vm1242, %v1288, 0.0
      %v1292 = vsel %vm1242, %v1289, 0.0
      %v1293 = vsel %vm1242, %v1290, 0.0
      %1294 = vst [vmem:[%s224] sm:$0xff] %v1291
      %1295 = vst [vmem:[%s224 + $0x8] sm:$0xff] %v1292
      %1296 = vst [vmem:[%s224 + $0x10] sm:$0xff] %v1293
      %p1297 = scmp.lt.s32.totalorder %s16, 1
      %s1298 = scalar_select %p1297, %s16, 1
      %s1299 = smul.addr %s1298, 3
      %s1300 = smul.addr %s1299, 8
      %s1301 = scalar_lea.vmem %s5, %s1300
      // Predicated region
      $region41: #{stylizing_network.9} parent=39 // pred_check
        %p1302 = pneg %p144
      $region42: #{stylizing_network.9} parent=39 // pred_check_branch
        %1304 = sbr.rel (%p1302) target = $region44
      $region43: #{stylizing_network.9} parent=39 // pred_region
        _
      $region44: #{stylizing_network.9} parent=39 // pred_fallthru
        _
    $region40: #{stylizing_network.9} parent=5 // pred_fallthru
      _
    %p1305 = scmp.le.s32.totalorder 2, %s11
    // Predicated region
    $region45: #{stylizing_network.9} parent=5 // pred_check
      %p1306 = pneg %p1305
    $region46: #{stylizing_network.9} parent=5 // pred_check_branch
      %1308 = sbr.rel (%p1306) target = $region48
    $region47: #{stylizing_network.9} parent=5 // pred_region
      %s1309 = ssub.s32 %s11, 2
      // Predicated region
      $region49: #{stylizing_network.9} parent=47 // pred_check
        %p1310 = pneg %p150
      $region50: #{stylizing_network.9} parent=47 // pred_check_branch
        %1312 = sbr.rel (%p1310) target = $region52
      $region51: #{stylizing_network.9} parent=47 // pred_region
        %p1313 = scmp.lt.s32.totalorder %s17, 1
        %s1314 = scalar_select %p1313, %s17, 1
        %s1315 = smul.addr %s1314, 3
        %s1316 = smul.addr %s1315, 8
        %s1317 = scalar_lea.vmem %s5, %s1316
      $region52: #{stylizing_network.9} parent=47 // pred_fallthru
        _
    $region48: #{stylizing_network.9} parent=5 // pred_fallthru
      _
  $region6: #{stylizing_network.9} parent=0 // loop_footer
    %s15 = sadd.s32 1, %s11
  $region7: #{stylizing_network.9} parent=0 // loop_footer_branch
    %10 = sbr.rel target = $region3
  $region8: #{stylizing_network.9} parent=0 // loop_exit
    _

</llo_original>
